<compile_context>
chip_gen: v7x
topology: tpu7x:2x2x1
jax: 0.10.0
libtpu: 0.0.40
codegen_flags: <defaults>
</compile_context>

<pallas_src>
from functools import partial

import jax
import jax.numpy as jnp
from jax.experimental import pallas as pl
from jax.experimental.pallas import tpu as pltpu

_C = 128      # padded channel width used throughout the trunk
_PAD = 8      # sublane-aligned left pad of the spatial scratch (>= 1 zero column)

_VMEM = pl.BlockSpec(memory_space=pltpu.MemorySpace.VMEM)


# ----------------------------------------------------------------------------
# Pallas kernels
# ----------------------------------------------------------------------------
def trunk_kernel(x_ref, w1_ref, s1_ref, sh1_ref, w2_ref, s2_ref, sh2_ref,
                 w3_ref, s3_ref, sh3_ref, wh_ref, bh_ref,
                 o_ref, xp_ref, im_ref):
    """conv1..conv3 (3x3, folded BN, ReLU) + fused action/value 1x1 conv (ReLU).

    x_ref  : (N, H, W, 128) f32   input, channels 2..127 zero
    w*_ref : (9*128, 128)   bf16  im2col conv weights (zero-padded rows/cols)
    s*,sh* : (1, 128)       f32   folded BN scale / shift
    wh_ref : (128, 128)     bf16  [action_conv | value_conv | zeros] columns
    bh_ref : (1, 128)       f32
    o_ref  : (N*H*W, 128)   f32   cols 0:32 action conv out, 32:64 value conv out
    xp_ref : (N, H+2, W+2*_PAD, 128) f32 scratch (spatial zero padding)
    im_ref : (N, H, W, 9*128) f32 scratch (im2col patches)
    """
    N, H, W, C = x_ref.shape
    M = N * H * W
    f32 = jnp.float32

    xp_ref[...] = jnp.zeros_like(xp_ref)          # zero once; borders stay zero

    def conv3x3_bn_relu(x_val, w_ref, s_ref, sh_ref):
        # write the interior at a tile-aligned sublane offset (_PAD)
        xp_ref[:, pl.ds(1, H), pl.ds(_PAD, W), :] = x_val
        # build the im2col buffer once: tap k occupies lanes [k*128, (k+1)*128)
        for k in range(9):
            dy, dx = k // 3, k % 3
            im_ref[:, :, :, pl.ds(k * C, C)] = (
                xp_ref[:, pl.ds(dy, H), pl.ds(_PAD - 1 + dx, W), :])
        patches = im_ref[...].reshape(M, 9 * C)
        y = jnp.dot(patches, w_ref[...].astype(f32),
                    preferred_element_type=f32)                 # single MXU matmul
        y = jnp.maximum(y * s_ref[...] + sh_ref[...], 0.0)      # folded BN + ReLU
        return y.reshape(N, H, W, C)

    x = conv3x3_bn_relu(x_ref[...], w1_ref, s1_ref, sh1_ref)
    x = conv3x3_bn_relu(x, w2_ref, s2_ref, sh2_ref)
    x = conv3x3_bn_relu(x, w3_ref, s3_ref, sh3_ref)

    feat = x.reshape(M, C)
    h = jnp.dot(feat, wh_ref[...].astype(f32), preferred_element_type=f32)
    o_ref[...] = jnp.maximum(h + bh_ref[...], 0.0)


def heads_kernel(a_ref, v_ref, w1a_ref, b1a_ref, w1v_ref, b1v_ref,
                 w2a_ref, b2a_ref, w2v_ref, b2v_ref, act_ref, val_ref):
    """action/value fully-connected heads: relu(fc1) -> fc2 ( / tanh )."""
    f32 = jnp.float32
    a = jnp.dot(a_ref[...], w1a_ref[...].astype(f32),
                preferred_element_type=f32) + b1a_ref[...]
    a = jnp.maximum(a, 0.0)
    act_ref[...] = jnp.dot(a, w2a_ref[...].astype(f32),
                           preferred_element_type=f32) + b2a_ref[...]

    v = jnp.dot(v_ref[...], w1v_ref[...].astype(f32),
                preferred_element_type=f32) + b1v_ref[...]
    v = jnp.maximum(v, 0.0)
    val_ref[...] = jnp.tanh(jnp.dot(v, w2v_ref[...].astype(f32),
                                    preferred_element_type=f32) + b2v_ref[...])


# ----------------------------------------------------------------------------
# pallas_call wrappers (no grid: everything fits comfortably in VMEM)
# ----------------------------------------------------------------------------
def trunk_forward(x_nhwc_pad, kp):
    N, H, W, C = x_nhwc_pad.shape
    return pl.pallas_call(
        trunk_kernel,
        out_shape=jax.ShapeDtypeStruct((N * H * W, C), jnp.float32),
        in_specs=[_VMEM] * 12,
        out_specs=_VMEM,
        scratch_shapes=[
            pltpu.VMEM((N, H + 2, W + 2 * _PAD, C), jnp.float32),
            pltpu.VMEM((N, H, W, 9 * C), jnp.float32),
        ],
    )(x_nhwc_pad, kp["w1"], kp["s1"], kp["sh1"],
      kp["w2"], kp["s2"], kp["sh2"], kp["w3"], kp["s3"], kp["sh3"],
      kp["wh"], kp["bh"])


def heads_forward(a_flat, v_flat, kp):
    N = a_flat.shape[0]
    n_act = kp["w2a"].shape[1]
    return pl.pallas_call(
        heads_kernel,
        out_shape=(jax.ShapeDtypeStruct((N, n_act), jnp.float32),
                   jax.ShapeDtypeStruct((N, 1), jnp.float32)),
        in_specs=[_VMEM] * 10,
        out_specs=(_VMEM, _VMEM),
    )(a_flat, v_flat, kp["w1a"], kp["b1a"], kp["w1v"], kp["b1v"],
      kp["w2a"], kp["b2a"], kp["w2v"], kp["b2v"])


@partial(jax.jit, static_argnums=(2, 3))
def dual_head_forward(x_nchw, kp, width, height):
    H, W = height, width
    x = x_nchw.reshape(-1, 2, H, W)                   # mirrors torch .view(-1,2,H,W)
    N = x.shape[0]
    x = jnp.transpose(x, (0, 2, 3, 1)).astype(jnp.float32)   # NCHW -> NHWC
    x = jnp.pad(x, ((0, 0), (0, 0), (0, 0), (0, _C - 2)))    # channel-pad 2 -> 128

    hc = trunk_forward(x, kp)                         # (N*H*W, 128), lane-dense
    a_flat = hc[:, :32].reshape(N, H * W * 32)        # NHWC (h, w, c) flatten order
    v_flat = hc[:, 32:64].reshape(N, H * W * 32)
    action, value = heads_forward(a_flat, v_flat, kp)
    return action, value


# ----------------------------------------------------------------------------
# Parameter initialization (deterministic, synthetic) + kernel-layout packing
# ----------------------------------------------------------------------------
def _fold_bn(conv_bias, bn, eps=1e-5):
    scale = bn["gamma"] / jnp.sqrt(bn["var"] + eps)
    shift = (conv_bias - bn["mean"]) * scale + bn["beta"]
    return scale, shift


def init_params(key, width, height):
    """Logical (module-style) parameters; weight matrices stored in bf16."""
    HW = width * height
    f32, bf16 = jnp.float32, jnp.bfloat16
    ks = iter(jax.random.split(key, 40))
    std = 0.05

    def mat(shape):
        return (std * jax.random.normal(next(ks), shape, f32)).astype(bf16)

    def vec(shape):
        return std * jax.random.normal(next(ks), shape, f32)

    def bn(c):
        return dict(gamma=0.5 + jax.random.uniform(next(ks), (c,), f32),
                    beta=vec((c,)), mean=vec((c,)),
                    var=0.5 + jax.random.uniform(next(ks), (c,), f32))

    return dict(
        conv1_w=mat((9, 2, 64)), conv1_b=vec((64,)), bn1=bn(64),
        conv2_w=mat((9, 64, 128)), conv2_b=vec((128,)), bn2=bn(128),
        conv3_w=mat((9, 128, 128)), conv3_b=vec((128,)), bn3=bn(128),
        aconv_w=mat((128, 32)), aconv_b=vec((32,)),
        vconv_w=mat((128, 32)), vconv_b=vec((32,)),
        afc1_w=mat((32 * HW, 256)), afc1_b=vec((256,)),
        afc2_w=mat((256, HW * 2)), afc2_b=vec((HW * 2,)),
        vfc1_w=mat((32 * HW, 256)), vfc1_b=vec((256,)),
        vfc2_w=mat((256, 1)), vfc2_b=vec((1,)),
    )


def pack_params(lp):
    """Build kernel-layout parameters (folded BN, channel-padded im2col weights)."""
    f32, bf16 = jnp.float32, jnp.bfloat16

    def pad_conv(w9):                                   # (9,Cin,Cout) -> (9*128,128)
        _, cin, cout = w9.shape
        wp = jnp.zeros((9, _C, _C), bf16).at[:, :cin, :cout].set(w9)
        return wp.reshape(9 * _C, _C)

    def pad_vec(v, fill):                               # (c,) -> (1, 128)
        return jnp.full((_C,), fill, f32).at[:v.shape[0]].set(v)[None, :]

    kp = {}
    for i, (w, b, bn) in enumerate(
            [(lp["conv1_w"], lp["conv1_b"], lp["bn1"]),
             (lp["conv2_w"], lp["conv2_b"], lp["bn2"]),
             (lp["conv3_w"], lp["conv3_b"], lp["bn3"])], start=1):
        scale, shift = _fold_bn(b, bn)
        kp[f"w{i}"] = pad_conv(w)
        kp[f"s{i}"] = pad_vec(scale, 1.0)
        kp[f"sh{i}"] = pad_vec(shift, 0.0)

    wh = jnp.zeros((_C, _C), bf16)
    kp["wh"] = wh.at[:, :32].set(lp["aconv_w"]).at[:, 32:64].set(lp["vconv_w"])
    bh = jnp.zeros((_C,), f32)
    kp["bh"] = bh.at[:32].set(lp["aconv_b"]).at[32:64].set(lp["vconv_b"])[None, :]

    kp["w1a"], kp["b1a"] = lp["afc1_w"], lp["afc1_b"][None, :]
    kp["w2a"], kp["b2a"] = lp["afc2_w"], lp["afc2_b"][None, :]
    kp["w1v"], kp["b1v"] = lp["vfc1_w"], lp["vfc1_b"][None, :]
    kp["w2v"], kp["b2v"] = lp["vfc2_w"], lp["vfc2_b"][None, :]
    return kp


# ----------------------------------------------------------------------------
# Pure-jnp reference of the same math (eval-mode BN, NHWC flatten order)
# ----------------------------------------------------------------------------
def reference_forward(x_nchw, lp, width, height):
    f32 = jnp.float32
    H, W = height, width
    x = jnp.transpose(x_nchw.reshape(-1, 2, H, W), (0, 2, 3, 1)).astype(f32)
    N = x.shape[0]

    def conv_bn_relu(x, w9, b, bn):
        cout = w9.shape[-1]
        xp = jnp.pad(x, ((0, 0), (1, 1), (1, 1), (0, 0)))
        acc = jnp.zeros((N, H, W, cout), f32)
        for k in range(9):
            dy, dx = k // 3, k % 3
            acc = acc + jnp.einsum("nhwc,co->nhwo",
                                   xp[:, dy:dy + H, dx:dx + W, :],
                                   w9[k].astype(f32))
        scale, shift = _fold_bn(b, bn)
        return jnp.maximum(acc * scale + shift, 0.0)

    x = conv_bn_relu(x, lp["conv1_w"], lp["conv1_b"], lp["bn1"])
    x = conv_bn_relu(x, lp["conv2_w"], lp["conv2_b"], lp["bn2"])
    x = conv_bn_relu(x, lp["conv3_w"], lp["conv3_b"], lp["bn3"])

    a = jnp.maximum(jnp.einsum("nhwc,co->nhwo", x, lp["aconv_w"].astype(f32))
                    + lp["aconv_b"], 0.0).reshape(N, -1)
    a = jnp.maximum(a @ lp["afc1_w"].astype(f32) + lp["afc1_b"], 0.0)
    action = a @ lp["afc2_w"].astype(f32) + lp["afc2_b"]

    v = jnp.maximum(jnp.einsum("nhwc,co->nhwo", x, lp["vconv_w"].astype(f32))
                    + lp["vconv_b"], 0.0).reshape(N, -1)
    v = jnp.maximum(v @ lp["vfc1_w"].astype(f32) + lp["vfc1_b"], 0.0)
    value = jnp.tanh(v @ lp["vfc2_w"].astype(f32) + lp["vfc2_b"])
    return action, value


# ----------------------------------------------------------------------------
if __name__ == "__main__":
    width, height, batch = 8, 8, 2
    key = jax.random.PRNGKey(0)
    k_param, k_x = jax.random.split(key)

    lp = init_params(k_param, width, height)
    kp = pack_params(lp)
    x = jax.random.normal(k_x, (batch, 2, height, width), jnp.float32)  # NCHW input

    action, value = dual_head_forward(x, kp, width, height)
    action = jax.block_until_ready(action)
    value = jax.block_until_ready(value)

    assert action.shape == (batch, width * height * 2)
    assert value.shape == (batch, 1)

    action_ref, value_ref = reference_forward(x, lp, width, height)
    assert jnp.allclose(action, action_ref, atol=2e-3, rtol=2e-3)
    assert jnp.allclose(value, value_ref, atol=2e-3, rtol=2e-3)

    print("KERNEL_OK")
</pallas_src>

<mosaic_0001>
module attributes {stable_mosaic.version = 11 : i64} {
  func.func @trunk_kernel(%arg0: memref<2x8x8x128xf32, #tpu.memory_space<vmem>>, %arg1: memref<1152x128xbf16, #tpu.memory_space<vmem>>, %arg2: memref<1x128xf32, #tpu.memory_space<vmem>>, %arg3: memref<1x128xf32, #tpu.memory_space<vmem>>, %arg4: memref<1152x128xbf16, #tpu.memory_space<vmem>>, %arg5: memref<1x128xf32, #tpu.memory_space<vmem>>, %arg6: memref<1x128xf32, #tpu.memory_space<vmem>>, %arg7: memref<1152x128xbf16, #tpu.memory_space<vmem>>, %arg8: memref<1x128xf32, #tpu.memory_space<vmem>>, %arg9: memref<1x128xf32, #tpu.memory_space<vmem>>, %arg10: memref<128x128xbf16, #tpu.memory_space<vmem>>, %arg11: memref<1x128xf32, #tpu.memory_space<vmem>>, %arg12: memref<128x128xf32, #tpu.memory_space<vmem>>, %arg13: memref<2x10x24x128xf32, #tpu.memory_space<vmem>>, %arg14: memref<2x8x8x1152xf32, #tpu.memory_space<vmem>>) attributes {dimension_semantics = [], scalar_prefetch = 0 : i64, scratch_operands = 2 : i64, tpu.core_type = #tpu.core_type<tc>} {
    %cst = arith.constant 0.000000e+00 : f32
    %0 = vector.broadcast %cst : f32 to vector<2x10x24x128xf32>
    %c0 = arith.constant 0 : index
    %c0_0 = arith.constant 0 : index
    %c0_1 = arith.constant 0 : index
    %c0_2 = arith.constant 0 : index
    %1 = vector.load %arg13[%c0, %c0_0, %c0_1, %c0_2] : memref<2x10x24x128xf32, #tpu.memory_space<vmem>>, vector<2x10x24x128xf32>
    tpu.vector_store %arg13[%c0, %c0_0, %c0_1, %c0_2], %0 {strides = array<i32>} : memref<2x10x24x128xf32, #tpu.memory_space<vmem>>, vector<2x10x24x128xf32>,
    %c0_3 = arith.constant 0 : index
    %c0_4 = arith.constant 0 : index
    %c0_5 = arith.constant 0 : index
    %c0_6 = arith.constant 0 : index
    %2 = vector.load %arg0[%c0_3, %c0_4, %c0_5, %c0_6] : memref<2x8x8x128xf32, #tpu.memory_space<vmem>>, vector<2x8x8x128xf32>
    %c0_7 = arith.constant 0 : index
    %c1 = arith.constant 1 : index
    %c8 = arith.constant 8 : index
    %c0_8 = arith.constant 0 : index
    %3 = vector.load %arg13[%c0_7, %c1, %c8, %c0_8] : memref<2x10x24x128xf32, #tpu.memory_space<vmem>>, vector<2x8x8x128xf32>
    tpu.vector_store %arg13[%c0_7, %c1, %c8, %c0_8], %2 {strides = array<i32>} : memref<2x10x24x128xf32, #tpu.memory_space<vmem>>, vector<2x8x8x128xf32>,
    %c0_9 = arith.constant 0 : index
    %c0_10 = arith.constant 0 : index
    %c7 = arith.constant 7 : index
    %c0_11 = arith.constant 0 : index
    %4 = vector.load %arg13[%c0_9, %c0_10, %c7, %c0_11] : memref<2x10x24x128xf32, #tpu.memory_space<vmem>>, vector<2x8x8x128xf32>
    %c0_12 = arith.constant 0 : index
    %c0_13 = arith.constant 0 : index
    %c0_14 = arith.constant 0 : index
    %c0_15 = arith.constant 0 : index
    %5 = vector.load %arg14[%c0_12, %c0_13, %c0_14, %c0_15] : memref<2x8x8x1152xf32, #tpu.memory_space<vmem>>, vector<2x8x8x128xf32>
    tpu.vector_store %arg14[%c0_12, %c0_13, %c0_14, %c0_15], %4 {strides = array<i32>} : memref<2x8x8x1152xf32, #tpu.memory_space<vmem>>, vector<2x8x8x128xf32>,
    %c0_16 = arith.constant 0 : index
    %c0_17 = arith.constant 0 : index
    %c8_18 = arith.constant 8 : index
    %c0_19 = arith.constant 0 : index
    %6 = vector.load %arg13[%c0_16, %c0_17, %c8_18, %c0_19] : memref<2x10x24x128xf32, #tpu.memory_space<vmem>>, vector<2x8x8x128xf32>
    %c0_20 = arith.constant 0 : index
    %c0_21 = arith.constant 0 : index
    %c0_22 = arith.constant 0 : index
    %c128 = arith.constant 128 : index
    %7 = vector.load %arg14[%c0_20, %c0_21, %c0_22, %c128] : memref<2x8x8x1152xf32, #tpu.memory_space<vmem>>, vector<2x8x8x128xf32>
    tpu.vector_store %arg14[%c0_20, %c0_21, %c0_22, %c128], %6 {strides = array<i32>} : memref<2x8x8x1152xf32, #tpu.memory_space<vmem>>, vector<2x8x8x128xf32>,
    %c0_23 = arith.constant 0 : index
    %c0_24 = arith.constant 0 : index
    %c9 = arith.constant 9 : index
    %c0_25 = arith.constant 0 : index
    %8 = vector.load %arg13[%c0_23, %c0_24, %c9, %c0_25] : memref<2x10x24x128xf32, #tpu.memory_space<vmem>>, vector<2x8x8x128xf32>
    %c0_26 = arith.constant 0 : index
    %c0_27 = arith.constant 0 : index
    %c0_28 = arith.constant 0 : index
    %c256 = arith.constant 256 : index
    %9 = vector.load %arg14[%c0_26, %c0_27, %c0_28, %c256] : memref<2x8x8x1152xf32, #tpu.memory_space<vmem>>, vector<2x8x8x128xf32>
    tpu.vector_store %arg14[%c0_26, %c0_27, %c0_28, %c256], %8 {strides = array<i32>} : memref<2x8x8x1152xf32, #tpu.memory_space<vmem>>, vector<2x8x8x128xf32>,
    %c0_29 = arith.constant 0 : index
    %c1_30 = arith.constant 1 : index
    %c7_31 = arith.constant 7 : index
    %c0_32 = arith.constant 0 : index
    %10 = vector.load %arg13[%c0_29, %c1_30, %c7_31, %c0_32] : memref<2x10x24x128xf32, #tpu.memory_space<vmem>>, vector<2x8x8x128xf32>
    %c0_33 = arith.constant 0 : index
    %c0_34 = arith.constant 0 : index
    %c0_35 = arith.constant 0 : index
    %c384 = arith.constant 384 : index
    %11 = vector.load %arg14[%c0_33, %c0_34, %c0_35, %c384] : memref<2x8x8x1152xf32, #tpu.memory_space<vmem>>, vector<2x8x8x128xf32>
    tpu.vector_store %arg14[%c0_33, %c0_34, %c0_35, %c384], %10 {strides = array<i32>} : memref<2x8x8x1152xf32, #tpu.memory_space<vmem>>, vector<2x8x8x128xf32>,
    %c0_36 = arith.constant 0 : index
    %c1_37 = arith.constant 1 : index
    %c8_38 = arith.constant 8 : index
    %c0_39 = arith.constant 0 : index
    %12 = vector.load %arg13[%c0_36, %c1_37, %c8_38, %c0_39] : memref<2x10x24x128xf32, #tpu.memory_space<vmem>>, vector<2x8x8x128xf32>
    %c0_40 = arith.constant 0 : index
    %c0_41 = arith.constant 0 : index
    %c0_42 = arith.constant 0 : index
    %c512 = arith.constant 512 : index
    %13 = vector.load %arg14[%c0_40, %c0_41, %c0_42, %c512] : memref<2x8x8x1152xf32, #tpu.memory_space<vmem>>, vector<2x8x8x128xf32>
    tpu.vector_store %arg14[%c0_40, %c0_41, %c0_42, %c512], %12 {strides = array<i32>} : memref<2x8x8x1152xf32, #tpu.memory_space<vmem>>, vector<2x8x8x128xf32>,
    %c0_43 = arith.constant 0 : index
    %c1_44 = arith.constant 1 : index
    %c9_45 = arith.constant 9 : index
    %c0_46 = arith.constant 0 : index
    %14 = vector.load %arg13[%c0_43, %c1_44, %c9_45, %c0_46] : memref<2x10x24x128xf32, #tpu.memory_space<vmem>>, vector<2x8x8x128xf32>
    %c0_47 = arith.constant 0 : index
    %c0_48 = arith.constant 0 : index
    %c0_49 = arith.constant 0 : index
    %c640 = arith.constant 640 : index
    %15 = vector.load %arg14[%c0_47, %c0_48, %c0_49, %c640] : memref<2x8x8x1152xf32, #tpu.memory_space<vmem>>, vector<2x8x8x128xf32>
    tpu.vector_store %arg14[%c0_47, %c0_48, %c0_49, %c640], %14 {strides = array<i32>} : memref<2x8x8x1152xf32, #tpu.memory_space<vmem>>, vector<2x8x8x128xf32>,
    %c0_50 = arith.constant 0 : index
    %c2 = arith.constant 2 : index
    %c7_51 = arith.constant 7 : index
    %c0_52 = arith.constant 0 : index
    %16 = vector.load %arg13[%c0_50, %c2, %c7_51, %c0_52] : memref<2x10x24x128xf32, #tpu.memory_space<vmem>>, vector<2x8x8x128xf32>
    %c0_53 = arith.constant 0 : index
    %c0_54 = arith.constant 0 : index
    %c0_55 = arith.constant 0 : index
    %c768 = arith.constant 768 : index
    %17 = vector.load %arg14[%c0_53, %c0_54, %c0_55, %c768] : memref<2x8x8x1152xf32, #tpu.memory_space<vmem>>, vector<2x8x8x128xf32>
    tpu.vector_store %arg14[%c0_53, %c0_54, %c0_55, %c768], %16 {strides = array<i32>} : memref<2x8x8x1152xf32, #tpu.memory_space<vmem>>, vector<2x8x8x128xf32>,
    %c0_56 = arith.constant 0 : index
    %c2_57 = arith.constant 2 : index
    %c8_58 = arith.constant 8 : index
    %c0_59 = arith.constant 0 : index
    %18 = vector.load %arg13[%c0_56, %c2_57, %c8_58, %c0_59] : memref<2x10x24x128xf32, #tpu.memory_space<vmem>>, vector<2x8x8x128xf32>
    %c0_60 = arith.constant 0 : index
    %c0_61 = arith.constant 0 : index
    %c0_62 = arith.constant 0 : index
    %c896 = arith.constant 896 : index
    %19 = vector.load %arg14[%c0_60, %c0_61, %c0_62, %c896] : memref<2x8x8x1152xf32, #tpu.memory_space<vmem>>, vector<2x8x8x128xf32>
    tpu.vector_store %arg14[%c0_60, %c0_61, %c0_62, %c896], %18 {strides = array<i32>} : memref<2x8x8x1152xf32, #tpu.memory_space<vmem>>, vector<2x8x8x128xf32>,
    %c0_63 = arith.constant 0 : index
    %c2_64 = arith.constant 2 : index
    %c9_65 = arith.constant 9 : index
    %c0_66 = arith.constant 0 : index
    %20 = vector.load %arg13[%c0_63, %c2_64, %c9_65, %c0_66] : memref<2x10x24x128xf32, #tpu.memory_space<vmem>>, vector<2x8x8x128xf32>
    %c0_67 = arith.constant 0 : index
    %c0_68 = arith.constant 0 : index
    %c0_69 = arith.constant 0 : index
    %c1024 = arith.constant 1024 : index
    %21 = vector.load %arg14[%c0_67, %c0_68, %c0_69, %c1024] : memref<2x8x8x1152xf32, #tpu.memory_space<vmem>>, vector<2x8x8x128xf32>
    tpu.vector_store %arg14[%c0_67, %c0_68, %c0_69, %c1024], %20 {strides = array<i32>} : memref<2x8x8x1152xf32, #tpu.memory_space<vmem>>, vector<2x8x8x128xf32>,
    %c0_70 = arith.constant 0 : index
    %c0_71 = arith.constant 0 : index
    %c0_72 = arith.constant 0 : index
    %c0_73 = arith.constant 0 : index
    %22 = vector.load %arg14[%c0_70, %c0_71, %c0_72, %c0_73] : memref<2x8x8x1152xf32, #tpu.memory_space<vmem>>, vector<2x8x8x1152xf32>
    %23 = vector.shape_cast %22 : vector<2x8x8x1152xf32> to vector<128x1152xf32>
    %c0_74 = arith.constant 0 : index
    %c0_75 = arith.constant 0 : index
    %24 = vector.load %arg1[%c0_74, %c0_75] : memref<1152x128xbf16, #tpu.memory_space<vmem>>, vector<1152x128xbf16>
    %25 = arith.extf %24 : vector<1152x128xbf16> to vector<1152x128xf32>
    %cst_76 = arith.constant dense<0.000000e+00> : vector<128x128xf32>
    %26 = tpu.matmul %23, %25, %cst_76 {dimension_numbers = #tpu.dot_dimension_numbers<[1], [0], [0], [1], [0, 0, 1, 1], [], []>} : vector<128x1152xf32>, vector<1152x128xf32>, vector<128x128xf32> -> vector<128x128xf32>
    %c0_77 = arith.constant 0 : index
    %c0_78 = arith.constant 0 : index
    %27 = vector.load %arg2[%c0_77, %c0_78] : memref<1x128xf32, #tpu.memory_space<vmem>>, vector<1x128xf32>
    %28 = vector.broadcast %27 : vector<1x128xf32> to vector<128x128xf32>
    %29 = arith.mulf %26, %28 : vector<128x128xf32>
    %c0_79 = arith.constant 0 : index
    %c0_80 = arith.constant 0 : index
    %30 = vector.load %arg3[%c0_79, %c0_80] : memref<1x128xf32, #tpu.memory_space<vmem>>, vector<1x128xf32>
    %31 = vector.broadcast %30 : vector<1x128xf32> to vector<128x128xf32>
    %32 = arith.addf %29, %31 : vector<128x128xf32>
    %cst_81 = arith.constant 0.000000e+00 : f32
    %33 = vector.broadcast %cst_81 : f32 to vector<128x128xf32>
    %34 = arith.maximumf %32, %33 : vector<128x128xf32>
    %35 = vector.shape_cast %34 : vector<128x128xf32> to vector<2x8x8x128xf32>
    %c0_82 = arith.constant 0 : index
    %c1_83 = arith.constant 1 : index
    %c8_84 = arith.constant 8 : index
    %c0_85 = arith.constant 0 : index
    %36 = vector.load %arg13[%c0_82, %c1_83, %c8_84, %c0_85] : memref<2x10x24x128xf32, #tpu.memory_space<vmem>>, vector<2x8x8x128xf32>
    tpu.vector_store %arg13[%c0_82, %c1_83, %c8_84, %c0_85], %35 {strides = array<i32>} : memref<2x10x24x128xf32, #tpu.memory_space<vmem>>, vector<2x8x8x128xf32>,
    %c0_86 = arith.constant 0 : index
    %c0_87 = arith.constant 0 : index
    %c7_88 = arith.constant 7 : index
    %c0_89 = arith.constant 0 : index
    %37 = vector.load %arg13[%c0_86, %c0_87, %c7_88, %c0_89] : memref<2x10x24x128xf32, #tpu.memory_space<vmem>>, vector<2x8x8x128xf32>
    %c0_90 = arith.constant 0 : index
    %c0_91 = arith.constant 0 : index
    %c0_92 = arith.constant 0 : index
    %c0_93 = arith.constant 0 : index
    %38 = vector.load %arg14[%c0_90, %c0_91, %c0_92, %c0_93] : memref<2x8x8x1152xf32, #tpu.memory_space<vmem>>, vector<2x8x8x128xf32>
    tpu.vector_store %arg14[%c0_90, %c0_91, %c0_92, %c0_93], %37 {strides = array<i32>} : memref<2x8x8x1152xf32, #tpu.memory_space<vmem>>, vector<2x8x8x128xf32>,
    %c0_94 = arith.constant 0 : index
    %c0_95 = arith.constant 0 : index
    %c8_96 = arith.constant 8 : index
    %c0_97 = arith.constant 0 : index
    %39 = vector.load %arg13[%c0_94, %c0_95, %c8_96, %c0_97] : memref<2x10x24x128xf32, #tpu.memory_space<vmem>>, vector<2x8x8x128xf32>
    %c0_98 = arith.constant 0 : index
    %c0_99 = arith.constant 0 : index
    %c0_100 = arith.constant 0 : index
    %c128_101 = arith.constant 128 : index
    %40 = vector.load %arg14[%c0_98, %c0_99, %c0_100, %c128_101] : memref<2x8x8x1152xf32, #tpu.memory_space<vmem>>, vector<2x8x8x128xf32>
    tpu.vector_store %arg14[%c0_98, %c0_99, %c0_100, %c128_101], %39 {strides = array<i32>} : memref<2x8x8x1152xf32, #tpu.memory_space<vmem>>, vector<2x8x8x128xf32>,
    %c0_102 = arith.constant 0 : index
    %c0_103 = arith.constant 0 : index
    %c9_104 = arith.constant 9 : index
    %c0_105 = arith.constant 0 : index
    %41 = vector.load %arg13[%c0_102, %c0_103, %c9_104, %c0_105] : memref<2x10x24x128xf32, #tpu.memory_space<vmem>>, vector<2x8x8x128xf32>
    %c0_106 = arith.constant 0 : index
    %c0_107 = arith.constant 0 : index
    %c0_108 = arith.constant 0 : index
    %c256_109 = arith.constant 256 : index
    %42 = vector.load %arg14[%c0_106, %c0_107, %c0_108, %c256_109] : memref<2x8x8x1152xf32, #tpu.memory_space<vmem>>, vector<2x8x8x128xf32>
    tpu.vector_store %arg14[%c0_106, %c0_107, %c0_108, %c256_109], %41 {strides = array<i32>} : memref<2x8x8x1152xf32, #tpu.memory_space<vmem>>, vector<2x8x8x128xf32>,
    %c0_110 = arith.constant 0 : index
    %c1_111 = arith.constant 1 : index
    %c7_112 = arith.constant 7 : index
    %c0_113 = arith.constant 0 : index
    %43 = vector.load %arg13[%c0_110, %c1_111, %c7_112, %c0_113] : memref<2x10x24x128xf32, #tpu.memory_space<vmem>>, vector<2x8x8x128xf32>
    %c0_114 = arith.constant 0 : index
    %c0_115 = arith.constant 0 : index
    %c0_116 = arith.constant 0 : index
    %c384_117 = arith.constant 384 : index
    %44 = vector.load %arg14[%c0_114, %c0_115, %c0_116, %c384_117] : memref<2x8x8x1152xf32, #tpu.memory_space<vmem>>, vector<2x8x8x128xf32>
    tpu.vector_store %arg14[%c0_114, %c0_115, %c0_116, %c384_117], %43 {strides = array<i32>} : memref<2x8x8x1152xf32, #tpu.memory_space<vmem>>, vector<2x8x8x128xf32>,
    %c0_118 = arith.constant 0 : index
    %c1_119 = arith.constant 1 : index
    %c8_120 = arith.constant 8 : index
    %c0_121 = arith.constant 0 : index
    %45 = vector.load %arg13[%c0_118, %c1_119, %c8_120, %c0_121] : memref<2x10x24x128xf32, #tpu.memory_space<vmem>>, vector<2x8x8x128xf32>
    %c0_122 = arith.constant 0 : index
    %c0_123 = arith.constant 0 : index
    %c0_124 = arith.constant 0 : index
    %c512_125 = arith.constant 512 : index
    %46 = vector.load %arg14[%c0_122, %c0_123, %c0_124, %c512_125] : memref<2x8x8x1152xf32, #tpu.memory_space<vmem>>, vector<2x8x8x128xf32>
    tpu.vector_store %arg14[%c0_122, %c0_123, %c0_124, %c512_125], %45 {strides = array<i32>} : memref<2x8x8x1152xf32, #tpu.memory_space<vmem>>, vector<2x8x8x128xf32>,
    %c0_126 = arith.constant 0 : index
    %c1_127 = arith.constant 1 : index
    %c9_128 = arith.constant 9 : index
    %c0_129 = arith.constant 0 : index
    %47 = vector.load %arg13[%c0_126, %c1_127, %c9_128, %c0_129] : memref<2x10x24x128xf32, #tpu.memory_space<vmem>>, vector<2x8x8x128xf32>
    %c0_130 = arith.constant 0 : index
    %c0_131 = arith.constant 0 : index
    %c0_132 = arith.constant 0 : index
    %c640_133 = arith.constant 640 : index
    %48 = vector.load %arg14[%c0_130, %c0_131, %c0_132, %c640_133] : memref<2x8x8x1152xf32, #tpu.memory_space<vmem>>, vector<2x8x8x128xf32>
    tpu.vector_store %arg14[%c0_130, %c0_131, %c0_132, %c640_133], %47 {strides = array<i32>} : memref<2x8x8x1152xf32, #tpu.memory_space<vmem>>, vector<2x8x8x128xf32>,
    %c0_134 = arith.constant 0 : index
    %c2_135 = arith.constant 2 : index
    %c7_136 = arith.constant 7 : index
    %c0_137 = arith.constant 0 : index
    %49 = vector.load %arg13[%c0_134, %c2_135, %c7_136, %c0_137] : memref<2x10x24x128xf32, #tpu.memory_space<vmem>>, vector<2x8x8x128xf32>
    %c0_138 = arith.constant 0 : index
    %c0_139 = arith.constant 0 : index
    %c0_140 = arith.constant 0 : index
    %c768_141 = arith.constant 768 : index
    %50 = vector.load %arg14[%c0_138, %c0_139, %c0_140, %c768_141] : memref<2x8x8x1152xf32, #tpu.memory_space<vmem>>, vector<2x8x8x128xf32>
    tpu.vector_store %arg14[%c0_138, %c0_139, %c0_140, %c768_141], %49 {strides = array<i32>} : memref<2x8x8x1152xf32, #tpu.memory_space<vmem>>, vector<2x8x8x128xf32>,
    %c0_142 = arith.constant 0 : index
    %c2_143 = arith.constant 2 : index
    %c8_144 = arith.constant 8 : index
    %c0_145 = arith.constant 0 : index
    %51 = vector.load %arg13[%c0_142, %c2_143, %c8_144, %c0_145] : memref<2x10x24x128xf32, #tpu.memory_space<vmem>>, vector<2x8x8x128xf32>
    %c0_146 = arith.constant 0 : index
    %c0_147 = arith.constant 0 : index
    %c0_148 = arith.constant 0 : index
    %c896_149 = arith.constant 896 : index
    %52 = vector.load %arg14[%c0_146, %c0_147, %c0_148, %c896_149] : memref<2x8x8x1152xf32, #tpu.memory_space<vmem>>, vector<2x8x8x128xf32>
    tpu.vector_store %arg14[%c0_146, %c0_147, %c0_148, %c896_149], %51 {strides = array<i32>} : memref<2x8x8x1152xf32, #tpu.memory_space<vmem>>, vector<2x8x8x128xf32>,
    %c0_150 = arith.constant 0 : index
    %c2_151 = arith.constant 2 : index
    %c9_152 = arith.constant 9 : index
    %c0_153 = arith.constant 0 : index
    %53 = vector.load %arg13[%c0_150, %c2_151, %c9_152, %c0_153] : memref<2x10x24x128xf32, #tpu.memory_space<vmem>>, vector<2x8x8x128xf32>
    %c0_154 = arith.constant 0 : index
    %c0_155 = arith.constant 0 : index
    %c0_156 = arith.constant 0 : index
    %c1024_157 = arith.constant 1024 : index
    %54 = vector.load %arg14[%c0_154, %c0_155, %c0_156, %c1024_157] : memref<2x8x8x1152xf32, #tpu.memory_space<vmem>>, vector<2x8x8x128xf32>
    tpu.vector_store %arg14[%c0_154, %c0_155, %c0_156, %c1024_157], %53 {strides = array<i32>} : memref<2x8x8x1152xf32, #tpu.memory_space<vmem>>, vector<2x8x8x128xf32>,
    %c0_158 = arith.constant 0 : index
    %c0_159 = arith.constant 0 : index
    %c0_160 = arith.constant 0 : index
    %c0_161 = arith.constant 0 : index
    %55 = vector.load %arg14[%c0_158, %c0_159, %c0_160, %c0_161] : memref<2x8x8x1152xf32, #tpu.memory_space<vmem>>, vector<2x8x8x1152xf32>
    %56 = vector.shape_cast %55 : vector<2x8x8x1152xf32> to vector<128x1152xf32>
    %c0_162 = arith.constant 0 : index
    %c0_163 = arith.constant 0 : index
    %57 = vector.load %arg4[%c0_162, %c0_163] : memref<1152x128xbf16, #tpu.memory_space<vmem>>, vector<1152x128xbf16>
    %58 = arith.extf %57 : vector<1152x128xbf16> to vector<1152x128xf32>
    %cst_164 = arith.constant dense<0.000000e+00> : vector<128x128xf32>
    %59 = tpu.matmul %56, %58, %cst_164 {dimension_numbers = #tpu.dot_dimension_numbers<[1], [0], [0], [1], [0, 0, 1, 1], [], []>} : vector<128x1152xf32>, vector<1152x128xf32>, vector<128x128xf32> -> vector<128x128xf32>
    %c0_165 = arith.constant 0 : index
    %c0_166 = arith.constant 0 : index
    %60 = vector.load %arg5[%c0_165, %c0_166] : memref<1x128xf32, #tpu.memory_space<vmem>>, vector<1x128xf32>
    %61 = vector.broadcast %60 : vector<1x128xf32> to vector<128x128xf32>
    %62 = arith.mulf %59, %61 : vector<128x128xf32>
    %c0_167 = arith.constant 0 : index
    %c0_168 = arith.constant 0 : index
    %63 = vector.load %arg6[%c0_167, %c0_168] : memref<1x128xf32, #tpu.memory_space<vmem>>, vector<1x128xf32>
    %64 = vector.broadcast %63 : vector<1x128xf32> to vector<128x128xf32>
    %65 = arith.addf %62, %64 : vector<128x128xf32>
    %cst_169 = arith.constant 0.000000e+00 : f32
    %66 = vector.broadcast %cst_169 : f32 to vector<128x128xf32>
    %67 = arith.maximumf %65, %66 : vector<128x128xf32>
    %68 = vector.shape_cast %67 : vector<128x128xf32> to vector<2x8x8x128xf32>
    %c0_170 = arith.constant 0 : index
    %c1_171 = arith.constant 1 : index
    %c8_172 = arith.constant 8 : index
    %c0_173 = arith.constant 0 : index
    %69 = vector.load %arg13[%c0_170, %c1_171, %c8_172, %c0_173] : memref<2x10x24x128xf32, #tpu.memory_space<vmem>>, vector<2x8x8x128xf32>
    tpu.vector_store %arg13[%c0_170, %c1_171, %c8_172, %c0_173], %68 {strides = array<i32>} : memref<2x10x24x128xf32, #tpu.memory_space<vmem>>, vector<2x8x8x128xf32>,
    %c0_174 = arith.constant 0 : index
    %c0_175 = arith.constant 0 : index
    %c7_176 = arith.constant 7 : index
    %c0_177 = arith.constant 0 : index
    %70 = vector.load %arg13[%c0_174, %c0_175, %c7_176, %c0_177] : memref<2x10x24x128xf32, #tpu.memory_space<vmem>>, vector<2x8x8x128xf32>
    %c0_178 = arith.constant 0 : index
    %c0_179 = arith.constant 0 : index
    %c0_180 = arith.constant 0 : index
    %c0_181 = arith.constant 0 : index
    %71 = vector.load %arg14[%c0_178, %c0_179, %c0_180, %c0_181] : memref<2x8x8x1152xf32, #tpu.memory_space<vmem>>, vector<2x8x8x128xf32>
    tpu.vector_store %arg14[%c0_178, %c0_179, %c0_180, %c0_181], %70 {strides = array<i32>} : memref<2x8x8x1152xf32, #tpu.memory_space<vmem>>, vector<2x8x8x128xf32>,
    %c0_182 = arith.constant 0 : index
    %c0_183 = arith.constant 0 : index
    %c8_184 = arith.constant 8 : index
    %c0_185 = arith.constant 0 : index
    %72 = vector.load %arg13[%c0_182, %c0_183, %c8_184, %c0_185] : memref<2x10x24x128xf32, #tpu.memory_space<vmem>>, vector<2x8x8x128xf32>
    %c0_186 = arith.constant 0 : index
    %c0_187 = arith.constant 0 : index
    %c0_188 = arith.constant 0 : index
    %c128_189 = arith.constant 128 : index
    %73 = vector.load %arg14[%c0_186, %c0_187, %c0_188, %c128_189] : memref<2x8x8x1152xf32, #tpu.memory_space<vmem>>, vector<2x8x8x128xf32>
    tpu.vector_store %arg14[%c0_186, %c0_187, %c0_188, %c128_189], %72 {strides = array<i32>} : memref<2x8x8x1152xf32, #tpu.memory_space<vmem>>, vector<2x8x8x128xf32>,
    %c0_190 = arith.constant 0 : index
    %c0_191 = arith.constant 0 : index
    %c9_192 = arith.constant 9 : index
    %c0_193 = arith.constant 0 : index
    %74 = vector.load %arg13[%c0_190, %c0_191, %c9_192, %c0_193] : memref<2x10x24x128xf32, #tpu.memory_space<vmem>>, vector<2x8x8x128xf32>
    %c0_194 = arith.constant 0 : index
    %c0_195 = arith.constant 0 : index
    %c0_196 = arith.constant 0 : index
    %c256_197 = arith.constant 256 : index
    %75 = vector.load %arg14[%c0_194, %c0_195, %c0_196, %c256_197] : memref<2x8x8x1152xf32, #tpu.memory_space<vmem>>, vector<2x8x8x128xf32>
    tpu.vector_store %arg14[%c0_194, %c0_195, %c0_196, %c256_197], %74 {strides = array<i32>} : memref<2x8x8x1152xf32, #tpu.memory_space<vmem>>, vector<2x8x8x128xf32>,
    %c0_198 = arith.constant 0 : index
    %c1_199 = arith.constant 1 : index
    %c7_200 = arith.constant 7 : index
    %c0_201 = arith.constant 0 : index
    %76 = vector.load %arg13[%c0_198, %c1_199, %c7_200, %c0_201] : memref<2x10x24x128xf32, #tpu.memory_space<vmem>>, vector<2x8x8x128xf32>
    %c0_202 = arith.constant 0 : index
    %c0_203 = arith.constant 0 : index
    %c0_204 = arith.constant 0 : index
    %c384_205 = arith.constant 384 : index
    %77 = vector.load %arg14[%c0_202, %c0_203, %c0_204, %c384_205] : memref<2x8x8x1152xf32, #tpu.memory_space<vmem>>, vector<2x8x8x128xf32>
    tpu.vector_store %arg14[%c0_202, %c0_203, %c0_204, %c384_205], %76 {strides = array<i32>} : memref<2x8x8x1152xf32, #tpu.memory_space<vmem>>, vector<2x8x8x128xf32>,
    %c0_206 = arith.constant 0 : index
    %c1_207 = arith.constant 1 : index
    %c8_208 = arith.constant 8 : index
    %c0_209 = arith.constant 0 : index
    %78 = vector.load %arg13[%c0_206, %c1_207, %c8_208, %c0_209] : memref<2x10x24x128xf32, #tpu.memory_space<vmem>>, vector<2x8x8x128xf32>
    %c0_210 = arith.constant 0 : index
    %c0_211 = arith.constant 0 : index
    %c0_212 = arith.constant 0 : index
    %c512_213 = arith.constant 512 : index
    %79 = vector.load %arg14[%c0_210, %c0_211, %c0_212, %c512_213] : memref<2x8x8x1152xf32, #tpu.memory_space<vmem>>, vector<2x8x8x128xf32>
    tpu.vector_store %arg14[%c0_210, %c0_211, %c0_212, %c512_213], %78 {strides = array<i32>} : memref<2x8x8x1152xf32, #tpu.memory_space<vmem>>, vector<2x8x8x128xf32>,
    %c0_214 = arith.constant 0 : index
    %c1_215 = arith.constant 1 : index
    %c9_216 = arith.constant 9 : index
    %c0_217 = arith.constant 0 : index
    %80 = vector.load %arg13[%c0_214, %c1_215, %c9_216, %c0_217] : memref<2x10x24x128xf32, #tpu.memory_space<vmem>>, vector<2x8x8x128xf32>
    %c0_218 = arith.constant 0 : index
    %c0_219 = arith.constant 0 : index
    %c0_220 = arith.constant 0 : index
    %c640_221 = arith.constant 640 : index
    %81 = vector.load %arg14[%c0_218, %c0_219, %c0_220, %c640_221] : memref<2x8x8x1152xf32, #tpu.memory_space<vmem>>, vector<2x8x8x128xf32>
    tpu.vector_store %arg14[%c0_218, %c0_219, %c0_220, %c640_221], %80 {strides = array<i32>} : memref<2x8x8x1152xf32, #tpu.memory_space<vmem>>, vector<2x8x8x128xf32>,
    %c0_222 = arith.constant 0 : index
    %c2_223 = arith.constant 2 : index
    %c7_224 = arith.constant 7 : index
    %c0_225 = arith.constant 0 : index
    %82 = vector.load %arg13[%c0_222, %c2_223, %c7_224, %c0_225] : memref<2x10x24x128xf32, #tpu.memory_space<vmem>>, vector<2x8x8x128xf32>
    %c0_226 = arith.constant 0 : index
    %c0_227 = arith.constant 0 : index
    %c0_228 = arith.constant 0 : index
    %c768_229 = arith.constant 768 : index
    %83 = vector.load %arg14[%c0_226, %c0_227, %c0_228, %c768_229] : memref<2x8x8x1152xf32, #tpu.memory_space<vmem>>, vector<2x8x8x128xf32>
    tpu.vector_store %arg14[%c0_226, %c0_227, %c0_228, %c768_229], %82 {strides = array<i32>} : memref<2x8x8x1152xf32, #tpu.memory_space<vmem>>, vector<2x8x8x128xf32>,
    %c0_230 = arith.constant 0 : index
    %c2_231 = arith.constant 2 : index
    %c8_232 = arith.constant 8 : index
    %c0_233 = arith.constant 0 : index
    %84 = vector.load %arg13[%c0_230, %c2_231, %c8_232, %c0_233] : memref<2x10x24x128xf32, #tpu.memory_space<vmem>>, vector<2x8x8x128xf32>
    %c0_234 = arith.constant 0 : index
    %c0_235 = arith.constant 0 : index
    %c0_236 = arith.constant 0 : index
    %c896_237 = arith.constant 896 : index
    %85 = vector.load %arg14[%c0_234, %c0_235, %c0_236, %c896_237] : memref<2x8x8x1152xf32, #tpu.memory_space<vmem>>, vector<2x8x8x128xf32>
    tpu.vector_store %arg14[%c0_234, %c0_235, %c0_236, %c896_237], %84 {strides = array<i32>} : memref<2x8x8x1152xf32, #tpu.memory_space<vmem>>, vector<2x8x8x128xf32>,
    %c0_238 = arith.constant 0 : index
    %c2_239 = arith.constant 2 : index
    %c9_240 = arith.constant 9 : index
    %c0_241 = arith.constant 0 : index
    %86 = vector.load %arg13[%c0_238, %c2_239, %c9_240, %c0_241] : memref<2x10x24x128xf32, #tpu.memory_space<vmem>>, vector<2x8x8x128xf32>
    %c0_242 = arith.constant 0 : index
    %c0_243 = arith.constant 0 : index
    %c0_244 = arith.constant 0 : index
    %c1024_245 = arith.constant 1024 : index
    %87 = vector.load %arg14[%c0_242, %c0_243, %c0_244, %c1024_245] : memref<2x8x8x1152xf32, #tpu.memory_space<vmem>>, vector<2x8x8x128xf32>
    tpu.vector_store %arg14[%c0_242, %c0_243, %c0_244, %c1024_245], %86 {strides = array<i32>} : memref<2x8x8x1152xf32, #tpu.memory_space<vmem>>, vector<2x8x8x128xf32>,
    %c0_246 = arith.constant 0 : index
    %c0_247 = arith.constant 0 : index
    %c0_248 = arith.constant 0 : index
    %c0_249 = arith.constant 0 : index
    %88 = vector.load %arg14[%c0_246, %c0_247, %c0_248, %c0_249] : memref<2x8x8x1152xf32, #tpu.memory_space<vmem>>, vector<2x8x8x1152xf32>
    %89 = vector.shape_cast %88 : vector<2x8x8x1152xf32> to vector<128x1152xf32>
    %c0_250 = arith.constant 0 : index
    %c0_251 = arith.constant 0 : index
    %90 = vector.load %arg7[%c0_250, %c0_251] : memref<1152x128xbf16, #tpu.memory_space<vmem>>, vector<1152x128xbf16>
    %91 = arith.extf %90 : vector<1152x128xbf16> to vector<1152x128xf32>
    %cst_252 = arith.constant dense<0.000000e+00> : vector<128x128xf32>
    %92 = tpu.matmul %89, %91, %cst_252 {dimension_numbers = #tpu.dot_dimension_numbers<[1], [0], [0], [1], [0, 0, 1, 1], [], []>} : vector<128x1152xf32>, vector<1152x128xf32>, vector<128x128xf32> -> vector<128x128xf32>
    %c0_253 = arith.constant 0 : index
    %c0_254 = arith.constant 0 : index
    %93 = vector.load %arg8[%c0_253, %c0_254] : memref<1x128xf32, #tpu.memory_space<vmem>>, vector<1x128xf32>
    %94 = vector.broadcast %93 : vector<1x128xf32> to vector<128x128xf32>
    %95 = arith.mulf %92, %94 : vector<128x128xf32>
    %c0_255 = arith.constant 0 : index
    %c0_256 = arith.constant 0 : index
    %96 = vector.load %arg9[%c0_255, %c0_256] : memref<1x128xf32, #tpu.memory_space<vmem>>, vector<1x128xf32>
    %97 = vector.broadcast %96 : vector<1x128xf32> to vector<128x128xf32>
    %98 = arith.addf %95, %97 : vector<128x128xf32>
    %cst_257 = arith.constant 0.000000e+00 : f32
    %99 = vector.broadcast %cst_257 : f32 to vector<128x128xf32>
    %100 = arith.maximumf %98, %99 : vector<128x128xf32>
    %101 = vector.shape_cast %100 : vector<128x128xf32> to vector<2x8x8x128xf32>
    %102 = vector.shape_cast %101 : vector<2x8x8x128xf32> to vector<128x128xf32>
    %c0_258 = arith.constant 0 : index
    %c0_259 = arith.constant 0 : index
    %103 = vector.load %arg10[%c0_258, %c0_259] : memref<128x128xbf16, #tpu.memory_space<vmem>>, vector<128x128xbf16>
    %104 = arith.extf %103 : vector<128x128xbf16> to vector<128x128xf32>
    %cst_260 = arith.constant dense<0.000000e+00> : vector<128x128xf32>
    %105 = tpu.matmul %102, %104, %cst_260 {dimension_numbers = #tpu.dot_dimension_numbers<[1], [0], [0], [1], [0, 0, 1, 1], [], []>} : vector<128x128xf32>, vector<128x128xf32>, vector<128x128xf32> -> vector<128x128xf32>
    %c0_261 = arith.constant 0 : index
    %c0_262 = arith.constant 0 : index
    %106 = vector.load %arg11[%c0_261, %c0_262] : memref<1x128xf32, #tpu.memory_space<vmem>>, vector<1x128xf32>
    %107 = vector.broadcast %106 : vector<1x128xf32> to vector<128x128xf32>
    %108 = arith.addf %105, %107 : vector<128x128xf32>
    %cst_263 = arith.constant 0.000000e+00 : f32
    %109 = vector.broadcast %cst_263 : f32 to vector<128x128xf32>
    %110 = arith.maximumf %108, %109 : vector<128x128xf32>
    %c0_264 = arith.constant 0 : index
    %c0_265 = arith.constant 0 : index
    %111 = vector.load %arg12[%c0_264, %c0_265] : memref<128x128xf32, #tpu.memory_space<vmem>>, vector<128x128xf32>
    tpu.vector_store %arg12[%c0_264, %c0_265], %110 {strides = array<i32>} : memref<128x128xf32, #tpu.memory_space<vmem>>, vector<128x128xf32>,
    return
  }
}

module attributes {stable_mosaic.version = 11 : i64} {
  func.func @heads_kernel(%arg0: memref<2x2048xf32, #tpu.memory_space<vmem>>, %arg1: memref<2x2048xf32, #tpu.memory_space<vmem>>, %arg2: memref<2048x256xbf16, #tpu.memory_space<vmem>>, %arg3: memref<1x256xf32, #tpu.memory_space<vmem>>, %arg4: memref<2048x256xbf16, #tpu.memory_space<vmem>>, %arg5: memref<1x256xf32, #tpu.memory_space<vmem>>, %arg6: memref<256x128xbf16, #tpu.memory_space<vmem>>, %arg7: memref<1x128xf32, #tpu.memory_space<vmem>>, %arg8: memref<256x1xbf16, #tpu.memory_space<vmem>>, %arg9: memref<1x1xf32, #tpu.memory_space<vmem>>, %arg10: memref<2x128xf32, #tpu.memory_space<vmem>>, %arg11: memref<2x1xf32, #tpu.memory_space<vmem>>) attributes {dimension_semantics = [], scalar_prefetch = 0 : i64, scratch_operands = 0 : i64, tpu.core_type = #tpu.core_type<tc>} {
    %c0 = arith.constant 0 : index
    %c0_0 = arith.constant 0 : index
    %0 = vector.load %arg0[%c0, %c0_0] : memref<2x2048xf32, #tpu.memory_space<vmem>>, vector<2x2048xf32>
    %c0_1 = arith.constant 0 : index
    %c0_2 = arith.constant 0 : index
    %1 = vector.load %arg2[%c0_1, %c0_2] : memref<2048x256xbf16, #tpu.memory_space<vmem>>, vector<2048x256xbf16>
    %2 = arith.extf %1 : vector<2048x256xbf16> to vector<2048x256xf32>
    %cst = arith.constant dense<0.000000e+00> : vector<2x256xf32>
    %3 = tpu.matmul %0, %2, %cst {dimension_numbers = #tpu.dot_dimension_numbers<[1], [0], [0], [1], [0, 0, 1, 1], [], []>} : vector<2x2048xf32>, vector<2048x256xf32>, vector<2x256xf32> -> vector<2x256xf32>
    %c0_3 = arith.constant 0 : index
    %c0_4 = arith.constant 0 : index
    %4 = vector.load %arg3[%c0_3, %c0_4] : memref<1x256xf32, #tpu.memory_space<vmem>>, vector<1x256xf32>
    %5 = vector.broadcast %4 : vector<1x256xf32> to vector<2x256xf32>
    %6 = arith.addf %3, %5 : vector<2x256xf32>
    %cst_5 = arith.constant 0.000000e+00 : f32
    %7 = vector.broadcast %cst_5 : f32 to vector<2x256xf32>
    %8 = arith.maximumf %6, %7 : vector<2x256xf32>
    %c0_6 = arith.constant 0 : index
    %c0_7 = arith.constant 0 : index
    %9 = vector.load %arg6[%c0_6, %c0_7] : memref<256x128xbf16, #tpu.memory_space<vmem>>, vector<256x128xbf16>
    %10 = arith.extf %9 : vector<256x128xbf16> to vector<256x128xf32>
    %cst_8 = arith.constant dense<0.000000e+00> : vector<2x128xf32>
    %11 = tpu.matmul %8, %10, %cst_8 {dimension_numbers = #tpu.dot_dimension_numbers<[1], [0], [0], [1], [0, 0, 1, 1], [], []>} : vector<2x256xf32>, vector<256x128xf32>, vector<2x128xf32> -> vector<2x128xf32>
    %c0_9 = arith.constant 0 : index
    %c0_10 = arith.constant 0 : index
    %12 = vector.load %arg7[%c0_9, %c0_10] : memref<1x128xf32, #tpu.memory_space<vmem>>, vector<1x128xf32>
    %13 = vector.broadcast %12 : vector<1x128xf32> to vector<2x128xf32>
    %14 = arith.addf %11, %13 : vector<2x128xf32>
    %c0_11 = arith.constant 0 : index
    %c0_12 = arith.constant 0 : index
    %15 = vector.load %arg10[%c0_11, %c0_12] : memref<2x128xf32, #tpu.memory_space<vmem>>, vector<2x128xf32>
    tpu.vector_store %arg10[%c0_11, %c0_12], %14 {strides = array<i32>} : memref<2x128xf32, #tpu.memory_space<vmem>>, vector<2x128xf32>,
    %c0_13 = arith.constant 0 : index
    %c0_14 = arith.constant 0 : index
    %16 = vector.load %arg1[%c0_13, %c0_14] : memref<2x2048xf32, #tpu.memory_space<vmem>>, vector<2x2048xf32>
    %c0_15 = arith.constant 0 : index
    %c0_16 = arith.constant 0 : index
    %17 = vector.load %arg4[%c0_15, %c0_16] : memref<2048x256xbf16, #tpu.memory_space<vmem>>, vector<2048x256xbf16>
    %18 = arith.extf %17 : vector<2048x256xbf16> to vector<2048x256xf32>
    %cst_17 = arith.constant dense<0.000000e+00> : vector<2x256xf32>
    %19 = tpu.matmul %16, %18, %cst_17 {dimension_numbers = #tpu.dot_dimension_numbers<[1], [0], [0], [1], [0, 0, 1, 1], [], []>} : vector<2x2048xf32>, vector<2048x256xf32>, vector<2x256xf32> -> vector<2x256xf32>
    %c0_18 = arith.constant 0 : index
    %c0_19 = arith.constant 0 : index
    %20 = vector.load %arg5[%c0_18, %c0_19] : memref<1x256xf32, #tpu.memory_space<vmem>>, vector<1x256xf32>
    %21 = vector.broadcast %20 : vector<1x256xf32> to vector<2x256xf32>
    %22 = arith.addf %19, %21 : vector<2x256xf32>
    %cst_20 = arith.constant 0.000000e+00 : f32
    %23 = vector.broadcast %cst_20 : f32 to vector<2x256xf32>
    %24 = arith.maximumf %22, %23 : vector<2x256xf32>
    %c0_21 = arith.constant 0 : index
    %c0_22 = arith.constant 0 : index
    %25 = vector.load %arg8[%c0_21, %c0_22] : memref<256x1xbf16, #tpu.memory_space<vmem>>, vector<256x1xbf16>
    %26 = arith.extf %25 : vector<256x1xbf16> to vector<256x1xf32>
    %cst_23 = arith.constant dense<0.000000e+00> : vector<2x1xf32>
    %27 = tpu.matmul %24, %26, %cst_23 {dimension_numbers = #tpu.dot_dimension_numbers<[1], [0], [0], [1], [0, 0, 1, 1], [], []>} : vector<2x256xf32>, vector<256x1xf32>, vector<2x1xf32> -> vector<2x1xf32>
    %c0_24 = arith.constant 0 : index
    %c0_25 = arith.constant 0 : index
    %28 = vector.load %arg9[%c0_24, %c0_25] : memref<1x1xf32, #tpu.memory_space<vmem>>, vector<1x1xf32>
    %29 = vector.broadcast %28 : vector<1x1xf32> to vector<2x1xf32>
    %30 = arith.addf %27, %29 : vector<2x1xf32>
    %31 = math.tanh %30 : vector<2x1xf32>
    %c0_26 = arith.constant 0 : index
    %c0_27 = arith.constant 0 : index
    %32 = vector.load %arg11[%c0_26, %c0_27] : memref<2x1xf32, #tpu.memory_space<vmem>>, vector<2x1xf32>
    tpu.vector_store %arg11[%c0_26, %c0_27], %31 {strides = array<i32>} : memref<2x1xf32, #tpu.memory_space<vmem>>, vector<2x1xf32>,
    return
  }
}

</mosaic_0001>

<llo_original>
// kernel: dual_head_forward.3
$region0: #{dual_head_forward.3}
  #allocation0 [shape = 'u32[]', space=smem, size = 0x4, offset = 0x4, fixed_abs, tag = 'smem constant byte address 0x4 - core index']
  #allocation1 [shape = 'u32[144,128]{1,0:T(1,128)}', space=vmem, size = 0x12000, scoped, tag = 'internal scratch']
  #allocation2 [shape = 'f32[1,1]{1,0:T(1,128)S(1)}', space=vmem, size = 0x200, scoped, tag = 'scoped memory for dual_head_forward.3']
  %s0 = inlined_call_operand.vmem [shape: f32[2,2048], index: 0, kind: input, shape index: {}]
  %s1 = inlined_call_operand.vmem [shape: f32[2,2048], index: 1, kind: input, shape index: {}]
  %s2 = inlined_call_operand.vmem [shape: bf16[2048,256], index: 2, kind: input, shape index: {}]
  %s3 = inlined_call_operand.vmem [shape: f32[1,256], index: 3, kind: input, shape index: {}]
  %s4 = inlined_call_operand.hbm [shape: bf16[2048,256], index: 4, kind: input, shape index: {}]
  %s5 = inlined_call_operand.vmem [shape: f32[1,256], index: 5, kind: input, shape index: {}]
  %s6 = inlined_call_operand.vmem [shape: bf16[256,128], index: 6, kind: input, shape index: {}]
  %s7 = inlined_call_operand.vmem [shape: f32[1,128], index: 7, kind: input, shape index: {}]
  %s8 = inlined_call_operand.vmem [shape: bf16[256,1], index: 8, kind: input, shape index: {}]
  %s9 = inlined_call_operand.<no memory space> [shape: f32[1,1], index: 9, kind: input, shape index: {}]
  %s10 = inlined_call_operand.hbm [shape: f32[2,128], index: 10, kind: output, shape index: {0}]
  %s11 = inlined_call_operand.vmem [shape: f32[2,1], index: 11, kind: output, shape index: {1}]
  %12 = xla_tuple %s10, %s11
  %s13 = sld [smem:[#allocation0]]
  $region62: #{dual_head_forward.3} parent=0
    _
  %s15 = ssub.s32 1, %s13
  %s16 = scalar_select 0, %s15, %s13
  %v17 = vstv %s9
  %18 = vst [vmem:[#allocation2] sm:$0x1] %v17
  $region1: #{dual_head_forward.3} parent=0
    #allocation3 [shape = 'u8[1048576]{0}', space=vmem, size = 0x100000, scoped, tag = 'input window, operand 4, single buffered']
    #allocation4 [shape = 's32[1]{0}', space=sflag, size = 0x4, scoped, tag = 'scoped memory for dual_head_forward.3']
    #allocation5 [shape = 's32[1]{0}', space=sflag, size = 0x4, scoped, tag = 'scoped memory for dual_head_forward.3']
    #allocation6 [shape = 'u8[1024]{0}', space=vmem, size = 0x400, scoped, tag = 'output window, operand 0, single buffered']
    %19 = vsyncpa [#allocation4], 0
    %20 = vsyncpa [#allocation5], 0
    // Predicated region
    $region2: #{dual_head_forward.3} parent=1 // pred_check
      _
    $region3: #{dual_head_forward.3} parent=1 // pred_check_branch
      %22 = sbr.rel (0) target = $region5
    $region4: #{dual_head_forward.3} parent=1 // pred_region
      _
    $region5: #{dual_head_forward.3} parent=1 // pred_fallthru
      _
    // Predicated region
    $region6: #{dual_head_forward.3} parent=1 // pred_check
      _
    $region7: #{dual_head_forward.3} parent=1 // pred_check_branch
      %24 = sbr.rel (0) target = $region9
    $region8: #{dual_head_forward.3} parent=1 // pred_region
      _
    $region9: #{dual_head_forward.3} parent=1 // pred_fallthru
      _
    // Predicated region
    $region10: #{dual_head_forward.3} parent=1 // pred_check
      _
    $region11: #{dual_head_forward.3} parent=1 // pred_check_branch
      %26 = sbr.rel (0) target = $region13
    $region12: #{dual_head_forward.3} parent=1 // pred_region
      _
    $region13: #{dual_head_forward.3} parent=1 // pred_fallthru
      _
    // Predicated region
    $region14: #{dual_head_forward.3} parent=1 // pred_check
      _
    $region15: #{dual_head_forward.3} parent=1 // pred_check_branch
      %28 = sbr.rel (0) target = $region17
    $region16: #{dual_head_forward.3} parent=1 // pred_region
      _
    $region17: #{dual_head_forward.3} parent=1 // pred_fallthru
      _
    // Predicated region
    $region18: #{dual_head_forward.3} parent=1 // pred_check
      _
    $region19: #{dual_head_forward.3} parent=1 // pred_check_branch
      %30 = sbr.rel (0) target = $region21
    $region20: #{dual_head_forward.3} parent=1 // pred_region
      %s32 = ssub.s32 32768, 32768
      %33 = vsyncadd [#allocation4], %s32
      %s34 = sshll.u32 [#allocation3], 4
      %s35 = int_to_ptr.vmem [resolvable:$true] %s34
      %40 = dma.hbm_to_vmem [thread:$0]  %s4, 32768, %s35, [#allocation4], 128, 128, 8
    $region21: #{dual_head_forward.3} parent=1 // pred_fallthru
      _
    // Predicated region
    $region22: #{dual_head_forward.3} parent=1 // pred_check
      _
    $region23: #{dual_head_forward.3} parent=1 // pred_check_branch
      %42 = sbr.rel (0) target = $region25
    $region24: #{dual_head_forward.3} parent=1 // pred_region
      _
    $region25: #{dual_head_forward.3} parent=1 // pred_fallthru
      _
    // Predicated region
    $region26: #{dual_head_forward.3} parent=1 // pred_check
      _
    $region27: #{dual_head_forward.3} parent=1 // pred_check_branch
      %44 = sbr.rel (0) target = $region29
    $region28: #{dual_head_forward.3} parent=1 // pred_region
      _
    $region29: #{dual_head_forward.3} parent=1 // pred_fallthru
      _
    // Predicated region
    $region30: #{dual_head_forward.3} parent=1 // pred_check
      _
    $region31: #{dual_head_forward.3} parent=1 // pred_check_branch
      %46 = sbr.rel (0) target = $region33
    $region32: #{dual_head_forward.3} parent=1 // pred_region
      _
    $region33: #{dual_head_forward.3} parent=1 // pred_fallthru
      _
    // Predicated region
    $region34: #{dual_head_forward.3} parent=1 // pred_check
      _
    $region35: #{dual_head_forward.3} parent=1 // pred_check_branch
      %48 = sbr.rel (0) target = $region37
    $region36: #{dual_head_forward.3} parent=1 // pred_region
      _
    $region37: #{dual_head_forward.3} parent=1 // pred_fallthru
      _
    // Predicated region
    $region38: #{dual_head_forward.3} parent=1 // pred_check
      _
    $region39: #{dual_head_forward.3} parent=1 // pred_check_branch
      %50 = sbr.rel (0) target = $region41
    $region40: #{dual_head_forward.3} parent=1 // pred_region
      _
    $region41: #{dual_head_forward.3} parent=1 // pred_fallthru
      _
    // Predicated region
    $region42: #{dual_head_forward.3} parent=1 // pred_check
      _
    $region43: #{dual_head_forward.3} parent=1 // pred_check_branch
      %52 = sbr.rel (0) target = $region45
    $region44: #{dual_head_forward.3} parent=1 // pred_region
      %53 = dma.done [#allocation4], 32768
    $region45: #{dual_head_forward.3} parent=1 // pred_fallthru
      _
    %v54 = vld [vmem:[%s0] sm:$0xff]
    %v55 = vld [vmem:[%s0 + $0x8] sm:$0xff]
    %v56 = vld [vmem:[%s0 + $0x10] sm:$0xff]
    %v57 = vld [vmem:[%s0 + $0x18] sm:$0xff]
    %v58 = vld [vmem:[%s2] sm:$0xff]
    %v59 = vld [vmem:[%s2 + $0x8] sm:$0xff]
    %v60 = vld [vmem:[%s2 + $0x10] sm:$0xff]
    %v61 = vld [vmem:[%s2 + $0x18] sm:$0xff]
    %v62 = vld [vmem:[%s2 + $0x20] sm:$0xff]
    %v63 = vld [vmem:[%s2 + $0x28] sm:$0xff]
    %v64 = vld [vmem:[%s2 + $0x30] sm:$0xff]
    %v65 = vld [vmem:[%s2 + $0x38] sm:$0xff]
    %v66 = vld [vmem:[%s2 + $0x40] sm:$0xff]
    %v67 = vld [vmem:[%s2 + $0x48] sm:$0xff]
    %v68 = vld [vmem:[%s2 + $0x50] sm:$0xff]
    %v69 = vld [vmem:[%s2 + $0x58] sm:$0xff]
    %v70 = vld [vmem:[%s2 + $0x60] sm:$0xff]
    %v71 = vld [vmem:[%s2 + $0x68] sm:$0xff]
    %v72 = vld [vmem:[%s2 + $0x70] sm:$0xff]
    %v73 = vld [vmem:[%s2 + $0x78] sm:$0xff]
    %v74 = vld [vmem:[%s2 + $0x80] sm:$0xff]
    %v75 = vld [vmem:[%s2 + $0x88] sm:$0xff]
    %v76 = vld [vmem:[%s2 + $0x90] sm:$0xff]
    %v77 = vld [vmem:[%s2 + $0x98] sm:$0xff]
    %v78 = vld [vmem:[%s2 + $0xa0] sm:$0xff]
    %v79 = vld [vmem:[%s2 + $0xa8] sm:$0xff]
    %v80 = vld [vmem:[%s2 + $0xb0] sm:$0xff]
    %v81 = vld [vmem:[%s2 + $0xb8] sm:$0xff]
    %v82 = vld [vmem:[%s2 + $0xc0] sm:$0xff]
    %v83 = vld [vmem:[%s2 + $0xc8] sm:$0xff]
    %v84 = vld [vmem:[%s2 + $0xd0] sm:$0xff]
    %v85 = vld [vmem:[%s2 + $0xd8] sm:$0xff]
    %v86 = vld [vmem:[%s2 + $0xe0] sm:$0xff]
    %v87 = vld [vmem:[%s2 + $0xe8] sm:$0xff]
    %v88 = vld [vmem:[%s2 + $0xf0] sm:$0xff]
    %v89 = vld [vmem:[%s2 + $0xf8] sm:$0xff]
    %v90 = vld [vmem:[%s2 + $0x100] sm:$0xff]
    %v91 = vld [vmem:[%s2 + $0x108] sm:$0xff]
    %v92 = vld [vmem:[%s2 + $0x110] sm:$0xff]
    %v93 = vld [vmem:[%s2 + $0x118] sm:$0xff]
    %v94 = vld [vmem:[%s2 + $0x120] sm:$0xff]
    %v95 = vld [vmem:[%s2 + $0x128] sm:$0xff]
    %v96 = vld [vmem:[%s2 + $0x130] sm:$0xff]
    %v97 = vld [vmem:[%s2 + $0x138] sm:$0xff]
    %v98 = vld [vmem:[%s2 + $0x140] sm:$0xff]
    %v99 = vld [vmem:[%s2 + $0x148] sm:$0xff]
    %v100 = vld [vmem:[%s2 + $0x150] sm:$0xff]
    %v101 = vld [vmem:[%s2 + $0x158] sm:$0xff]
    %v102 = vld [vmem:[%s2 + $0x160] sm:$0xff]
    %v103 = vld [vmem:[%s2 + $0x168] sm:$0xff]
    %v104 = vld [vmem:[%s2 + $0x170] sm:$0xff]
    %v105 = vld [vmem:[%s2 + $0x178] sm:$0xff]
    %v106 = vld [vmem:[%s2 + $0x180] sm:$0xff]
    %v107 = vld [vmem:[%s2 + $0x188] sm:$0xff]
    %v108 = vld [vmem:[%s2 + $0x190] sm:$0xff]
    %v109 = vld [vmem:[%s2 + $0x198] sm:$0xff]
    %v110 = vld [vmem:[%s2 + $0x1a0] sm:$0xff]
    %v111 = vld [vmem:[%s2 + $0x1a8] sm:$0xff]
    %v112 = vld [vmem:[%s2 + $0x1b0] sm:$0xff]
    %v113 = vld [vmem:[%s2 + $0x1b8] sm:$0xff]
    %v114 = vld [vmem:[%s2 + $0x1c0] sm:$0xff]
    %v115 = vld [vmem:[%s2 + $0x1c8] sm:$0xff]
    %v116 = vld [vmem:[%s2 + $0x1d0] sm:$0xff]
    %v117 = vld [vmem:[%s2 + $0x1d8] sm:$0xff]
    %v118 = vld [vmem:[%s2 + $0x1e0] sm:$0xff]
    %v119 = vld [vmem:[%s2 + $0x1e8] sm:$0xff]
    %v120 = vld [vmem:[%s2 + $0x1f0] sm:$0xff]
    %v121 = vld [vmem:[%s2 + $0x1f8] sm:$0xff]
    %v122 = vld [vmem:[%s2 + $0x200] sm:$0xff]
    %v123 = vld [vmem:[%s2 + $0x208] sm:$0xff]
    %v124 = vld [vmem:[%s2 + $0x210] sm:$0xff]
    %v125 = vld [vmem:[%s2 + $0x218] sm:$0xff]
    %v126 = vld [vmem:[%s2 + $0x220] sm:$0xff]
    %v127 = vld [vmem:[%s2 + $0x228] sm:$0xff]
    %v128 = vld [vmem:[%s2 + $0x230] sm:$0xff]
    %v129 = vld [vmem:[%s2 + $0x238] sm:$0xff]
    %v130 = vld [vmem:[%s2 + $0x240] sm:$0xff]
    %v131 = vld [vmem:[%s2 + $0x248] sm:$0xff]
    %v132 = vld [vmem:[%s2 + $0x250] sm:$0xff]
    %v133 = vld [vmem:[%s2 + $0x258] sm:$0xff]
    %v134 = vld [vmem:[%s2 + $0x260] sm:$0xff]
    %v135 = vld [vmem:[%s2 + $0x268] sm:$0xff]
    %v136 = vld [vmem:[%s2 + $0x270] sm:$0xff]
    %v137 = vld [vmem:[%s2 + $0x278] sm:$0xff]
    %v138 = vld [vmem:[%s2 + $0x280] sm:$0xff]
    %v139 = vld [vmem:[%s2 + $0x288] sm:$0xff]
    %v140 = vld [vmem:[%s2 + $0x290] sm:$0xff]
    %v141 = vld [vmem:[%s2 + $0x298] sm:$0xff]
    %v142 = vld [vmem:[%s2 + $0x2a0] sm:$0xff]
    %v143 = vld [vmem:[%s2 + $0x2a8] sm:$0xff]
    %v144 = vld [vmem:[%s2 + $0x2b0] sm:$0xff]
    %v145 = vld [vmem:[%s2 + $0x2b8] sm:$0xff]
    %v146 = vld [vmem:[%s2 + $0x2c0] sm:$0xff]
    %v147 = vld [vmem:[%s2 + $0x2c8] sm:$0xff]
    %v148 = vld [vmem:[%s2 + $0x2d0] sm:$0xff]
    %v149 = vld [vmem:[%s2 + $0x2d8] sm:$0xff]
    %v150 = vld [vmem:[%s2 + $0x2e0] sm:$0xff]
    %v151 = vld [vmem:[%s2 + $0x2e8] sm:$0xff]
    %v152 = vld [vmem:[%s2 + $0x2f0] sm:$0xff]
    %v153 = vld [vmem:[%s2 + $0x2f8] sm:$0xff]
    %v154 = vld [vmem:[%s2 + $0x300] sm:$0xff]
    %v155 = vld [vmem:[%s2 + $0x308] sm:$0xff]
    %v156 = vld [vmem:[%s2 + $0x310] sm:$0xff]
    %v157 = vld [vmem:[%s2 + $0x318] sm:$0xff]
    %v158 = vld [vmem:[%s2 + $0x320] sm:$0xff]
    %v159 = vld [vmem:[%s2 + $0x328] sm:$0xff]
    %v160 = vld [vmem:[%s2 + $0x330] sm:$0xff]
    %v161 = vld [vmem:[%s2 + $0x338] sm:$0xff]
    %v162 = vld [vmem:[%s2 + $0x340] sm:$0xff]
    %v163 = vld [vmem:[%s2 + $0x348] sm:$0xff]
    %v164 = vld [vmem:[%s2 + $0x350] sm:$0xff]
    %v165 = vld [vmem:[%s2 + $0x358] sm:$0xff]
    %v166 = vld [vmem:[%s2 + $0x360] sm:$0xff]
    %v167 = vld [vmem:[%s2 + $0x368] sm:$0xff]
    %v168 = vld [vmem:[%s2 + $0x370] sm:$0xff]
    %v169 = vld [vmem:[%s2 + $0x378] sm:$0xff]
    %v170 = vld [vmem:[%s2 + $0x380] sm:$0xff]
    %v171 = vld [vmem:[%s2 + $0x388] sm:$0xff]
    %v172 = vld [vmem:[%s2 + $0x390] sm:$0xff]
    %v173 = vld [vmem:[%s2 + $0x398] sm:$0xff]
    %v174 = vld [vmem:[%s2 + $0x3a0] sm:$0xff]
    %v175 = vld [vmem:[%s2 + $0x3a8] sm:$0xff]
    %v176 = vld [vmem:[%s2 + $0x3b0] sm:$0xff]
    %v177 = vld [vmem:[%s2 + $0x3b8] sm:$0xff]
    %v178 = vld [vmem:[%s2 + $0x3c0] sm:$0xff]
    %v179 = vld [vmem:[%s2 + $0x3c8] sm:$0xff]
    %v180 = vld [vmem:[%s2 + $0x3d0] sm:$0xff]
    %v181 = vld [vmem:[%s2 + $0x3d8] sm:$0xff]
    %v182 = vld [vmem:[%s2 + $0x3e0] sm:$0xff]
    %v183 = vld [vmem:[%s2 + $0x3e8] sm:$0xff]
    %v184 = vld [vmem:[%s2 + $0x3f0] sm:$0xff]
    %v185 = vld [vmem:[%s2 + $0x3f8] sm:$0xff]
    %v186 = vld [vmem:[%s2 + $0x400] sm:$0xff]
    %v187 = vld [vmem:[%s2 + $0x408] sm:$0xff]
    %v188 = vld [vmem:[%s2 + $0x410] sm:$0xff]
    %v189 = vld [vmem:[%s2 + $0x418] sm:$0xff]
    %v190 = vld [vmem:[%s2 + $0x420] sm:$0xff]
    %v191 = vld [vmem:[%s2 + $0x428] sm:$0xff]
    %v192 = vld [vmem:[%s2 + $0x430] sm:$0xff]
    %v193 = vld [vmem:[%s2 + $0x438] sm:$0xff]
    %v194 = vld [vmem:[%s2 + $0x440] sm:$0xff]
    %v195 = vld [vmem:[%s2 + $0x448] sm:$0xff]
    %v196 = vld [vmem:[%s2 + $0x450] sm:$0xff]
    %v197 = vld [vmem:[%s2 + $0x458] sm:$0xff]
    %v198 = vld [vmem:[%s2 + $0x460] sm:$0xff]
    %v199 = vld [vmem:[%s2 + $0x468] sm:$0xff]
    %v200 = vld [vmem:[%s2 + $0x470] sm:$0xff]
    %v201 = vld [vmem:[%s2 + $0x478] sm:$0xff]
    %v202 = vld [vmem:[%s2 + $0x480] sm:$0xff]
    %v203 = vld [vmem:[%s2 + $0x488] sm:$0xff]
    %v204 = vld [vmem:[%s2 + $0x490] sm:$0xff]
    %v205 = vld [vmem:[%s2 + $0x498] sm:$0xff]
    %v206 = vld [vmem:[%s2 + $0x4a0] sm:$0xff]
    %v207 = vld [vmem:[%s2 + $0x4a8] sm:$0xff]
    %v208 = vld [vmem:[%s2 + $0x4b0] sm:$0xff]
    %v209 = vld [vmem:[%s2 + $0x4b8] sm:$0xff]
    %v210 = vld [vmem:[%s2 + $0x4c0] sm:$0xff]
    %v211 = vld [vmem:[%s2 + $0x4c8] sm:$0xff]
    %v212 = vld [vmem:[%s2 + $0x4d0] sm:$0xff]
    %v213 = vld [vmem:[%s2 + $0x4d8] sm:$0xff]
    %v214 = vld [vmem:[%s2 + $0x4e0] sm:$0xff]
    %v215 = vld [vmem:[%s2 + $0x4e8] sm:$0xff]
    %v216 = vld [vmem:[%s2 + $0x4f0] sm:$0xff]
    %v217 = vld [vmem:[%s2 + $0x4f8] sm:$0xff]
    %v218 = vld [vmem:[%s2 + $0x500] sm:$0xff]
    %v219 = vld [vmem:[%s2 + $0x508] sm:$0xff]
    %v220 = vld [vmem:[%s2 + $0x510] sm:$0xff]
    %v221 = vld [vmem:[%s2 + $0x518] sm:$0xff]
    %v222 = vld [vmem:[%s2 + $0x520] sm:$0xff]
    %v223 = vld [vmem:[%s2 + $0x528] sm:$0xff]
    %v224 = vld [vmem:[%s2 + $0x530] sm:$0xff]
    %v225 = vld [vmem:[%s2 + $0x538] sm:$0xff]
    %v226 = vld [vmem:[%s2 + $0x540] sm:$0xff]
    %v227 = vld [vmem:[%s2 + $0x548] sm:$0xff]
    %v228 = vld [vmem:[%s2 + $0x550] sm:$0xff]
    %v229 = vld [vmem:[%s2 + $0x558] sm:$0xff]
    %v230 = vld [vmem:[%s2 + $0x560] sm:$0xff]
    %v231 = vld [vmem:[%s2 + $0x568] sm:$0xff]
    %v232 = vld [vmem:[%s2 + $0x570] sm:$0xff]
    %v233 = vld [vmem:[%s2 + $0x578] sm:$0xff]
    %v234 = vld [vmem:[%s2 + $0x580] sm:$0xff]
    %v235 = vld [vmem:[%s2 + $0x588] sm:$0xff]
    %v236 = vld [vmem:[%s2 + $0x590] sm:$0xff]
    %v237 = vld [vmem:[%s2 + $0x598] sm:$0xff]
    %v238 = vld [vmem:[%s2 + $0x5a0] sm:$0xff]
    %v239 = vld [vmem:[%s2 + $0x5a8] sm:$0xff]
    %v240 = vld [vmem:[%s2 + $0x5b0] sm:$0xff]
    %v241 = vld [vmem:[%s2 + $0x5b8] sm:$0xff]
    %v242 = vld [vmem:[%s2 + $0x5c0] sm:$0xff]
    %v243 = vld [vmem:[%s2 + $0x5c8] sm:$0xff]
    %v244 = vld [vmem:[%s2 + $0x5d0] sm:$0xff]
    %v245 = vld [vmem:[%s2 + $0x5d8] sm:$0xff]
    %v246 = vld [vmem:[%s2 + $0x5e0] sm:$0xff]
    %v247 = vld [vmem:[%s2 + $0x5e8] sm:$0xff]
    %v248 = vld [vmem:[%s2 + $0x5f0] sm:$0xff]
    %v249 = vld [vmem:[%s2 + $0x5f8] sm:$0xff]
    %v250 = vld [vmem:[%s2 + $0x600] sm:$0xff]
    %v251 = vld [vmem:[%s2 + $0x608] sm:$0xff]
    %v252 = vld [vmem:[%s2 + $0x610] sm:$0xff]
    %v253 = vld [vmem:[%s2 + $0x618] sm:$0xff]
    %v254 = vld [vmem:[%s2 + $0x620] sm:$0xff]
    %v255 = vld [vmem:[%s2 + $0x628] sm:$0xff]
    %v256 = vld [vmem:[%s2 + $0x630] sm:$0xff]
    %v257 = vld [vmem:[%s2 + $0x638] sm:$0xff]
    %v258 = vld [vmem:[%s2 + $0x640] sm:$0xff]
    %v259 = vld [vmem:[%s2 + $0x648] sm:$0xff]
    %v260 = vld [vmem:[%s2 + $0x650] sm:$0xff]
    %v261 = vld [vmem:[%s2 + $0x658] sm:$0xff]
    %v262 = vld [vmem:[%s2 + $0x660] sm:$0xff]
    %v263 = vld [vmem:[%s2 + $0x668] sm:$0xff]
    %v264 = vld [vmem:[%s2 + $0x670] sm:$0xff]
    %v265 = vld [vmem:[%s2 + $0x678] sm:$0xff]
    %v266 = vld [vmem:[%s2 + $0x680] sm:$0xff]
    %v267 = vld [vmem:[%s2 + $0x688] sm:$0xff]
    %v268 = vld [vmem:[%s2 + $0x690] sm:$0xff]
    %v269 = vld [vmem:[%s2 + $0x698] sm:$0xff]
    %v270 = vld [vmem:[%s2 + $0x6a0] sm:$0xff]
    %v271 = vld [vmem:[%s2 + $0x6a8] sm:$0xff]
    %v272 = vld [vmem:[%s2 + $0x6b0] sm:$0xff]
    %v273 = vld [vmem:[%s2 + $0x6b8] sm:$0xff]
    %v274 = vld [vmem:[%s2 + $0x6c0] sm:$0xff]
    %v275 = vld [vmem:[%s2 + $0x6c8] sm:$0xff]
    %v276 = vld [vmem:[%s2 + $0x6d0] sm:$0xff]
    %v277 = vld [vmem:[%s2 + $0x6d8] sm:$0xff]
    %v278 = vld [vmem:[%s2 + $0x6e0] sm:$0xff]
    %v279 = vld [vmem:[%s2 + $0x6e8] sm:$0xff]
    %v280 = vld [vmem:[%s2 + $0x6f0] sm:$0xff]
    %v281 = vld [vmem:[%s2 + $0x6f8] sm:$0xff]
    %v282 = vld [vmem:[%s2 + $0x700] sm:$0xff]
    %v283 = vld [vmem:[%s2 + $0x708] sm:$0xff]
    %v284 = vld [vmem:[%s2 + $0x710] sm:$0xff]
    %v285 = vld [vmem:[%s2 + $0x718] sm:$0xff]
    %v286 = vld [vmem:[%s2 + $0x720] sm:$0xff]
    %v287 = vld [vmem:[%s2 + $0x728] sm:$0xff]
    %v288 = vld [vmem:[%s2 + $0x730] sm:$0xff]
    %v289 = vld [vmem:[%s2 + $0x738] sm:$0xff]
    %v290 = vld [vmem:[%s2 + $0x740] sm:$0xff]
    %v291 = vld [vmem:[%s2 + $0x748] sm:$0xff]
    %v292 = vld [vmem:[%s2 + $0x750] sm:$0xff]
    %v293 = vld [vmem:[%s2 + $0x758] sm:$0xff]
    %v294 = vld [vmem:[%s2 + $0x760] sm:$0xff]
    %v295 = vld [vmem:[%s2 + $0x768] sm:$0xff]
    %v296 = vld [vmem:[%s2 + $0x770] sm:$0xff]
    %v297 = vld [vmem:[%s2 + $0x778] sm:$0xff]
    %v298 = vld [vmem:[%s2 + $0x780] sm:$0xff]
    %v299 = vld [vmem:[%s2 + $0x788] sm:$0xff]
    %v300 = vld [vmem:[%s2 + $0x790] sm:$0xff]
    %v301 = vld [vmem:[%s2 + $0x798] sm:$0xff]
    %v302 = vld [vmem:[%s2 + $0x7a0] sm:$0xff]
    %v303 = vld [vmem:[%s2 + $0x7a8] sm:$0xff]
    %v304 = vld [vmem:[%s2 + $0x7b0] sm:$0xff]
    %v305 = vld [vmem:[%s2 + $0x7b8] sm:$0xff]
    %v306 = vld [vmem:[%s2 + $0x7c0] sm:$0xff]
    %v307 = vld [vmem:[%s2 + $0x7c8] sm:$0xff]
    %v308 = vld [vmem:[%s2 + $0x7d0] sm:$0xff]
    %v309 = vld [vmem:[%s2 + $0x7d8] sm:$0xff]
    %v310 = vld [vmem:[%s2 + $0x7e0] sm:$0xff]
    %v311 = vld [vmem:[%s2 + $0x7e8] sm:$0xff]
    %v312 = vld [vmem:[%s2 + $0x7f0] sm:$0xff]
    %v313 = vld [vmem:[%s2 + $0x7f8] sm:$0xff]
    %v314 = vunpack.c.l.bf16 %v58
    %v315 = vunpack.c.h.bf16 %v58
    %v316 = vunpack.c.l.bf16 %v59
    %v317 = vunpack.c.h.bf16 %v59
    %v318 = vunpack.c.l.bf16 %v60
    %v319 = vunpack.c.h.bf16 %v60
    %v320 = vunpack.c.l.bf16 %v61
    %v321 = vunpack.c.h.bf16 %v61
    %v322 = vunpack.c.l.bf16 %v62
    %v323 = vunpack.c.h.bf16 %v62
    %v324 = vunpack.c.l.bf16 %v63
    %v325 = vunpack.c.h.bf16 %v63
    %v326 = vunpack.c.l.bf16 %v64
    %v327 = vunpack.c.h.bf16 %v64
    %v328 = vunpack.c.l.bf16 %v65
    %v329 = vunpack.c.h.bf16 %v65
    %v330 = vunpack.c.l.bf16 %v66
    %v331 = vunpack.c.h.bf16 %v66
    %v332 = vunpack.c.l.bf16 %v67
    %v333 = vunpack.c.h.bf16 %v67
    %v334 = vunpack.c.l.bf16 %v68
    %v335 = vunpack.c.h.bf16 %v68
    %v336 = vunpack.c.l.bf16 %v69
    %v337 = vunpack.c.h.bf16 %v69
    %v338 = vunpack.c.l.bf16 %v70
    %v339 = vunpack.c.h.bf16 %v70
    %v340 = vunpack.c.l.bf16 %v71
    %v341 = vunpack.c.h.bf16 %v71
    %v342 = vunpack.c.l.bf16 %v72
    %v343 = vunpack.c.h.bf16 %v72
    %v344 = vunpack.c.l.bf16 %v73
    %v345 = vunpack.c.h.bf16 %v73
    %v346 = vunpack.c.l.bf16 %v74
    %v347 = vunpack.c.h.bf16 %v74
    %v348 = vunpack.c.l.bf16 %v75
    %v349 = vunpack.c.h.bf16 %v75
    %v350 = vunpack.c.l.bf16 %v76
    %v351 = vunpack.c.h.bf16 %v76
    %v352 = vunpack.c.l.bf16 %v77
    %v353 = vunpack.c.h.bf16 %v77
    %v354 = vunpack.c.l.bf16 %v78
    %v355 = vunpack.c.h.bf16 %v78
    %v356 = vunpack.c.l.bf16 %v79
    %v357 = vunpack.c.h.bf16 %v79
    %v358 = vunpack.c.l.bf16 %v80
    %v359 = vunpack.c.h.bf16 %v80
    %v360 = vunpack.c.l.bf16 %v81
    %v361 = vunpack.c.h.bf16 %v81
    %v362 = vunpack.c.l.bf16 %v82
    %v363 = vunpack.c.h.bf16 %v82
    %v364 = vunpack.c.l.bf16 %v83
    %v365 = vunpack.c.h.bf16 %v83
    %v366 = vunpack.c.l.bf16 %v84
    %v367 = vunpack.c.h.bf16 %v84
    %v368 = vunpack.c.l.bf16 %v85
    %v369 = vunpack.c.h.bf16 %v85
    %v370 = vunpack.c.l.bf16 %v86
    %v371 = vunpack.c.h.bf16 %v86
    %v372 = vunpack.c.l.bf16 %v87
    %v373 = vunpack.c.h.bf16 %v87
    %v374 = vunpack.c.l.bf16 %v88
    %v375 = vunpack.c.h.bf16 %v88
    %v376 = vunpack.c.l.bf16 %v89
    %v377 = vunpack.c.h.bf16 %v89
    %v378 = vunpack.c.l.bf16 %v90
    %v379 = vunpack.c.h.bf16 %v90
    %v380 = vunpack.c.l.bf16 %v91
    %v381 = vunpack.c.h.bf16 %v91
    %v382 = vunpack.c.l.bf16 %v92
    %v383 = vunpack.c.h.bf16 %v92
    %v384 = vunpack.c.l.bf16 %v93
    %v385 = vunpack.c.h.bf16 %v93
    %v386 = vunpack.c.l.bf16 %v94
    %v387 = vunpack.c.h.bf16 %v94
    %v388 = vunpack.c.l.bf16 %v95
    %v389 = vunpack.c.h.bf16 %v95
    %v390 = vunpack.c.l.bf16 %v96
    %v391 = vunpack.c.h.bf16 %v96
    %v392 = vunpack.c.l.bf16 %v97
    %v393 = vunpack.c.h.bf16 %v97
    %v394 = vunpack.c.l.bf16 %v98
    %v395 = vunpack.c.h.bf16 %v98
    %v396 = vunpack.c.l.bf16 %v99
    %v397 = vunpack.c.h.bf16 %v99
    %v398 = vunpack.c.l.bf16 %v100
    %v399 = vunpack.c.h.bf16 %v100
    %v400 = vunpack.c.l.bf16 %v101
    %v401 = vunpack.c.h.bf16 %v101
    %v402 = vunpack.c.l.bf16 %v102
    %v403 = vunpack.c.h.bf16 %v102
    %v404 = vunpack.c.l.bf16 %v103
    %v405 = vunpack.c.h.bf16 %v103
    %v406 = vunpack.c.l.bf16 %v104
    %v407 = vunpack.c.h.bf16 %v104
    %v408 = vunpack.c.l.bf16 %v105
    %v409 = vunpack.c.h.bf16 %v105
    %v410 = vunpack.c.l.bf16 %v106
    %v411 = vunpack.c.h.bf16 %v106
    %v412 = vunpack.c.l.bf16 %v107
    %v413 = vunpack.c.h.bf16 %v107
    %v414 = vunpack.c.l.bf16 %v108
    %v415 = vunpack.c.h.bf16 %v108
    %v416 = vunpack.c.l.bf16 %v109
    %v417 = vunpack.c.h.bf16 %v109
    %v418 = vunpack.c.l.bf16 %v110
    %v419 = vunpack.c.h.bf16 %v110
    %v420 = vunpack.c.l.bf16 %v111
    %v421 = vunpack.c.h.bf16 %v111
    %v422 = vunpack.c.l.bf16 %v112
    %v423 = vunpack.c.h.bf16 %v112
    %v424 = vunpack.c.l.bf16 %v113
    %v425 = vunpack.c.h.bf16 %v113
    %v426 = vunpack.c.l.bf16 %v114
    %v427 = vunpack.c.h.bf16 %v114
    %v428 = vunpack.c.l.bf16 %v115
    %v429 = vunpack.c.h.bf16 %v115
    %v430 = vunpack.c.l.bf16 %v116
    %v431 = vunpack.c.h.bf16 %v116
    %v432 = vunpack.c.l.bf16 %v117
    %v433 = vunpack.c.h.bf16 %v117
    %v434 = vunpack.c.l.bf16 %v118
    %v435 = vunpack.c.h.bf16 %v118
    %v436 = vunpack.c.l.bf16 %v119
    %v437 = vunpack.c.h.bf16 %v119
    %v438 = vunpack.c.l.bf16 %v120
    %v439 = vunpack.c.h.bf16 %v120
    %v440 = vunpack.c.l.bf16 %v121
    %v441 = vunpack.c.h.bf16 %v121
    %v442 = vunpack.c.l.bf16 %v122
    %v443 = vunpack.c.h.bf16 %v122
    %v444 = vunpack.c.l.bf16 %v123
    %v445 = vunpack.c.h.bf16 %v123
    %v446 = vunpack.c.l.bf16 %v124
    %v447 = vunpack.c.h.bf16 %v124
    %v448 = vunpack.c.l.bf16 %v125
    %v449 = vunpack.c.h.bf16 %v125
    %v450 = vunpack.c.l.bf16 %v126
    %v451 = vunpack.c.h.bf16 %v126
    %v452 = vunpack.c.l.bf16 %v127
    %v453 = vunpack.c.h.bf16 %v127
    %v454 = vunpack.c.l.bf16 %v128
    %v455 = vunpack.c.h.bf16 %v128
    %v456 = vunpack.c.l.bf16 %v129
    %v457 = vunpack.c.h.bf16 %v129
    %v458 = vunpack.c.l.bf16 %v130
    %v459 = vunpack.c.h.bf16 %v130
    %v460 = vunpack.c.l.bf16 %v131
    %v461 = vunpack.c.h.bf16 %v131
    %v462 = vunpack.c.l.bf16 %v132
    %v463 = vunpack.c.h.bf16 %v132
    %v464 = vunpack.c.l.bf16 %v133
    %v465 = vunpack.c.h.bf16 %v133
    %v466 = vunpack.c.l.bf16 %v134
    %v467 = vunpack.c.h.bf16 %v134
    %v468 = vunpack.c.l.bf16 %v135
    %v469 = vunpack.c.h.bf16 %v135
    %v470 = vunpack.c.l.bf16 %v136
    %v471 = vunpack.c.h.bf16 %v136
    %v472 = vunpack.c.l.bf16 %v137
    %v473 = vunpack.c.h.bf16 %v137
    %v474 = vunpack.c.l.bf16 %v138
    %v475 = vunpack.c.h.bf16 %v138
    %v476 = vunpack.c.l.bf16 %v139
    %v477 = vunpack.c.h.bf16 %v139
    %v478 = vunpack.c.l.bf16 %v140
    %v479 = vunpack.c.h.bf16 %v140
    %v480 = vunpack.c.l.bf16 %v141
    %v481 = vunpack.c.h.bf16 %v141
    %v482 = vunpack.c.l.bf16 %v142
    %v483 = vunpack.c.h.bf16 %v142
    %v484 = vunpack.c.l.bf16 %v143
    %v485 = vunpack.c.h.bf16 %v143
    %v486 = vunpack.c.l.bf16 %v144
    %v487 = vunpack.c.h.bf16 %v144
    %v488 = vunpack.c.l.bf16 %v145
    %v489 = vunpack.c.h.bf16 %v145
    %v490 = vunpack.c.l.bf16 %v146
    %v491 = vunpack.c.h.bf16 %v146
    %v492 = vunpack.c.l.bf16 %v147
    %v493 = vunpack.c.h.bf16 %v147
    %v494 = vunpack.c.l.bf16 %v148
    %v495 = vunpack.c.h.bf16 %v148
    %v496 = vunpack.c.l.bf16 %v149
    %v497 = vunpack.c.h.bf16 %v149
    %v498 = vunpack.c.l.bf16 %v150
    %v499 = vunpack.c.h.bf16 %v150
    %v500 = vunpack.c.l.bf16 %v151
    %v501 = vunpack.c.h.bf16 %v151
    %v502 = vunpack.c.l.bf16 %v152
    %v503 = vunpack.c.h.bf16 %v152
    %v504 = vunpack.c.l.bf16 %v153
    %v505 = vunpack.c.h.bf16 %v153
    %v506 = vunpack.c.l.bf16 %v154
    %v507 = vunpack.c.h.bf16 %v154
    %v508 = vunpack.c.l.bf16 %v155
    %v509 = vunpack.c.h.bf16 %v155
    %v510 = vunpack.c.l.bf16 %v156
    %v511 = vunpack.c.h.bf16 %v156
    %v512 = vunpack.c.l.bf16 %v157
    %v513 = vunpack.c.h.bf16 %v157
    %v514 = vunpack.c.l.bf16 %v158
    %v515 = vunpack.c.h.bf16 %v158
    %v516 = vunpack.c.l.bf16 %v159
    %v517 = vunpack.c.h.bf16 %v159
    %v518 = vunpack.c.l.bf16 %v160
    %v519 = vunpack.c.h.bf16 %v160
    %v520 = vunpack.c.l.bf16 %v161
    %v521 = vunpack.c.h.bf16 %v161
    %v522 = vunpack.c.l.bf16 %v162
    %v523 = vunpack.c.h.bf16 %v162
    %v524 = vunpack.c.l.bf16 %v163
    %v525 = vunpack.c.h.bf16 %v163
    %v526 = vunpack.c.l.bf16 %v164
    %v527 = vunpack.c.h.bf16 %v164
    %v528 = vunpack.c.l.bf16 %v165
    %v529 = vunpack.c.h.bf16 %v165
    %v530 = vunpack.c.l.bf16 %v166
    %v531 = vunpack.c.h.bf16 %v166
    %v532 = vunpack.c.l.bf16 %v167
    %v533 = vunpack.c.h.bf16 %v167
    %v534 = vunpack.c.l.bf16 %v168
    %v535 = vunpack.c.h.bf16 %v168
    %v536 = vunpack.c.l.bf16 %v169
    %v537 = vunpack.c.h.bf16 %v169
    %v538 = vunpack.c.l.bf16 %v170
    %v539 = vunpack.c.h.bf16 %v170
    %v540 = vunpack.c.l.bf16 %v171
    %v541 = vunpack.c.h.bf16 %v171
    %v542 = vunpack.c.l.bf16 %v172
    %v543 = vunpack.c.h.bf16 %v172
    %v544 = vunpack.c.l.bf16 %v173
    %v545 = vunpack.c.h.bf16 %v173
    %v546 = vunpack.c.l.bf16 %v174
    %v547 = vunpack.c.h.bf16 %v174
    %v548 = vunpack.c.l.bf16 %v175
    %v549 = vunpack.c.h.bf16 %v175
    %v550 = vunpack.c.l.bf16 %v176
    %v551 = vunpack.c.h.bf16 %v176
    %v552 = vunpack.c.l.bf16 %v177
    %v553 = vunpack.c.h.bf16 %v177
    %v554 = vunpack.c.l.bf16 %v178
    %v555 = vunpack.c.h.bf16 %v178
    %v556 = vunpack.c.l.bf16 %v179
    %v557 = vunpack.c.h.bf16 %v179
    %v558 = vunpack.c.l.bf16 %v180
    %v559 = vunpack.c.h.bf16 %v180
    %v560 = vunpack.c.l.bf16 %v181
    %v561 = vunpack.c.h.bf16 %v181
    %v562 = vunpack.c.l.bf16 %v182
    %v563 = vunpack.c.h.bf16 %v182
    %v564 = vunpack.c.l.bf16 %v183
    %v565 = vunpack.c.h.bf16 %v183
    %v566 = vunpack.c.l.bf16 %v184
    %v567 = vunpack.c.h.bf16 %v184
    %v568 = vunpack.c.l.bf16 %v185
    %v569 = vunpack.c.h.bf16 %v185
    %v570 = vunpack.c.l.bf16 %v186
    %v571 = vunpack.c.h.bf16 %v186
    %v572 = vunpack.c.l.bf16 %v187
    %v573 = vunpack.c.h.bf16 %v187
    %v574 = vunpack.c.l.bf16 %v188
    %v575 = vunpack.c.h.bf16 %v188
    %v576 = vunpack.c.l.bf16 %v189
    %v577 = vunpack.c.h.bf16 %v189
    %v578 = vunpack.c.l.bf16 %v190
    %v579 = vunpack.c.h.bf16 %v190
    %v580 = vunpack.c.l.bf16 %v191
    %v581 = vunpack.c.h.bf16 %v191
    %v582 = vunpack.c.l.bf16 %v192
    %v583 = vunpack.c.h.bf16 %v192
    %v584 = vunpack.c.l.bf16 %v193
    %v585 = vunpack.c.h.bf16 %v193
    %v586 = vunpack.c.l.bf16 %v194
    %v587 = vunpack.c.h.bf16 %v194
    %v588 = vunpack.c.l.bf16 %v195
    %v589 = vunpack.c.h.bf16 %v195
    %v590 = vunpack.c.l.bf16 %v196
    %v591 = vunpack.c.h.bf16 %v196
    %v592 = vunpack.c.l.bf16 %v197
    %v593 = vunpack.c.h.bf16 %v197
    %v594 = vunpack.c.l.bf16 %v198
    %v595 = vunpack.c.h.bf16 %v198
    %v596 = vunpack.c.l.bf16 %v199
    %v597 = vunpack.c.h.bf16 %v199
    %v598 = vunpack.c.l.bf16 %v200
    %v599 = vunpack.c.h.bf16 %v200
    %v600 = vunpack.c.l.bf16 %v201
    %v601 = vunpack.c.h.bf16 %v201
    %v602 = vunpack.c.l.bf16 %v202
    %v603 = vunpack.c.h.bf16 %v202
    %v604 = vunpack.c.l.bf16 %v203
    %v605 = vunpack.c.h.bf16 %v203
    %v606 = vunpack.c.l.bf16 %v204
    %v607 = vunpack.c.h.bf16 %v204
    %v608 = vunpack.c.l.bf16 %v205
    %v609 = vunpack.c.h.bf16 %v205
    %v610 = vunpack.c.l.bf16 %v206
    %v611 = vunpack.c.h.bf16 %v206
    %v612 = vunpack.c.l.bf16 %v207
    %v613 = vunpack.c.h.bf16 %v207
    %v614 = vunpack.c.l.bf16 %v208
    %v615 = vunpack.c.h.bf16 %v208
    %v616 = vunpack.c.l.bf16 %v209
    %v617 = vunpack.c.h.bf16 %v209
    %v618 = vunpack.c.l.bf16 %v210
    %v619 = vunpack.c.h.bf16 %v210
    %v620 = vunpack.c.l.bf16 %v211
    %v621 = vunpack.c.h.bf16 %v211
    %v622 = vunpack.c.l.bf16 %v212
    %v623 = vunpack.c.h.bf16 %v212
    %v624 = vunpack.c.l.bf16 %v213
    %v625 = vunpack.c.h.bf16 %v213
    %v626 = vunpack.c.l.bf16 %v214
    %v627 = vunpack.c.h.bf16 %v214
    %v628 = vunpack.c.l.bf16 %v215
    %v629 = vunpack.c.h.bf16 %v215
    %v630 = vunpack.c.l.bf16 %v216
    %v631 = vunpack.c.h.bf16 %v216
    %v632 = vunpack.c.l.bf16 %v217
    %v633 = vunpack.c.h.bf16 %v217
    %v634 = vunpack.c.l.bf16 %v218
    %v635 = vunpack.c.h.bf16 %v218
    %v636 = vunpack.c.l.bf16 %v219
    %v637 = vunpack.c.h.bf16 %v219
    %v638 = vunpack.c.l.bf16 %v220
    %v639 = vunpack.c.h.bf16 %v220
    %v640 = vunpack.c.l.bf16 %v221
    %v641 = vunpack.c.h.bf16 %v221
    %v642 = vunpack.c.l.bf16 %v222
    %v643 = vunpack.c.h.bf16 %v222
    %v644 = vunpack.c.l.bf16 %v223
    %v645 = vunpack.c.h.bf16 %v223
    %v646 = vunpack.c.l.bf16 %v224
    %v647 = vunpack.c.h.bf16 %v224
    %v648 = vunpack.c.l.bf16 %v225
    %v649 = vunpack.c.h.bf16 %v225
    %v650 = vunpack.c.l.bf16 %v226
    %v651 = vunpack.c.h.bf16 %v226
    %v652 = vunpack.c.l.bf16 %v227
    %v653 = vunpack.c.h.bf16 %v227
    %v654 = vunpack.c.l.bf16 %v228
    %v655 = vunpack.c.h.bf16 %v228
    %v656 = vunpack.c.l.bf16 %v229
    %v657 = vunpack.c.h.bf16 %v229
    %v658 = vunpack.c.l.bf16 %v230
    %v659 = vunpack.c.h.bf16 %v230
    %v660 = vunpack.c.l.bf16 %v231
    %v661 = vunpack.c.h.bf16 %v231
    %v662 = vunpack.c.l.bf16 %v232
    %v663 = vunpack.c.h.bf16 %v232
    %v664 = vunpack.c.l.bf16 %v233
    %v665 = vunpack.c.h.bf16 %v233
    %v666 = vunpack.c.l.bf16 %v234
    %v667 = vunpack.c.h.bf16 %v234
    %v668 = vunpack.c.l.bf16 %v235
    %v669 = vunpack.c.h.bf16 %v235
    %v670 = vunpack.c.l.bf16 %v236
    %v671 = vunpack.c.h.bf16 %v236
    %v672 = vunpack.c.l.bf16 %v237
    %v673 = vunpack.c.h.bf16 %v237
    %v674 = vunpack.c.l.bf16 %v238
    %v675 = vunpack.c.h.bf16 %v238
    %v676 = vunpack.c.l.bf16 %v239
    %v677 = vunpack.c.h.bf16 %v239
    %v678 = vunpack.c.l.bf16 %v240
    %v679 = vunpack.c.h.bf16 %v240
    %v680 = vunpack.c.l.bf16 %v241
    %v681 = vunpack.c.h.bf16 %v241
    %v682 = vunpack.c.l.bf16 %v242
    %v683 = vunpack.c.h.bf16 %v242
    %v684 = vunpack.c.l.bf16 %v243
    %v685 = vunpack.c.h.bf16 %v243
    %v686 = vunpack.c.l.bf16 %v244
    %v687 = vunpack.c.h.bf16 %v244
    %v688 = vunpack.c.l.bf16 %v245
    %v689 = vunpack.c.h.bf16 %v245
    %v690 = vunpack.c.l.bf16 %v246
    %v691 = vunpack.c.h.bf16 %v246
    %v692 = vunpack.c.l.bf16 %v247
    %v693 = vunpack.c.h.bf16 %v247
    %v694 = vunpack.c.l.bf16 %v248
    %v695 = vunpack.c.h.bf16 %v248
    %v696 = vunpack.c.l.bf16 %v249
    %v697 = vunpack.c.h.bf16 %v249
    %v698 = vunpack.c.l.bf16 %v250
    %v699 = vunpack.c.h.bf16 %v250
    %v700 = vunpack.c.l.bf16 %v251
    %v701 = vunpack.c.h.bf16 %v251
    %v702 = vunpack.c.l.bf16 %v252
    %v703 = vunpack.c.h.bf16 %v252
    %v704 = vunpack.c.l.bf16 %v253
    %v705 = vunpack.c.h.bf16 %v253
    %v706 = vunpack.c.l.bf16 %v254
    %v707 = vunpack.c.h.bf16 %v254
    %v708 = vunpack.c.l.bf16 %v255
    %v709 = vunpack.c.h.bf16 %v255
    %v710 = vunpack.c.l.bf16 %v256
    %v711 = vunpack.c.h.bf16 %v256
    %v712 = vunpack.c.l.bf16 %v257
    %v713 = vunpack.c.h.bf16 %v257
    %v714 = vunpack.c.l.bf16 %v258
    %v715 = vunpack.c.h.bf16 %v258
    %v716 = vunpack.c.l.bf16 %v259
    %v717 = vunpack.c.h.bf16 %v259
    %v718 = vunpack.c.l.bf16 %v260
    %v719 = vunpack.c.h.bf16 %v260
    %v720 = vunpack.c.l.bf16 %v261
    %v721 = vunpack.c.h.bf16 %v261
    %v722 = vunpack.c.l.bf16 %v262
    %v723 = vunpack.c.h.bf16 %v262
    %v724 = vunpack.c.l.bf16 %v263
    %v725 = vunpack.c.h.bf16 %v263
    %v726 = vunpack.c.l.bf16 %v264
    %v727 = vunpack.c.h.bf16 %v264
    %v728 = vunpack.c.l.bf16 %v265
    %v729 = vunpack.c.h.bf16 %v265
    %v730 = vunpack.c.l.bf16 %v266
    %v731 = vunpack.c.h.bf16 %v266
    %v732 = vunpack.c.l.bf16 %v267
    %v733 = vunpack.c.h.bf16 %v267
    %v734 = vunpack.c.l.bf16 %v268
    %v735 = vunpack.c.h.bf16 %v268
    %v736 = vunpack.c.l.bf16 %v269
    %v737 = vunpack.c.h.bf16 %v269
    %v738 = vunpack.c.l.bf16 %v270
    %v739 = vunpack.c.h.bf16 %v270
    %v740 = vunpack.c.l.bf16 %v271
    %v741 = vunpack.c.h.bf16 %v271
    %v742 = vunpack.c.l.bf16 %v272
    %v743 = vunpack.c.h.bf16 %v272
    %v744 = vunpack.c.l.bf16 %v273
    %v745 = vunpack.c.h.bf16 %v273
    %v746 = vunpack.c.l.bf16 %v274
    %v747 = vunpack.c.h.bf16 %v274
    %v748 = vunpack.c.l.bf16 %v275
    %v749 = vunpack.c.h.bf16 %v275
    %v750 = vunpack.c.l.bf16 %v276
    %v751 = vunpack.c.h.bf16 %v276
    %v752 = vunpack.c.l.bf16 %v277
    %v753 = vunpack.c.h.bf16 %v277
    %v754 = vunpack.c.l.bf16 %v278
    %v755 = vunpack.c.h.bf16 %v278
    %v756 = vunpack.c.l.bf16 %v279
    %v757 = vunpack.c.h.bf16 %v279
    %v758 = vunpack.c.l.bf16 %v280
    %v759 = vunpack.c.h.bf16 %v280
    %v760 = vunpack.c.l.bf16 %v281
    %v761 = vunpack.c.h.bf16 %v281
    %v762 = vunpack.c.l.bf16 %v282
    %v763 = vunpack.c.h.bf16 %v282
    %v764 = vunpack.c.l.bf16 %v283
    %v765 = vunpack.c.h.bf16 %v283
    %v766 = vunpack.c.l.bf16 %v284
    %v767 = vunpack.c.h.bf16 %v284
    %v768 = vunpack.c.l.bf16 %v285
    %v769 = vunpack.c.h.bf16 %v285
    %v770 = vunpack.c.l.bf16 %v286
    %v771 = vunpack.c.h.bf16 %v286
    %v772 = vunpack.c.l.bf16 %v287
    %v773 = vunpack.c.h.bf16 %v287
    %v774 = vunpack.c.l.bf16 %v288
    %v775 = vunpack.c.h.bf16 %v288
    %v776 = vunpack.c.l.bf16 %v289
    %v777 = vunpack.c.h.bf16 %v289
    %v778 = vunpack.c.l.bf16 %v290
    %v779 = vunpack.c.h.bf16 %v290
    %v780 = vunpack.c.l.bf16 %v291
    %v781 = vunpack.c.h.bf16 %v291
    %v782 = vunpack.c.l.bf16 %v292
    %v783 = vunpack.c.h.bf16 %v292
    %v784 = vunpack.c.l.bf16 %v293
    %v785 = vunpack.c.h.bf16 %v293
    %v786 = vunpack.c.l.bf16 %v294
    %v787 = vunpack.c.h.bf16 %v294
    %v788 = vunpack.c.l.bf16 %v295
    %v789 = vunpack.c.h.bf16 %v295
    %v790 = vunpack.c.l.bf16 %v296
    %v791 = vunpack.c.h.bf16 %v296
    %v792 = vunpack.c.l.bf16 %v297
    %v793 = vunpack.c.h.bf16 %v297
    %v794 = vunpack.c.l.bf16 %v298
    %v795 = vunpack.c.h.bf16 %v298
    %v796 = vunpack.c.l.bf16 %v299
    %v797 = vunpack.c.h.bf16 %v299
    %v798 = vunpack.c.l.bf16 %v300
    %v799 = vunpack.c.h.bf16 %v300
    %v800 = vunpack.c.l.bf16 %v301
    %v801 = vunpack.c.h.bf16 %v301
    %v802 = vunpack.c.l.bf16 %v302
    %v803 = vunpack.c.h.bf16 %v302
    %v804 = vunpack.c.l.bf16 %v303
    %v805 = vunpack.c.h.bf16 %v303
    %v806 = vunpack.c.l.bf16 %v304
    %v807 = vunpack.c.h.bf16 %v304
    %v808 = vunpack.c.l.bf16 %v305
    %v809 = vunpack.c.h.bf16 %v305
    %v810 = vunpack.c.l.bf16 %v306
    %v811 = vunpack.c.h.bf16 %v306
    %v812 = vunpack.c.l.bf16 %v307
    %v813 = vunpack.c.h.bf16 %v307
    %v814 = vunpack.c.l.bf16 %v308
    %v815 = vunpack.c.h.bf16 %v308
    %v816 = vunpack.c.l.bf16 %v309
    %v817 = vunpack.c.h.bf16 %v309
    %v818 = vunpack.c.l.bf16 %v310
    %v819 = vunpack.c.h.bf16 %v310
    %v820 = vunpack.c.l.bf16 %v311
    %v821 = vunpack.c.h.bf16 %v311
    %v822 = vunpack.c.l.bf16 %v312
    %v823 = vunpack.c.h.bf16 %v312
    %v824 = vunpack.c.l.bf16 %v313
    %v825 = vunpack.c.h.bf16 %v313
    %v826 = vld [vmem:[%s3] sm:$0x3]
    %v828 = vlaneseq
    %v829 = vshrl.u32 %v828, 7
    %v830 = vsub.s32 0, %v829
    %v831 = vrot.slane %v826, %v830
    %v832 = vlaneseq
    %v833 = vshrl.u32 %v832, 7
    %v834 = vsub.s32 1, %v833
    %v835 = vrot.slane %v826, %v834
    %v842 = vcombine.high %v54, %v54
    %v844 = vunpack.c.l.s4 1983009808
    %v845 = vunpack.c.0.s8 %v844
    %v846 = vlaneseq
    %v847 = vshrl.u32 %v846, 7
    %v848 = vsub.s32 %v845, %v847
    %v849 = vrot.slane %v54, %v848
    %v851 = vunpack.c.l.s4 1983009808
    %v852 = vunpack.c.0.s8 %v851
    %v853 = vlaneseq
    %v854 = vshrl.u32 %v853, 7
    %v855 = vsub.s32 %v852, %v854
    %v856 = vrot.slane %v842, %v855
    %v857 = vcombine.high %v849, %v849
    %v858 = vcombine.high %v856, %v856
    %v859 = vcombine.high %v55, %v55
    %v861 = vunpack.c.l.s4 1983009808
    %v862 = vunpack.c.0.s8 %v861
    %v863 = vlaneseq
    %v864 = vshrl.u32 %v863, 7
    %v865 = vsub.s32 %v862, %v864
    %v866 = vrot.slane %v55, %v865
    %v868 = vunpack.c.l.s4 1983009808
    %v869 = vunpack.c.0.s8 %v868
    %v870 = vlaneseq
    %v871 = vshrl.u32 %v870, 7
    %v872 = vsub.s32 %v869, %v871
    %v873 = vrot.slane %v859, %v872
    %v874 = vcombine.high %v866, %v866
    %v875 = vcombine.high %v873, %v873
    %v876 = vcombine.high %v56, %v56
    %v878 = vunpack.c.l.s4 1983009808
    %v879 = vunpack.c.0.s8 %v878
    %v880 = vlaneseq
    %v881 = vshrl.u32 %v880, 7
    %v882 = vsub.s32 %v879, %v881
    %v883 = vrot.slane %v56, %v882
    %v885 = vunpack.c.l.s4 1983009808
    %v886 = vunpack.c.0.s8 %v885
    %v887 = vlaneseq
    %v888 = vshrl.u32 %v887, 7
    %v889 = vsub.s32 %v886, %v888
    %v890 = vrot.slane %v876, %v889
    %v891 = vcombine.high %v883, %v883
    %v892 = vcombine.high %v890, %v890
    %v893 = vcombine.high %v57, %v57
    %v895 = vunpack.c.l.s4 1983009808
    %v896 = vunpack.c.0.s8 %v895
    %v897 = vlaneseq
    %v898 = vshrl.u32 %v897, 7
    %v899 = vsub.s32 %v896, %v898
    %v900 = vrot.slane %v57, %v899
    %v902 = vunpack.c.l.s4 1983009808
    %v903 = vunpack.c.0.s8 %v902
    %v904 = vlaneseq
    %v905 = vshrl.u32 %v904, 7
    %v906 = vsub.s32 %v903, %v905
    %v907 = vrot.slane %v893, %v906
    %v908 = vcombine.high %v900, %v900
    %v909 = vcombine.high %v907, %v907
    %926 = vmatprep.subr.mxu0 %v315
    %927 = vmatpush1.msra.mxu0 %v314
    %928 = vmatprep.subr.mxu0 %v317
    %929 = vmatpush1.msra.mxu0 %v316
    %930 = vmatprep.subr.mxu0 %v319
    %931 = vmatpush1.msra.mxu0 %v318
    %932 = vmatprep.subr.mxu0 %v321
    %933 = vmatpush1.msra.mxu0 %v320
    %934 = vmatprep.subr.mxu0 %v323
    %935 = vmatpush1.msra.mxu0 %v322
    %936 = vmatprep.subr.mxu0 %v325
    %937 = vmatpush1.msra.mxu0 %v324
    %938 = vmatprep.subr.mxu0 %v327
    %939 = vmatpush1.msra.mxu0 %v326
    %940 = vmatprep.subr.mxu0 %v329
    %941 = vmatpush1.msra.mxu0 %v328
    %942 = vmatprep.subr.mxu0 %v331
    %943 = vmatpush1.msra.mxu0 %v330
    %944 = vmatprep.subr.mxu0 %v333
    %945 = vmatpush1.msra.mxu0 %v332
    %946 = vmatprep.subr.mxu0 %v335
    %947 = vmatpush1.msra.mxu0 %v334
    %948 = vmatprep.subr.mxu0 %v337
    %949 = vmatpush1.msra.mxu0 %v336
    %950 = vmatprep.subr.mxu0 %v339
    %951 = vmatpush1.msra.mxu0 %v338
    %952 = vmatprep.subr.mxu0 %v341
    %953 = vmatpush1.msra.mxu0 %v340
    %954 = vmatprep.subr.mxu0 %v343
    %955 = vmatpush1.msra.mxu0 %v342
    %956 = vmatprep.subr.mxu0 %v345
    %957 = vmatpush1.msra.mxu0 %v344
    %958 = vmatprep.subr.mxu0 %v347
    %959 = vmatpush1.msra.mxu0 %v346
    %960 = vmatprep.subr.mxu0 %v349
    %961 = vmatpush1.msra.mxu0 %v348
    %962 = vmatprep.subr.mxu0 %v351
    %963 = vmatpush1.msra.mxu0 %v350
    %964 = vmatprep.subr.mxu0 %v353
    %965 = vmatpush1.msra.mxu0 %v352
    %966 = vmatprep.subr.mxu0 %v355
    %967 = vmatpush1.msra.mxu0 %v354
    %968 = vmatprep.subr.mxu0 %v357
    %969 = vmatpush1.msra.mxu0 %v356
    %970 = vmatprep.subr.mxu0 %v359
    %971 = vmatpush1.msra.mxu0 %v358
    %972 = vmatprep.subr.mxu0 %v361
    %973 = vmatpush1.msra.mxu0 %v360
    %974 = vmatprep.subr.mxu0 %v363
    %975 = vmatpush1.msra.mxu0 %v362
    %976 = vmatprep.subr.mxu0 %v365
    %977 = vmatpush1.msra.mxu0 %v364
    %978 = vmatprep.subr.mxu0 %v367
    %979 = vmatpush1.msra.mxu0 %v366
    %980 = vmatprep.subr.mxu0 %v369
    %981 = vmatpush1.msra.mxu0 %v368
    %982 = vmatprep.subr.mxu0 %v371
    %983 = vmatpush1.msra.mxu0 %v370
    %984 = vmatprep.subr.mxu0 %v373
    %985 = vmatpush1.msra.mxu0 %v372
    %986 = vmatprep.subr.mxu0 %v375
    %987 = vmatpush1.msra.mxu0 %v374
    %988 = vmatprep.subr.mxu0 %v377
    %989 = vmatpush1.msra.mxu0 %v376
    %990 = vmatprep.mubr.f32.mxu0 %v857
    %991 = vmatmul.mubr.f32.gmra.mrb[0].mxu0 %v849
    %v992 = vpop.f32.mrb[0].mxu0
    %v993 = vadd.f32 %v831, %v992
    %v994 = vpop.f32.mrb[0].mxu0
    %v995 = vadd.f32 %v835, %v994
    %996 = vdwg.mxu0
    %997 = vmatprep.subr.mxu0 %v379
    %998 = vmatpush1.msra.mxu0 %v378
    %999 = vmatprep.subr.mxu0 %v381
    %1000 = vmatpush1.msra.mxu0 %v380
    %1001 = vmatprep.subr.mxu0 %v383
    %1002 = vmatpush1.msra.mxu0 %v382
    %1003 = vmatprep.subr.mxu0 %v385
    %1004 = vmatpush1.msra.mxu0 %v384
    %1005 = vmatprep.subr.mxu0 %v387
    %1006 = vmatpush1.msra.mxu0 %v386
    %1007 = vmatprep.subr.mxu0 %v389
    %1008 = vmatpush1.msra.mxu0 %v388
    %1009 = vmatprep.subr.mxu0 %v391
    %1010 = vmatpush1.msra.mxu0 %v390
    %1011 = vmatprep.subr.mxu0 %v393
    %1012 = vmatpush1.msra.mxu0 %v392
    %1013 = vmatprep.subr.mxu0 %v395
    %1014 = vmatpush1.msra.mxu0 %v394
    %1015 = vmatprep.subr.mxu0 %v397
    %1016 = vmatpush1.msra.mxu0 %v396
    %1017 = vmatprep.subr.mxu0 %v399
    %1018 = vmatpush1.msra.mxu0 %v398
    %1019 = vmatprep.subr.mxu0 %v401
    %1020 = vmatpush1.msra.mxu0 %v400
    %1021 = vmatprep.subr.mxu0 %v403
    %1022 = vmatpush1.msra.mxu0 %v402
    %1023 = vmatprep.subr.mxu0 %v405
    %1024 = vmatpush1.msra.mxu0 %v404
    %1025 = vmatprep.subr.mxu0 %v407
    %1026 = vmatpush1.msra.mxu0 %v406
    %1027 = vmatprep.subr.mxu0 %v409
    %1028 = vmatpush1.msra.mxu0 %v408
    %1029 = vmatprep.subr.mxu0 %v411
    %1030 = vmatpush1.msra.mxu0 %v410
    %1031 = vmatprep.subr.mxu0 %v413
    %1032 = vmatpush1.msra.mxu0 %v412
    %1033 = vmatprep.subr.mxu0 %v415
    %1034 = vmatpush1.msra.mxu0 %v414
    %1035 = vmatprep.subr.mxu0 %v417
    %1036 = vmatpush1.msra.mxu0 %v416
    %1037 = vmatprep.subr.mxu0 %v419
    %1038 = vmatpush1.msra.mxu0 %v418
    %1039 = vmatprep.subr.mxu0 %v421
    %1040 = vmatpush1.msra.mxu0 %v420
    %1041 = vmatprep.subr.mxu0 %v423
    %1042 = vmatpush1.msra.mxu0 %v422
    %1043 = vmatprep.subr.mxu0 %v425
    %1044 = vmatpush1.msra.mxu0 %v424
    %1045 = vmatprep.subr.mxu0 %v427
    %1046 = vmatpush1.msra.mxu0 %v426
    %1047 = vmatprep.subr.mxu0 %v429
    %1048 = vmatpush1.msra.mxu0 %v428
    %1049 = vmatprep.subr.mxu0 %v431
    %1050 = vmatpush1.msra.mxu0 %v430
    %1051 = vmatprep.subr.mxu0 %v433
    %1052 = vmatpush1.msra.mxu0 %v432
    %1053 = vmatprep.subr.mxu0 %v435
    %1054 = vmatpush1.msra.mxu0 %v434
    %1055 = vmatprep.subr.mxu0 %v437
    %1056 = vmatpush1.msra.mxu0 %v436
    %1057 = vmatprep.subr.mxu0 %v439
    %1058 = vmatpush1.msra.mxu0 %v438
    %1059 = vmatprep.subr.mxu0 %v441
    %1060 = vmatpush1.msra.mxu0 %v440
    %1061 = vmatprep.mubr.f32.mxu0 %v858
    %1062 = vmatmul.mubr.f32.gmra.mrb[0].mxu0 %v856
    %v1063 = vpop.f32.mrb[0].mxu0
    %v1064 = vadd.f32 %v993, %v1063
    %v1065 = vpop.f32.mrb[0].mxu0
    %v1066 = vadd.f32 %v995, %v1065
    %1067 = vdwg.mxu0
    %1068 = vmatprep.subr.mxu0 %v443
    %1069 = vmatpush1.msra.mxu0 %v442
    %1070 = vmatprep.subr.mxu0 %v445
    %1071 = vmatpush1.msra.mxu0 %v444
    %1072 = vmatprep.subr.mxu0 %v447
    %1073 = vmatpush1.msra.mxu0 %v446
    %1074 = vmatprep.subr.mxu0 %v449
    %1075 = vmatpush1.msra.mxu0 %v448
    %1076 = vmatprep.subr.mxu0 %v451
    %1077 = vmatpush1.msra.mxu0 %v450
    %1078 = vmatprep.subr.mxu0 %v453
    %1079 = vmatpush1.msra.mxu0 %v452
    %1080 = vmatprep.subr.mxu0 %v455
    %1081 = vmatpush1.msra.mxu0 %v454
    %1082 = vmatprep.subr.mxu0 %v457
    %1083 = vmatpush1.msra.mxu0 %v456
    %1084 = vmatprep.subr.mxu0 %v459
    %1085 = vmatpush1.msra.mxu0 %v458
    %1086 = vmatprep.subr.mxu0 %v461
    %1087 = vmatpush1.msra.mxu0 %v460
    %1088 = vmatprep.subr.mxu0 %v463
    %1089 = vmatpush1.msra.mxu0 %v462
    %1090 = vmatprep.subr.mxu0 %v465
    %1091 = vmatpush1.msra.mxu0 %v464
    %1092 = vmatprep.subr.mxu0 %v467
    %1093 = vmatpush1.msra.mxu0 %v466
    %1094 = vmatprep.subr.mxu0 %v469
    %1095 = vmatpush1.msra.mxu0 %v468
    %1096 = vmatprep.subr.mxu0 %v471
    %1097 = vmatpush1.msra.mxu0 %v470
    %1098 = vmatprep.subr.mxu0 %v473
    %1099 = vmatpush1.msra.mxu0 %v472
    %1100 = vmatprep.subr.mxu0 %v475
    %1101 = vmatpush1.msra.mxu0 %v474
    %1102 = vmatprep.subr.mxu0 %v477
    %1103 = vmatpush1.msra.mxu0 %v476
    %1104 = vmatprep.subr.mxu0 %v479
    %1105 = vmatpush1.msra.mxu0 %v478
    %1106 = vmatprep.subr.mxu0 %v481
    %1107 = vmatpush1.msra.mxu0 %v480
    %1108 = vmatprep.subr.mxu0 %v483
    %1109 = vmatpush1.msra.mxu0 %v482
    %1110 = vmatprep.subr.mxu0 %v485
    %1111 = vmatpush1.msra.mxu0 %v484
    %1112 = vmatprep.subr.mxu0 %v487
    %1113 = vmatpush1.msra.mxu0 %v486
    %1114 = vmatprep.subr.mxu0 %v489
    %1115 = vmatpush1.msra.mxu0 %v488
    %1116 = vmatprep.subr.mxu0 %v491
    %1117 = vmatpush1.msra.mxu0 %v490
    %1118 = vmatprep.subr.mxu0 %v493
    %1119 = vmatpush1.msra.mxu0 %v492
    %1120 = vmatprep.subr.mxu0 %v495
    %1121 = vmatpush1.msra.mxu0 %v494
    %1122 = vmatprep.subr.mxu0 %v497
    %1123 = vmatpush1.msra.mxu0 %v496
    %1124 = vmatprep.subr.mxu0 %v499
    %1125 = vmatpush1.msra.mxu0 %v498
    %1126 = vmatprep.subr.mxu0 %v501
    %1127 = vmatpush1.msra.mxu0 %v500
    %1128 = vmatprep.subr.mxu0 %v503
    %1129 = vmatpush1.msra.mxu0 %v502
    %1130 = vmatprep.subr.mxu0 %v505
    %1131 = vmatpush1.msra.mxu0 %v504
    %1132 = vmatprep.mubr.f32.mxu0 %v874
    %1133 = vmatmul.mubr.f32.gmra.mrb[0].mxu0 %v866
    %v1134 = vpop.f32.mrb[0].mxu0
    %v1135 = vadd.f32 %v1064, %v1134
    %v1136 = vpop.f32.mrb[0].mxu0
    %v1137 = vadd.f32 %v1066, %v1136
    %1138 = vdwg.mxu0
    %1139 = vmatprep.subr.mxu0 %v507
    %1140 = vmatpush1.msra.mxu0 %v506
    %1141 = vmatprep.subr.mxu0 %v509
    %1142 = vmatpush1.msra.mxu0 %v508
    %1143 = vmatprep.subr.mxu0 %v511
    %1144 = vmatpush1.msra.mxu0 %v510
    %1145 = vmatprep.subr.mxu0 %v513
    %1146 = vmatpush1.msra.mxu0 %v512
    %1147 = vmatprep.subr.mxu0 %v515
    %1148 = vmatpush1.msra.mxu0 %v514
    %1149 = vmatprep.subr.mxu0 %v517
    %1150 = vmatpush1.msra.mxu0 %v516
    %1151 = vmatprep.subr.mxu0 %v519
    %1152 = vmatpush1.msra.mxu0 %v518
    %1153 = vmatprep.subr.mxu0 %v521
    %1154 = vmatpush1.msra.mxu0 %v520
    %1155 = vmatprep.subr.mxu0 %v523
    %1156 = vmatpush1.msra.mxu0 %v522
    %1157 = vmatprep.subr.mxu0 %v525
    %1158 = vmatpush1.msra.mxu0 %v524
    %1159 = vmatprep.subr.mxu0 %v527
    %1160 = vmatpush1.msra.mxu0 %v526
    %1161 = vmatprep.subr.mxu0 %v529
    %1162 = vmatpush1.msra.mxu0 %v528
    %1163 = vmatprep.subr.mxu0 %v531
    %1164 = vmatpush1.msra.mxu0 %v530
    %1165 = vmatprep.subr.mxu0 %v533
    %1166 = vmatpush1.msra.mxu0 %v532
    %1167 = vmatprep.subr.mxu0 %v535
    %1168 = vmatpush1.msra.mxu0 %v534
    %1169 = vmatprep.subr.mxu0 %v537
    %1170 = vmatpush1.msra.mxu0 %v536
    %1171 = vmatprep.subr.mxu0 %v539
    %1172 = vmatpush1.msra.mxu0 %v538
    %1173 = vmatprep.subr.mxu0 %v541
    %1174 = vmatpush1.msra.mxu0 %v540
    %1175 = vmatprep.subr.mxu0 %v543
    %1176 = vmatpush1.msra.mxu0 %v542
    %1177 = vmatprep.subr.mxu0 %v545
    %1178 = vmatpush1.msra.mxu0 %v544
    %1179 = vmatprep.subr.mxu0 %v547
    %1180 = vmatpush1.msra.mxu0 %v546
    %1181 = vmatprep.subr.mxu0 %v549
    %1182 = vmatpush1.msra.mxu0 %v548
    %1183 = vmatprep.subr.mxu0 %v551
    %1184 = vmatpush1.msra.mxu0 %v550
    %1185 = vmatprep.subr.mxu0 %v553
    %1186 = vmatpush1.msra.mxu0 %v552
    %1187 = vmatprep.subr.mxu0 %v555
    %1188 = vmatpush1.msra.mxu0 %v554
    %1189 = vmatprep.subr.mxu0 %v557
    %1190 = vmatpush1.msra.mxu0 %v556
    %1191 = vmatprep.subr.mxu0 %v559
    %1192 = vmatpush1.msra.mxu0 %v558
    %1193 = vmatprep.subr.mxu0 %v561
    %1194 = vmatpush1.msra.mxu0 %v560
    %1195 = vmatprep.subr.mxu0 %v563
    %1196 = vmatpush1.msra.mxu0 %v562
    %1197 = vmatprep.subr.mxu0 %v565
    %1198 = vmatpush1.msra.mxu0 %v564
    %1199 = vmatprep.subr.mxu0 %v567
    %1200 = vmatpush1.msra.mxu0 %v566
    %1201 = vmatprep.subr.mxu0 %v569
    %1202 = vmatpush1.msra.mxu0 %v568
    %1203 = vmatprep.mubr.f32.mxu0 %v875
    %1204 = vmatmul.mubr.f32.gmra.mrb[0].mxu0 %v873
    %v1205 = vpop.f32.mrb[0].mxu0
    %v1206 = vadd.f32 %v1135, %v1205
    %v1207 = vpop.f32.mrb[0].mxu0
    %v1208 = vadd.f32 %v1137, %v1207
    %1209 = vdwg.mxu0
    %1210 = vmatprep.subr.mxu0 %v571
    %1211 = vmatpush1.msra.mxu0 %v570
    %1212 = vmatprep.subr.mxu0 %v573
    %1213 = vmatpush1.msra.mxu0 %v572
    %1214 = vmatprep.subr.mxu0 %v575
    %1215 = vmatpush1.msra.mxu0 %v574
    %1216 = vmatprep.subr.mxu0 %v577
    %1217 = vmatpush1.msra.mxu0 %v576
    %1218 = vmatprep.subr.mxu0 %v579
    %1219 = vmatpush1.msra.mxu0 %v578
    %1220 = vmatprep.subr.mxu0 %v581
    %1221 = vmatpush1.msra.mxu0 %v580
    %1222 = vmatprep.subr.mxu0 %v583
    %1223 = vmatpush1.msra.mxu0 %v582
    %1224 = vmatprep.subr.mxu0 %v585
    %1225 = vmatpush1.msra.mxu0 %v584
    %1226 = vmatprep.subr.mxu0 %v587
    %1227 = vmatpush1.msra.mxu0 %v586
    %1228 = vmatprep.subr.mxu0 %v589
    %1229 = vmatpush1.msra.mxu0 %v588
    %1230 = vmatprep.subr.mxu0 %v591
    %1231 = vmatpush1.msra.mxu0 %v590
    %1232 = vmatprep.subr.mxu0 %v593
    %1233 = vmatpush1.msra.mxu0 %v592
    %1234 = vmatprep.subr.mxu0 %v595
    %1235 = vmatpush1.msra.mxu0 %v594
    %1236 = vmatprep.subr.mxu0 %v597
    %1237 = vmatpush1.msra.mxu0 %v596
    %1238 = vmatprep.subr.mxu0 %v599
    %1239 = vmatpush1.msra.mxu0 %v598
    %1240 = vmatprep.subr.mxu0 %v601
    %1241 = vmatpush1.msra.mxu0 %v600
    %1242 = vmatprep.subr.mxu0 %v603
    %1243 = vmatpush1.msra.mxu0 %v602
    %1244 = vmatprep.subr.mxu0 %v605
    %1245 = vmatpush1.msra.mxu0 %v604
    %1246 = vmatprep.subr.mxu0 %v607
    %1247 = vmatpush1.msra.mxu0 %v606
    %1248 = vmatprep.subr.mxu0 %v609
    %1249 = vmatpush1.msra.mxu0 %v608
    %1250 = vmatprep.subr.mxu0 %v611
    %1251 = vmatpush1.msra.mxu0 %v610
    %1252 = vmatprep.subr.mxu0 %v613
    %1253 = vmatpush1.msra.mxu0 %v612
    %1254 = vmatprep.subr.mxu0 %v615
    %1255 = vmatpush1.msra.mxu0 %v614
    %1256 = vmatprep.subr.mxu0 %v617
    %1257 = vmatpush1.msra.mxu0 %v616
    %1258 = vmatprep.subr.mxu0 %v619
    %1259 = vmatpush1.msra.mxu0 %v618
    %1260 = vmatprep.subr.mxu0 %v621
    %1261 = vmatpush1.msra.mxu0 %v620
    %1262 = vmatprep.subr.mxu0 %v623
    %1263 = vmatpush1.msra.mxu0 %v622
    %1264 = vmatprep.subr.mxu0 %v625
    %1265 = vmatpush1.msra.mxu0 %v624
    %1266 = vmatprep.subr.mxu0 %v627
    %1267 = vmatpush1.msra.mxu0 %v626
    %1268 = vmatprep.subr.mxu0 %v629
    %1269 = vmatpush1.msra.mxu0 %v628
    %1270 = vmatprep.subr.mxu0 %v631
    %1271 = vmatpush1.msra.mxu0 %v630
    %1272 = vmatprep.subr.mxu0 %v633
    %1273 = vmatpush1.msra.mxu0 %v632
    %1274 = vmatprep.mubr.f32.mxu0 %v891
    %1275 = vmatmul.mubr.f32.gmra.mrb[0].mxu0 %v883
    %v1276 = vpop.f32.mrb[0].mxu0
    %v1277 = vadd.f32 %v1206, %v1276
    %v1278 = vpop.f32.mrb[0].mxu0
    %v1279 = vadd.f32 %v1208, %v1278
    %1280 = vdwg.mxu0
    %1281 = vmatprep.subr.mxu0 %v635
    %1282 = vmatpush1.msra.mxu0 %v634
    %1283 = vmatprep.subr.mxu0 %v637
    %1284 = vmatpush1.msra.mxu0 %v636
    %1285 = vmatprep.subr.mxu0 %v639
    %1286 = vmatpush1.msra.mxu0 %v638
    %1287 = vmatprep.subr.mxu0 %v641
    %1288 = vmatpush1.msra.mxu0 %v640
    %1289 = vmatprep.subr.mxu0 %v643
    %1290 = vmatpush1.msra.mxu0 %v642
    %1291 = vmatprep.subr.mxu0 %v645
    %1292 = vmatpush1.msra.mxu0 %v644
    %1293 = vmatprep.subr.mxu0 %v647
    %1294 = vmatpush1.msra.mxu0 %v646
    %1295 = vmatprep.subr.mxu0 %v649
    %1296 = vmatpush1.msra.mxu0 %v648
    %1297 = vmatprep.subr.mxu0 %v651
    %1298 = vmatpush1.msra.mxu0 %v650
    %1299 = vmatprep.subr.mxu0 %v653
    %1300 = vmatpush1.msra.mxu0 %v652
    %1301 = vmatprep.subr.mxu0 %v655
    %1302 = vmatpush1.msra.mxu0 %v654
    %1303 = vmatprep.subr.mxu0 %v657
    %1304 = vmatpush1.msra.mxu0 %v656
    %1305 = vmatprep.subr.mxu0 %v659
    %1306 = vmatpush1.msra.mxu0 %v658
    %1307 = vmatprep.subr.mxu0 %v661
    %1308 = vmatpush1.msra.mxu0 %v660
    %1309 = vmatprep.subr.mxu0 %v663
    %1310 = vmatpush1.msra.mxu0 %v662
    %1311 = vmatprep.subr.mxu0 %v665
    %1312 = vmatpush1.msra.mxu0 %v664
    %1313 = vmatprep.subr.mxu0 %v667
    %1314 = vmatpush1.msra.mxu0 %v666
    %1315 = vmatprep.subr.mxu0 %v669
    %1316 = vmatpush1.msra.mxu0 %v668
    %1317 = vmatprep.subr.mxu0 %v671
    %1318 = vmatpush1.msra.mxu0 %v670
    %1319 = vmatprep.subr.mxu0 %v673
    %1320 = vmatpush1.msra.mxu0 %v672
    %1321 = vmatprep.subr.mxu0 %v675
    %1322 = vmatpush1.msra.mxu0 %v674
    %1323 = vmatprep.subr.mxu0 %v677
    %1324 = vmatpush1.msra.mxu0 %v676
    %1325 = vmatprep.subr.mxu0 %v679
    %1326 = vmatpush1.msra.mxu0 %v678
    %1327 = vmatprep.subr.mxu0 %v681
    %1328 = vmatpush1.msra.mxu0 %v680
    %1329 = vmatprep.subr.mxu0 %v683
    %1330 = vmatpush1.msra.mxu0 %v682
    %1331 = vmatprep.subr.mxu0 %v685
    %1332 = vmatpush1.msra.mxu0 %v684
    %1333 = vmatprep.subr.mxu0 %v687
    %1334 = vmatpush1.msra.mxu0 %v686
    %1335 = vmatprep.subr.mxu0 %v689
    %1336 = vmatpush1.msra.mxu0 %v688
    %1337 = vmatprep.subr.mxu0 %v691
    %1338 = vmatpush1.msra.mxu0 %v690
    %1339 = vmatprep.subr.mxu0 %v693
    %1340 = vmatpush1.msra.mxu0 %v692
    %1341 = vmatprep.subr.mxu0 %v695
    %1342 = vmatpush1.msra.mxu0 %v694
    %1343 = vmatprep.subr.mxu0 %v697
    %1344 = vmatpush1.msra.mxu0 %v696
    %1345 = vmatprep.mubr.f32.mxu0 %v892
    %1346 = vmatmul.mubr.f32.gmra.mrb[0].mxu0 %v890
    %v1347 = vpop.f32.mrb[0].mxu0
    %v1348 = vadd.f32 %v1277, %v1347
    %v1349 = vpop.f32.mrb[0].mxu0
    %v1350 = vadd.f32 %v1279, %v1349
    %1351 = vdwg.mxu0
    %1352 = vmatprep.subr.mxu0 %v699
    %1353 = vmatpush1.msra.mxu0 %v698
    %1354 = vmatprep.subr.mxu0 %v701
    %1355 = vmatpush1.msra.mxu0 %v700
    %1356 = vmatprep.subr.mxu0 %v703
    %1357 = vmatpush1.msra.mxu0 %v702
    %1358 = vmatprep.subr.mxu0 %v705
    %1359 = vmatpush1.msra.mxu0 %v704
    %1360 = vmatprep.subr.mxu0 %v707
    %1361 = vmatpush1.msra.mxu0 %v706
    %1362 = vmatprep.subr.mxu0 %v709
    %1363 = vmatpush1.msra.mxu0 %v708
    %1364 = vmatprep.subr.mxu0 %v711
    %1365 = vmatpush1.msra.mxu0 %v710
    %1366 = vmatprep.subr.mxu0 %v713
    %1367 = vmatpush1.msra.mxu0 %v712
    %1368 = vmatprep.subr.mxu0 %v715
    %1369 = vmatpush1.msra.mxu0 %v714
    %1370 = vmatprep.subr.mxu0 %v717
    %1371 = vmatpush1.msra.mxu0 %v716
    %1372 = vmatprep.subr.mxu0 %v719
    %1373 = vmatpush1.msra.mxu0 %v718
    %1374 = vmatprep.subr.mxu0 %v721
    %1375 = vmatpush1.msra.mxu0 %v720
    %1376 = vmatprep.subr.mxu0 %v723
    %1377 = vmatpush1.msra.mxu0 %v722
    %1378 = vmatprep.subr.mxu0 %v725
    %1379 = vmatpush1.msra.mxu0 %v724
    %1380 = vmatprep.subr.mxu0 %v727
    %1381 = vmatpush1.msra.mxu0 %v726
    %1382 = vmatprep.subr.mxu0 %v729
    %1383 = vmatpush1.msra.mxu0 %v728
    %1384 = vmatprep.subr.mxu0 %v731
    %1385 = vmatpush1.msra.mxu0 %v730
    %1386 = vmatprep.subr.mxu0 %v733
    %1387 = vmatpush1.msra.mxu0 %v732
    %1388 = vmatprep.subr.mxu0 %v735
    %1389 = vmatpush1.msra.mxu0 %v734
    %1390 = vmatprep.subr.mxu0 %v737
    %1391 = vmatpush1.msra.mxu0 %v736
    %1392 = vmatprep.subr.mxu0 %v739
    %1393 = vmatpush1.msra.mxu0 %v738
    %1394 = vmatprep.subr.mxu0 %v741
    %1395 = vmatpush1.msra.mxu0 %v740
    %1396 = vmatprep.subr.mxu0 %v743
    %1397 = vmatpush1.msra.mxu0 %v742
    %1398 = vmatprep.subr.mxu0 %v745
    %1399 = vmatpush1.msra.mxu0 %v744
    %1400 = vmatprep.subr.mxu0 %v747
    %1401 = vmatpush1.msra.mxu0 %v746
    %1402 = vmatprep.subr.mxu0 %v749
    %1403 = vmatpush1.msra.mxu0 %v748
    %1404 = vmatprep.subr.mxu0 %v751
    %1405 = vmatpush1.msra.mxu0 %v750
    %1406 = vmatprep.subr.mxu0 %v753
    %1407 = vmatpush1.msra.mxu0 %v752
    %1408 = vmatprep.subr.mxu0 %v755
    %1409 = vmatpush1.msra.mxu0 %v754
    %1410 = vmatprep.subr.mxu0 %v757
    %1411 = vmatpush1.msra.mxu0 %v756
    %1412 = vmatprep.subr.mxu0 %v759
    %1413 = vmatpush1.msra.mxu0 %v758
    %1414 = vmatprep.subr.mxu0 %v761
    %1415 = vmatpush1.msra.mxu0 %v760
    %1416 = vmatprep.mubr.f32.mxu0 %v908
    %1417 = vmatmul.mubr.f32.gmra.mrb[0].mxu0 %v900
    %v1418 = vpop.f32.mrb[0].mxu0
    %v1419 = vadd.f32 %v1348, %v1418
    %v1420 = vpop.f32.mrb[0].mxu0
    %v1421 = vadd.f32 %v1350, %v1420
    %1422 = vdwg.mxu0
    %1423 = vmatprep.subr.mxu0 %v763
    %1424 = vmatpush1.msra.mxu0 %v762
    %1425 = vmatprep.subr.mxu0 %v765
    %1426 = vmatpush1.msra.mxu0 %v764
    %1427 = vmatprep.subr.mxu0 %v767
    %1428 = vmatpush1.msra.mxu0 %v766
    %1429 = vmatprep.subr.mxu0 %v769
    %1430 = vmatpush1.msra.mxu0 %v768
    %1431 = vmatprep.subr.mxu0 %v771
    %1432 = vmatpush1.msra.mxu0 %v770
    %1433 = vmatprep.subr.mxu0 %v773
    %1434 = vmatpush1.msra.mxu0 %v772
    %1435 = vmatprep.subr.mxu0 %v775
    %1436 = vmatpush1.msra.mxu0 %v774
    %1437 = vmatprep.subr.mxu0 %v777
    %1438 = vmatpush1.msra.mxu0 %v776
    %1439 = vmatprep.subr.mxu0 %v779
    %1440 = vmatpush1.msra.mxu0 %v778
    %1441 = vmatprep.subr.mxu0 %v781
    %1442 = vmatpush1.msra.mxu0 %v780
    %1443 = vmatprep.subr.mxu0 %v783
    %1444 = vmatpush1.msra.mxu0 %v782
    %1445 = vmatprep.subr.mxu0 %v785
    %1446 = vmatpush1.msra.mxu0 %v784
    %1447 = vmatprep.subr.mxu0 %v787
    %1448 = vmatpush1.msra.mxu0 %v786
    %1449 = vmatprep.subr.mxu0 %v789
    %1450 = vmatpush1.msra.mxu0 %v788
    %1451 = vmatprep.subr.mxu0 %v791
    %1452 = vmatpush1.msra.mxu0 %v790
    %1453 = vmatprep.subr.mxu0 %v793
    %1454 = vmatpush1.msra.mxu0 %v792
    %1455 = vmatprep.subr.mxu0 %v795
    %1456 = vmatpush1.msra.mxu0 %v794
    %1457 = vmatprep.subr.mxu0 %v797
    %1458 = vmatpush1.msra.mxu0 %v796
    %1459 = vmatprep.subr.mxu0 %v799
    %1460 = vmatpush1.msra.mxu0 %v798
    %1461 = vmatprep.subr.mxu0 %v801
    %1462 = vmatpush1.msra.mxu0 %v800
    %1463 = vmatprep.subr.mxu0 %v803
    %1464 = vmatpush1.msra.mxu0 %v802
    %1465 = vmatprep.subr.mxu0 %v805
    %1466 = vmatpush1.msra.mxu0 %v804
    %1467 = vmatprep.subr.mxu0 %v807
    %1468 = vmatpush1.msra.mxu0 %v806
    %1469 = vmatprep.subr.mxu0 %v809
    %1470 = vmatpush1.msra.mxu0 %v808
    %1471 = vmatprep.subr.mxu0 %v811
    %1472 = vmatpush1.msra.mxu0 %v810
    %1473 = vmatprep.subr.mxu0 %v813
    %1474 = vmatpush1.msra.mxu0 %v812
    %1475 = vmatprep.subr.mxu0 %v815
    %1476 = vmatpush1.msra.mxu0 %v814
    %1477 = vmatprep.subr.mxu0 %v817
    %1478 = vmatpush1.msra.mxu0 %v816
    %1479 = vmatprep.subr.mxu0 %v819
    %1480 = vmatpush1.msra.mxu0 %v818
    %1481 = vmatprep.subr.mxu0 %v821
    %1482 = vmatpush1.msra.mxu0 %v820
    %1483 = vmatprep.subr.mxu0 %v823
    %1484 = vmatpush1.msra.mxu0 %v822
    %1485 = vmatprep.subr.mxu0 %v825
    %1486 = vmatpush1.msra.mxu0 %v824
    %1487 = vmatprep.mubr.f32.mxu0 %v909
    %1488 = vmatmul.mubr.f32.gmra.mrb[0].mxu0 %v907
    %v1489 = vpop.f32.mrb[0].mxu0
    %v1490 = vadd.f32 %v1419, %v1489
    %v1491 = vpop.f32.mrb[0].mxu0
    %v1492 = vadd.f32 %v1421, %v1491
    %1493 = vdwg.mxu0
    %v1494 = vmax.f32 %v1490, 0.0
    %v1495 = vmax.f32 %v1492, 0.0
    %v1496 = vld [vmem:[%s6] sm:$0xf]
    %v1497 = vld [vmem:[%s6 + $0x4] sm:$0xf]
    %v1498 = vld [vmem:[%s6 + $0x8] sm:$0xf]
    %v1499 = vld [vmem:[%s6 + $0xc] sm:$0xf]
    %v1500 = vld [vmem:[%s6 + $0x10] sm:$0xf]
    %v1501 = vld [vmem:[%s6 + $0x14] sm:$0xf]
    %v1502 = vld [vmem:[%s6 + $0x18] sm:$0xf]
    %v1503 = vld [vmem:[%s6 + $0x1c] sm:$0xf]
    %v1504 = vld [vmem:[%s6 + $0x20] sm:$0xf]
    %v1505 = vld [vmem:[%s6 + $0x24] sm:$0xf]
    %v1506 = vld [vmem:[%s6 + $0x28] sm:$0xf]
    %v1507 = vld [vmem:[%s6 + $0x2c] sm:$0xf]
    %v1508 = vld [vmem:[%s6 + $0x30] sm:$0xf]
    %v1509 = vld [vmem:[%s6 + $0x34] sm:$0xf]
    %v1510 = vld [vmem:[%s6 + $0x38] sm:$0xf]
    %v1511 = vld [vmem:[%s6 + $0x3c] sm:$0xf]
    %v1512 = vld [vmem:[%s6 + $0x40] sm:$0xf]
    %v1513 = vld [vmem:[%s6 + $0x44] sm:$0xf]
    %v1514 = vld [vmem:[%s6 + $0x48] sm:$0xf]
    %v1515 = vld [vmem:[%s6 + $0x4c] sm:$0xf]
    %v1516 = vld [vmem:[%s6 + $0x50] sm:$0xf]
    %v1517 = vld [vmem:[%s6 + $0x54] sm:$0xf]
    %v1518 = vld [vmem:[%s6 + $0x58] sm:$0xf]
    %v1519 = vld [vmem:[%s6 + $0x5c] sm:$0xf]
    %v1520 = vld [vmem:[%s6 + $0x60] sm:$0xf]
    %v1521 = vld [vmem:[%s6 + $0x64] sm:$0xf]
    %v1522 = vld [vmem:[%s6 + $0x68] sm:$0xf]
    %v1523 = vld [vmem:[%s6 + $0x6c] sm:$0xf]
    %v1524 = vld [vmem:[%s6 + $0x70] sm:$0xf]
    %v1525 = vld [vmem:[%s6 + $0x74] sm:$0xf]
    %v1526 = vld [vmem:[%s6 + $0x78] sm:$0xf]
    %v1527 = vld [vmem:[%s6 + $0x7c] sm:$0xf]
    %v1528 = vunpack.c.l.bf16 %v1496
    %v1529 = vunpack.c.l.bf16 %v1497
    %v1530 = vunpack.c.l.bf16 %v1498
    %v1531 = vunpack.c.l.bf16 %v1499
    %v1532 = vunpack.c.l.bf16 %v1500
    %v1533 = vunpack.c.l.bf16 %v1501
    %v1534 = vunpack.c.l.bf16 %v1502
    %v1535 = vunpack.c.l.bf16 %v1503
    %v1536 = vunpack.c.l.bf16 %v1504
    %v1537 = vunpack.c.l.bf16 %v1505
    %v1538 = vunpack.c.l.bf16 %v1506
    %v1539 = vunpack.c.l.bf16 %v1507
    %v1540 = vunpack.c.l.bf16 %v1508
    %v1541 = vunpack.c.l.bf16 %v1509
    %v1542 = vunpack.c.l.bf16 %v1510
    %v1543 = vunpack.c.l.bf16 %v1511
    %v1544 = vunpack.c.l.bf16 %v1512
    %v1545 = vunpack.c.l.bf16 %v1513
    %v1546 = vunpack.c.l.bf16 %v1514
    %v1547 = vunpack.c.l.bf16 %v1515
    %v1548 = vunpack.c.l.bf16 %v1516
    %v1549 = vunpack.c.l.bf16 %v1517
    %v1550 = vunpack.c.l.bf16 %v1518
    %v1551 = vunpack.c.l.bf16 %v1519
    %v1552 = vunpack.c.l.bf16 %v1520
    %v1553 = vunpack.c.l.bf16 %v1521
    %v1554 = vunpack.c.l.bf16 %v1522
    %v1555 = vunpack.c.l.bf16 %v1523
    %v1556 = vunpack.c.l.bf16 %v1524
    %v1557 = vunpack.c.l.bf16 %v1525
    %v1558 = vunpack.c.l.bf16 %v1526
    %v1559 = vunpack.c.l.bf16 %v1527
    %v1560 = vld [vmem:[%s7] sm:$0x1]
    %v1562 = vlaneseq
    %v1563 = vshrl.u32 %v1562, 7
    %v1564 = vsub.s32 0, %v1563
    %v1565 = vrot.slane %v1560, %v1564
    %1567 = vmatprep.subr.mxu0 0.0
    %1568 = vmatpush1.msra.mxu0 %v1528
    %1569 = vmatprep.subr.mxu0 0.0
    %1570 = vmatpush1.msra.mxu0 %v1529
    %1571 = vmatprep.subr.mxu0 0.0
    %1572 = vmatpush1.msra.mxu0 %v1530
    %1573 = vmatprep.subr.mxu0 0.0
    %1574 = vmatpush1.msra.mxu0 %v1531
    %1575 = vmatprep.subr.mxu0 0.0
    %1576 = vmatpush1.msra.mxu0 %v1532
    %1577 = vmatprep.subr.mxu0 0.0
    %1578 = vmatpush1.msra.mxu0 %v1533
    %1579 = vmatprep.subr.mxu0 0.0
    %1580 = vmatpush1.msra.mxu0 %v1534
    %1581 = vmatprep.subr.mxu0 0.0
    %1582 = vmatpush1.msra.mxu0 %v1535
    %1583 = vmatprep.subr.mxu0 0.0
    %1584 = vmatpush1.msra.mxu0 %v1536
    %1585 = vmatprep.subr.mxu0 0.0
    %1586 = vmatpush1.msra.mxu0 %v1537
    %1587 = vmatprep.subr.mxu0 0.0
    %1588 = vmatpush1.msra.mxu0 %v1538
    %1589 = vmatprep.subr.mxu0 0.0
    %1590 = vmatpush1.msra.mxu0 %v1539
    %1591 = vmatprep.subr.mxu0 0.0
    %1592 = vmatpush1.msra.mxu0 %v1540
    %1593 = vmatprep.subr.mxu0 0.0
    %1594 = vmatpush1.msra.mxu0 %v1541
    %1595 = vmatprep.subr.mxu0 0.0
    %1596 = vmatpush1.msra.mxu0 %v1542
    %1597 = vmatprep.subr.mxu0 0.0
    %1598 = vmatpush1.msra.mxu0 %v1543
    %1599 = vmatprep.subr.mxu0 0.0
    %1600 = vmatpush1.msra.mxu0 %v1544
    %1601 = vmatprep.subr.mxu0 0.0
    %1602 = vmatpush1.msra.mxu0 %v1545
    %1603 = vmatprep.subr.mxu0 0.0
    %1604 = vmatpush1.msra.mxu0 %v1546
    %1605 = vmatprep.subr.mxu0 0.0
    %1606 = vmatpush1.msra.mxu0 %v1547
    %1607 = vmatprep.subr.mxu0 0.0
    %1608 = vmatpush1.msra.mxu0 %v1548
    %1609 = vmatprep.subr.mxu0 0.0
    %1610 = vmatpush1.msra.mxu0 %v1549
    %1611 = vmatprep.subr.mxu0 0.0
    %1612 = vmatpush1.msra.mxu0 %v1550
    %1613 = vmatprep.subr.mxu0 0.0
    %1614 = vmatpush1.msra.mxu0 %v1551
    %1615 = vmatprep.subr.mxu0 0.0
    %1616 = vmatpush1.msra.mxu0 %v1552
    %1617 = vmatprep.subr.mxu0 0.0
    %1618 = vmatpush1.msra.mxu0 %v1553
    %1619 = vmatprep.subr.mxu0 0.0
    %1620 = vmatpush1.msra.mxu0 %v1554
    %1621 = vmatprep.subr.mxu0 0.0
    %1622 = vmatpush1.msra.mxu0 %v1555
    %1623 = vmatprep.subr.mxu0 0.0
    %1624 = vmatpush1.msra.mxu0 %v1556
    %1625 = vmatprep.subr.mxu0 0.0
    %1626 = vmatpush1.msra.mxu0 %v1557
    %1627 = vmatprep.subr.mxu0 0.0
    %1628 = vmatpush1.msra.mxu0 %v1558
    %1629 = vmatprep.subr.mxu0 0.0
    %1630 = vmatpush1.msra.mxu0 %v1559
    %1631 = vmatprep.mubr.f32.mxu0 %v1495
    %1632 = vmatmul.mubr.f32.gmra.mrb[0].mxu0 %v1494
    %v1633 = vpop.f32.mrb[0].mxu0
    %v1634 = vadd.f32 %v1565, %v1633
    %v1635 = vpop.f32.mrb[0].mxu0
    %1636 = vdwg.mxu0
    %1637 = vst [vmem:[#allocation6] sm:$0x3] %v1634
    %v1638 = vld [vmem:[%s1] sm:$0xff]
    %v1639 = vld [vmem:[%s1 + $0x8] sm:$0xff]
    %v1640 = vld [vmem:[%s1 + $0x10] sm:$0xff]
    %v1641 = vld [vmem:[%s1 + $0x18] sm:$0xff]
    %v1642 = vld [vmem:[#allocation3] sm:$0xff]
    %v1643 = vld [vmem:[#allocation3 + $0x8] sm:$0xff]
    %v1644 = vld [vmem:[#allocation3 + $0x10] sm:$0xff]
    %v1645 = vld [vmem:[#allocation3 + $0x18] sm:$0xff]
    %v1646 = vld [vmem:[#allocation3 + $0x20] sm:$0xff]
    %v1647 = vld [vmem:[#allocation3 + $0x28] sm:$0xff]
    %v1648 = vld [vmem:[#allocation3 + $0x30] sm:$0xff]
    %v1649 = vld [vmem:[#allocation3 + $0x38] sm:$0xff]
    %v1650 = vld [vmem:[#allocation3 + $0x40] sm:$0xff]
    %v1651 = vld [vmem:[#allocation3 + $0x48] sm:$0xff]
    %v1652 = vld [vmem:[#allocation3 + $0x50] sm:$0xff]
    %v1653 = vld [vmem:[#allocation3 + $0x58] sm:$0xff]
    %v1654 = vld [vmem:[#allocation3 + $0x60] sm:$0xff]
    %v1655 = vld [vmem:[#allocation3 + $0x68] sm:$0xff]
    %v1656 = vld [vmem:[#allocation3 + $0x70] sm:$0xff]
    %v1657 = vld [vmem:[#allocation3 + $0x78] sm:$0xff]
    %v1658 = vld [vmem:[#allocation3 + $0x80] sm:$0xff]
    %v1659 = vld [vmem:[#allocation3 + $0x88] sm:$0xff]
    %v1660 = vld [vmem:[#allocation3 + $0x90] sm:$0xff]
    %v1661 = vld [vmem:[#allocation3 + $0x98] sm:$0xff]
    %v1662 = vld [vmem:[#allocation3 + $0xa0] sm:$0xff]
    %v1663 = vld [vmem:[#allocation3 + $0xa8] sm:$0xff]
    %v1664 = vld [vmem:[#allocation3 + $0xb0] sm:$0xff]
    %v1665 = vld [vmem:[#allocation3 + $0xb8] sm:$0xff]
    %v1666 = vld [vmem:[#allocation3 + $0xc0] sm:$0xff]
    %v1667 = vld [vmem:[#allocation3 + $0xc8] sm:$0xff]
    %v1668 = vld [vmem:[#allocation3 + $0xd0] sm:$0xff]
    %v1669 = vld [vmem:[#allocation3 + $0xd8] sm:$0xff]
    %v1670 = vld [vmem:[#allocation3 + $0xe0] sm:$0xff]
    %v1671 = vld [vmem:[#allocation3 + $0xe8] sm:$0xff]
    %v1672 = vld [vmem:[#allocation3 + $0xf0] sm:$0xff]
    %v1673 = vld [vmem:[#allocation3 + $0xf8] sm:$0xff]
    %v1674 = vld [vmem:[#allocation3 + $0x100] sm:$0xff]
    %v1675 = vld [vmem:[#allocation3 + $0x108] sm:$0xff]
    %v1676 = vld [vmem:[#allocation3 + $0x110] sm:$0xff]
    %v1677 = vld [vmem:[#allocation3 + $0x118] sm:$0xff]
    %v1678 = vld [vmem:[#allocation3 + $0x120] sm:$0xff]
    %v1679 = vld [vmem:[#allocation3 + $0x128] sm:$0xff]
    %v1680 = vld [vmem:[#allocation3 + $0x130] sm:$0xff]
    %v1681 = vld [vmem:[#allocation3 + $0x138] sm:$0xff]
    %v1682 = vld [vmem:[#allocation3 + $0x140] sm:$0xff]
    %v1683 = vld [vmem:[#allocation3 + $0x148] sm:$0xff]
    %v1684 = vld [vmem:[#allocation3 + $0x150] sm:$0xff]
    %v1685 = vld [vmem:[#allocation3 + $0x158] sm:$0xff]
    %v1686 = vld [vmem:[#allocation3 + $0x160] sm:$0xff]
    %v1687 = vld [vmem:[#allocation3 + $0x168] sm:$0xff]
    %v1688 = vld [vmem:[#allocation3 + $0x170] sm:$0xff]
    %v1689 = vld [vmem:[#allocation3 + $0x178] sm:$0xff]
    %v1690 = vld [vmem:[#allocation3 + $0x180] sm:$0xff]
    %v1691 = vld [vmem:[#allocation3 + $0x188] sm:$0xff]
    %v1692 = vld [vmem:[#allocation3 + $0x190] sm:$0xff]
    %v1693 = vld [vmem:[#allocation3 + $0x198] sm:$0xff]
    %v1694 = vld [vmem:[#allocation3 + $0x1a0] sm:$0xff]
    %v1695 = vld [vmem:[#allocation3 + $0x1a8] sm:$0xff]
    %v1696 = vld [vmem:[#allocation3 + $0x1b0] sm:$0xff]
    %v1697 = vld [vmem:[#allocation3 + $0x1b8] sm:$0xff]
    %v1698 = vld [vmem:[#allocation3 + $0x1c0] sm:$0xff]
    %v1699 = vld [vmem:[#allocation3 + $0x1c8] sm:$0xff]
    %v1700 = vld [vmem:[#allocation3 + $0x1d0] sm:$0xff]
    %v1701 = vld [vmem:[#allocation3 + $0x1d8] sm:$0xff]
    %v1702 = vld [vmem:[#allocation3 + $0x1e0] sm:$0xff]
    %v1703 = vld [vmem:[#allocation3 + $0x1e8] sm:$0xff]
    %v1704 = vld [vmem:[#allocation3 + $0x1f0] sm:$0xff]
    %v1705 = vld [vmem:[#allocation3 + $0x1f8] sm:$0xff]
    %v1706 = vld [vmem:[#allocation3 + $0x200] sm:$0xff]
    %v1707 = vld [vmem:[#allocation3 + $0x208] sm:$0xff]
    %v1708 = vld [vmem:[#allocation3 + $0x210] sm:$0xff]
    %v1709 = vld [vmem:[#allocation3 + $0x218] sm:$0xff]
    %v1710 = vld [vmem:[#allocation3 + $0x220] sm:$0xff]
    %v1711 = vld [vmem:[#allocation3 + $0x228] sm:$0xff]
    %v1712 = vld [vmem:[#allocation3 + $0x230] sm:$0xff]
    %v1713 = vld [vmem:[#allocation3 + $0x238] sm:$0xff]
    %v1714 = vld [vmem:[#allocation3 + $0x240] sm:$0xff]
    %v1715 = vld [vmem:[#allocation3 + $0x248] sm:$0xff]
    %v1716 = vld [vmem:[#allocation3 + $0x250] sm:$0xff]
    %v1717 = vld [vmem:[#allocation3 + $0x258] sm:$0xff]
    %v1718 = vld [vmem:[#allocation3 + $0x260] sm:$0xff]
    %v1719 = vld [vmem:[#allocation3 + $0x268] sm:$0xff]
    %v1720 = vld [vmem:[#allocation3 + $0x270] sm:$0xff]
    %v1721 = vld [vmem:[#allocation3 + $0x278] sm:$0xff]
    %v1722 = vld [vmem:[#allocation3 + $0x280] sm:$0xff]
    %v1723 = vld [vmem:[#allocation3 + $0x288] sm:$0xff]
    %v1724 = vld [vmem:[#allocation3 + $0x290] sm:$0xff]
    %v1725 = vld [vmem:[#allocation3 + $0x298] sm:$0xff]
    %v1726 = vld [vmem:[#allocation3 + $0x2a0] sm:$0xff]
    %v1727 = vld [vmem:[#allocation3 + $0x2a8] sm:$0xff]
    %v1728 = vld [vmem:[#allocation3 + $0x2b0] sm:$0xff]
    %v1729 = vld [vmem:[#allocation3 + $0x2b8] sm:$0xff]
    %v1730 = vld [vmem:[#allocation3 + $0x2c0] sm:$0xff]
    %v1731 = vld [vmem:[#allocation3 + $0x2c8] sm:$0xff]
    %v1732 = vld [vmem:[#allocation3 + $0x2d0] sm:$0xff]
    %v1733 = vld [vmem:[#allocation3 + $0x2d8] sm:$0xff]
    %v1734 = vld [vmem:[#allocation3 + $0x2e0] sm:$0xff]
    %v1735 = vld [vmem:[#allocation3 + $0x2e8] sm:$0xff]
    %v1736 = vld [vmem:[#allocation3 + $0x2f0] sm:$0xff]
    %v1737 = vld [vmem:[#allocation3 + $0x2f8] sm:$0xff]
    %v1738 = vld [vmem:[#allocation3 + $0x300] sm:$0xff]
    %v1739 = vld [vmem:[#allocation3 + $0x308] sm:$0xff]
    %v1740 = vld [vmem:[#allocation3 + $0x310] sm:$0xff]
    %v1741 = vld [vmem:[#allocation3 + $0x318] sm:$0xff]
    %v1742 = vld [vmem:[#allocation3 + $0x320] sm:$0xff]
    %v1743 = vld [vmem:[#allocation3 + $0x328] sm:$0xff]
    %v1744 = vld [vmem:[#allocation3 + $0x330] sm:$0xff]
    %v1745 = vld [vmem:[#allocation3 + $0x338] sm:$0xff]
    %v1746 = vld [vmem:[#allocation3 + $0x340] sm:$0xff]
    %v1747 = vld [vmem:[#allocation3 + $0x348] sm:$0xff]
    %v1748 = vld [vmem:[#allocation3 + $0x350] sm:$0xff]
    %v1749 = vld [vmem:[#allocation3 + $0x358] sm:$0xff]
    %v1750 = vld [vmem:[#allocation3 + $0x360] sm:$0xff]
    %v1751 = vld [vmem:[#allocation3 + $0x368] sm:$0xff]
    %v1752 = vld [vmem:[#allocation3 + $0x370] sm:$0xff]
    %v1753 = vld [vmem:[#allocation3 + $0x378] sm:$0xff]
    %v1754 = vld [vmem:[#allocation3 + $0x380] sm:$0xff]
    %v1755 = vld [vmem:[#allocation3 + $0x388] sm:$0xff]
    %v1756 = vld [vmem:[#allocation3 + $0x390] sm:$0xff]
    %v1757 = vld [vmem:[#allocation3 + $0x398] sm:$0xff]
    %v1758 = vld [vmem:[#allocation3 + $0x3a0] sm:$0xff]
    %v1759 = vld [vmem:[#allocation3 + $0x3a8] sm:$0xff]
    %v1760 = vld [vmem:[#allocation3 + $0x3b0] sm:$0xff]
    %v1761 = vld [vmem:[#allocation3 + $0x3b8] sm:$0xff]
    %v1762 = vld [vmem:[#allocation3 + $0x3c0] sm:$0xff]
    %v1763 = vld [vmem:[#allocation3 + $0x3c8] sm:$0xff]
    %v1764 = vld [vmem:[#allocation3 + $0x3d0] sm:$0xff]
    %v1765 = vld [vmem:[#allocation3 + $0x3d8] sm:$0xff]
    %v1766 = vld [vmem:[#allocation3 + $0x3e0] sm:$0xff]
    %v1767 = vld [vmem:[#allocation3 + $0x3e8] sm:$0xff]
    %v1768 = vld [vmem:[#allocation3 + $0x3f0] sm:$0xff]
    %v1769 = vld [vmem:[#allocation3 + $0x3f8] sm:$0xff]
    %v1770 = vld [vmem:[#allocation3 + $0x400] sm:$0xff]
    %v1771 = vld [vmem:[#allocation3 + $0x408] sm:$0xff]
    %v1772 = vld [vmem:[#allocation3 + $0x410] sm:$0xff]
    %v1773 = vld [vmem:[#allocation3 + $0x418] sm:$0xff]
    %v1774 = vld [vmem:[#allocation3 + $0x420] sm:$0xff]
    %v1775 = vld [vmem:[#allocation3 + $0x428] sm:$0xff]
    %v1776 = vld [vmem:[#allocation3 + $0x430] sm:$0xff]
    %v1777 = vld [vmem:[#allocation3 + $0x438] sm:$0xff]
    %v1778 = vld [vmem:[#allocation3 + $0x440] sm:$0xff]
    %v1779 = vld [vmem:[#allocation3 + $0x448] sm:$0xff]
    %v1780 = vld [vmem:[#allocation3 + $0x450] sm:$0xff]
    %v1781 = vld [vmem:[#allocation3 + $0x458] sm:$0xff]
    %v1782 = vld [vmem:[#allocation3 + $0x460] sm:$0xff]
    %v1783 = vld [vmem:[#allocation3 + $0x468] sm:$0xff]
    %v1784 = vld [vmem:[#allocation3 + $0x470] sm:$0xff]
    %v1785 = vld [vmem:[#allocation3 + $0x478] sm:$0xff]
    %v1786 = vld [vmem:[#allocation3 + $0x480] sm:$0xff]
    %v1787 = vld [vmem:[#allocation3 + $0x488] sm:$0xff]
    %v1788 = vld [vmem:[#allocation3 + $0x490] sm:$0xff]
    %v1789 = vld [vmem:[#allocation3 + $0x498] sm:$0xff]
    %v1790 = vld [vmem:[#allocation3 + $0x4a0] sm:$0xff]
    %v1791 = vld [vmem:[#allocation3 + $0x4a8] sm:$0xff]
    %v1792 = vld [vmem:[#allocation3 + $0x4b0] sm:$0xff]
    %v1793 = vld [vmem:[#allocation3 + $0x4b8] sm:$0xff]
    %v1794 = vld [vmem:[#allocation3 + $0x4c0] sm:$0xff]
    %v1795 = vld [vmem:[#allocation3 + $0x4c8] sm:$0xff]
    %v1796 = vld [vmem:[#allocation3 + $0x4d0] sm:$0xff]
    %v1797 = vld [vmem:[#allocation3 + $0x4d8] sm:$0xff]
    %v1798 = vld [vmem:[#allocation3 + $0x4e0] sm:$0xff]
    %v1799 = vld [vmem:[#allocation3 + $0x4e8] sm:$0xff]
    %v1800 = vld [vmem:[#allocation3 + $0x4f0] sm:$0xff]
    %v1801 = vld [vmem:[#allocation3 + $0x4f8] sm:$0xff]
    %v1802 = vld [vmem:[#allocation3 + $0x500] sm:$0xff]
    %v1803 = vld [vmem:[#allocation3 + $0x508] sm:$0xff]
    %v1804 = vld [vmem:[#allocation3 + $0x510] sm:$0xff]
    %v1805 = vld [vmem:[#allocation3 + $0x518] sm:$0xff]
    %v1806 = vld [vmem:[#allocation3 + $0x520] sm:$0xff]
    %v1807 = vld [vmem:[#allocation3 + $0x528] sm:$0xff]
    %v1808 = vld [vmem:[#allocation3 + $0x530] sm:$0xff]
    %v1809 = vld [vmem:[#allocation3 + $0x538] sm:$0xff]
    %v1810 = vld [vmem:[#allocation3 + $0x540] sm:$0xff]
    %v1811 = vld [vmem:[#allocation3 + $0x548] sm:$0xff]
    %v1812 = vld [vmem:[#allocation3 + $0x550] sm:$0xff]
    %v1813 = vld [vmem:[#allocation3 + $0x558] sm:$0xff]
    %v1814 = vld [vmem:[#allocation3 + $0x560] sm:$0xff]
    %v1815 = vld [vmem:[#allocation3 + $0x568] sm:$0xff]
    %v1816 = vld [vmem:[#allocation3 + $0x570] sm:$0xff]
    %v1817 = vld [vmem:[#allocation3 + $0x578] sm:$0xff]
    %v1818 = vld [vmem:[#allocation3 + $0x580] sm:$0xff]
    %v1819 = vld [vmem:[#allocation3 + $0x588] sm:$0xff]
    %v1820 = vld [vmem:[#allocation3 + $0x590] sm:$0xff]
    %v1821 = vld [vmem:[#allocation3 + $0x598] sm:$0xff]
    %v1822 = vld [vmem:[#allocation3 + $0x5a0] sm:$0xff]
    %v1823 = vld [vmem:[#allocation3 + $0x5a8] sm:$0xff]
    %v1824 = vld [vmem:[#allocation3 + $0x5b0] sm:$0xff]
    %v1825 = vld [vmem:[#allocation3 + $0x5b8] sm:$0xff]
    %v1826 = vld [vmem:[#allocation3 + $0x5c0] sm:$0xff]
    %v1827 = vld [vmem:[#allocation3 + $0x5c8] sm:$0xff]
    %v1828 = vld [vmem:[#allocation3 + $0x5d0] sm:$0xff]
    %v1829 = vld [vmem:[#allocation3 + $0x5d8] sm:$0xff]
    %v1830 = vld [vmem:[#allocation3 + $0x5e0] sm:$0xff]
    %v1831 = vld [vmem:[#allocation3 + $0x5e8] sm:$0xff]
    %v1832 = vld [vmem:[#allocation3 + $0x5f0] sm:$0xff]
    %v1833 = vld [vmem:[#allocation3 + $0x5f8] sm:$0xff]
    %v1834 = vld [vmem:[#allocation3 + $0x600] sm:$0xff]
    %v1835 = vld [vmem:[#allocation3 + $0x608] sm:$0xff]
    %v1836 = vld [vmem:[#allocation3 + $0x610] sm:$0xff]
    %v1837 = vld [vmem:[#allocation3 + $0x618] sm:$0xff]
    %v1838 = vld [vmem:[#allocation3 + $0x620] sm:$0xff]
    %v1839 = vld [vmem:[#allocation3 + $0x628] sm:$0xff]
    %v1840 = vld [vmem:[#allocation3 + $0x630] sm:$0xff]
    %v1841 = vld [vmem:[#allocation3 + $0x638] sm:$0xff]
    %v1842 = vld [vmem:[#allocation3 + $0x640] sm:$0xff]
    %v1843 = vld [vmem:[#allocation3 + $0x648] sm:$0xff]
    %v1844 = vld [vmem:[#allocation3 + $0x650] sm:$0xff]
    %v1845 = vld [vmem:[#allocation3 + $0x658] sm:$0xff]
    %v1846 = vld [vmem:[#allocation3 + $0x660] sm:$0xff]
    %v1847 = vld [vmem:[#allocation3 + $0x668] sm:$0xff]
    %v1848 = vld [vmem:[#allocation3 + $0x670] sm:$0xff]
    %v1849 = vld [vmem:[#allocation3 + $0x678] sm:$0xff]
    %v1850 = vld [vmem:[#allocation3 + $0x680] sm:$0xff]
    %v1851 = vld [vmem:[#allocation3 + $0x688] sm:$0xff]
    %v1852 = vld [vmem:[#allocation3 + $0x690] sm:$0xff]
    %v1853 = vld [vmem:[#allocation3 + $0x698] sm:$0xff]
    %v1854 = vld [vmem:[#allocation3 + $0x6a0] sm:$0xff]
    %v1855 = vld [vmem:[#allocation3 + $0x6a8] sm:$0xff]
    %v1856 = vld [vmem:[#allocation3 + $0x6b0] sm:$0xff]
    %v1857 = vld [vmem:[#allocation3 + $0x6b8] sm:$0xff]
    %v1858 = vld [vmem:[#allocation3 + $0x6c0] sm:$0xff]
    %v1859 = vld [vmem:[#allocation3 + $0x6c8] sm:$0xff]
    %v1860 = vld [vmem:[#allocation3 + $0x6d0] sm:$0xff]
    %v1861 = vld [vmem:[#allocation3 + $0x6d8] sm:$0xff]
    %v1862 = vld [vmem:[#allocation3 + $0x6e0] sm:$0xff]
    %v1863 = vld [vmem:[#allocation3 + $0x6e8] sm:$0xff]
    %v1864 = vld [vmem:[#allocation3 + $0x6f0] sm:$0xff]
    %v1865 = vld [vmem:[#allocation3 + $0x6f8] sm:$0xff]
    %v1866 = vld [vmem:[#allocation3 + $0x700] sm:$0xff]
    %v1867 = vld [vmem:[#allocation3 + $0x708] sm:$0xff]
    %v1868 = vld [vmem:[#allocation3 + $0x710] sm:$0xff]
    %v1869 = vld [vmem:[#allocation3 + $0x718] sm:$0xff]
    %v1870 = vld [vmem:[#allocation3 + $0x720] sm:$0xff]
    %v1871 = vld [vmem:[#allocation3 + $0x728] sm:$0xff]
    %v1872 = vld [vmem:[#allocation3 + $0x730] sm:$0xff]
    %v1873 = vld [vmem:[#allocation3 + $0x738] sm:$0xff]
    %v1874 = vld [vmem:[#allocation3 + $0x740] sm:$0xff]
    %v1875 = vld [vmem:[#allocation3 + $0x748] sm:$0xff]
    %v1876 = vld [vmem:[#allocation3 + $0x750] sm:$0xff]
    %v1877 = vld [vmem:[#allocation3 + $0x758] sm:$0xff]
    %v1878 = vld [vmem:[#allocation3 + $0x760] sm:$0xff]
    %v1879 = vld [vmem:[#allocation3 + $0x768] sm:$0xff]
    %v1880 = vld [vmem:[#allocation3 + $0x770] sm:$0xff]
    %v1881 = vld [vmem:[#allocation3 + $0x778] sm:$0xff]
    %v1882 = vld [vmem:[#allocation3 + $0x780] sm:$0xff]
    %v1883 = vld [vmem:[#allocation3 + $0x788] sm:$0xff]
    %v1884 = vld [vmem:[#allocation3 + $0x790] sm:$0xff]
    %v1885 = vld [vmem:[#allocation3 + $0x798] sm:$0xff]
    %v1886 = vld [vmem:[#allocation3 + $0x7a0] sm:$0xff]
    %v1887 = vld [vmem:[#allocation3 + $0x7a8] sm:$0xff]
    %v1888 = vld [vmem:[#allocation3 + $0x7b0] sm:$0xff]
    %v1889 = vld [vmem:[#allocation3 + $0x7b8] sm:$0xff]
    %v1890 = vld [vmem:[#allocation3 + $0x7c0] sm:$0xff]
    %v1891 = vld [vmem:[#allocation3 + $0x7c8] sm:$0xff]
    %v1892 = vld [vmem:[#allocation3 + $0x7d0] sm:$0xff]
    %v1893 = vld [vmem:[#allocation3 + $0x7d8] sm:$0xff]
    %v1894 = vld [vmem:[#allocation3 + $0x7e0] sm:$0xff]
    %v1895 = vld [vmem:[#allocation3 + $0x7e8] sm:$0xff]
    %v1896 = vld [vmem:[#allocation3 + $0x7f0] sm:$0xff]
    %v1897 = vld [vmem:[#allocation3 + $0x7f8] sm:$0xff]
    %v1898 = vunpack.c.l.bf16 %v1642
    %v1899 = vunpack.c.h.bf16 %v1642
    %v1900 = vunpack.c.l.bf16 %v1643
    %v1901 = vunpack.c.h.bf16 %v1643
    %v1902 = vunpack.c.l.bf16 %v1644
    %v1903 = vunpack.c.h.bf16 %v1644
    %v1904 = vunpack.c.l.bf16 %v1645
    %v1905 = vunpack.c.h.bf16 %v1645
    %v1906 = vunpack.c.l.bf16 %v1646
    %v1907 = vunpack.c.h.bf16 %v1646
    %v1908 = vunpack.c.l.bf16 %v1647
    %v1909 = vunpack.c.h.bf16 %v1647
    %v1910 = vunpack.c.l.bf16 %v1648
    %v1911 = vunpack.c.h.bf16 %v1648
    %v1912 = vunpack.c.l.bf16 %v1649
    %v1913 = vunpack.c.h.bf16 %v1649
    %v1914 = vunpack.c.l.bf16 %v1650
    %v1915 = vunpack.c.h.bf16 %v1650
    %v1916 = vunpack.c.l.bf16 %v1651
    %v1917 = vunpack.c.h.bf16 %v1651
    %v1918 = vunpack.c.l.bf16 %v1652
    %v1919 = vunpack.c.h.bf16 %v1652
    %v1920 = vunpack.c.l.bf16 %v1653
    %v1921 = vunpack.c.h.bf16 %v1653
    %v1922 = vunpack.c.l.bf16 %v1654
    %v1923 = vunpack.c.h.bf16 %v1654
    %v1924 = vunpack.c.l.bf16 %v1655
    %v1925 = vunpack.c.h.bf16 %v1655
    %v1926 = vunpack.c.l.bf16 %v1656
    %v1927 = vunpack.c.h.bf16 %v1656
    %v1928 = vunpack.c.l.bf16 %v1657
    %v1929 = vunpack.c.h.bf16 %v1657
    %v1930 = vunpack.c.l.bf16 %v1658
    %v1931 = vunpack.c.h.bf16 %v1658
    %v1932 = vunpack.c.l.bf16 %v1659
    %v1933 = vunpack.c.h.bf16 %v1659
    %v1934 = vunpack.c.l.bf16 %v1660
    %v1935 = vunpack.c.h.bf16 %v1660
    %v1936 = vunpack.c.l.bf16 %v1661
    %v1937 = vunpack.c.h.bf16 %v1661
    %v1938 = vunpack.c.l.bf16 %v1662
    %v1939 = vunpack.c.h.bf16 %v1662
    %v1940 = vunpack.c.l.bf16 %v1663
    %v1941 = vunpack.c.h.bf16 %v1663
    %v1942 = vunpack.c.l.bf16 %v1664
    %v1943 = vunpack.c.h.bf16 %v1664
    %v1944 = vunpack.c.l.bf16 %v1665
    %v1945 = vunpack.c.h.bf16 %v1665
    %v1946 = vunpack.c.l.bf16 %v1666
    %v1947 = vunpack.c.h.bf16 %v1666
    %v1948 = vunpack.c.l.bf16 %v1667
    %v1949 = vunpack.c.h.bf16 %v1667
    %v1950 = vunpack.c.l.bf16 %v1668
    %v1951 = vunpack.c.h.bf16 %v1668
    %v1952 = vunpack.c.l.bf16 %v1669
    %v1953 = vunpack.c.h.bf16 %v1669
    %v1954 = vunpack.c.l.bf16 %v1670
    %v1955 = vunpack.c.h.bf16 %v1670
    %v1956 = vunpack.c.l.bf16 %v1671
    %v1957 = vunpack.c.h.bf16 %v1671
    %v1958 = vunpack.c.l.bf16 %v1672
    %v1959 = vunpack.c.h.bf16 %v1672
    %v1960 = vunpack.c.l.bf16 %v1673
    %v1961 = vunpack.c.h.bf16 %v1673
    %v1962 = vunpack.c.l.bf16 %v1674
    %v1963 = vunpack.c.h.bf16 %v1674
    %v1964 = vunpack.c.l.bf16 %v1675
    %v1965 = vunpack.c.h.bf16 %v1675
    %v1966 = vunpack.c.l.bf16 %v1676
    %v1967 = vunpack.c.h.bf16 %v1676
    %v1968 = vunpack.c.l.bf16 %v1677
    %v1969 = vunpack.c.h.bf16 %v1677
    %v1970 = vunpack.c.l.bf16 %v1678
    %v1971 = vunpack.c.h.bf16 %v1678
    %v1972 = vunpack.c.l.bf16 %v1679
    %v1973 = vunpack.c.h.bf16 %v1679
    %v1974 = vunpack.c.l.bf16 %v1680
    %v1975 = vunpack.c.h.bf16 %v1680
    %v1976 = vunpack.c.l.bf16 %v1681
    %v1977 = vunpack.c.h.bf16 %v1681
    %v1978 = vunpack.c.l.bf16 %v1682
    %v1979 = vunpack.c.h.bf16 %v1682
    %v1980 = vunpack.c.l.bf16 %v1683
    %v1981 = vunpack.c.h.bf16 %v1683
    %v1982 = vunpack.c.l.bf16 %v1684
    %v1983 = vunpack.c.h.bf16 %v1684
    %v1984 = vunpack.c.l.bf16 %v1685
    %v1985 = vunpack.c.h.bf16 %v1685
    %v1986 = vunpack.c.l.bf16 %v1686
    %v1987 = vunpack.c.h.bf16 %v1686
    %v1988 = vunpack.c.l.bf16 %v1687
    %v1989 = vunpack.c.h.bf16 %v1687
    %v1990 = vunpack.c.l.bf16 %v1688
    %v1991 = vunpack.c.h.bf16 %v1688
    %v1992 = vunpack.c.l.bf16 %v1689
    %v1993 = vunpack.c.h.bf16 %v1689
    %v1994 = vunpack.c.l.bf16 %v1690
    %v1995 = vunpack.c.h.bf16 %v1690
    %v1996 = vunpack.c.l.bf16 %v1691
    %v1997 = vunpack.c.h.bf16 %v1691
    %v1998 = vunpack.c.l.bf16 %v1692
    %v1999 = vunpack.c.h.bf16 %v1692
    %v2000 = vunpack.c.l.bf16 %v1693
    %v2001 = vunpack.c.h.bf16 %v1693
    %v2002 = vunpack.c.l.bf16 %v1694
    %v2003 = vunpack.c.h.bf16 %v1694
    %v2004 = vunpack.c.l.bf16 %v1695
    %v2005 = vunpack.c.h.bf16 %v1695
    %v2006 = vunpack.c.l.bf16 %v1696
    %v2007 = vunpack.c.h.bf16 %v1696
    %v2008 = vunpack.c.l.bf16 %v1697
    %v2009 = vunpack.c.h.bf16 %v1697
    %v2010 = vunpack.c.l.bf16 %v1698
    %v2011 = vunpack.c.h.bf16 %v1698
    %v2012 = vunpack.c.l.bf16 %v1699
    %v2013 = vunpack.c.h.bf16 %v1699
    %v2014 = vunpack.c.l.bf16 %v1700
    %v2015 = vunpack.c.h.bf16 %v1700
    %v2016 = vunpack.c.l.bf16 %v1701
    %v2017 = vunpack.c.h.bf16 %v1701
    %v2018 = vunpack.c.l.bf16 %v1702
    %v2019 = vunpack.c.h.bf16 %v1702
    %v2020 = vunpack.c.l.bf16 %v1703
    %v2021 = vunpack.c.h.bf16 %v1703
    %v2022 = vunpack.c.l.bf16 %v1704
    %v2023 = vunpack.c.h.bf16 %v1704
    %v2024 = vunpack.c.l.bf16 %v1705
    %v2025 = vunpack.c.h.bf16 %v1705
    %v2026 = vunpack.c.l.bf16 %v1706
    %v2027 = vunpack.c.h.bf16 %v1706
    %v2028 = vunpack.c.l.bf16 %v1707
    %v2029 = vunpack.c.h.bf16 %v1707
    %v2030 = vunpack.c.l.bf16 %v1708
    %v2031 = vunpack.c.h.bf16 %v1708
    %v2032 = vunpack.c.l.bf16 %v1709
    %v2033 = vunpack.c.h.bf16 %v1709
    %v2034 = vunpack.c.l.bf16 %v1710
    %v2035 = vunpack.c.h.bf16 %v1710
    %v2036 = vunpack.c.l.bf16 %v1711
    %v2037 = vunpack.c.h.bf16 %v1711
    %v2038 = vunpack.c.l.bf16 %v1712
    %v2039 = vunpack.c.h.bf16 %v1712
    %v2040 = vunpack.c.l.bf16 %v1713
    %v2041 = vunpack.c.h.bf16 %v1713
    %v2042 = vunpack.c.l.bf16 %v1714
    %v2043 = vunpack.c.h.bf16 %v1714
    %v2044 = vunpack.c.l.bf16 %v1715
    %v2045 = vunpack.c.h.bf16 %v1715
    %v2046 = vunpack.c.l.bf16 %v1716
    %v2047 = vunpack.c.h.bf16 %v1716
    %v2048 = vunpack.c.l.bf16 %v1717
    %v2049 = vunpack.c.h.bf16 %v1717
    %v2050 = vunpack.c.l.bf16 %v1718
    %v2051 = vunpack.c.h.bf16 %v1718
    %v2052 = vunpack.c.l.bf16 %v1719
    %v2053 = vunpack.c.h.bf16 %v1719
    %v2054 = vunpack.c.l.bf16 %v1720
    %v2055 = vunpack.c.h.bf16 %v1720
    %v2056 = vunpack.c.l.bf16 %v1721
    %v2057 = vunpack.c.h.bf16 %v1721
    %v2058 = vunpack.c.l.bf16 %v1722
    %v2059 = vunpack.c.h.bf16 %v1722
    %v2060 = vunpack.c.l.bf16 %v1723
    %v2061 = vunpack.c.h.bf16 %v1723
    %v2062 = vunpack.c.l.bf16 %v1724
    %v2063 = vunpack.c.h.bf16 %v1724
    %v2064 = vunpack.c.l.bf16 %v1725
    %v2065 = vunpack.c.h.bf16 %v1725
    %v2066 = vunpack.c.l.bf16 %v1726
    %v2067 = vunpack.c.h.bf16 %v1726
    %v2068 = vunpack.c.l.bf16 %v1727
    %v2069 = vunpack.c.h.bf16 %v1727
    %v2070 = vunpack.c.l.bf16 %v1728
    %v2071 = vunpack.c.h.bf16 %v1728
    %v2072 = vunpack.c.l.bf16 %v1729
    %v2073 = vunpack.c.h.bf16 %v1729
    %v2074 = vunpack.c.l.bf16 %v1730
    %v2075 = vunpack.c.h.bf16 %v1730
    %v2076 = vunpack.c.l.bf16 %v1731
    %v2077 = vunpack.c.h.bf16 %v1731
    %v2078 = vunpack.c.l.bf16 %v1732
    %v2079 = vunpack.c.h.bf16 %v1732
    %v2080 = vunpack.c.l.bf16 %v1733
    %v2081 = vunpack.c.h.bf16 %v1733
    %v2082 = vunpack.c.l.bf16 %v1734
    %v2083 = vunpack.c.h.bf16 %v1734
    %v2084 = vunpack.c.l.bf16 %v1735
    %v2085 = vunpack.c.h.bf16 %v1735
    %v2086 = vunpack.c.l.bf16 %v1736
    %v2087 = vunpack.c.h.bf16 %v1736
    %v2088 = vunpack.c.l.bf16 %v1737
    %v2089 = vunpack.c.h.bf16 %v1737
    %v2090 = vunpack.c.l.bf16 %v1738
    %v2091 = vunpack.c.h.bf16 %v1738
    %v2092 = vunpack.c.l.bf16 %v1739
    %v2093 = vunpack.c.h.bf16 %v1739
    %v2094 = vunpack.c.l.bf16 %v1740
    %v2095 = vunpack.c.h.bf16 %v1740
    %v2096 = vunpack.c.l.bf16 %v1741
    %v2097 = vunpack.c.h.bf16 %v1741
    %v2098 = vunpack.c.l.bf16 %v1742
    %v2099 = vunpack.c.h.bf16 %v1742
    %v2100 = vunpack.c.l.bf16 %v1743
    %v2101 = vunpack.c.h.bf16 %v1743
    %v2102 = vunpack.c.l.bf16 %v1744
    %v2103 = vunpack.c.h.bf16 %v1744
    %v2104 = vunpack.c.l.bf16 %v1745
    %v2105 = vunpack.c.h.bf16 %v1745
    %v2106 = vunpack.c.l.bf16 %v1746
    %v2107 = vunpack.c.h.bf16 %v1746
    %v2108 = vunpack.c.l.bf16 %v1747
    %v2109 = vunpack.c.h.bf16 %v1747
    %v2110 = vunpack.c.l.bf16 %v1748
    %v2111 = vunpack.c.h.bf16 %v1748
    %v2112 = vunpack.c.l.bf16 %v1749
    %v2113 = vunpack.c.h.bf16 %v1749
    %v2114 = vunpack.c.l.bf16 %v1750
    %v2115 = vunpack.c.h.bf16 %v1750
    %v2116 = vunpack.c.l.bf16 %v1751
    %v2117 = vunpack.c.h.bf16 %v1751
    %v2118 = vunpack.c.l.bf16 %v1752
    %v2119 = vunpack.c.h.bf16 %v1752
    %v2120 = vunpack.c.l.bf16 %v1753
    %v2121 = vunpack.c.h.bf16 %v1753
    %v2122 = vunpack.c.l.bf16 %v1754
    %v2123 = vunpack.c.h.bf16 %v1754
    %v2124 = vunpack.c.l.bf16 %v1755
    %v2125 = vunpack.c.h.bf16 %v1755
    %v2126 = vunpack.c.l.bf16 %v1756
    %v2127 = vunpack.c.h.bf16 %v1756
    %v2128 = vunpack.c.l.bf16 %v1757
    %v2129 = vunpack.c.h.bf16 %v1757
    %v2130 = vunpack.c.l.bf16 %v1758
    %v2131 = vunpack.c.h.bf16 %v1758
    %v2132 = vunpack.c.l.bf16 %v1759
    %v2133 = vunpack.c.h.bf16 %v1759
    %v2134 = vunpack.c.l.bf16 %v1760
    %v2135 = vunpack.c.h.bf16 %v1760
    %v2136 = vunpack.c.l.bf16 %v1761
    %v2137 = vunpack.c.h.bf16 %v1761
    %v2138 = vunpack.c.l.bf16 %v1762
    %v2139 = vunpack.c.h.bf16 %v1762
    %v2140 = vunpack.c.l.bf16 %v1763
    %v2141 = vunpack.c.h.bf16 %v1763
    %v2142 = vunpack.c.l.bf16 %v1764
    %v2143 = vunpack.c.h.bf16 %v1764
    %v2144 = vunpack.c.l.bf16 %v1765
    %v2145 = vunpack.c.h.bf16 %v1765
    %v2146 = vunpack.c.l.bf16 %v1766
    %v2147 = vunpack.c.h.bf16 %v1766
    %v2148 = vunpack.c.l.bf16 %v1767
    %v2149 = vunpack.c.h.bf16 %v1767
    %v2150 = vunpack.c.l.bf16 %v1768
    %v2151 = vunpack.c.h.bf16 %v1768
    %v2152 = vunpack.c.l.bf16 %v1769
    %v2153 = vunpack.c.h.bf16 %v1769
    %v2154 = vunpack.c.l.bf16 %v1770
    %v2155 = vunpack.c.h.bf16 %v1770
    %v2156 = vunpack.c.l.bf16 %v1771
    %v2157 = vunpack.c.h.bf16 %v1771
    %v2158 = vunpack.c.l.bf16 %v1772
    %v2159 = vunpack.c.h.bf16 %v1772
    %v2160 = vunpack.c.l.bf16 %v1773
    %v2161 = vunpack.c.h.bf16 %v1773
    %v2162 = vunpack.c.l.bf16 %v1774
    %v2163 = vunpack.c.h.bf16 %v1774
    %v2164 = vunpack.c.l.bf16 %v1775
    %v2165 = vunpack.c.h.bf16 %v1775
    %v2166 = vunpack.c.l.bf16 %v1776
    %v2167 = vunpack.c.h.bf16 %v1776
    %v2168 = vunpack.c.l.bf16 %v1777
    %v2169 = vunpack.c.h.bf16 %v1777
    %v2170 = vunpack.c.l.bf16 %v1778
    %v2171 = vunpack.c.h.bf16 %v1778
    %v2172 = vunpack.c.l.bf16 %v1779
    %v2173 = vunpack.c.h.bf16 %v1779
    %v2174 = vunpack.c.l.bf16 %v1780
    %v2175 = vunpack.c.h.bf16 %v1780
    %v2176 = vunpack.c.l.bf16 %v1781
    %v2177 = vunpack.c.h.bf16 %v1781
    %v2178 = vunpack.c.l.bf16 %v1782
    %v2179 = vunpack.c.h.bf16 %v1782
    %v2180 = vunpack.c.l.bf16 %v1783
    %v2181 = vunpack.c.h.bf16 %v1783
    %v2182 = vunpack.c.l.bf16 %v1784
    %v2183 = vunpack.c.h.bf16 %v1784
    %v2184 = vunpack.c.l.bf16 %v1785
    %v2185 = vunpack.c.h.bf16 %v1785
    %v2186 = vunpack.c.l.bf16 %v1786
    %v2187 = vunpack.c.h.bf16 %v1786
    %v2188 = vunpack.c.l.bf16 %v1787
    %v2189 = vunpack.c.h.bf16 %v1787
    %v2190 = vunpack.c.l.bf16 %v1788
    %v2191 = vunpack.c.h.bf16 %v1788
    %v2192 = vunpack.c.l.bf16 %v1789
    %v2193 = vunpack.c.h.bf16 %v1789
    %v2194 = vunpack.c.l.bf16 %v1790
    %v2195 = vunpack.c.h.bf16 %v1790
    %v2196 = vunpack.c.l.bf16 %v1791
    %v2197 = vunpack.c.h.bf16 %v1791
    %v2198 = vunpack.c.l.bf16 %v1792
    %v2199 = vunpack.c.h.bf16 %v1792
    %v2200 = vunpack.c.l.bf16 %v1793
    %v2201 = vunpack.c.h.bf16 %v1793
    %v2202 = vunpack.c.l.bf16 %v1794
    %v2203 = vunpack.c.h.bf16 %v1794
    %v2204 = vunpack.c.l.bf16 %v1795
    %v2205 = vunpack.c.h.bf16 %v1795
    %v2206 = vunpack.c.l.bf16 %v1796
    %v2207 = vunpack.c.h.bf16 %v1796
    %v2208 = vunpack.c.l.bf16 %v1797
    %v2209 = vunpack.c.h.bf16 %v1797
    %v2210 = vunpack.c.l.bf16 %v1798
    %v2211 = vunpack.c.h.bf16 %v1798
    %v2212 = vunpack.c.l.bf16 %v1799
    %v2213 = vunpack.c.h.bf16 %v1799
    %v2214 = vunpack.c.l.bf16 %v1800
    %v2215 = vunpack.c.h.bf16 %v1800
    %v2216 = vunpack.c.l.bf16 %v1801
    %v2217 = vunpack.c.h.bf16 %v1801
    %v2218 = vunpack.c.l.bf16 %v1802
    %v2219 = vunpack.c.h.bf16 %v1802
    %v2220 = vunpack.c.l.bf16 %v1803
    %v2221 = vunpack.c.h.bf16 %v1803
    %v2222 = vunpack.c.l.bf16 %v1804
    %v2223 = vunpack.c.h.bf16 %v1804
    %v2224 = vunpack.c.l.bf16 %v1805
    %v2225 = vunpack.c.h.bf16 %v1805
    %v2226 = vunpack.c.l.bf16 %v1806
    %v2227 = vunpack.c.h.bf16 %v1806
    %v2228 = vunpack.c.l.bf16 %v1807
    %v2229 = vunpack.c.h.bf16 %v1807
    %v2230 = vunpack.c.l.bf16 %v1808
    %v2231 = vunpack.c.h.bf16 %v1808
    %v2232 = vunpack.c.l.bf16 %v1809
    %v2233 = vunpack.c.h.bf16 %v1809
    %v2234 = vunpack.c.l.bf16 %v1810
    %v2235 = vunpack.c.h.bf16 %v1810
    %v2236 = vunpack.c.l.bf16 %v1811
    %v2237 = vunpack.c.h.bf16 %v1811
    %v2238 = vunpack.c.l.bf16 %v1812
    %v2239 = vunpack.c.h.bf16 %v1812
    %v2240 = vunpack.c.l.bf16 %v1813
    %v2241 = vunpack.c.h.bf16 %v1813
    %v2242 = vunpack.c.l.bf16 %v1814
    %v2243 = vunpack.c.h.bf16 %v1814
    %v2244 = vunpack.c.l.bf16 %v1815
    %v2245 = vunpack.c.h.bf16 %v1815
    %v2246 = vunpack.c.l.bf16 %v1816
    %v2247 = vunpack.c.h.bf16 %v1816
    %v2248 = vunpack.c.l.bf16 %v1817
    %v2249 = vunpack.c.h.bf16 %v1817
    %v2250 = vunpack.c.l.bf16 %v1818
    %v2251 = vunpack.c.h.bf16 %v1818
    %v2252 = vunpack.c.l.bf16 %v1819
    %v2253 = vunpack.c.h.bf16 %v1819
    %v2254 = vunpack.c.l.bf16 %v1820
    %v2255 = vunpack.c.h.bf16 %v1820
    %v2256 = vunpack.c.l.bf16 %v1821
    %v2257 = vunpack.c.h.bf16 %v1821
    %v2258 = vunpack.c.l.bf16 %v1822
    %v2259 = vunpack.c.h.bf16 %v1822
    %v2260 = vunpack.c.l.bf16 %v1823
    %v2261 = vunpack.c.h.bf16 %v1823
    %v2262 = vunpack.c.l.bf16 %v1824
    %v2263 = vunpack.c.h.bf16 %v1824
    %v2264 = vunpack.c.l.bf16 %v1825
    %v2265 = vunpack.c.h.bf16 %v1825
    %v2266 = vunpack.c.l.bf16 %v1826
    %v2267 = vunpack.c.h.bf16 %v1826
    %v2268 = vunpack.c.l.bf16 %v1827
    %v2269 = vunpack.c.h.bf16 %v1827
    %v2270 = vunpack.c.l.bf16 %v1828
    %v2271 = vunpack.c.h.bf16 %v1828
    %v2272 = vunpack.c.l.bf16 %v1829
    %v2273 = vunpack.c.h.bf16 %v1829
    %v2274 = vunpack.c.l.bf16 %v1830
    %v2275 = vunpack.c.h.bf16 %v1830
    %v2276 = vunpack.c.l.bf16 %v1831
    %v2277 = vunpack.c.h.bf16 %v1831
    %v2278 = vunpack.c.l.bf16 %v1832
    %v2279 = vunpack.c.h.bf16 %v1832
    %v2280 = vunpack.c.l.bf16 %v1833
    %v2281 = vunpack.c.h.bf16 %v1833
    %v2282 = vunpack.c.l.bf16 %v1834
    %v2283 = vunpack.c.h.bf16 %v1834
    %v2284 = vunpack.c.l.bf16 %v1835
    %v2285 = vunpack.c.h.bf16 %v1835
    %v2286 = vunpack.c.l.bf16 %v1836
    %v2287 = vunpack.c.h.bf16 %v1836
    %v2288 = vunpack.c.l.bf16 %v1837
    %v2289 = vunpack.c.h.bf16 %v1837
    %v2290 = vunpack.c.l.bf16 %v1838
    %v2291 = vunpack.c.h.bf16 %v1838
    %v2292 = vunpack.c.l.bf16 %v1839
    %v2293 = vunpack.c.h.bf16 %v1839
    %v2294 = vunpack.c.l.bf16 %v1840
    %v2295 = vunpack.c.h.bf16 %v1840
    %v2296 = vunpack.c.l.bf16 %v1841
    %v2297 = vunpack.c.h.bf16 %v1841
    %v2298 = vunpack.c.l.bf16 %v1842
    %v2299 = vunpack.c.h.bf16 %v1842
    %v2300 = vunpack.c.l.bf16 %v1843
    %v2301 = vunpack.c.h.bf16 %v1843
    %v2302 = vunpack.c.l.bf16 %v1844
    %v2303 = vunpack.c.h.bf16 %v1844
    %v2304 = vunpack.c.l.bf16 %v1845
    %v2305 = vunpack.c.h.bf16 %v1845
    %v2306 = vunpack.c.l.bf16 %v1846
    %v2307 = vunpack.c.h.bf16 %v1846
    %v2308 = vunpack.c.l.bf16 %v1847
    %v2309 = vunpack.c.h.bf16 %v1847
    %v2310 = vunpack.c.l.bf16 %v1848
    %v2311 = vunpack.c.h.bf16 %v1848
    %v2312 = vunpack.c.l.bf16 %v1849
    %v2313 = vunpack.c.h.bf16 %v1849
    %v2314 = vunpack.c.l.bf16 %v1850
    %v2315 = vunpack.c.h.bf16 %v1850
    %v2316 = vunpack.c.l.bf16 %v1851
    %v2317 = vunpack.c.h.bf16 %v1851
    %v2318 = vunpack.c.l.bf16 %v1852
    %v2319 = vunpack.c.h.bf16 %v1852
    %v2320 = vunpack.c.l.bf16 %v1853
    %v2321 = vunpack.c.h.bf16 %v1853
    %v2322 = vunpack.c.l.bf16 %v1854
    %v2323 = vunpack.c.h.bf16 %v1854
    %v2324 = vunpack.c.l.bf16 %v1855
    %v2325 = vunpack.c.h.bf16 %v1855
    %v2326 = vunpack.c.l.bf16 %v1856
    %v2327 = vunpack.c.h.bf16 %v1856
    %v2328 = vunpack.c.l.bf16 %v1857
    %v2329 = vunpack.c.h.bf16 %v1857
    %v2330 = vunpack.c.l.bf16 %v1858
    %v2331 = vunpack.c.h.bf16 %v1858
    %v2332 = vunpack.c.l.bf16 %v1859
    %v2333 = vunpack.c.h.bf16 %v1859
    %v2334 = vunpack.c.l.bf16 %v1860
    %v2335 = vunpack.c.h.bf16 %v1860
    %v2336 = vunpack.c.l.bf16 %v1861
    %v2337 = vunpack.c.h.bf16 %v1861
    %v2338 = vunpack.c.l.bf16 %v1862
    %v2339 = vunpack.c.h.bf16 %v1862
    %v2340 = vunpack.c.l.bf16 %v1863
    %v2341 = vunpack.c.h.bf16 %v1863
    %v2342 = vunpack.c.l.bf16 %v1864
    %v2343 = vunpack.c.h.bf16 %v1864
    %v2344 = vunpack.c.l.bf16 %v1865
    %v2345 = vunpack.c.h.bf16 %v1865
    %v2346 = vunpack.c.l.bf16 %v1866
    %v2347 = vunpack.c.h.bf16 %v1866
    %v2348 = vunpack.c.l.bf16 %v1867
    %v2349 = vunpack.c.h.bf16 %v1867
    %v2350 = vunpack.c.l.bf16 %v1868
    %v2351 = vunpack.c.h.bf16 %v1868
    %v2352 = vunpack.c.l.bf16 %v1869
    %v2353 = vunpack.c.h.bf16 %v1869
    %v2354 = vunpack.c.l.bf16 %v1870
    %v2355 = vunpack.c.h.bf16 %v1870
    %v2356 = vunpack.c.l.bf16 %v1871
    %v2357 = vunpack.c.h.bf16 %v1871
    %v2358 = vunpack.c.l.bf16 %v1872
    %v2359 = vunpack.c.h.bf16 %v1872
    %v2360 = vunpack.c.l.bf16 %v1873
    %v2361 = vunpack.c.h.bf16 %v1873
    %v2362 = vunpack.c.l.bf16 %v1874
    %v2363 = vunpack.c.h.bf16 %v1874
    %v2364 = vunpack.c.l.bf16 %v1875
    %v2365 = vunpack.c.h.bf16 %v1875
    %v2366 = vunpack.c.l.bf16 %v1876
    %v2367 = vunpack.c.h.bf16 %v1876
    %v2368 = vunpack.c.l.bf16 %v1877
    %v2369 = vunpack.c.h.bf16 %v1877
    %v2370 = vunpack.c.l.bf16 %v1878
    %v2371 = vunpack.c.h.bf16 %v1878
    %v2372 = vunpack.c.l.bf16 %v1879
    %v2373 = vunpack.c.h.bf16 %v1879
    %v2374 = vunpack.c.l.bf16 %v1880
    %v2375 = vunpack.c.h.bf16 %v1880
    %v2376 = vunpack.c.l.bf16 %v1881
    %v2377 = vunpack.c.h.bf16 %v1881
    %v2378 = vunpack.c.l.bf16 %v1882
    %v2379 = vunpack.c.h.bf16 %v1882
    %v2380 = vunpack.c.l.bf16 %v1883
    %v2381 = vunpack.c.h.bf16 %v1883
    %v2382 = vunpack.c.l.bf16 %v1884
    %v2383 = vunpack.c.h.bf16 %v1884
    %v2384 = vunpack.c.l.bf16 %v1885
    %v2385 = vunpack.c.h.bf16 %v1885
    %v2386 = vunpack.c.l.bf16 %v1886
    %v2387 = vunpack.c.h.bf16 %v1886
    %v2388 = vunpack.c.l.bf16 %v1887
    %v2389 = vunpack.c.h.bf16 %v1887
    %v2390 = vunpack.c.l.bf16 %v1888
    %v2391 = vunpack.c.h.bf16 %v1888
    %v2392 = vunpack.c.l.bf16 %v1889
    %v2393 = vunpack.c.h.bf16 %v1889
    %v2394 = vunpack.c.l.bf16 %v1890
    %v2395 = vunpack.c.h.bf16 %v1890
    %v2396 = vunpack.c.l.bf16 %v1891
    %v2397 = vunpack.c.h.bf16 %v1891
    %v2398 = vunpack.c.l.bf16 %v1892
    %v2399 = vunpack.c.h.bf16 %v1892
    %v2400 = vunpack.c.l.bf16 %v1893
    %v2401 = vunpack.c.h.bf16 %v1893
    %v2402 = vunpack.c.l.bf16 %v1894
    %v2403 = vunpack.c.h.bf16 %v1894
    %v2404 = vunpack.c.l.bf16 %v1895
    %v2405 = vunpack.c.h.bf16 %v1895
    %v2406 = vunpack.c.l.bf16 %v1896
    %v2407 = vunpack.c.h.bf16 %v1896
    %v2408 = vunpack.c.l.bf16 %v1897
    %v2409 = vunpack.c.h.bf16 %v1897
    %v2410 = vld [vmem:[%s5] sm:$0x3]
    %v2412 = vlaneseq
    %v2413 = vshrl.u32 %v2412, 7
    %v2414 = vsub.s32 0, %v2413
    %v2415 = vrot.slane %v2410, %v2414
    %v2416 = vlaneseq
    %v2417 = vshrl.u32 %v2416, 7
    %v2418 = vsub.s32 1, %v2417
    %v2419 = vrot.slane %v2410, %v2418
    %v2426 = vcombine.high %v1638, %v1638
    %v2428 = vunpack.c.l.s4 1983009808
    %v2429 = vunpack.c.0.s8 %v2428
    %v2430 = vlaneseq
    %v2431 = vshrl.u32 %v2430, 7
    %v2432 = vsub.s32 %v2429, %v2431
    %v2433 = vrot.slane %v1638, %v2432
    %v2435 = vunpack.c.l.s4 1983009808
    %v2436 = vunpack.c.0.s8 %v2435
    %v2437 = vlaneseq
    %v2438 = vshrl.u32 %v2437, 7
    %v2439 = vsub.s32 %v2436, %v2438
    %v2440 = vrot.slane %v2426, %v2439
    %v2441 = vcombine.high %v2433, %v2433
    %v2442 = vcombine.high %v2440, %v2440
    %v2443 = vcombine.high %v1639, %v1639
    %v2445 = vunpack.c.l.s4 1983009808
    %v2446 = vunpack.c.0.s8 %v2445
    %v2447 = vlaneseq
    %v2448 = vshrl.u32 %v2447, 7
    %v2449 = vsub.s32 %v2446, %v2448
    %v2450 = vrot.slane %v1639, %v2449
    %v2452 = vunpack.c.l.s4 1983009808
    %v2453 = vunpack.c.0.s8 %v2452
    %v2454 = vlaneseq
    %v2455 = vshrl.u32 %v2454, 7
    %v2456 = vsub.s32 %v2453, %v2455
    %v2457 = vrot.slane %v2443, %v2456
    %v2458 = vcombine.high %v2450, %v2450
    %v2459 = vcombine.high %v2457, %v2457
    %v2460 = vcombine.high %v1640, %v1640
    %v2462 = vunpack.c.l.s4 1983009808
    %v2463 = vunpack.c.0.s8 %v2462
    %v2464 = vlaneseq
    %v2465 = vshrl.u32 %v2464, 7
    %v2466 = vsub.s32 %v2463, %v2465
    %v2467 = vrot.slane %v1640, %v2466
    %v2469 = vunpack.c.l.s4 1983009808
    %v2470 = vunpack.c.0.s8 %v2469
    %v2471 = vlaneseq
    %v2472 = vshrl.u32 %v2471, 7
    %v2473 = vsub.s32 %v2470, %v2472
    %v2474 = vrot.slane %v2460, %v2473
    %v2475 = vcombine.high %v2467, %v2467
    %v2476 = vcombine.high %v2474, %v2474
    %v2477 = vcombine.high %v1641, %v1641
    %v2479 = vunpack.c.l.s4 1983009808
    %v2480 = vunpack.c.0.s8 %v2479
    %v2481 = vlaneseq
    %v2482 = vshrl.u32 %v2481, 7
    %v2483 = vsub.s32 %v2480, %v2482
    %v2484 = vrot.slane %v1641, %v2483
    %v2486 = vunpack.c.l.s4 1983009808
    %v2487 = vunpack.c.0.s8 %v2486
    %v2488 = vlaneseq
    %v2489 = vshrl.u32 %v2488, 7
    %v2490 = vsub.s32 %v2487, %v2489
    %v2491 = vrot.slane %v2477, %v2490
    %v2492 = vcombine.high %v2484, %v2484
    %v2493 = vcombine.high %v2491, %v2491
    %2510 = vmatprep.subr.mxu0 %v1899
    %2511 = vmatpush1.msra.mxu0 %v1898
    %2512 = vmatprep.subr.mxu0 %v1901
    %2513 = vmatpush1.msra.mxu0 %v1900
    %2514 = vmatprep.subr.mxu0 %v1903
    %2515 = vmatpush1.msra.mxu0 %v1902
    %2516 = vmatprep.subr.mxu0 %v1905
    %2517 = vmatpush1.msra.mxu0 %v1904
    %2518 = vmatprep.subr.mxu0 %v1907
    %2519 = vmatpush1.msra.mxu0 %v1906
    %2520 = vmatprep.subr.mxu0 %v1909
    %2521 = vmatpush1.msra.mxu0 %v1908
    %2522 = vmatprep.subr.mxu0 %v1911
    %2523 = vmatpush1.msra.mxu0 %v1910
    %2524 = vmatprep.subr.mxu0 %v1913
    %2525 = vmatpush1.msra.mxu0 %v1912
    %2526 = vmatprep.subr.mxu0 %v1915
    %2527 = vmatpush1.msra.mxu0 %v1914
    %2528 = vmatprep.subr.mxu0 %v1917
    %2529 = vmatpush1.msra.mxu0 %v1916
    %2530 = vmatprep.subr.mxu0 %v1919
    %2531 = vmatpush1.msra.mxu0 %v1918
    %2532 = vmatprep.subr.mxu0 %v1921
    %2533 = vmatpush1.msra.mxu0 %v1920
    %2534 = vmatprep.subr.mxu0 %v1923
    %2535 = vmatpush1.msra.mxu0 %v1922
    %2536 = vmatprep.subr.mxu0 %v1925
    %2537 = vmatpush1.msra.mxu0 %v1924
    %2538 = vmatprep.subr.mxu0 %v1927
    %2539 = vmatpush1.msra.mxu0 %v1926
    %2540 = vmatprep.subr.mxu0 %v1929
    %2541 = vmatpush1.msra.mxu0 %v1928
    %2542 = vmatprep.subr.mxu0 %v1931
    %2543 = vmatpush1.msra.mxu0 %v1930
    %2544 = vmatprep.subr.mxu0 %v1933
    %2545 = vmatpush1.msra.mxu0 %v1932
    %2546 = vmatprep.subr.mxu0 %v1935
    %2547 = vmatpush1.msra.mxu0 %v1934
    %2548 = vmatprep.subr.mxu0 %v1937
    %2549 = vmatpush1.msra.mxu0 %v1936
    %2550 = vmatprep.subr.mxu0 %v1939
    %2551 = vmatpush1.msra.mxu0 %v1938
    %2552 = vmatprep.subr.mxu0 %v1941
    %2553 = vmatpush1.msra.mxu0 %v1940
    %2554 = vmatprep.subr.mxu0 %v1943
    %2555 = vmatpush1.msra.mxu0 %v1942
    %2556 = vmatprep.subr.mxu0 %v1945
    %2557 = vmatpush1.msra.mxu0 %v1944
    %2558 = vmatprep.subr.mxu0 %v1947
    %2559 = vmatpush1.msra.mxu0 %v1946
    %2560 = vmatprep.subr.mxu0 %v1949
    %2561 = vmatpush1.msra.mxu0 %v1948
    %2562 = vmatprep.subr.mxu0 %v1951
    %2563 = vmatpush1.msra.mxu0 %v1950
    %2564 = vmatprep.subr.mxu0 %v1953
    %2565 = vmatpush1.msra.mxu0 %v1952
    %2566 = vmatprep.subr.mxu0 %v1955
    %2567 = vmatpush1.msra.mxu0 %v1954
    %2568 = vmatprep.subr.mxu0 %v1957
    %2569 = vmatpush1.msra.mxu0 %v1956
    %2570 = vmatprep.subr.mxu0 %v1959
    %2571 = vmatpush1.msra.mxu0 %v1958
    %2572 = vmatprep.subr.mxu0 %v1961
    %2573 = vmatpush1.msra.mxu0 %v1960
    %2574 = vmatprep.mubr.f32.mxu0 %v2441
    %2575 = vmatmul.mubr.f32.gmra.mrb[0].mxu0 %v2433
    %v2576 = vpop.f32.mrb[0].mxu0
    %v2577 = vadd.f32 %v2415, %v2576
    %v2578 = vpop.f32.mrb[0].mxu0
    %v2579 = vadd.f32 %v2419, %v2578
    %2580 = vdwg.mxu0
    %2581 = vmatprep.subr.mxu0 %v1963
    %2582 = vmatpush1.msra.mxu0 %v1962
    %2583 = vmatprep.subr.mxu0 %v1965
    %2584 = vmatpush1.msra.mxu0 %v1964
    %2585 = vmatprep.subr.mxu0 %v1967
    %2586 = vmatpush1.msra.mxu0 %v1966
    %2587 = vmatprep.subr.mxu0 %v1969
    %2588 = vmatpush1.msra.mxu0 %v1968
    %2589 = vmatprep.subr.mxu0 %v1971
    %2590 = vmatpush1.msra.mxu0 %v1970
    %2591 = vmatprep.subr.mxu0 %v1973
    %2592 = vmatpush1.msra.mxu0 %v1972
    %2593 = vmatprep.subr.mxu0 %v1975
    %2594 = vmatpush1.msra.mxu0 %v1974
    %2595 = vmatprep.subr.mxu0 %v1977
    %2596 = vmatpush1.msra.mxu0 %v1976
    %2597 = vmatprep.subr.mxu0 %v1979
    %2598 = vmatpush1.msra.mxu0 %v1978
    %2599 = vmatprep.subr.mxu0 %v1981
    %2600 = vmatpush1.msra.mxu0 %v1980
    %2601 = vmatprep.subr.mxu0 %v1983
    %2602 = vmatpush1.msra.mxu0 %v1982
    %2603 = vmatprep.subr.mxu0 %v1985
    %2604 = vmatpush1.msra.mxu0 %v1984
    %2605 = vmatprep.subr.mxu0 %v1987
    %2606 = vmatpush1.msra.mxu0 %v1986
    %2607 = vmatprep.subr.mxu0 %v1989
    %2608 = vmatpush1.msra.mxu0 %v1988
    %2609 = vmatprep.subr.mxu0 %v1991
    %2610 = vmatpush1.msra.mxu0 %v1990
    %2611 = vmatprep.subr.mxu0 %v1993
    %2612 = vmatpush1.msra.mxu0 %v1992
    %2613 = vmatprep.subr.mxu0 %v1995
    %2614 = vmatpush1.msra.mxu0 %v1994
    %2615 = vmatprep.subr.mxu0 %v1997
    %2616 = vmatpush1.msra.mxu0 %v1996
    %2617 = vmatprep.subr.mxu0 %v1999
    %2618 = vmatpush1.msra.mxu0 %v1998
    %2619 = vmatprep.subr.mxu0 %v2001
    %2620 = vmatpush1.msra.mxu0 %v2000
    %2621 = vmatprep.subr.mxu0 %v2003
    %2622 = vmatpush1.msra.mxu0 %v2002
    %2623 = vmatprep.subr.mxu0 %v2005
    %2624 = vmatpush1.msra.mxu0 %v2004
    %2625 = vmatprep.subr.mxu0 %v2007
    %2626 = vmatpush1.msra.mxu0 %v2006
    %2627 = vmatprep.subr.mxu0 %v2009
    %2628 = vmatpush1.msra.mxu0 %v2008
    %2629 = vmatprep.subr.mxu0 %v2011
    %2630 = vmatpush1.msra.mxu0 %v2010
    %2631 = vmatprep.subr.mxu0 %v2013
    %2632 = vmatpush1.msra.mxu0 %v2012
    %2633 = vmatprep.subr.mxu0 %v2015
    %2634 = vmatpush1.msra.mxu0 %v2014
    %2635 = vmatprep.subr.mxu0 %v2017
    %2636 = vmatpush1.msra.mxu0 %v2016
    %2637 = vmatprep.subr.mxu0 %v2019
    %2638 = vmatpush1.msra.mxu0 %v2018
    %2639 = vmatprep.subr.mxu0 %v2021
    %2640 = vmatpush1.msra.mxu0 %v2020
    %2641 = vmatprep.subr.mxu0 %v2023
    %2642 = vmatpush1.msra.mxu0 %v2022
    %2643 = vmatprep.subr.mxu0 %v2025
    %2644 = vmatpush1.msra.mxu0 %v2024
    %2645 = vmatprep.mubr.f32.mxu0 %v2442
    %2646 = vmatmul.mubr.f32.gmra.mrb[0].mxu0 %v2440
    %v2647 = vpop.f32.mrb[0].mxu0
    %v2648 = vadd.f32 %v2577, %v2647
    %v2649 = vpop.f32.mrb[0].mxu0
    %v2650 = vadd.f32 %v2579, %v2649
    %2651 = vdwg.mxu0
    %2652 = vmatprep.subr.mxu0 %v2027
    %2653 = vmatpush1.msra.mxu0 %v2026
    %2654 = vmatprep.subr.mxu0 %v2029
    %2655 = vmatpush1.msra.mxu0 %v2028
    %2656 = vmatprep.subr.mxu0 %v2031
    %2657 = vmatpush1.msra.mxu0 %v2030
    %2658 = vmatprep.subr.mxu0 %v2033
    %2659 = vmatpush1.msra.mxu0 %v2032
    %2660 = vmatprep.subr.mxu0 %v2035
    %2661 = vmatpush1.msra.mxu0 %v2034
    %2662 = vmatprep.subr.mxu0 %v2037
    %2663 = vmatpush1.msra.mxu0 %v2036
    %2664 = vmatprep.subr.mxu0 %v2039
    %2665 = vmatpush1.msra.mxu0 %v2038
    %2666 = vmatprep.subr.mxu0 %v2041
    %2667 = vmatpush1.msra.mxu0 %v2040
    %2668 = vmatprep.subr.mxu0 %v2043
    %2669 = vmatpush1.msra.mxu0 %v2042
    %2670 = vmatprep.subr.mxu0 %v2045
    %2671 = vmatpush1.msra.mxu0 %v2044
    %2672 = vmatprep.subr.mxu0 %v2047
    %2673 = vmatpush1.msra.mxu0 %v2046
    %2674 = vmatprep.subr.mxu0 %v2049
    %2675 = vmatpush1.msra.mxu0 %v2048
    %2676 = vmatprep.subr.mxu0 %v2051
    %2677 = vmatpush1.msra.mxu0 %v2050
    %2678 = vmatprep.subr.mxu0 %v2053
    %2679 = vmatpush1.msra.mxu0 %v2052
    %2680 = vmatprep.subr.mxu0 %v2055
    %2681 = vmatpush1.msra.mxu0 %v2054
    %2682 = vmatprep.subr.mxu0 %v2057
    %2683 = vmatpush1.msra.mxu0 %v2056
    %2684 = vmatprep.subr.mxu0 %v2059
    %2685 = vmatpush1.msra.mxu0 %v2058
    %2686 = vmatprep.subr.mxu0 %v2061
    %2687 = vmatpush1.msra.mxu0 %v2060
    %2688 = vmatprep.subr.mxu0 %v2063
    %2689 = vmatpush1.msra.mxu0 %v2062
    %2690 = vmatprep.subr.mxu0 %v2065
    %2691 = vmatpush1.msra.mxu0 %v2064
    %2692 = vmatprep.subr.mxu0 %v2067
    %2693 = vmatpush1.msra.mxu0 %v2066
    %2694 = vmatprep.subr.mxu0 %v2069
    %2695 = vmatpush1.msra.mxu0 %v2068
    %2696 = vmatprep.subr.mxu0 %v2071
    %2697 = vmatpush1.msra.mxu0 %v2070
    %2698 = vmatprep.subr.mxu0 %v2073
    %2699 = vmatpush1.msra.mxu0 %v2072
    %2700 = vmatprep.subr.mxu0 %v2075
    %2701 = vmatpush1.msra.mxu0 %v2074
    %2702 = vmatprep.subr.mxu0 %v2077
    %2703 = vmatpush1.msra.mxu0 %v2076
    %2704 = vmatprep.subr.mxu0 %v2079
    %2705 = vmatpush1.msra.mxu0 %v2078
    %2706 = vmatprep.subr.mxu0 %v2081
    %2707 = vmatpush1.msra.mxu0 %v2080
    %2708 = vmatprep.subr.mxu0 %v2083
    %2709 = vmatpush1.msra.mxu0 %v2082
    %2710 = vmatprep.subr.mxu0 %v2085
    %2711 = vmatpush1.msra.mxu0 %v2084
    %2712 = vmatprep.subr.mxu0 %v2087
    %2713 = vmatpush1.msra.mxu0 %v2086
    %2714 = vmatprep.subr.mxu0 %v2089
    %2715 = vmatpush1.msra.mxu0 %v2088
    %2716 = vmatprep.mubr.f32.mxu0 %v2458
    %2717 = vmatmul.mubr.f32.gmra.mrb[0].mxu0 %v2450
    %v2718 = vpop.f32.mrb[0].mxu0
    %v2719 = vadd.f32 %v2648, %v2718
    %v2720 = vpop.f32.mrb[0].mxu0
    %v2721 = vadd.f32 %v2650, %v2720
    %2722 = vdwg.mxu0
    %2723 = vmatprep.subr.mxu0 %v2091
    %2724 = vmatpush1.msra.mxu0 %v2090
    %2725 = vmatprep.subr.mxu0 %v2093
    %2726 = vmatpush1.msra.mxu0 %v2092
    %2727 = vmatprep.subr.mxu0 %v2095
    %2728 = vmatpush1.msra.mxu0 %v2094
    %2729 = vmatprep.subr.mxu0 %v2097
    %2730 = vmatpush1.msra.mxu0 %v2096
    %2731 = vmatprep.subr.mxu0 %v2099
    %2732 = vmatpush1.msra.mxu0 %v2098
    %2733 = vmatprep.subr.mxu0 %v2101
    %2734 = vmatpush1.msra.mxu0 %v2100
    %2735 = vmatprep.subr.mxu0 %v2103
    %2736 = vmatpush1.msra.mxu0 %v2102
    %2737 = vmatprep.subr.mxu0 %v2105
    %2738 = vmatpush1.msra.mxu0 %v2104
    %2739 = vmatprep.subr.mxu0 %v2107
    %2740 = vmatpush1.msra.mxu0 %v2106
    %2741 = vmatprep.subr.mxu0 %v2109
    %2742 = vmatpush1.msra.mxu0 %v2108
    %2743 = vmatprep.subr.mxu0 %v2111
    %2744 = vmatpush1.msra.mxu0 %v2110
    %2745 = vmatprep.subr.mxu0 %v2113
    %2746 = vmatpush1.msra.mxu0 %v2112
    %2747 = vmatprep.subr.mxu0 %v2115
    %2748 = vmatpush1.msra.mxu0 %v2114
    %2749 = vmatprep.subr.mxu0 %v2117
    %2750 = vmatpush1.msra.mxu0 %v2116
    %2751 = vmatprep.subr.mxu0 %v2119
    %2752 = vmatpush1.msra.mxu0 %v2118
    %2753 = vmatprep.subr.mxu0 %v2121
    %2754 = vmatpush1.msra.mxu0 %v2120
    %2755 = vmatprep.subr.mxu0 %v2123
    %2756 = vmatpush1.msra.mxu0 %v2122
    %2757 = vmatprep.subr.mxu0 %v2125
    %2758 = vmatpush1.msra.mxu0 %v2124
    %2759 = vmatprep.subr.mxu0 %v2127
    %2760 = vmatpush1.msra.mxu0 %v2126
    %2761 = vmatprep.subr.mxu0 %v2129
    %2762 = vmatpush1.msra.mxu0 %v2128
    %2763 = vmatprep.subr.mxu0 %v2131
    %2764 = vmatpush1.msra.mxu0 %v2130
    %2765 = vmatprep.subr.mxu0 %v2133
    %2766 = vmatpush1.msra.mxu0 %v2132
    %2767 = vmatprep.subr.mxu0 %v2135
    %2768 = vmatpush1.msra.mxu0 %v2134
    %2769 = vmatprep.subr.mxu0 %v2137
    %2770 = vmatpush1.msra.mxu0 %v2136
    %2771 = vmatprep.subr.mxu0 %v2139
    %2772 = vmatpush1.msra.mxu0 %v2138
    %2773 = vmatprep.subr.mxu0 %v2141
    %2774 = vmatpush1.msra.mxu0 %v2140
    %2775 = vmatprep.subr.mxu0 %v2143
    %2776 = vmatpush1.msra.mxu0 %v2142
    %2777 = vmatprep.subr.mxu0 %v2145
    %2778 = vmatpush1.msra.mxu0 %v2144
    %2779 = vmatprep.subr.mxu0 %v2147
    %2780 = vmatpush1.msra.mxu0 %v2146
    %2781 = vmatprep.subr.mxu0 %v2149
    %2782 = vmatpush1.msra.mxu0 %v2148
    %2783 = vmatprep.subr.mxu0 %v2151
    %2784 = vmatpush1.msra.mxu0 %v2150
    %2785 = vmatprep.subr.mxu0 %v2153
    %2786 = vmatpush1.msra.mxu0 %v2152
    %2787 = vmatprep.mubr.f32.mxu0 %v2459
    %2788 = vmatmul.mubr.f32.gmra.mrb[0].mxu0 %v2457
    %v2789 = vpop.f32.mrb[0].mxu0
    %v2790 = vadd.f32 %v2719, %v2789
    %v2791 = vpop.f32.mrb[0].mxu0
    %v2792 = vadd.f32 %v2721, %v2791
    %2793 = vdwg.mxu0
    %2794 = vmatprep.subr.mxu0 %v2155
    %2795 = vmatpush1.msra.mxu0 %v2154
    %2796 = vmatprep.subr.mxu0 %v2157
    %2797 = vmatpush1.msra.mxu0 %v2156
    %2798 = vmatprep.subr.mxu0 %v2159
    %2799 = vmatpush1.msra.mxu0 %v2158
    %2800 = vmatprep.subr.mxu0 %v2161
    %2801 = vmatpush1.msra.mxu0 %v2160
    %2802 = vmatprep.subr.mxu0 %v2163
    %2803 = vmatpush1.msra.mxu0 %v2162
    %2804 = vmatprep.subr.mxu0 %v2165
    %2805 = vmatpush1.msra.mxu0 %v2164
    %2806 = vmatprep.subr.mxu0 %v2167
    %2807 = vmatpush1.msra.mxu0 %v2166
    %2808 = vmatprep.subr.mxu0 %v2169
    %2809 = vmatpush1.msra.mxu0 %v2168
    %2810 = vmatprep.subr.mxu0 %v2171
    %2811 = vmatpush1.msra.mxu0 %v2170
    %2812 = vmatprep.subr.mxu0 %v2173
    %2813 = vmatpush1.msra.mxu0 %v2172
    %2814 = vmatprep.subr.mxu0 %v2175
    %2815 = vmatpush1.msra.mxu0 %v2174
    %2816 = vmatprep.subr.mxu0 %v2177
    %2817 = vmatpush1.msra.mxu0 %v2176
    %2818 = vmatprep.subr.mxu0 %v2179
    %2819 = vmatpush1.msra.mxu0 %v2178
    %2820 = vmatprep.subr.mxu0 %v2181
    %2821 = vmatpush1.msra.mxu0 %v2180
    %2822 = vmatprep.subr.mxu0 %v2183
    %2823 = vmatpush1.msra.mxu0 %v2182
    %2824 = vmatprep.subr.mxu0 %v2185
    %2825 = vmatpush1.msra.mxu0 %v2184
    %2826 = vmatprep.subr.mxu0 %v2187
    %2827 = vmatpush1.msra.mxu0 %v2186
    %2828 = vmatprep.subr.mxu0 %v2189
    %2829 = vmatpush1.msra.mxu0 %v2188
    %2830 = vmatprep.subr.mxu0 %v2191
    %2831 = vmatpush1.msra.mxu0 %v2190
    %2832 = vmatprep.subr.mxu0 %v2193
    %2833 = vmatpush1.msra.mxu0 %v2192
    %2834 = vmatprep.subr.mxu0 %v2195
    %2835 = vmatpush1.msra.mxu0 %v2194
    %2836 = vmatprep.subr.mxu0 %v2197
    %2837 = vmatpush1.msra.mxu0 %v2196
    %2838 = vmatprep.subr.mxu0 %v2199
    %2839 = vmatpush1.msra.mxu0 %v2198
    %2840 = vmatprep.subr.mxu0 %v2201
    %2841 = vmatpush1.msra.mxu0 %v2200
    %2842 = vmatprep.subr.mxu0 %v2203
    %2843 = vmatpush1.msra.mxu0 %v2202
    %2844 = vmatprep.subr.mxu0 %v2205
    %2845 = vmatpush1.msra.mxu0 %v2204
    %2846 = vmatprep.subr.mxu0 %v2207
    %2847 = vmatpush1.msra.mxu0 %v2206
    %2848 = vmatprep.subr.mxu0 %v2209
    %2849 = vmatpush1.msra.mxu0 %v2208
    %2850 = vmatprep.subr.mxu0 %v2211
    %2851 = vmatpush1.msra.mxu0 %v2210
    %2852 = vmatprep.subr.mxu0 %v2213
    %2853 = vmatpush1.msra.mxu0 %v2212
    %2854 = vmatprep.subr.mxu0 %v2215
    %2855 = vmatpush1.msra.mxu0 %v2214
    %2856 = vmatprep.subr.mxu0 %v2217
    %2857 = vmatpush1.msra.mxu0 %v2216
    %2858 = vmatprep.mubr.f32.mxu0 %v2475
    %2859 = vmatmul.mubr.f32.gmra.mrb[0].mxu0 %v2467
    %v2860 = vpop.f32.mrb[0].mxu0
    %v2861 = vadd.f32 %v2790, %v2860
    %v2862 = vpop.f32.mrb[0].mxu0
    %v2863 = vadd.f32 %v2792, %v2862
    %2864 = vdwg.mxu0
    %2865 = vmatprep.subr.mxu0 %v2219
    %2866 = vmatpush1.msra.mxu0 %v2218
    %2867 = vmatprep.subr.mxu0 %v2221
    %2868 = vmatpush1.msra.mxu0 %v2220
    %2869 = vmatprep.subr.mxu0 %v2223
    %2870 = vmatpush1.msra.mxu0 %v2222
    %2871 = vmatprep.subr.mxu0 %v2225
    %2872 = vmatpush1.msra.mxu0 %v2224
    %2873 = vmatprep.subr.mxu0 %v2227
    %2874 = vmatpush1.msra.mxu0 %v2226
    %2875 = vmatprep.subr.mxu0 %v2229
    %2876 = vmatpush1.msra.mxu0 %v2228
    %2877 = vmatprep.subr.mxu0 %v2231
    %2878 = vmatpush1.msra.mxu0 %v2230
    %2879 = vmatprep.subr.mxu0 %v2233
    %2880 = vmatpush1.msra.mxu0 %v2232
    %2881 = vmatprep.subr.mxu0 %v2235
    %2882 = vmatpush1.msra.mxu0 %v2234
    %2883 = vmatprep.subr.mxu0 %v2237
    %2884 = vmatpush1.msra.mxu0 %v2236
    %2885 = vmatprep.subr.mxu0 %v2239
    %2886 = vmatpush1.msra.mxu0 %v2238
    %2887 = vmatprep.subr.mxu0 %v2241
    %2888 = vmatpush1.msra.mxu0 %v2240
    %2889 = vmatprep.subr.mxu0 %v2243
    %2890 = vmatpush1.msra.mxu0 %v2242
    %2891 = vmatprep.subr.mxu0 %v2245
    %2892 = vmatpush1.msra.mxu0 %v2244
    %2893 = vmatprep.subr.mxu0 %v2247
    %2894 = vmatpush1.msra.mxu0 %v2246
    %2895 = vmatprep.subr.mxu0 %v2249
    %2896 = vmatpush1.msra.mxu0 %v2248
    %2897 = vmatprep.subr.mxu0 %v2251
    %2898 = vmatpush1.msra.mxu0 %v2250
    %2899 = vmatprep.subr.mxu0 %v2253
    %2900 = vmatpush1.msra.mxu0 %v2252
    %2901 = vmatprep.subr.mxu0 %v2255
    %2902 = vmatpush1.msra.mxu0 %v2254
    %2903 = vmatprep.subr.mxu0 %v2257
    %2904 = vmatpush1.msra.mxu0 %v2256
    %2905 = vmatprep.subr.mxu0 %v2259
    %2906 = vmatpush1.msra.mxu0 %v2258
    %2907 = vmatprep.subr.mxu0 %v2261
    %2908 = vmatpush1.msra.mxu0 %v2260
    %2909 = vmatprep.subr.mxu0 %v2263
    %2910 = vmatpush1.msra.mxu0 %v2262
    %2911 = vmatprep.subr.mxu0 %v2265
    %2912 = vmatpush1.msra.mxu0 %v2264
    %2913 = vmatprep.subr.mxu0 %v2267
    %2914 = vmatpush1.msra.mxu0 %v2266
    %2915 = vmatprep.subr.mxu0 %v2269
    %2916 = vmatpush1.msra.mxu0 %v2268
    %2917 = vmatprep.subr.mxu0 %v2271
    %2918 = vmatpush1.msra.mxu0 %v2270
    %2919 = vmatprep.subr.mxu0 %v2273
    %2920 = vmatpush1.msra.mxu0 %v2272
    %2921 = vmatprep.subr.mxu0 %v2275
    %2922 = vmatpush1.msra.mxu0 %v2274
    %2923 = vmatprep.subr.mxu0 %v2277
    %2924 = vmatpush1.msra.mxu0 %v2276
    %2925 = vmatprep.subr.mxu0 %v2279
    %2926 = vmatpush1.msra.mxu0 %v2278
    %2927 = vmatprep.subr.mxu0 %v2281
    %2928 = vmatpush1.msra.mxu0 %v2280
    %2929 = vmatprep.mubr.f32.mxu0 %v2476
    %2930 = vmatmul.mubr.f32.gmra.mrb[0].mxu0 %v2474
    %v2931 = vpop.f32.mrb[0].mxu0
    %v2932 = vadd.f32 %v2861, %v2931
    %v2933 = vpop.f32.mrb[0].mxu0
    %v2934 = vadd.f32 %v2863, %v2933
    %2935 = vdwg.mxu0
    %2936 = vmatprep.subr.mxu0 %v2283
    %2937 = vmatpush1.msra.mxu0 %v2282
    %2938 = vmatprep.subr.mxu0 %v2285
    %2939 = vmatpush1.msra.mxu0 %v2284
    %2940 = vmatprep.subr.mxu0 %v2287
    %2941 = vmatpush1.msra.mxu0 %v2286
    %2942 = vmatprep.subr.mxu0 %v2289
    %2943 = vmatpush1.msra.mxu0 %v2288
    %2944 = vmatprep.subr.mxu0 %v2291
    %2945 = vmatpush1.msra.mxu0 %v2290
    %2946 = vmatprep.subr.mxu0 %v2293
    %2947 = vmatpush1.msra.mxu0 %v2292
    %2948 = vmatprep.subr.mxu0 %v2295
    %2949 = vmatpush1.msra.mxu0 %v2294
    %2950 = vmatprep.subr.mxu0 %v2297
    %2951 = vmatpush1.msra.mxu0 %v2296
    %2952 = vmatprep.subr.mxu0 %v2299
    %2953 = vmatpush1.msra.mxu0 %v2298
    %2954 = vmatprep.subr.mxu0 %v2301
    %2955 = vmatpush1.msra.mxu0 %v2300
    %2956 = vmatprep.subr.mxu0 %v2303
    %2957 = vmatpush1.msra.mxu0 %v2302
    %2958 = vmatprep.subr.mxu0 %v2305
    %2959 = vmatpush1.msra.mxu0 %v2304
    %2960 = vmatprep.subr.mxu0 %v2307
    %2961 = vmatpush1.msra.mxu0 %v2306
    %2962 = vmatprep.subr.mxu0 %v2309
    %2963 = vmatpush1.msra.mxu0 %v2308
    %2964 = vmatprep.subr.mxu0 %v2311
    %2965 = vmatpush1.msra.mxu0 %v2310
    %2966 = vmatprep.subr.mxu0 %v2313
    %2967 = vmatpush1.msra.mxu0 %v2312
    %2968 = vmatprep.subr.mxu0 %v2315
    %2969 = vmatpush1.msra.mxu0 %v2314
    %2970 = vmatprep.subr.mxu0 %v2317
    %2971 = vmatpush1.msra.mxu0 %v2316
    %2972 = vmatprep.subr.mxu0 %v2319
    %2973 = vmatpush1.msra.mxu0 %v2318
    %2974 = vmatprep.subr.mxu0 %v2321
    %2975 = vmatpush1.msra.mxu0 %v2320
    %2976 = vmatprep.subr.mxu0 %v2323
    %2977 = vmatpush1.msra.mxu0 %v2322
    %2978 = vmatprep.subr.mxu0 %v2325
    %2979 = vmatpush1.msra.mxu0 %v2324
    %2980 = vmatprep.subr.mxu0 %v2327
    %2981 = vmatpush1.msra.mxu0 %v2326
    %2982 = vmatprep.subr.mxu0 %v2329
    %2983 = vmatpush1.msra.mxu0 %v2328
    %2984 = vmatprep.subr.mxu0 %v2331
    %2985 = vmatpush1.msra.mxu0 %v2330
    %2986 = vmatprep.subr.mxu0 %v2333
    %2987 = vmatpush1.msra.mxu0 %v2332
    %2988 = vmatprep.subr.mxu0 %v2335
    %2989 = vmatpush1.msra.mxu0 %v2334
    %2990 = vmatprep.subr.mxu0 %v2337
    %2991 = vmatpush1.msra.mxu0 %v2336
    %2992 = vmatprep.subr.mxu0 %v2339
    %2993 = vmatpush1.msra.mxu0 %v2338
    %2994 = vmatprep.subr.mxu0 %v2341
    %2995 = vmatpush1.msra.mxu0 %v2340
    %2996 = vmatprep.subr.mxu0 %v2343
    %2997 = vmatpush1.msra.mxu0 %v2342
    %2998 = vmatprep.subr.mxu0 %v2345
    %2999 = vmatpush1.msra.mxu0 %v2344
    %3000 = vmatprep.mubr.f32.mxu0 %v2492
    %3001 = vmatmul.mubr.f32.gmra.mrb[0].mxu0 %v2484
    %v3002 = vpop.f32.mrb[0].mxu0
    %v3003 = vadd.f32 %v2932, %v3002
    %v3004 = vpop.f32.mrb[0].mxu0
    %v3005 = vadd.f32 %v2934, %v3004
    %3006 = vdwg.mxu0
    %3007 = vmatprep.subr.mxu0 %v2347
    %3008 = vmatpush1.msra.mxu0 %v2346
    %3009 = vmatprep.subr.mxu0 %v2349
    %3010 = vmatpush1.msra.mxu0 %v2348
    %3011 = vmatprep.subr.mxu0 %v2351
    %3012 = vmatpush1.msra.mxu0 %v2350
    %3013 = vmatprep.subr.mxu0 %v2353
    %3014 = vmatpush1.msra.mxu0 %v2352
    %3015 = vmatprep.subr.mxu0 %v2355
    %3016 = vmatpush1.msra.mxu0 %v2354
    %3017 = vmatprep.subr.mxu0 %v2357
    %3018 = vmatpush1.msra.mxu0 %v2356
    %3019 = vmatprep.subr.mxu0 %v2359
    %3020 = vmatpush1.msra.mxu0 %v2358
    %3021 = vmatprep.subr.mxu0 %v2361
    %3022 = vmatpush1.msra.mxu0 %v2360
    %3023 = vmatprep.subr.mxu0 %v2363
    %3024 = vmatpush1.msra.mxu0 %v2362
    %3025 = vmatprep.subr.mxu0 %v2365
    %3026 = vmatpush1.msra.mxu0 %v2364
    %3027 = vmatprep.subr.mxu0 %v2367
    %3028 = vmatpush1.msra.mxu0 %v2366
    %3029 = vmatprep.subr.mxu0 %v2369
    %3030 = vmatpush1.msra.mxu0 %v2368
    %3031 = vmatprep.subr.mxu0 %v2371
    %3032 = vmatpush1.msra.mxu0 %v2370
    %3033 = vmatprep.subr.mxu0 %v2373
    %3034 = vmatpush1.msra.mxu0 %v2372
    %3035 = vmatprep.subr.mxu0 %v2375
    %3036 = vmatpush1.msra.mxu0 %v2374
    %3037 = vmatprep.subr.mxu0 %v2377
    %3038 = vmatpush1.msra.mxu0 %v2376
    %3039 = vmatprep.subr.mxu0 %v2379
    %3040 = vmatpush1.msra.mxu0 %v2378
    %3041 = vmatprep.subr.mxu0 %v2381
    %3042 = vmatpush1.msra.mxu0 %v2380
    %3043 = vmatprep.subr.mxu0 %v2383
    %3044 = vmatpush1.msra.mxu0 %v2382
    %3045 = vmatprep.subr.mxu0 %v2385
    %3046 = vmatpush1.msra.mxu0 %v2384
    %3047 = vmatprep.subr.mxu0 %v2387
    %3048 = vmatpush1.msra.mxu0 %v2386
    %3049 = vmatprep.subr.mxu0 %v2389
    %3050 = vmatpush1.msra.mxu0 %v2388
    %3051 = vmatprep.subr.mxu0 %v2391
    %3052 = vmatpush1.msra.mxu0 %v2390
    %3053 = vmatprep.subr.mxu0 %v2393
    %3054 = vmatpush1.msra.mxu0 %v2392
    %3055 = vmatprep.subr.mxu0 %v2395
    %3056 = vmatpush1.msra.mxu0 %v2394
    %3057 = vmatprep.subr.mxu0 %v2397
    %3058 = vmatpush1.msra.mxu0 %v2396
    %3059 = vmatprep.subr.mxu0 %v2399
    %3060 = vmatpush1.msra.mxu0 %v2398
    %3061 = vmatprep.subr.mxu0 %v2401
    %3062 = vmatpush1.msra.mxu0 %v2400
    %3063 = vmatprep.subr.mxu0 %v2403
    %3064 = vmatpush1.msra.mxu0 %v2402
    %3065 = vmatprep.subr.mxu0 %v2405
    %3066 = vmatpush1.msra.mxu0 %v2404
    %3067 = vmatprep.subr.mxu0 %v2407
    %3068 = vmatpush1.msra.mxu0 %v2406
    %3069 = vmatprep.subr.mxu0 %v2409
    %3070 = vmatpush1.msra.mxu0 %v2408
    %3071 = vmatprep.mubr.f32.mxu0 %v2493
    %3072 = vmatmul.mubr.f32.gmra.mrb[0].mxu0 %v2491
    %v3073 = vpop.f32.mrb[0].mxu0
    %v3074 = vadd.f32 %v3003, %v3073
    %v3075 = vpop.f32.mrb[0].mxu0
    %v3076 = vadd.f32 %v3005, %v3075
    %3077 = vdwg.mxu0
    %v3078 = vmax.f32 %v3074, 0.0
    %v3079 = vmax.f32 %v3076, 0.0
    %v3080 = vld [vmem:[%s8] sm:$0xf]
    %v3081 = vld [vmem:[%s8 + $0x4] sm:$0xf]
    %v3082 = vld [vmem:[%s8 + $0x8] sm:$0xf]
    %v3083 = vld [vmem:[%s8 + $0xc] sm:$0xf]
    %v3084 = vld [vmem:[%s8 + $0x10] sm:$0xf]
    %v3085 = vld [vmem:[%s8 + $0x14] sm:$0xf]
    %v3086 = vld [vmem:[%s8 + $0x18] sm:$0xf]
    %v3087 = vld [vmem:[%s8 + $0x1c] sm:$0xf]
    %v3088 = vld [vmem:[%s8 + $0x20] sm:$0xf]
    %v3089 = vld [vmem:[%s8 + $0x24] sm:$0xf]
    %v3090 = vld [vmem:[%s8 + $0x28] sm:$0xf]
    %v3091 = vld [vmem:[%s8 + $0x2c] sm:$0xf]
    %v3092 = vld [vmem:[%s8 + $0x30] sm:$0xf]
    %v3093 = vld [vmem:[%s8 + $0x34] sm:$0xf]
    %v3094 = vld [vmem:[%s8 + $0x38] sm:$0xf]
    %v3095 = vld [vmem:[%s8 + $0x3c] sm:$0xf]
    %v3096 = vld [vmem:[%s8 + $0x40] sm:$0xf]
    %v3097 = vld [vmem:[%s8 + $0x44] sm:$0xf]
    %v3098 = vld [vmem:[%s8 + $0x48] sm:$0xf]
    %v3099 = vld [vmem:[%s8 + $0x4c] sm:$0xf]
    %v3100 = vld [vmem:[%s8 + $0x50] sm:$0xf]
    %v3101 = vld [vmem:[%s8 + $0x54] sm:$0xf]
    %v3102 = vld [vmem:[%s8 + $0x58] sm:$0xf]
    %v3103 = vld [vmem:[%s8 + $0x5c] sm:$0xf]
    %v3104 = vld [vmem:[%s8 + $0x60] sm:$0xf]
    %v3105 = vld [vmem:[%s8 + $0x64] sm:$0xf]
    %v3106 = vld [vmem:[%s8 + $0x68] sm:$0xf]
    %v3107 = vld [vmem:[%s8 + $0x6c] sm:$0xf]
    %v3108 = vld [vmem:[%s8 + $0x70] sm:$0xf]
    %v3109 = vld [vmem:[%s8 + $0x74] sm:$0xf]
    %v3110 = vld [vmem:[%s8 + $0x78] sm:$0xf]
    %v3111 = vld [vmem:[%s8 + $0x7c] sm:$0xf]
    %v3112 = vunpack.c.l.bf16 %v3080
    %v3113 = vunpack.c.l.bf16 %v3081
    %v3114 = vunpack.c.l.bf16 %v3082
    %v3115 = vunpack.c.l.bf16 %v3083
    %v3116 = vunpack.c.l.bf16 %v3084
    %v3117 = vunpack.c.l.bf16 %v3085
    %v3118 = vunpack.c.l.bf16 %v3086
    %v3119 = vunpack.c.l.bf16 %v3087
    %v3120 = vunpack.c.l.bf16 %v3088
    %v3121 = vunpack.c.l.bf16 %v3089
    %v3122 = vunpack.c.l.bf16 %v3090
    %v3123 = vunpack.c.l.bf16 %v3091
    %v3124 = vunpack.c.l.bf16 %v3092
    %v3125 = vunpack.c.l.bf16 %v3093
    %v3126 = vunpack.c.l.bf16 %v3094
    %v3127 = vunpack.c.l.bf16 %v3095
    %v3128 = vunpack.c.l.bf16 %v3096
    %v3129 = vunpack.c.l.bf16 %v3097
    %v3130 = vunpack.c.l.bf16 %v3098
    %v3131 = vunpack.c.l.bf16 %v3099
    %v3132 = vunpack.c.l.bf16 %v3100
    %v3133 = vunpack.c.l.bf16 %v3101
    %v3134 = vunpack.c.l.bf16 %v3102
    %v3135 = vunpack.c.l.bf16 %v3103
    %v3136 = vunpack.c.l.bf16 %v3104
    %v3137 = vunpack.c.l.bf16 %v3105
    %v3138 = vunpack.c.l.bf16 %v3106
    %v3139 = vunpack.c.l.bf16 %v3107
    %v3140 = vunpack.c.l.bf16 %v3108
    %v3141 = vunpack.c.l.bf16 %v3109
    %v3142 = vunpack.c.l.bf16 %v3110
    %v3143 = vunpack.c.l.bf16 %v3111
    %v3144 = vld [vmem:[#allocation2] sm:$0x1]
    %v3146 = vlaneseq
    %v3147 = vshrl.u32 %v3146, 7
    %v3148 = vsub.s32 0, %v3147
    %v3149 = vrot.slane %v3144, %v3148
    %3151 = vmatprep.subr.mxu0 0.0
    %3152 = vmatpush1.msra.mxu0 %v3112
    %3153 = vmatprep.subr.mxu0 0.0
    %3154 = vmatpush1.msra.mxu0 %v3113
    %3155 = vmatprep.subr.mxu0 0.0
    %3156 = vmatpush1.msra.mxu0 %v3114
    %3157 = vmatprep.subr.mxu0 0.0
    %3158 = vmatpush1.msra.mxu0 %v3115
    %3159 = vmatprep.subr.mxu0 0.0
    %3160 = vmatpush1.msra.mxu0 %v3116
    %3161 = vmatprep.subr.mxu0 0.0
    %3162 = vmatpush1.msra.mxu0 %v3117
    %3163 = vmatprep.subr.mxu0 0.0
    %3164 = vmatpush1.msra.mxu0 %v3118
    %3165 = vmatprep.subr.mxu0 0.0
    %3166 = vmatpush1.msra.mxu0 %v3119
    %3167 = vmatprep.subr.mxu0 0.0
    %3168 = vmatpush1.msra.mxu0 %v3120
    %3169 = vmatprep.subr.mxu0 0.0
    %3170 = vmatpush1.msra.mxu0 %v3121
    %3171 = vmatprep.subr.mxu0 0.0
    %3172 = vmatpush1.msra.mxu0 %v3122
    %3173 = vmatprep.subr.mxu0 0.0
    %3174 = vmatpush1.msra.mxu0 %v3123
    %3175 = vmatprep.subr.mxu0 0.0
    %3176 = vmatpush1.msra.mxu0 %v3124
    %3177 = vmatprep.subr.mxu0 0.0
    %3178 = vmatpush1.msra.mxu0 %v3125
    %3179 = vmatprep.subr.mxu0 0.0
    %3180 = vmatpush1.msra.mxu0 %v3126
    %3181 = vmatprep.subr.mxu0 0.0
    %3182 = vmatpush1.msra.mxu0 %v3127
    %3183 = vmatprep.subr.mxu0 0.0
    %3184 = vmatpush1.msra.mxu0 %v3128
    %3185 = vmatprep.subr.mxu0 0.0
    %3186 = vmatpush1.msra.mxu0 %v3129
    %3187 = vmatprep.subr.mxu0 0.0
    %3188 = vmatpush1.msra.mxu0 %v3130
    %3189 = vmatprep.subr.mxu0 0.0
    %3190 = vmatpush1.msra.mxu0 %v3131
    %3191 = vmatprep.subr.mxu0 0.0
    %3192 = vmatpush1.msra.mxu0 %v3132
    %3193 = vmatprep.subr.mxu0 0.0
    %3194 = vmatpush1.msra.mxu0 %v3133
    %3195 = vmatprep.subr.mxu0 0.0
    %3196 = vmatpush1.msra.mxu0 %v3134
    %3197 = vmatprep.subr.mxu0 0.0
    %3198 = vmatpush1.msra.mxu0 %v3135
    %3199 = vmatprep.subr.mxu0 0.0
    %3200 = vmatpush1.msra.mxu0 %v3136
    %3201 = vmatprep.subr.mxu0 0.0
    %3202 = vmatpush1.msra.mxu0 %v3137
    %3203 = vmatprep.subr.mxu0 0.0
    %3204 = vmatpush1.msra.mxu0 %v3138
    %3205 = vmatprep.subr.mxu0 0.0
    %3206 = vmatpush1.msra.mxu0 %v3139
    %3207 = vmatprep.subr.mxu0 0.0
    %3208 = vmatpush1.msra.mxu0 %v3140
    %3209 = vmatprep.subr.mxu0 0.0
    %3210 = vmatpush1.msra.mxu0 %v3141
    %3211 = vmatprep.subr.mxu0 0.0
    %3212 = vmatpush1.msra.mxu0 %v3142
    %3213 = vmatprep.subr.mxu0 0.0
    %3214 = vmatpush1.msra.mxu0 %v3143
    %3215 = vmatprep.mubr.f32.mxu0 %v3079
    %3216 = vmatmul.mubr.f32.gmra.mrb[0].mxu0 %v3078
    %v3217 = vpop.f32.mrb[0].mxu0
    %v3218 = vadd.f32 %v3149, %v3217
    %v3219 = vpop.f32.mrb[0].mxu0
    %3220 = vdwg.mxu0
    %v3221 = vtanh.pop %v3218
    %vm3222 = vcmask 1024
    %3223 = vst.msk [vmem:[%s11] sm:$0x3] %vm3222, %v3221
    // Predicated region
    $region46: #{dual_head_forward.3} parent=1 // pred_check
      _
    $region47: #{dual_head_forward.3} parent=1 // pred_check_branch
      %3225 = sbr.rel (0) target = $region49
    $region48: #{dual_head_forward.3} parent=1 // pred_region
      %s3227 = ssub.s32 32, 32
      %3228 = vsyncadd [#allocation5], %s3227
      %s3230 = sshll.u32 [#allocation6], 4
      %s3231 = int_to_ptr.vmem [resolvable:$true] %s3230
      %3233 = dma.vmem_to_hbm [thread:$0]  %s3231, 32, %s10, [#allocation5]
    $region49: #{dual_head_forward.3} parent=1 // pred_fallthru
      _
    // Predicated region
    $region50: #{dual_head_forward.3} parent=1 // pred_check
      _
    $region51: #{dual_head_forward.3} parent=1 // pred_check_branch
      %3235 = sbr.rel (0) target = $region53
    $region52: #{dual_head_forward.3} parent=1 // pred_region
      _
    $region53: #{dual_head_forward.3} parent=1 // pred_fallthru
      _
    // Predicated region
    $region54: #{dual_head_forward.3} parent=1 // pred_check
      _
    $region55: #{dual_head_forward.3} parent=1 // pred_check_branch
      %3237 = sbr.rel (0) target = $region57
    $region56: #{dual_head_forward.3} parent=1 // pred_region
      %3238 = dma.done [#allocation5], 32
    $region57: #{dual_head_forward.3} parent=1 // pred_fallthru
      _
    // Predicated region
    $region58: #{dual_head_forward.3} parent=1 // pred_check
      _
    $region59: #{dual_head_forward.3} parent=1 // pred_check_branch
      %3240 = sbr.rel (0) target = $region61
    $region60: #{dual_head_forward.3} parent=1 // pred_region
      _
    $region61: #{dual_head_forward.3} parent=1 // pred_fallthru
      _
    %3241 = vsyncpa [#allocation4], 1
    %3242 = vsyncpa [#allocation5], 1

// kernel: dual_head_forward.2
$region0: #{dual_head_forward.2}
  #allocation0 [shape = 'u32[]', space=smem, size = 0x4, offset = 0x4, fixed_abs, tag = 'smem constant byte address 0x4 - core index']
  #allocation1 [shape = 'u32[144,128]{1,0:T(1,128)}', space=vmem, size = 0x12000, scoped, tag = 'internal scratch']
  #allocation2 [shape = 'f32[2,10,24,128]{3,2,1,0:T(8,128)}', space=vmem, size = 0x3c000, scoped, tag = 'scratch operand']
  #allocation3 [shape = 'f32[2,8,8,1152]{3,2,1,0:T(8,128)}', space=vmem, size = 0x90000, scoped, tag = 'scratch operand']
  %s0 = inlined_call_operand.vmem [shape: f32[2,8,8,128], index: 0, kind: input, shape index: {}]
  %s1 = inlined_call_operand.hbm [shape: bf16[1152,128], index: 1, kind: input, shape index: {}]
  %s2 = inlined_call_operand.vmem [shape: f32[1,128], index: 2, kind: input, shape index: {}]
  %s3 = inlined_call_operand.vmem [shape: f32[1,128], index: 3, kind: input, shape index: {}]
  %s4 = inlined_call_operand.hbm [shape: bf16[1152,128], index: 4, kind: input, shape index: {}]
  %s5 = inlined_call_operand.vmem [shape: f32[1,128], index: 5, kind: input, shape index: {}]
  %s6 = inlined_call_operand.vmem [shape: f32[1,128], index: 6, kind: input, shape index: {}]
  %s7 = inlined_call_operand.hbm [shape: bf16[1152,128], index: 7, kind: input, shape index: {}]
  %s8 = inlined_call_operand.vmem [shape: f32[1,128], index: 8, kind: input, shape index: {}]
  %s9 = inlined_call_operand.vmem [shape: f32[1,128], index: 9, kind: input, shape index: {}]
  %s10 = inlined_call_operand.vmem [shape: bf16[128,128], index: 10, kind: input, shape index: {}]
  %s11 = inlined_call_operand.vmem [shape: f32[1,128], index: 11, kind: input, shape index: {}]
  %s12 = inlined_call_operand.vmem [shape: f32[128,128], index: 12, kind: output, shape index: {}]
  %s13 = sld [smem:[#allocation0]]
  $region70: #{dual_head_forward.2} parent=0
    _
  %s15 = ssub.s32 1, %s13
  %s16 = scalar_select 0, %s15, %s13
  $region1: #{dual_head_forward.2} parent=0
    #allocation4 [shape = 'u8[294912]{0}', space=vmem, size = 0x48000, scoped, tag = 'input window, operand 1, single buffered']
    #allocation5 [shape = 's32[1]{0}', space=sflag, size = 0x4, scoped, tag = 'scoped memory for dual_head_forward.2']
    #allocation6 [shape = 'u8[294912]{0}', space=vmem, size = 0x48000, scoped, tag = 'input window, operand 4, single buffered']
    #allocation7 [shape = 's32[1]{0}', space=sflag, size = 0x4, scoped, tag = 'scoped memory for dual_head_forward.2']
    #allocation8 [shape = 'u8[294912]{0}', space=vmem, size = 0x48000, scoped, tag = 'input window, operand 7, single buffered']
    %17 = vsyncpa [#allocation5], 0
    %18 = vsyncpa [#allocation7], 0
    // Predicated region
    $region2: #{dual_head_forward.2} parent=1 // pred_check
      _
    $region3: #{dual_head_forward.2} parent=1 // pred_check_branch
      %20 = sbr.rel (0) target = $region5
    $region4: #{dual_head_forward.2} parent=1 // pred_region
      _
    $region5: #{dual_head_forward.2} parent=1 // pred_fallthru
      _
    // Predicated region
    $region6: #{dual_head_forward.2} parent=1 // pred_check
      _
    $region7: #{dual_head_forward.2} parent=1 // pred_check_branch
      %22 = sbr.rel (0) target = $region9
    $region8: #{dual_head_forward.2} parent=1 // pred_region
      %s24 = ssub.s32 9216, 9216
      %25 = vsyncadd [#allocation5], %s24
      %s26 = sshll.u32 [#allocation4], 4
      %s27 = int_to_ptr.vmem [resolvable:$true] %s26
      %32 = dma.hbm_to_vmem [thread:$0]  %s1, 9216, %s27, [#allocation5], 64, 64, 4
    $region9: #{dual_head_forward.2} parent=1 // pred_fallthru
      _
    // Predicated region
    $region10: #{dual_head_forward.2} parent=1 // pred_check
      _
    $region11: #{dual_head_forward.2} parent=1 // pred_check_branch
      %34 = sbr.rel (0) target = $region13
    $region12: #{dual_head_forward.2} parent=1 // pred_region
      _
    $region13: #{dual_head_forward.2} parent=1 // pred_fallthru
      _
    // Predicated region
    $region14: #{dual_head_forward.2} parent=1 // pred_check
      _
    $region15: #{dual_head_forward.2} parent=1 // pred_check_branch
      %36 = sbr.rel (0) target = $region17
    $region16: #{dual_head_forward.2} parent=1 // pred_region
      _
    $region17: #{dual_head_forward.2} parent=1 // pred_fallthru
      _
    // Predicated region
    $region18: #{dual_head_forward.2} parent=1 // pred_check
      _
    $region19: #{dual_head_forward.2} parent=1 // pred_check_branch
      %38 = sbr.rel (0) target = $region21
    $region20: #{dual_head_forward.2} parent=1 // pred_region
      %s40 = ssub.s32 9216, 9216
      %41 = vsyncadd [#allocation7], %s40
      %s42 = sshll.u32 [#allocation6], 4
      %s43 = int_to_ptr.vmem [resolvable:$true] %s42
      %48 = dma.hbm_to_vmem [thread:$0]  %s4, 9216, %s43, [#allocation7], 64, 64, 4
    $region21: #{dual_head_forward.2} parent=1 // pred_fallthru
      _
    // Predicated region
    $region22: #{dual_head_forward.2} parent=1 // pred_check
      _
    $region23: #{dual_head_forward.2} parent=1 // pred_check_branch
      %50 = sbr.rel (0) target = $region25
    $region24: #{dual_head_forward.2} parent=1 // pred_region
      _
    $region25: #{dual_head_forward.2} parent=1 // pred_fallthru
      _
    // Predicated region
    $region26: #{dual_head_forward.2} parent=1 // pred_check
      _
    $region27: #{dual_head_forward.2} parent=1 // pred_check_branch
      %52 = sbr.rel (0) target = $region29
    $region28: #{dual_head_forward.2} parent=1 // pred_region
      _
    $region29: #{dual_head_forward.2} parent=1 // pred_fallthru
      _
    // Predicated region
    $region30: #{dual_head_forward.2} parent=1 // pred_check
      _
    $region31: #{dual_head_forward.2} parent=1 // pred_check_branch
      %54 = sbr.rel (0) target = $region33
    $region32: #{dual_head_forward.2} parent=1 // pred_region
      %s56 = ssub.s32 9216, 9216
      %57 = vsyncadd [#allocation7], %s56
      %s58 = sshll.u32 [#allocation8], 4
      %s59 = int_to_ptr.vmem [resolvable:$true] %s58
      %64 = dma.hbm_to_vmem [thread:$0]  %s7, 9216, %s59, [#allocation7], 64, 64, 4
    $region33: #{dual_head_forward.2} parent=1 // pred_fallthru
      _
    // Predicated region
    $region34: #{dual_head_forward.2} parent=1 // pred_check
      _
    $region35: #{dual_head_forward.2} parent=1 // pred_check_branch
      %66 = sbr.rel (0) target = $region37
    $region36: #{dual_head_forward.2} parent=1 // pred_region
      _
    $region37: #{dual_head_forward.2} parent=1 // pred_fallthru
      _
    // Predicated region
    $region38: #{dual_head_forward.2} parent=1 // pred_check
      _
    $region39: #{dual_head_forward.2} parent=1 // pred_check_branch
      %68 = sbr.rel (0) target = $region41
    $region40: #{dual_head_forward.2} parent=1 // pred_region
      _
    $region41: #{dual_head_forward.2} parent=1 // pred_fallthru
      _
    // Predicated region
    $region42: #{dual_head_forward.2} parent=1 // pred_check
      _
    $region43: #{dual_head_forward.2} parent=1 // pred_check_branch
      %70 = sbr.rel (0) target = $region45
    $region44: #{dual_head_forward.2} parent=1 // pred_region
      _
    $region45: #{dual_head_forward.2} parent=1 // pred_fallthru
      _
    // Predicated region
    $region46: #{dual_head_forward.2} parent=1 // pred_check
      _
    $region47: #{dual_head_forward.2} parent=1 // pred_check_branch
      %72 = sbr.rel (0) target = $region49
    $region48: #{dual_head_forward.2} parent=1 // pred_region
      _
    $region49: #{dual_head_forward.2} parent=1 // pred_fallthru
      _
    // Predicated region
    $region50: #{dual_head_forward.2} parent=1 // pred_check
      _
    $region51: #{dual_head_forward.2} parent=1 // pred_check_branch
      %74 = sbr.rel (0) target = $region53
    $region52: #{dual_head_forward.2} parent=1 // pred_region
      %75 = dma.done [#allocation5], 9216
    $region53: #{dual_head_forward.2} parent=1 // pred_fallthru
      _
    // Predicated region
    $region54: #{dual_head_forward.2} parent=1 // pred_check
      _
    $region55: #{dual_head_forward.2} parent=1 // pred_check_branch
      %77 = sbr.rel (0) target = $region57
    $region56: #{dual_head_forward.2} parent=1 // pred_region
      %78 = dma.done [#allocation7], 9216
    $region57: #{dual_head_forward.2} parent=1 // pred_fallthru
      _
    // Predicated region
    $region58: #{dual_head_forward.2} parent=1 // pred_check
      _
    $region59: #{dual_head_forward.2} parent=1 // pred_check_branch
      %80 = sbr.rel (0) target = $region61
    $region60: #{dual_head_forward.2} parent=1 // pred_region
      %81 = dma.done [#allocation7], 9216
    $region61: #{dual_head_forward.2} parent=1 // pred_fallthru
      _
    %82 = vst [vmem:[#allocation2] sm:$0xff] 0.0
    %83 = vst [vmem:[#allocation2 + $0x8] sm:$0xff] 0.0
    %84 = vst [vmem:[#allocation2 + $0x10] sm:$0xff] 0.0
    %85 = vst [vmem:[#allocation2 + $0x18] sm:$0xff] 0.0
    %86 = vst [vmem:[#allocation2 + $0x20] sm:$0xff] 0.0
    %87 = vst [vmem:[#allocation2 + $0x28] sm:$0xff] 0.0
    %88 = vst [vmem:[#allocation2 + $0x30] sm:$0xff] 0.0
    %89 = vst [vmem:[#allocation2 + $0x38] sm:$0xff] 0.0
    %90 = vst [vmem:[#allocation2 + $0x40] sm:$0xff] 0.0
    %91 = vst [vmem:[#allocation2 + $0x48] sm:$0xff] 0.0
    %92 = vst [vmem:[#allocation2 + $0x50] sm:$0xff] 0.0
    %93 = vst [vmem:[#allocation2 + $0x58] sm:$0xff] 0.0
    %94 = vst [vmem:[#allocation2 + $0x60] sm:$0xff] 0.0
    %95 = vst [vmem:[#allocation2 + $0x68] sm:$0xff] 0.0
    %96 = vst [vmem:[#allocation2 + $0x70] sm:$0xff] 0.0
    %97 = vst [vmem:[#allocation2 + $0x78] sm:$0xff] 0.0
    %98 = vst [vmem:[#allocation2 + $0x80] sm:$0xff] 0.0
    %99 = vst [vmem:[#allocation2 + $0x88] sm:$0xff] 0.0
    %100 = vst [vmem:[#allocation2 + $0x90] sm:$0xff] 0.0
    %101 = vst [vmem:[#allocation2 + $0x98] sm:$0xff] 0.0
    %102 = vst [vmem:[#allocation2 + $0xa0] sm:$0xff] 0.0
    %103 = vst [vmem:[#allocation2 + $0xa8] sm:$0xff] 0.0
    %104 = vst [vmem:[#allocation2 + $0xb0] sm:$0xff] 0.0
    %105 = vst [vmem:[#allocation2 + $0xb8] sm:$0xff] 0.0
    %106 = vst [vmem:[#allocation2 + $0xc0] sm:$0xff] 0.0
    %107 = vst [vmem:[#allocation2 + $0xc8] sm:$0xff] 0.0
    %108 = vst [vmem:[#allocation2 + $0xd0] sm:$0xff] 0.0
    %109 = vst [vmem:[#allocation2 + $0xd8] sm:$0xff] 0.0
    %110 = vst [vmem:[#allocation2 + $0xe0] sm:$0xff] 0.0
    %111 = vst [vmem:[#allocation2 + $0xe8] sm:$0xff] 0.0
    %112 = vst [vmem:[#allocation2 + $0xf0] sm:$0xff] 0.0
    %113 = vst [vmem:[#allocation2 + $0xf8] sm:$0xff] 0.0
    %114 = vst [vmem:[#allocation2 + $0x100] sm:$0xff] 0.0
    %115 = vst [vmem:[#allocation2 + $0x108] sm:$0xff] 0.0
    %116 = vst [vmem:[#allocation2 + $0x110] sm:$0xff] 0.0
    %117 = vst [vmem:[#allocation2 + $0x118] sm:$0xff] 0.0
    %118 = vst [vmem:[#allocation2 + $0x120] sm:$0xff] 0.0
    %119 = vst [vmem:[#allocation2 + $0x128] sm:$0xff] 0.0
    %120 = vst [vmem:[#allocation2 + $0x130] sm:$0xff] 0.0
    %121 = vst [vmem:[#allocation2 + $0x138] sm:$0xff] 0.0
    %122 = vst [vmem:[#allocation2 + $0x140] sm:$0xff] 0.0
    %123 = vst [vmem:[#allocation2 + $0x148] sm:$0xff] 0.0
    %124 = vst [vmem:[#allocation2 + $0x150] sm:$0xff] 0.0
    %125 = vst [vmem:[#allocation2 + $0x158] sm:$0xff] 0.0
    %126 = vst [vmem:[#allocation2 + $0x160] sm:$0xff] 0.0
    %127 = vst [vmem:[#allocation2 + $0x168] sm:$0xff] 0.0
    %128 = vst [vmem:[#allocation2 + $0x170] sm:$0xff] 0.0
    %129 = vst [vmem:[#allocation2 + $0x178] sm:$0xff] 0.0
    %130 = vst [vmem:[#allocation2 + $0x180] sm:$0xff] 0.0
    %131 = vst [vmem:[#allocation2 + $0x188] sm:$0xff] 0.0
    %132 = vst [vmem:[#allocation2 + $0x190] sm:$0xff] 0.0
    %133 = vst [vmem:[#allocation2 + $0x198] sm:$0xff] 0.0
    %134 = vst [vmem:[#allocation2 + $0x1a0] sm:$0xff] 0.0
    %135 = vst [vmem:[#allocation2 + $0x1a8] sm:$0xff] 0.0
    %136 = vst [vmem:[#allocation2 + $0x1b0] sm:$0xff] 0.0
    %137 = vst [vmem:[#allocation2 + $0x1b8] sm:$0xff] 0.0
    %138 = vst [vmem:[#allocation2 + $0x1c0] sm:$0xff] 0.0
    %139 = vst [vmem:[#allocation2 + $0x1c8] sm:$0xff] 0.0
    %140 = vst [vmem:[#allocation2 + $0x1d0] sm:$0xff] 0.0
    %141 = vst [vmem:[#allocation2 + $0x1d8] sm:$0xff] 0.0
    %v142 = vld [vmem:[%s0] sm:$0xff]
    %v143 = vld [vmem:[%s0 + $0x8] sm:$0xff]
    %v144 = vld [vmem:[%s0 + $0x10] sm:$0xff]
    %v145 = vld [vmem:[%s0 + $0x18] sm:$0xff]
    %v146 = vld [vmem:[%s0 + $0x20] sm:$0xff]
    %v147 = vld [vmem:[%s0 + $0x28] sm:$0xff]
    %v148 = vld [vmem:[%s0 + $0x30] sm:$0xff]
    %v149 = vld [vmem:[%s0 + $0x38] sm:$0xff]
    %v150 = vld [vmem:[%s0 + $0x40] sm:$0xff]
    %v151 = vld [vmem:[%s0 + $0x48] sm:$0xff]
    %v152 = vld [vmem:[%s0 + $0x50] sm:$0xff]
    %v153 = vld [vmem:[%s0 + $0x58] sm:$0xff]
    %v154 = vld [vmem:[%s0 + $0x60] sm:$0xff]
    %v155 = vld [vmem:[%s0 + $0x68] sm:$0xff]
    %v156 = vld [vmem:[%s0 + $0x70] sm:$0xff]
    %v157 = vld [vmem:[%s0 + $0x78] sm:$0xff]
    %s158 = scalar_lea.vmem [#allocation2], 24
    %159 = vst [vmem:[%s158 + $0x8] sm:$0xff] %v142
    %160 = vst [vmem:[%s158 + $0x20] sm:$0xff] %v143
    %161 = vst [vmem:[%s158 + $0x38] sm:$0xff] %v144
    %162 = vst [vmem:[%s158 + $0x50] sm:$0xff] %v145
    %163 = vst [vmem:[%s158 + $0x68] sm:$0xff] %v146
    %164 = vst [vmem:[%s158 + $0x80] sm:$0xff] %v147
    %165 = vst [vmem:[%s158 + $0x98] sm:$0xff] %v148
    %166 = vst [vmem:[%s158 + $0xb0] sm:$0xff] %v149
    %167 = vst [vmem:[%s158 + $0xf8] sm:$0xff] %v150
    %168 = vst [vmem:[%s158 + $0x110] sm:$0xff] %v151
    %169 = vst [vmem:[%s158 + $0x128] sm:$0xff] %v152
    %170 = vst [vmem:[%s158 + $0x140] sm:$0xff] %v153
    %171 = vst [vmem:[%s158 + $0x158] sm:$0xff] %v154
    %172 = vst [vmem:[%s158 + $0x170] sm:$0xff] %v155
    %173 = vst [vmem:[%s158 + $0x188] sm:$0xff] %v156
    %174 = vst [vmem:[%s158 + $0x1a0] sm:$0xff] %v157
    %v175 = vld [vmem:[#allocation2 + $0x7] sm:$0xff]
    %v176 = vld [vmem:[#allocation2 + $0x1f] sm:$0xff]
    %v177 = vld [vmem:[#allocation2 + $0x37] sm:$0xff]
    %v178 = vld [vmem:[#allocation2 + $0x4f] sm:$0xff]
    %v179 = vld [vmem:[#allocation2 + $0x67] sm:$0xff]
    %v180 = vld [vmem:[#allocation2 + $0x7f] sm:$0xff]
    %v181 = vld [vmem:[#allocation2 + $0x97] sm:$0xff]
    %v182 = vld [vmem:[#allocation2 + $0xaf] sm:$0xff]
    %v183 = vld [vmem:[#allocation2 + $0xf7] sm:$0xff]
    %v184 = vld [vmem:[#allocation2 + $0x10f] sm:$0xff]
    %v185 = vld [vmem:[#allocation2 + $0x127] sm:$0xff]
    %v186 = vld [vmem:[#allocation2 + $0x13f] sm:$0xff]
    %v187 = vld [vmem:[#allocation2 + $0x157] sm:$0xff]
    %v188 = vld [vmem:[#allocation2 + $0x16f] sm:$0xff]
    %v189 = vld [vmem:[#allocation2 + $0x187] sm:$0xff]
    %v190 = vld [vmem:[#allocation2 + $0x19f] sm:$0xff]
    %191 = vst [vmem:[#allocation3] sm:$0xff] %v175
    %192 = vst [vmem:[#allocation3 + $0x48] sm:$0xff] %v176
    %193 = vst [vmem:[#allocation3 + $0x90] sm:$0xff] %v177
    %194 = vst [vmem:[#allocation3 + $0xd8] sm:$0xff] %v178
    %195 = vst [vmem:[#allocation3 + $0x120] sm:$0xff] %v179
    %196 = vst [vmem:[#allocation3 + $0x168] sm:$0xff] %v180
    %197 = vst [vmem:[#allocation3 + $0x1b0] sm:$0xff] %v181
    %198 = vst [vmem:[#allocation3 + $0x1f8] sm:$0xff] %v182
    %199 = vst [vmem:[#allocation3 + $0x240] sm:$0xff] %v183
    %200 = vst [vmem:[#allocation3 + $0x288] sm:$0xff] %v184
    %201 = vst [vmem:[#allocation3 + $0x2d0] sm:$0xff] %v185
    %202 = vst [vmem:[#allocation3 + $0x318] sm:$0xff] %v186
    %203 = vst [vmem:[#allocation3 + $0x360] sm:$0xff] %v187
    %204 = vst [vmem:[#allocation3 + $0x3a8] sm:$0xff] %v188
    %205 = vst [vmem:[#allocation3 + $0x3f0] sm:$0xff] %v189
    %206 = vst [vmem:[#allocation3 + $0x438] sm:$0xff] %v190
    %v207 = vld [vmem:[#allocation2 + $0x8] sm:$0xff]
    %v208 = vld [vmem:[#allocation2 + $0x20] sm:$0xff]
    %v209 = vld [vmem:[#allocation2 + $0x38] sm:$0xff]
    %v210 = vld [vmem:[#allocation2 + $0x50] sm:$0xff]
    %v211 = vld [vmem:[#allocation2 + $0x68] sm:$0xff]
    %v212 = vld [vmem:[#allocation2 + $0x80] sm:$0xff]
    %v213 = vld [vmem:[#allocation2 + $0x98] sm:$0xff]
    %v214 = vld [vmem:[#allocation2 + $0xb0] sm:$0xff]
    %v215 = vld [vmem:[#allocation2 + $0xf8] sm:$0xff]
    %v216 = vld [vmem:[#allocation2 + $0x110] sm:$0xff]
    %v217 = vld [vmem:[#allocation2 + $0x128] sm:$0xff]
    %v218 = vld [vmem:[#allocation2 + $0x140] sm:$0xff]
    %v219 = vld [vmem:[#allocation2 + $0x158] sm:$0xff]
    %v220 = vld [vmem:[#allocation2 + $0x170] sm:$0xff]
    %v221 = vld [vmem:[#allocation2 + $0x188] sm:$0xff]
    %v222 = vld [vmem:[#allocation2 + $0x1a0] sm:$0xff]
    %223 = vst [vmem:[#allocation3 + $0x8] sm:$0xff] %v207
    %224 = vst [vmem:[#allocation3 + $0x50] sm:$0xff] %v208
    %225 = vst [vmem:[#allocation3 + $0x98] sm:$0xff] %v209
    %226 = vst [vmem:[#allocation3 + $0xe0] sm:$0xff] %v210
    %227 = vst [vmem:[#allocation3 + $0x128] sm:$0xff] %v211
    %228 = vst [vmem:[#allocation3 + $0x170] sm:$0xff] %v212
    %229 = vst [vmem:[#allocation3 + $0x1b8] sm:$0xff] %v213
    %230 = vst [vmem:[#allocation3 + $0x200] sm:$0xff] %v214
    %231 = vst [vmem:[#allocation3 + $0x248] sm:$0xff] %v215
    %232 = vst [vmem:[#allocation3 + $0x290] sm:$0xff] %v216
    %233 = vst [vmem:[#allocation3 + $0x2d8] sm:$0xff] %v217
    %234 = vst [vmem:[#allocation3 + $0x320] sm:$0xff] %v218
    %235 = vst [vmem:[#allocation3 + $0x368] sm:$0xff] %v219
    %236 = vst [vmem:[#allocation3 + $0x3b0] sm:$0xff] %v220
    %237 = vst [vmem:[#allocation3 + $0x3f8] sm:$0xff] %v221
    %238 = vst [vmem:[#allocation3 + $0x440] sm:$0xff] %v222
    %v239 = vld [vmem:[#allocation2 + $0x9] sm:$0xff]
    %v240 = vld [vmem:[#allocation2 + $0x21] sm:$0xff]
    %v241 = vld [vmem:[#allocation2 + $0x39] sm:$0xff]
    %v242 = vld [vmem:[#allocation2 + $0x51] sm:$0xff]
    %v243 = vld [vmem:[#allocation2 + $0x69] sm:$0xff]
    %v244 = vld [vmem:[#allocation2 + $0x81] sm:$0xff]
    %v245 = vld [vmem:[#allocation2 + $0x99] sm:$0xff]
    %v246 = vld [vmem:[#allocation2 + $0xb1] sm:$0xff]
    %v247 = vld [vmem:[#allocation2 + $0xf9] sm:$0xff]
    %v248 = vld [vmem:[#allocation2 + $0x111] sm:$0xff]
    %v249 = vld [vmem:[#allocation2 + $0x129] sm:$0xff]
    %v250 = vld [vmem:[#allocation2 + $0x141] sm:$0xff]
    %v251 = vld [vmem:[#allocation2 + $0x159] sm:$0xff]
    %v252 = vld [vmem:[#allocation2 + $0x171] sm:$0xff]
    %v253 = vld [vmem:[#allocation2 + $0x189] sm:$0xff]
    %v254 = vld [vmem:[#allocation2 + $0x1a1] sm:$0xff]
    %255 = vst [vmem:[#allocation3 + $0x10] sm:$0xff] %v239
    %256 = vst [vmem:[#allocation3 + $0x58] sm:$0xff] %v240
    %257 = vst [vmem:[#allocation3 + $0xa0] sm:$0xff] %v241
    %258 = vst [vmem:[#allocation3 + $0xe8] sm:$0xff] %v242
    %259 = vst [vmem:[#allocation3 + $0x130] sm:$0xff] %v243
    %260 = vst [vmem:[#allocation3 + $0x178] sm:$0xff] %v244
    %261 = vst [vmem:[#allocation3 + $0x1c0] sm:$0xff] %v245
    %262 = vst [vmem:[#allocation3 + $0x208] sm:$0xff] %v246
    %263 = vst [vmem:[#allocation3 + $0x250] sm:$0xff] %v247
    %264 = vst [vmem:[#allocation3 + $0x298] sm:$0xff] %v248
    %265 = vst [vmem:[#allocation3 + $0x2e0] sm:$0xff] %v249
    %266 = vst [vmem:[#allocation3 + $0x328] sm:$0xff] %v250
    %267 = vst [vmem:[#allocation3 + $0x370] sm:$0xff] %v251
    %268 = vst [vmem:[#allocation3 + $0x3b8] sm:$0xff] %v252
    %269 = vst [vmem:[#allocation3 + $0x400] sm:$0xff] %v253
    %270 = vst [vmem:[#allocation3 + $0x448] sm:$0xff] %v254
    %v271 = vld [vmem:[%s158 + $0x7] sm:$0xff]
    %v272 = vld [vmem:[%s158 + $0x1f] sm:$0xff]
    %v273 = vld [vmem:[%s158 + $0x37] sm:$0xff]
    %v274 = vld [vmem:[%s158 + $0x4f] sm:$0xff]
    %v275 = vld [vmem:[%s158 + $0x67] sm:$0xff]
    %v276 = vld [vmem:[%s158 + $0x7f] sm:$0xff]
    %v277 = vld [vmem:[%s158 + $0x97] sm:$0xff]
    %v278 = vld [vmem:[%s158 + $0xaf] sm:$0xff]
    %v279 = vld [vmem:[%s158 + $0xf7] sm:$0xff]
    %v280 = vld [vmem:[%s158 + $0x10f] sm:$0xff]
    %v281 = vld [vmem:[%s158 + $0x127] sm:$0xff]
    %v282 = vld [vmem:[%s158 + $0x13f] sm:$0xff]
    %v283 = vld [vmem:[%s158 + $0x157] sm:$0xff]
    %v284 = vld [vmem:[%s158 + $0x16f] sm:$0xff]
    %v285 = vld [vmem:[%s158 + $0x187] sm:$0xff]
    %v286 = vld [vmem:[%s158 + $0x19f] sm:$0xff]
    %287 = vst [vmem:[#allocation3 + $0x18] sm:$0xff] %v271
    %288 = vst [vmem:[#allocation3 + $0x60] sm:$0xff] %v272
    %289 = vst [vmem:[#allocation3 + $0xa8] sm:$0xff] %v273
    %290 = vst [vmem:[#allocation3 + $0xf0] sm:$0xff] %v274
    %291 = vst [vmem:[#allocation3 + $0x138] sm:$0xff] %v275
    %292 = vst [vmem:[#allocation3 + $0x180] sm:$0xff] %v276
    %293 = vst [vmem:[#allocation3 + $0x1c8] sm:$0xff] %v277
    %294 = vst [vmem:[#allocation3 + $0x210] sm:$0xff] %v278
    %295 = vst [vmem:[#allocation3 + $0x258] sm:$0xff] %v279
    %296 = vst [vmem:[#allocation3 + $0x2a0] sm:$0xff] %v280
    %297 = vst [vmem:[#allocation3 + $0x2e8] sm:$0xff] %v281
    %298 = vst [vmem:[#allocation3 + $0x330] sm:$0xff] %v282
    %299 = vst [vmem:[#allocation3 + $0x378] sm:$0xff] %v283
    %300 = vst [vmem:[#allocation3 + $0x3c0] sm:$0xff] %v284
    %301 = vst [vmem:[#allocation3 + $0x408] sm:$0xff] %v285
    %302 = vst [vmem:[#allocation3 + $0x450] sm:$0xff] %v286
    %v303 = vld [vmem:[%s158 + $0x8] sm:$0xff]
    %v304 = vld [vmem:[%s158 + $0x20] sm:$0xff]
    %v305 = vld [vmem:[%s158 + $0x38] sm:$0xff]
    %v306 = vld [vmem:[%s158 + $0x50] sm:$0xff]
    %v307 = vld [vmem:[%s158 + $0x68] sm:$0xff]
    %v308 = vld [vmem:[%s158 + $0x80] sm:$0xff]
    %v309 = vld [vmem:[%s158 + $0x98] sm:$0xff]
    %v310 = vld [vmem:[%s158 + $0xb0] sm:$0xff]
    %v311 = vld [vmem:[%s158 + $0xf8] sm:$0xff]
    %v312 = vld [vmem:[%s158 + $0x110] sm:$0xff]
    %v313 = vld [vmem:[%s158 + $0x128] sm:$0xff]
    %v314 = vld [vmem:[%s158 + $0x140] sm:$0xff]
    %v315 = vld [vmem:[%s158 + $0x158] sm:$0xff]
    %v316 = vld [vmem:[%s158 + $0x170] sm:$0xff]
    %v317 = vld [vmem:[%s158 + $0x188] sm:$0xff]
    %v318 = vld [vmem:[%s158 + $0x1a0] sm:$0xff]
    %319 = vst [vmem:[#allocation3 + $0x20] sm:$0xff] %v303
    %320 = vst [vmem:[#allocation3 + $0x68] sm:$0xff] %v304
    %321 = vst [vmem:[#allocation3 + $0xb0] sm:$0xff] %v305
    %322 = vst [vmem:[#allocation3 + $0xf8] sm:$0xff] %v306
    %323 = vst [vmem:[#allocation3 + $0x140] sm:$0xff] %v307
    %324 = vst [vmem:[#allocation3 + $0x188] sm:$0xff] %v308
    %325 = vst [vmem:[#allocation3 + $0x1d0] sm:$0xff] %v309
    %326 = vst [vmem:[#allocation3 + $0x218] sm:$0xff] %v310
    %327 = vst [vmem:[#allocation3 + $0x260] sm:$0xff] %v311
    %328 = vst [vmem:[#allocation3 + $0x2a8] sm:$0xff] %v312
    %329 = vst [vmem:[#allocation3 + $0x2f0] sm:$0xff] %v313
    %330 = vst [vmem:[#allocation3 + $0x338] sm:$0xff] %v314
    %331 = vst [vmem:[#allocation3 + $0x380] sm:$0xff] %v315
    %332 = vst [vmem:[#allocation3 + $0x3c8] sm:$0xff] %v316
    %333 = vst [vmem:[#allocation3 + $0x410] sm:$0xff] %v317
    %334 = vst [vmem:[#allocation3 + $0x458] sm:$0xff] %v318
    %v335 = vld [vmem:[%s158 + $0x9] sm:$0xff]
    %v336 = vld [vmem:[%s158 + $0x21] sm:$0xff]
    %v337 = vld [vmem:[%s158 + $0x39] sm:$0xff]
    %v338 = vld [vmem:[%s158 + $0x51] sm:$0xff]
    %v339 = vld [vmem:[%s158 + $0x69] sm:$0xff]
    %v340 = vld [vmem:[%s158 + $0x81] sm:$0xff]
    %v341 = vld [vmem:[%s158 + $0x99] sm:$0xff]
    %v342 = vld [vmem:[%s158 + $0xb1] sm:$0xff]
    %v343 = vld [vmem:[%s158 + $0xf9] sm:$0xff]
    %v344 = vld [vmem:[%s158 + $0x111] sm:$0xff]
    %v345 = vld [vmem:[%s158 + $0x129] sm:$0xff]
    %v346 = vld [vmem:[%s158 + $0x141] sm:$0xff]
    %v347 = vld [vmem:[%s158 + $0x159] sm:$0xff]
    %v348 = vld [vmem:[%s158 + $0x171] sm:$0xff]
    %v349 = vld [vmem:[%s158 + $0x189] sm:$0xff]
    %v350 = vld [vmem:[%s158 + $0x1a1] sm:$0xff]
    %351 = vst [vmem:[#allocation3 + $0x28] sm:$0xff] %v335
    %352 = vst [vmem:[#allocation3 + $0x70] sm:$0xff] %v336
    %353 = vst [vmem:[#allocation3 + $0xb8] sm:$0xff] %v337
    %354 = vst [vmem:[#allocation3 + $0x100] sm:$0xff] %v338
    %355 = vst [vmem:[#allocation3 + $0x148] sm:$0xff] %v339
    %356 = vst [vmem:[#allocation3 + $0x190] sm:$0xff] %v340
    %357 = vst [vmem:[#allocation3 + $0x1d8] sm:$0xff] %v341
    %358 = vst [vmem:[#allocation3 + $0x220] sm:$0xff] %v342
    %359 = vst [vmem:[#allocation3 + $0x268] sm:$0xff] %v343
    %360 = vst [vmem:[#allocation3 + $0x2b0] sm:$0xff] %v344
    %361 = vst [vmem:[#allocation3 + $0x2f8] sm:$0xff] %v345
    %362 = vst [vmem:[#allocation3 + $0x340] sm:$0xff] %v346
    %363 = vst [vmem:[#allocation3 + $0x388] sm:$0xff] %v347
    %364 = vst [vmem:[#allocation3 + $0x3d0] sm:$0xff] %v348
    %365 = vst [vmem:[#allocation3 + $0x418] sm:$0xff] %v349
    %366 = vst [vmem:[#allocation3 + $0x460] sm:$0xff] %v350
    %s367 = scalar_lea.vmem [#allocation2], 48
    %v368 = vld [vmem:[%s367 + $0x7] sm:$0xff]
    %v369 = vld [vmem:[%s367 + $0x1f] sm:$0xff]
    %v370 = vld [vmem:[%s367 + $0x37] sm:$0xff]
    %v371 = vld [vmem:[%s367 + $0x4f] sm:$0xff]
    %v372 = vld [vmem:[%s367 + $0x67] sm:$0xff]
    %v373 = vld [vmem:[%s367 + $0x7f] sm:$0xff]
    %v374 = vld [vmem:[%s367 + $0x97] sm:$0xff]
    %v375 = vld [vmem:[%s367 + $0xaf] sm:$0xff]
    %v376 = vld [vmem:[%s367 + $0xf7] sm:$0xff]
    %v377 = vld [vmem:[%s367 + $0x10f] sm:$0xff]
    %v378 = vld [vmem:[%s367 + $0x127] sm:$0xff]
    %v379 = vld [vmem:[%s367 + $0x13f] sm:$0xff]
    %v380 = vld [vmem:[%s367 + $0x157] sm:$0xff]
    %v381 = vld [vmem:[%s367 + $0x16f] sm:$0xff]
    %v382 = vld [vmem:[%s367 + $0x187] sm:$0xff]
    %v383 = vld [vmem:[%s367 + $0x19f] sm:$0xff]
    %384 = vst [vmem:[#allocation3 + $0x30] sm:$0xff] %v368
    %385 = vst [vmem:[#allocation3 + $0x78] sm:$0xff] %v369
    %386 = vst [vmem:[#allocation3 + $0xc0] sm:$0xff] %v370
    %387 = vst [vmem:[#allocation3 + $0x108] sm:$0xff] %v371
    %388 = vst [vmem:[#allocation3 + $0x150] sm:$0xff] %v372
    %389 = vst [vmem:[#allocation3 + $0x198] sm:$0xff] %v373
    %390 = vst [vmem:[#allocation3 + $0x1e0] sm:$0xff] %v374
    %391 = vst [vmem:[#allocation3 + $0x228] sm:$0xff] %v375
    %392 = vst [vmem:[#allocation3 + $0x270] sm:$0xff] %v376
    %393 = vst [vmem:[#allocation3 + $0x2b8] sm:$0xff] %v377
    %394 = vst [vmem:[#allocation3 + $0x300] sm:$0xff] %v378
    %395 = vst [vmem:[#allocation3 + $0x348] sm:$0xff] %v379
    %396 = vst [vmem:[#allocation3 + $0x390] sm:$0xff] %v380
    %397 = vst [vmem:[#allocation3 + $0x3d8] sm:$0xff] %v381
    %398 = vst [vmem:[#allocation3 + $0x420] sm:$0xff] %v382
    %399 = vst [vmem:[#allocation3 + $0x468] sm:$0xff] %v383
    %v400 = vld [vmem:[%s367 + $0x8] sm:$0xff]
    %v401 = vld [vmem:[%s367 + $0x20] sm:$0xff]
    %v402 = vld [vmem:[%s367 + $0x38] sm:$0xff]
    %v403 = vld [vmem:[%s367 + $0x50] sm:$0xff]
    %v404 = vld [vmem:[%s367 + $0x68] sm:$0xff]
    %v405 = vld [vmem:[%s367 + $0x80] sm:$0xff]
    %v406 = vld [vmem:[%s367 + $0x98] sm:$0xff]
    %v407 = vld [vmem:[%s367 + $0xb0] sm:$0xff]
    %v408 = vld [vmem:[%s367 + $0xf8] sm:$0xff]
    %v409 = vld [vmem:[%s367 + $0x110] sm:$0xff]
    %v410 = vld [vmem:[%s367 + $0x128] sm:$0xff]
    %v411 = vld [vmem:[%s367 + $0x140] sm:$0xff]
    %v412 = vld [vmem:[%s367 + $0x158] sm:$0xff]
    %v413 = vld [vmem:[%s367 + $0x170] sm:$0xff]
    %v414 = vld [vmem:[%s367 + $0x188] sm:$0xff]
    %v415 = vld [vmem:[%s367 + $0x1a0] sm:$0xff]
    %416 = vst [vmem:[#allocation3 + $0x38] sm:$0xff] %v400
    %417 = vst [vmem:[#allocation3 + $0x80] sm:$0xff] %v401
    %418 = vst [vmem:[#allocation3 + $0xc8] sm:$0xff] %v402
    %419 = vst [vmem:[#allocation3 + $0x110] sm:$0xff] %v403
    %420 = vst [vmem:[#allocation3 + $0x158] sm:$0xff] %v404
    %421 = vst [vmem:[#allocation3 + $0x1a0] sm:$0xff] %v405
    %422 = vst [vmem:[#allocation3 + $0x1e8] sm:$0xff] %v406
    %423 = vst [vmem:[#allocation3 + $0x230] sm:$0xff] %v407
    %424 = vst [vmem:[#allocation3 + $0x278] sm:$0xff] %v408
    %425 = vst [vmem:[#allocation3 + $0x2c0] sm:$0xff] %v409
    %426 = vst [vmem:[#allocation3 + $0x308] sm:$0xff] %v410
    %427 = vst [vmem:[#allocation3 + $0x350] sm:$0xff] %v411
    %428 = vst [vmem:[#allocation3 + $0x398] sm:$0xff] %v412
    %429 = vst [vmem:[#allocation3 + $0x3e0] sm:$0xff] %v413
    %430 = vst [vmem:[#allocation3 + $0x428] sm:$0xff] %v414
    %431 = vst [vmem:[#allocation3 + $0x470] sm:$0xff] %v415
    %v432 = vld [vmem:[%s367 + $0x9] sm:$0xff]
    %v433 = vld [vmem:[%s367 + $0x21] sm:$0xff]
    %v434 = vld [vmem:[%s367 + $0x39] sm:$0xff]
    %v435 = vld [vmem:[%s367 + $0x51] sm:$0xff]
    %v436 = vld [vmem:[%s367 + $0x69] sm:$0xff]
    %v437 = vld [vmem:[%s367 + $0x81] sm:$0xff]
    %v438 = vld [vmem:[%s367 + $0x99] sm:$0xff]
    %v439 = vld [vmem:[%s367 + $0xb1] sm:$0xff]
    %v440 = vld [vmem:[%s367 + $0xf9] sm:$0xff]
    %v441 = vld [vmem:[%s367 + $0x111] sm:$0xff]
    %v442 = vld [vmem:[%s367 + $0x129] sm:$0xff]
    %v443 = vld [vmem:[%s367 + $0x141] sm:$0xff]
    %v444 = vld [vmem:[%s367 + $0x159] sm:$0xff]
    %v445 = vld [vmem:[%s367 + $0x171] sm:$0xff]
    %v446 = vld [vmem:[%s367 + $0x189] sm:$0xff]
    %v447 = vld [vmem:[%s367 + $0x1a1] sm:$0xff]
    %448 = vst [vmem:[#allocation3 + $0x40] sm:$0xff] %v432
    %449 = vst [vmem:[#allocation3 + $0x88] sm:$0xff] %v433
    %450 = vst [vmem:[#allocation3 + $0xd0] sm:$0xff] %v434
    %451 = vst [vmem:[#allocation3 + $0x118] sm:$0xff] %v435
    %452 = vst [vmem:[#allocation3 + $0x160] sm:$0xff] %v436
    %453 = vst [vmem:[#allocation3 + $0x1a8] sm:$0xff] %v437
    %454 = vst [vmem:[#allocation3 + $0x1f0] sm:$0xff] %v438
    %455 = vst [vmem:[#allocation3 + $0x238] sm:$0xff] %v439
    %456 = vst [vmem:[#allocation3 + $0x280] sm:$0xff] %v440
    %457 = vst [vmem:[#allocation3 + $0x2c8] sm:$0xff] %v441
    %458 = vst [vmem:[#allocation3 + $0x310] sm:$0xff] %v442
    %459 = vst [vmem:[#allocation3 + $0x358] sm:$0xff] %v443
    %460 = vst [vmem:[#allocation3 + $0x3a0] sm:$0xff] %v444
    %461 = vst [vmem:[#allocation3 + $0x3e8] sm:$0xff] %v445
    %462 = vst [vmem:[#allocation3 + $0x430] sm:$0xff] %v446
    %463 = vst [vmem:[#allocation3 + $0x478] sm:$0xff] %v447
    %v464 = vld [vmem:[#allocation3] sm:$0xff]
    %v465 = vld [vmem:[#allocation3 + $0x8] sm:$0xff]
    %v466 = vld [vmem:[#allocation3 + $0x10] sm:$0xff]
    %v467 = vld [vmem:[#allocation3 + $0x18] sm:$0xff]
    %v468 = vld [vmem:[#allocation3 + $0x20] sm:$0xff]
    %v469 = vld [vmem:[#allocation3 + $0x28] sm:$0xff]
    %v470 = vld [vmem:[#allocation3 + $0x30] sm:$0xff]
    %v471 = vld [vmem:[#allocation3 + $0x38] sm:$0xff]
    %v472 = vld [vmem:[#allocation3 + $0x40] sm:$0xff]
    %v473 = vld [vmem:[#allocation3 + $0x48] sm:$0xff]
    %v474 = vld [vmem:[#allocation3 + $0x50] sm:$0xff]
    %v475 = vld [vmem:[#allocation3 + $0x58] sm:$0xff]
    %v476 = vld [vmem:[#allocation3 + $0x60] sm:$0xff]
    %v477 = vld [vmem:[#allocation3 + $0x68] sm:$0xff]
    %v478 = vld [vmem:[#allocation3 + $0x70] sm:$0xff]
    %v479 = vld [vmem:[#allocation3 + $0x78] sm:$0xff]
    %v480 = vld [vmem:[#allocation3 + $0x80] sm:$0xff]
    %v481 = vld [vmem:[#allocation3 + $0x88] sm:$0xff]
    %v482 = vld [vmem:[#allocation3 + $0x90] sm:$0xff]
    %v483 = vld [vmem:[#allocation3 + $0x98] sm:$0xff]
    %v484 = vld [vmem:[#allocation3 + $0xa0] sm:$0xff]
    %v485 = vld [vmem:[#allocation3 + $0xa8] sm:$0xff]
    %v486 = vld [vmem:[#allocation3 + $0xb0] sm:$0xff]
    %v487 = vld [vmem:[#allocation3 + $0xb8] sm:$0xff]
    %v488 = vld [vmem:[#allocation3 + $0xc0] sm:$0xff]
    %v489 = vld [vmem:[#allocation3 + $0xc8] sm:$0xff]
    %v490 = vld [vmem:[#allocation3 + $0xd0] sm:$0xff]
    %v491 = vld [vmem:[#allocation3 + $0xd8] sm:$0xff]
    %v492 = vld [vmem:[#allocation3 + $0xe0] sm:$0xff]
    %v493 = vld [vmem:[#allocation3 + $0xe8] sm:$0xff]
    %v494 = vld [vmem:[#allocation3 + $0xf0] sm:$0xff]
    %v495 = vld [vmem:[#allocation3 + $0xf8] sm:$0xff]
    %v496 = vld [vmem:[#allocation3 + $0x100] sm:$0xff]
    %v497 = vld [vmem:[#allocation3 + $0x108] sm:$0xff]
    %v498 = vld [vmem:[#allocation3 + $0x110] sm:$0xff]
    %v499 = vld [vmem:[#allocation3 + $0x118] sm:$0xff]
    %v500 = vld [vmem:[#allocation3 + $0x120] sm:$0xff]
    %v501 = vld [vmem:[#allocation3 + $0x128] sm:$0xff]
    %v502 = vld [vmem:[#allocation3 + $0x130] sm:$0xff]
    %v503 = vld [vmem:[#allocation3 + $0x138] sm:$0xff]
    %v504 = vld [vmem:[#allocation3 + $0x140] sm:$0xff]
    %v505 = vld [vmem:[#allocation3 + $0x148] sm:$0xff]
    %v506 = vld [vmem:[#allocation3 + $0x150] sm:$0xff]
    %v507 = vld [vmem:[#allocation3 + $0x158] sm:$0xff]
    %v508 = vld [vmem:[#allocation3 + $0x160] sm:$0xff]
    %v509 = vld [vmem:[#allocation3 + $0x168] sm:$0xff]
    %v510 = vld [vmem:[#allocation3 + $0x170] sm:$0xff]
    %v511 = vld [vmem:[#allocation3 + $0x178] sm:$0xff]
    %v512 = vld [vmem:[#allocation3 + $0x180] sm:$0xff]
    %v513 = vld [vmem:[#allocation3 + $0x188] sm:$0xff]
    %v514 = vld [vmem:[#allocation3 + $0x190] sm:$0xff]
    %v515 = vld [vmem:[#allocation3 + $0x198] sm:$0xff]
    %v516 = vld [vmem:[#allocation3 + $0x1a0] sm:$0xff]
    %v517 = vld [vmem:[#allocation3 + $0x1a8] sm:$0xff]
    %v518 = vld [vmem:[#allocation3 + $0x1b0] sm:$0xff]
    %v519 = vld [vmem:[#allocation3 + $0x1b8] sm:$0xff]
    %v520 = vld [vmem:[#allocation3 + $0x1c0] sm:$0xff]
    %v521 = vld [vmem:[#allocation3 + $0x1c8] sm:$0xff]
    %v522 = vld [vmem:[#allocation3 + $0x1d0] sm:$0xff]
    %v523 = vld [vmem:[#allocation3 + $0x1d8] sm:$0xff]
    %v524 = vld [vmem:[#allocation3 + $0x1e0] sm:$0xff]
    %v525 = vld [vmem:[#allocation3 + $0x1e8] sm:$0xff]
    %v526 = vld [vmem:[#allocation3 + $0x1f0] sm:$0xff]
    %v527 = vld [vmem:[#allocation3 + $0x1f8] sm:$0xff]
    %v528 = vld [vmem:[#allocation3 + $0x200] sm:$0xff]
    %v529 = vld [vmem:[#allocation3 + $0x208] sm:$0xff]
    %v530 = vld [vmem:[#allocation3 + $0x210] sm:$0xff]
    %v531 = vld [vmem:[#allocation3 + $0x218] sm:$0xff]
    %v532 = vld [vmem:[#allocation3 + $0x220] sm:$0xff]
    %v533 = vld [vmem:[#allocation3 + $0x228] sm:$0xff]
    %v534 = vld [vmem:[#allocation3 + $0x230] sm:$0xff]
    %v535 = vld [vmem:[#allocation3 + $0x238] sm:$0xff]
    %v536 = vld [vmem:[#allocation3 + $0x240] sm:$0xff]
    %v537 = vld [vmem:[#allocation3 + $0x248] sm:$0xff]
    %v538 = vld [vmem:[#allocation3 + $0x250] sm:$0xff]
    %v539 = vld [vmem:[#allocation3 + $0x258] sm:$0xff]
    %v540 = vld [vmem:[#allocation3 + $0x260] sm:$0xff]
    %v541 = vld [vmem:[#allocation3 + $0x268] sm:$0xff]
    %v542 = vld [vmem:[#allocation3 + $0x270] sm:$0xff]
    %v543 = vld [vmem:[#allocation3 + $0x278] sm:$0xff]
    %v544 = vld [vmem:[#allocation3 + $0x280] sm:$0xff]
    %v545 = vld [vmem:[#allocation3 + $0x288] sm:$0xff]
    %v546 = vld [vmem:[#allocation3 + $0x290] sm:$0xff]
    %v547 = vld [vmem:[#allocation3 + $0x298] sm:$0xff]
    %v548 = vld [vmem:[#allocation3 + $0x2a0] sm:$0xff]
    %v549 = vld [vmem:[#allocation3 + $0x2a8] sm:$0xff]
    %v550 = vld [vmem:[#allocation3 + $0x2b0] sm:$0xff]
    %v551 = vld [vmem:[#allocation3 + $0x2b8] sm:$0xff]
    %v552 = vld [vmem:[#allocation3 + $0x2c0] sm:$0xff]
    %v553 = vld [vmem:[#allocation3 + $0x2c8] sm:$0xff]
    %v554 = vld [vmem:[#allocation3 + $0x2d0] sm:$0xff]
    %v555 = vld [vmem:[#allocation3 + $0x2d8] sm:$0xff]
    %v556 = vld [vmem:[#allocation3 + $0x2e0] sm:$0xff]
    %v557 = vld [vmem:[#allocation3 + $0x2e8] sm:$0xff]
    %v558 = vld [vmem:[#allocation3 + $0x2f0] sm:$0xff]
    %v559 = vld [vmem:[#allocation3 + $0x2f8] sm:$0xff]
    %v560 = vld [vmem:[#allocation3 + $0x300] sm:$0xff]
    %v561 = vld [vmem:[#allocation3 + $0x308] sm:$0xff]
    %v562 = vld [vmem:[#allocation3 + $0x310] sm:$0xff]
    %v563 = vld [vmem:[#allocation3 + $0x318] sm:$0xff]
    %v564 = vld [vmem:[#allocation3 + $0x320] sm:$0xff]
    %v565 = vld [vmem:[#allocation3 + $0x328] sm:$0xff]
    %v566 = vld [vmem:[#allocation3 + $0x330] sm:$0xff]
    %v567 = vld [vmem:[#allocation3 + $0x338] sm:$0xff]
    %v568 = vld [vmem:[#allocation3 + $0x340] sm:$0xff]
    %v569 = vld [vmem:[#allocation3 + $0x348] sm:$0xff]
    %v570 = vld [vmem:[#allocation3 + $0x350] sm:$0xff]
    %v571 = vld [vmem:[#allocation3 + $0x358] sm:$0xff]
    %v572 = vld [vmem:[#allocation3 + $0x360] sm:$0xff]
    %v573 = vld [vmem:[#allocation3 + $0x368] sm:$0xff]
    %v574 = vld [vmem:[#allocation3 + $0x370] sm:$0xff]
    %v575 = vld [vmem:[#allocation3 + $0x378] sm:$0xff]
    %v576 = vld [vmem:[#allocation3 + $0x380] sm:$0xff]
    %v577 = vld [vmem:[#allocation3 + $0x388] sm:$0xff]
    %v578 = vld [vmem:[#allocation3 + $0x390] sm:$0xff]
    %v579 = vld [vmem:[#allocation3 + $0x398] sm:$0xff]
    %v580 = vld [vmem:[#allocation3 + $0x3a0] sm:$0xff]
    %v581 = vld [vmem:[#allocation3 + $0x3a8] sm:$0xff]
    %v582 = vld [vmem:[#allocation3 + $0x3b0] sm:$0xff]
    %v583 = vld [vmem:[#allocation3 + $0x3b8] sm:$0xff]
    %v584 = vld [vmem:[#allocation3 + $0x3c0] sm:$0xff]
    %v585 = vld [vmem:[#allocation3 + $0x3c8] sm:$0xff]
    %v586 = vld [vmem:[#allocation3 + $0x3d0] sm:$0xff]
    %v587 = vld [vmem:[#allocation3 + $0x3d8] sm:$0xff]
    %v588 = vld [vmem:[#allocation3 + $0x3e0] sm:$0xff]
    %v589 = vld [vmem:[#allocation3 + $0x3e8] sm:$0xff]
    %v590 = vld [vmem:[#allocation3 + $0x3f0] sm:$0xff]
    %v591 = vld [vmem:[#allocation3 + $0x3f8] sm:$0xff]
    %v592 = vld [vmem:[#allocation3 + $0x400] sm:$0xff]
    %v593 = vld [vmem:[#allocation3 + $0x408] sm:$0xff]
    %v594 = vld [vmem:[#allocation3 + $0x410] sm:$0xff]
    %v595 = vld [vmem:[#allocation3 + $0x418] sm:$0xff]
    %v596 = vld [vmem:[#allocation3 + $0x420] sm:$0xff]
    %v597 = vld [vmem:[#allocation3 + $0x428] sm:$0xff]
    %v598 = vld [vmem:[#allocation3 + $0x430] sm:$0xff]
    %v599 = vld [vmem:[#allocation3 + $0x438] sm:$0xff]
    %v600 = vld [vmem:[#allocation3 + $0x440] sm:$0xff]
    %v601 = vld [vmem:[#allocation3 + $0x448] sm:$0xff]
    %v602 = vld [vmem:[#allocation3 + $0x450] sm:$0xff]
    %v603 = vld [vmem:[#allocation3 + $0x458] sm:$0xff]
    %v604 = vld [vmem:[#allocation3 + $0x460] sm:$0xff]
    %v605 = vld [vmem:[#allocation3 + $0x468] sm:$0xff]
    %v606 = vld [vmem:[#allocation3 + $0x470] sm:$0xff]
    %v607 = vld [vmem:[#allocation3 + $0x478] sm:$0xff]
    %v608 = vld [vmem:[#allocation4] sm:$0xf]
    %v609 = vld [vmem:[#allocation4 + $0x4] sm:$0xf]
    %v610 = vld [vmem:[#allocation4 + $0x8] sm:$0xf]
    %v611 = vld [vmem:[#allocation4 + $0xc] sm:$0xf]
    %v612 = vld [vmem:[#allocation4 + $0x10] sm:$0xf]
    %v613 = vld [vmem:[#allocation4 + $0x14] sm:$0xf]
    %v614 = vld [vmem:[#allocation4 + $0x18] sm:$0xf]
    %v615 = vld [vmem:[#allocation4 + $0x1c] sm:$0xf]
    %v616 = vld [vmem:[#allocation4 + $0x20] sm:$0xf]
    %v617 = vld [vmem:[#allocation4 + $0x24] sm:$0xf]
    %v618 = vld [vmem:[#allocation4 + $0x28] sm:$0xf]
    %v619 = vld [vmem:[#allocation4 + $0x2c] sm:$0xf]
    %v620 = vld [vmem:[#allocation4 + $0x30] sm:$0xf]
    %v621 = vld [vmem:[#allocation4 + $0x34] sm:$0xf]
    %v622 = vld [vmem:[#allocation4 + $0x38] sm:$0xf]
    %v623 = vld [vmem:[#allocation4 + $0x3c] sm:$0xf]
    %v624 = vld [vmem:[#allocation4 + $0x40] sm:$0xf]
    %v625 = vld [vmem:[#allocation4 + $0x44] sm:$0xf]
    %v626 = vld [vmem:[#allocation4 + $0x48] sm:$0xf]
    %v627 = vld [vmem:[#allocation4 + $0x4c] sm:$0xf]
    %v628 = vld [vmem:[#allocation4 + $0x50] sm:$0xf]
    %v629 = vld [vmem:[#allocation4 + $0x54] sm:$0xf]
    %v630 = vld [vmem:[#allocation4 + $0x58] sm:$0xf]
    %v631 = vld [vmem:[#allocation4 + $0x5c] sm:$0xf]
    %v632 = vld [vmem:[#allocation4 + $0x60] sm:$0xf]
    %v633 = vld [vmem:[#allocation4 + $0x64] sm:$0xf]
    %v634 = vld [vmem:[#allocation4 + $0x68] sm:$0xf]
    %v635 = vld [vmem:[#allocation4 + $0x6c] sm:$0xf]
    %v636 = vld [vmem:[#allocation4 + $0x70] sm:$0xf]
    %v637 = vld [vmem:[#allocation4 + $0x74] sm:$0xf]
    %v638 = vld [vmem:[#allocation4 + $0x78] sm:$0xf]
    %v639 = vld [vmem:[#allocation4 + $0x7c] sm:$0xf]
    %v640 = vld [vmem:[#allocation4 + $0x80] sm:$0xf]
    %v641 = vld [vmem:[#allocation4 + $0x84] sm:$0xf]
    %v642 = vld [vmem:[#allocation4 + $0x88] sm:$0xf]
    %v643 = vld [vmem:[#allocation4 + $0x8c] sm:$0xf]
    %v644 = vld [vmem:[#allocation4 + $0x90] sm:$0xf]
    %v645 = vld [vmem:[#allocation4 + $0x94] sm:$0xf]
    %v646 = vld [vmem:[#allocation4 + $0x98] sm:$0xf]
    %v647 = vld [vmem:[#allocation4 + $0x9c] sm:$0xf]
    %v648 = vld [vmem:[#allocation4 + $0xa0] sm:$0xf]
    %v649 = vld [vmem:[#allocation4 + $0xa4] sm:$0xf]
    %v650 = vld [vmem:[#allocation4 + $0xa8] sm:$0xf]
    %v651 = vld [vmem:[#allocation4 + $0xac] sm:$0xf]
    %v652 = vld [vmem:[#allocation4 + $0xb0] sm:$0xf]
    %v653 = vld [vmem:[#allocation4 + $0xb4] sm:$0xf]
    %v654 = vld [vmem:[#allocation4 + $0xb8] sm:$0xf]
    %v655 = vld [vmem:[#allocation4 + $0xbc] sm:$0xf]
    %v656 = vld [vmem:[#allocation4 + $0xc0] sm:$0xf]
    %v657 = vld [vmem:[#allocation4 + $0xc4] sm:$0xf]
    %v658 = vld [vmem:[#allocation4 + $0xc8] sm:$0xf]
    %v659 = vld [vmem:[#allocation4 + $0xcc] sm:$0xf]
    %v660 = vld [vmem:[#allocation4 + $0xd0] sm:$0xf]
    %v661 = vld [vmem:[#allocation4 + $0xd4] sm:$0xf]
    %v662 = vld [vmem:[#allocation4 + $0xd8] sm:$0xf]
    %v663 = vld [vmem:[#allocation4 + $0xdc] sm:$0xf]
    %v664 = vld [vmem:[#allocation4 + $0xe0] sm:$0xf]
    %v665 = vld [vmem:[#allocation4 + $0xe4] sm:$0xf]
    %v666 = vld [vmem:[#allocation4 + $0xe8] sm:$0xf]
    %v667 = vld [vmem:[#allocation4 + $0xec] sm:$0xf]
    %v668 = vld [vmem:[#allocation4 + $0xf0] sm:$0xf]
    %v669 = vld [vmem:[#allocation4 + $0xf4] sm:$0xf]
    %v670 = vld [vmem:[#allocation4 + $0xf8] sm:$0xf]
    %v671 = vld [vmem:[#allocation4 + $0xfc] sm:$0xf]
    %v672 = vld [vmem:[#allocation4 + $0x100] sm:$0xf]
    %v673 = vld [vmem:[#allocation4 + $0x104] sm:$0xf]
    %v674 = vld [vmem:[#allocation4 + $0x108] sm:$0xf]
    %v675 = vld [vmem:[#allocation4 + $0x10c] sm:$0xf]
    %v676 = vld [vmem:[#allocation4 + $0x110] sm:$0xf]
    %v677 = vld [vmem:[#allocation4 + $0x114] sm:$0xf]
    %v678 = vld [vmem:[#allocation4 + $0x118] sm:$0xf]
    %v679 = vld [vmem:[#allocation4 + $0x11c] sm:$0xf]
    %v680 = vld [vmem:[#allocation4 + $0x120] sm:$0xf]
    %v681 = vld [vmem:[#allocation4 + $0x124] sm:$0xf]
    %v682 = vld [vmem:[#allocation4 + $0x128] sm:$0xf]
    %v683 = vld [vmem:[#allocation4 + $0x12c] sm:$0xf]
    %v684 = vld [vmem:[#allocation4 + $0x130] sm:$0xf]
    %v685 = vld [vmem:[#allocation4 + $0x134] sm:$0xf]
    %v686 = vld [vmem:[#allocation4 + $0x138] sm:$0xf]
    %v687 = vld [vmem:[#allocation4 + $0x13c] sm:$0xf]
    %v688 = vld [vmem:[#allocation4 + $0x140] sm:$0xf]
    %v689 = vld [vmem:[#allocation4 + $0x144] sm:$0xf]
    %v690 = vld [vmem:[#allocation4 + $0x148] sm:$0xf]
    %v691 = vld [vmem:[#allocation4 + $0x14c] sm:$0xf]
    %v692 = vld [vmem:[#allocation4 + $0x150] sm:$0xf]
    %v693 = vld [vmem:[#allocation4 + $0x154] sm:$0xf]
    %v694 = vld [vmem:[#allocation4 + $0x158] sm:$0xf]
    %v695 = vld [vmem:[#allocation4 + $0x15c] sm:$0xf]
    %v696 = vld [vmem:[#allocation4 + $0x160] sm:$0xf]
    %v697 = vld [vmem:[#allocation4 + $0x164] sm:$0xf]
    %v698 = vld [vmem:[#allocation4 + $0x168] sm:$0xf]
    %v699 = vld [vmem:[#allocation4 + $0x16c] sm:$0xf]
    %v700 = vld [vmem:[#allocation4 + $0x170] sm:$0xf]
    %v701 = vld [vmem:[#allocation4 + $0x174] sm:$0xf]
    %v702 = vld [vmem:[#allocation4 + $0x178] sm:$0xf]
    %v703 = vld [vmem:[#allocation4 + $0x17c] sm:$0xf]
    %v704 = vld [vmem:[#allocation4 + $0x180] sm:$0xf]
    %v705 = vld [vmem:[#allocation4 + $0x184] sm:$0xf]
    %v706 = vld [vmem:[#allocation4 + $0x188] sm:$0xf]
    %v707 = vld [vmem:[#allocation4 + $0x18c] sm:$0xf]
    %v708 = vld [vmem:[#allocation4 + $0x190] sm:$0xf]
    %v709 = vld [vmem:[#allocation4 + $0x194] sm:$0xf]
    %v710 = vld [vmem:[#allocation4 + $0x198] sm:$0xf]
    %v711 = vld [vmem:[#allocation4 + $0x19c] sm:$0xf]
    %v712 = vld [vmem:[#allocation4 + $0x1a0] sm:$0xf]
    %v713 = vld [vmem:[#allocation4 + $0x1a4] sm:$0xf]
    %v714 = vld [vmem:[#allocation4 + $0x1a8] sm:$0xf]
    %v715 = vld [vmem:[#allocation4 + $0x1ac] sm:$0xf]
    %v716 = vld [vmem:[#allocation4 + $0x1b0] sm:$0xf]
    %v717 = vld [vmem:[#allocation4 + $0x1b4] sm:$0xf]
    %v718 = vld [vmem:[#allocation4 + $0x1b8] sm:$0xf]
    %v719 = vld [vmem:[#allocation4 + $0x1bc] sm:$0xf]
    %v720 = vld [vmem:[#allocation4 + $0x1c0] sm:$0xf]
    %v721 = vld [vmem:[#allocation4 + $0x1c4] sm:$0xf]
    %v722 = vld [vmem:[#allocation4 + $0x1c8] sm:$0xf]
    %v723 = vld [vmem:[#allocation4 + $0x1cc] sm:$0xf]
    %v724 = vld [vmem:[#allocation4 + $0x1d0] sm:$0xf]
    %v725 = vld [vmem:[#allocation4 + $0x1d4] sm:$0xf]
    %v726 = vld [vmem:[#allocation4 + $0x1d8] sm:$0xf]
    %v727 = vld [vmem:[#allocation4 + $0x1dc] sm:$0xf]
    %v728 = vld [vmem:[#allocation4 + $0x1e0] sm:$0xf]
    %v729 = vld [vmem:[#allocation4 + $0x1e4] sm:$0xf]
    %v730 = vld [vmem:[#allocation4 + $0x1e8] sm:$0xf]
    %v731 = vld [vmem:[#allocation4 + $0x1ec] sm:$0xf]
    %v732 = vld [vmem:[#allocation4 + $0x1f0] sm:$0xf]
    %v733 = vld [vmem:[#allocation4 + $0x1f4] sm:$0xf]
    %v734 = vld [vmem:[#allocation4 + $0x1f8] sm:$0xf]
    %v735 = vld [vmem:[#allocation4 + $0x1fc] sm:$0xf]
    %v736 = vld [vmem:[#allocation4 + $0x200] sm:$0xf]
    %v737 = vld [vmem:[#allocation4 + $0x204] sm:$0xf]
    %v738 = vld [vmem:[#allocation4 + $0x208] sm:$0xf]
    %v739 = vld [vmem:[#allocation4 + $0x20c] sm:$0xf]
    %v740 = vld [vmem:[#allocation4 + $0x210] sm:$0xf]
    %v741 = vld [vmem:[#allocation4 + $0x214] sm:$0xf]
    %v742 = vld [vmem:[#allocation4 + $0x218] sm:$0xf]
    %v743 = vld [vmem:[#allocation4 + $0x21c] sm:$0xf]
    %v744 = vld [vmem:[#allocation4 + $0x220] sm:$0xf]
    %v745 = vld [vmem:[#allocation4 + $0x224] sm:$0xf]
    %v746 = vld [vmem:[#allocation4 + $0x228] sm:$0xf]
    %v747 = vld [vmem:[#allocation4 + $0x22c] sm:$0xf]
    %v748 = vld [vmem:[#allocation4 + $0x230] sm:$0xf]
    %v749 = vld [vmem:[#allocation4 + $0x234] sm:$0xf]
    %v750 = vld [vmem:[#allocation4 + $0x238] sm:$0xf]
    %v751 = vld [vmem:[#allocation4 + $0x23c] sm:$0xf]
    %v752 = vunpack.c.l.bf16 %v608
    %v753 = vunpack.c.l.bf16 %v609
    %v754 = vunpack.c.l.bf16 %v610
    %v755 = vunpack.c.l.bf16 %v611
    %v756 = vunpack.c.l.bf16 %v612
    %v757 = vunpack.c.l.bf16 %v613
    %v758 = vunpack.c.l.bf16 %v614
    %v759 = vunpack.c.l.bf16 %v615
    %v760 = vunpack.c.l.bf16 %v616
    %v761 = vunpack.c.l.bf16 %v617
    %v762 = vunpack.c.l.bf16 %v618
    %v763 = vunpack.c.l.bf16 %v619
    %v764 = vunpack.c.l.bf16 %v620
    %v765 = vunpack.c.l.bf16 %v621
    %v766 = vunpack.c.l.bf16 %v622
    %v767 = vunpack.c.l.bf16 %v623
    %v768 = vunpack.c.l.bf16 %v624
    %v769 = vunpack.c.l.bf16 %v625
    %v770 = vunpack.c.l.bf16 %v626
    %v771 = vunpack.c.l.bf16 %v627
    %v772 = vunpack.c.l.bf16 %v628
    %v773 = vunpack.c.l.bf16 %v629
    %v774 = vunpack.c.l.bf16 %v630
    %v775 = vunpack.c.l.bf16 %v631
    %v776 = vunpack.c.l.bf16 %v632
    %v777 = vunpack.c.l.bf16 %v633
    %v778 = vunpack.c.l.bf16 %v634
    %v779 = vunpack.c.l.bf16 %v635
    %v780 = vunpack.c.l.bf16 %v636
    %v781 = vunpack.c.l.bf16 %v637
    %v782 = vunpack.c.l.bf16 %v638
    %v783 = vunpack.c.l.bf16 %v639
    %v784 = vunpack.c.l.bf16 %v640
    %v785 = vunpack.c.l.bf16 %v641
    %v786 = vunpack.c.l.bf16 %v642
    %v787 = vunpack.c.l.bf16 %v643
    %v788 = vunpack.c.l.bf16 %v644
    %v789 = vunpack.c.l.bf16 %v645
    %v790 = vunpack.c.l.bf16 %v646
    %v791 = vunpack.c.l.bf16 %v647
    %v792 = vunpack.c.l.bf16 %v648
    %v793 = vunpack.c.l.bf16 %v649
    %v794 = vunpack.c.l.bf16 %v650
    %v795 = vunpack.c.l.bf16 %v651
    %v796 = vunpack.c.l.bf16 %v652
    %v797 = vunpack.c.l.bf16 %v653
    %v798 = vunpack.c.l.bf16 %v654
    %v799 = vunpack.c.l.bf16 %v655
    %v800 = vunpack.c.l.bf16 %v656
    %v801 = vunpack.c.l.bf16 %v657
    %v802 = vunpack.c.l.bf16 %v658
    %v803 = vunpack.c.l.bf16 %v659
    %v804 = vunpack.c.l.bf16 %v660
    %v805 = vunpack.c.l.bf16 %v661
    %v806 = vunpack.c.l.bf16 %v662
    %v807 = vunpack.c.l.bf16 %v663
    %v808 = vunpack.c.l.bf16 %v664
    %v809 = vunpack.c.l.bf16 %v665
    %v810 = vunpack.c.l.bf16 %v666
    %v811 = vunpack.c.l.bf16 %v667
    %v812 = vunpack.c.l.bf16 %v668
    %v813 = vunpack.c.l.bf16 %v669
    %v814 = vunpack.c.l.bf16 %v670
    %v815 = vunpack.c.l.bf16 %v671
    %v816 = vunpack.c.l.bf16 %v672
    %v817 = vunpack.c.l.bf16 %v673
    %v818 = vunpack.c.l.bf16 %v674
    %v819 = vunpack.c.l.bf16 %v675
    %v820 = vunpack.c.l.bf16 %v676
    %v821 = vunpack.c.l.bf16 %v677
    %v822 = vunpack.c.l.bf16 %v678
    %v823 = vunpack.c.l.bf16 %v679
    %v824 = vunpack.c.l.bf16 %v680
    %v825 = vunpack.c.l.bf16 %v681
    %v826 = vunpack.c.l.bf16 %v682
    %v827 = vunpack.c.l.bf16 %v683
    %v828 = vunpack.c.l.bf16 %v684
    %v829 = vunpack.c.l.bf16 %v685
    %v830 = vunpack.c.l.bf16 %v686
    %v831 = vunpack.c.l.bf16 %v687
    %v832 = vunpack.c.l.bf16 %v688
    %v833 = vunpack.c.l.bf16 %v689
    %v834 = vunpack.c.l.bf16 %v690
    %v835 = vunpack.c.l.bf16 %v691
    %v836 = vunpack.c.l.bf16 %v692
    %v837 = vunpack.c.l.bf16 %v693
    %v838 = vunpack.c.l.bf16 %v694
    %v839 = vunpack.c.l.bf16 %v695
    %v840 = vunpack.c.l.bf16 %v696
    %v841 = vunpack.c.l.bf16 %v697
    %v842 = vunpack.c.l.bf16 %v698
    %v843 = vunpack.c.l.bf16 %v699
    %v844 = vunpack.c.l.bf16 %v700
    %v845 = vunpack.c.l.bf16 %v701
    %v846 = vunpack.c.l.bf16 %v702
    %v847 = vunpack.c.l.bf16 %v703
    %v848 = vunpack.c.l.bf16 %v704
    %v849 = vunpack.c.l.bf16 %v705
    %v850 = vunpack.c.l.bf16 %v706
    %v851 = vunpack.c.l.bf16 %v707
    %v852 = vunpack.c.l.bf16 %v708
    %v853 = vunpack.c.l.bf16 %v709
    %v854 = vunpack.c.l.bf16 %v710
    %v855 = vunpack.c.l.bf16 %v711
    %v856 = vunpack.c.l.bf16 %v712
    %v857 = vunpack.c.l.bf16 %v713
    %v858 = vunpack.c.l.bf16 %v714
    %v859 = vunpack.c.l.bf16 %v715
    %v860 = vunpack.c.l.bf16 %v716
    %v861 = vunpack.c.l.bf16 %v717
    %v862 = vunpack.c.l.bf16 %v718
    %v863 = vunpack.c.l.bf16 %v719
    %v864 = vunpack.c.l.bf16 %v720
    %v865 = vunpack.c.l.bf16 %v721
    %v866 = vunpack.c.l.bf16 %v722
    %v867 = vunpack.c.l.bf16 %v723
    %v868 = vunpack.c.l.bf16 %v724
    %v869 = vunpack.c.l.bf16 %v725
    %v870 = vunpack.c.l.bf16 %v726
    %v871 = vunpack.c.l.bf16 %v727
    %v872 = vunpack.c.l.bf16 %v728
    %v873 = vunpack.c.l.bf16 %v729
    %v874 = vunpack.c.l.bf16 %v730
    %v875 = vunpack.c.l.bf16 %v731
    %v876 = vunpack.c.l.bf16 %v732
    %v877 = vunpack.c.l.bf16 %v733
    %v878 = vunpack.c.l.bf16 %v734
    %v879 = vunpack.c.l.bf16 %v735
    %v880 = vunpack.c.l.bf16 %v736
    %v881 = vunpack.c.l.bf16 %v737
    %v882 = vunpack.c.l.bf16 %v738
    %v883 = vunpack.c.l.bf16 %v739
    %v884 = vunpack.c.l.bf16 %v740
    %v885 = vunpack.c.l.bf16 %v741
    %v886 = vunpack.c.l.bf16 %v742
    %v887 = vunpack.c.l.bf16 %v743
    %v888 = vunpack.c.l.bf16 %v744
    %v889 = vunpack.c.l.bf16 %v745
    %v890 = vunpack.c.l.bf16 %v746
    %v891 = vunpack.c.l.bf16 %v747
    %v892 = vunpack.c.l.bf16 %v748
    %v893 = vunpack.c.l.bf16 %v749
    %v894 = vunpack.c.l.bf16 %v750
    %v895 = vunpack.c.l.bf16 %v751
    %896 = vmatprep.subr.mxu0 0.0
    %897 = vmatpush1.msra.mxu0 %v752
    %898 = vmatprep.subr.mxu0 0.0
    %899 = vmatpush1.msra.mxu0 %v753
    %900 = vmatprep.subr.mxu0 0.0
    %901 = vmatpush1.msra.mxu0 %v754
    %902 = vmatprep.subr.mxu0 0.0
    %903 = vmatpush1.msra.mxu0 %v755
    %904 = vmatprep.subr.mxu0 0.0
    %905 = vmatpush1.msra.mxu0 %v756
    %906 = vmatprep.subr.mxu0 0.0
    %907 = vmatpush1.msra.mxu0 %v757
    %908 = vmatprep.subr.mxu0 0.0
    %909 = vmatpush1.msra.mxu0 %v758
    %910 = vmatprep.subr.mxu0 0.0
    %911 = vmatpush1.msra.mxu0 %v759
    %912 = vmatprep.subr.mxu0 0.0
    %913 = vmatpush1.msra.mxu0 %v760
    %914 = vmatprep.subr.mxu0 0.0
    %915 = vmatpush1.msra.mxu0 %v761
    %916 = vmatprep.subr.mxu0 0.0
    %917 = vmatpush1.msra.mxu0 %v762
    %918 = vmatprep.subr.mxu0 0.0
    %919 = vmatpush1.msra.mxu0 %v763
    %920 = vmatprep.subr.mxu0 0.0
    %921 = vmatpush1.msra.mxu0 %v764
    %922 = vmatprep.subr.mxu0 0.0
    %923 = vmatpush1.msra.mxu0 %v765
    %924 = vmatprep.subr.mxu0 0.0
    %925 = vmatpush1.msra.mxu0 %v766
    %926 = vmatprep.subr.mxu0 0.0
    %927 = vmatpush1.msra.mxu0 %v767
    %928 = vmatprep.subr.mxu0 0.0
    %929 = vmatpush1.msra.mxu0 %v768
    %930 = vmatprep.subr.mxu0 0.0
    %931 = vmatpush1.msra.mxu0 %v769
    %932 = vmatprep.subr.mxu0 0.0
    %933 = vmatpush1.msra.mxu0 %v770
    %934 = vmatprep.subr.mxu0 0.0
    %935 = vmatpush1.msra.mxu0 %v771
    %936 = vmatprep.subr.mxu0 0.0
    %937 = vmatpush1.msra.mxu0 %v772
    %938 = vmatprep.subr.mxu0 0.0
    %939 = vmatpush1.msra.mxu0 %v773
    %940 = vmatprep.subr.mxu0 0.0
    %941 = vmatpush1.msra.mxu0 %v774
    %942 = vmatprep.subr.mxu0 0.0
    %943 = vmatpush1.msra.mxu0 %v775
    %944 = vmatprep.subr.mxu0 0.0
    %945 = vmatpush1.msra.mxu0 %v776
    %946 = vmatprep.subr.mxu0 0.0
    %947 = vmatpush1.msra.mxu0 %v777
    %948 = vmatprep.subr.mxu0 0.0
    %949 = vmatpush1.msra.mxu0 %v778
    %950 = vmatprep.subr.mxu0 0.0
    %951 = vmatpush1.msra.mxu0 %v779
    %952 = vmatprep.subr.mxu0 0.0
    %953 = vmatpush1.msra.mxu0 %v780
    %954 = vmatprep.subr.mxu0 0.0
    %955 = vmatpush1.msra.mxu0 %v781
    %956 = vmatprep.subr.mxu0 0.0
    %957 = vmatpush1.msra.mxu0 %v782
    %958 = vmatprep.subr.mxu0 0.0
    %959 = vmatpush1.msra.mxu0 %v783
    %960 = vmatprep.mubr.f32.mxu0 %v465
    %961 = vmatmul.mubr.f32.gmra.mrb[0].mxu0 %v464
    %v962 = vpop.f32.mrb[0].mxu0
    %v963 = vadd.f32 0.0, %v962
    %v964 = vpop.f32.mrb[0].mxu0
    %965 = vmatprep.mubr.f32.mxu0 %v474
    %966 = vmatmul.mubr.f32.gmra.mrb[0].mxu0 %v473
    %v967 = vpop.f32.mrb[0].mxu0
    %v968 = vadd.f32 0.0, %v967
    %v969 = vpop.f32.mrb[0].mxu0
    %970 = vmatprep.mubr.f32.mxu0 %v483
    %971 = vmatmul.mubr.f32.gmra.mrb[0].mxu0 %v482
    %v972 = vpop.f32.mrb[0].mxu0
    %v973 = vadd.f32 0.0, %v972
    %v974 = vpop.f32.mrb[0].mxu0
    %975 = vmatprep.mubr.f32.mxu0 %v492
    %976 = vmatmul.mubr.f32.gmra.mrb[0].mxu0 %v491
    %v977 = vpop.f32.mrb[0].mxu0
    %v978 = vadd.f32 0.0, %v977
    %v979 = vpop.f32.mrb[0].mxu0
    %980 = vmatprep.mubr.f32.mxu0 %v501
    %981 = vmatmul.mubr.f32.gmra.mrb[0].mxu0 %v500
    %v982 = vpop.f32.mrb[0].mxu0
    %v983 = vadd.f32 0.0, %v982
    %v984 = vpop.f32.mrb[0].mxu0
    %985 = vmatprep.mubr.f32.mxu0 %v510
    %986 = vmatmul.mubr.f32.gmra.mrb[0].mxu0 %v509
    %v987 = vpop.f32.mrb[0].mxu0
    %v988 = vadd.f32 0.0, %v987
    %v989 = vpop.f32.mrb[0].mxu0
    %990 = vmatprep.mubr.f32.mxu0 %v519
    %991 = vmatmul.mubr.f32.gmra.mrb[0].mxu0 %v518
    %v992 = vpop.f32.mrb[0].mxu0
    %v993 = vadd.f32 0.0, %v992
    %v994 = vpop.f32.mrb[0].mxu0
    %995 = vmatprep.mubr.f32.mxu0 %v528
    %996 = vmatmul.mubr.f32.gmra.mrb[0].mxu0 %v527
    %v997 = vpop.f32.mrb[0].mxu0
    %v998 = vadd.f32 0.0, %v997
    %v999 = vpop.f32.mrb[0].mxu0
    %1000 = vmatprep.mubr.f32.mxu0 %v537
    %1001 = vmatmul.mubr.f32.gmra.mrb[0].mxu0 %v536
    %v1002 = vpop.f32.mrb[0].mxu0
    %v1003 = vadd.f32 0.0, %v1002
    %v1004 = vpop.f32.mrb[0].mxu0
    %1005 = vmatprep.mubr.f32.mxu0 %v546
    %1006 = vmatmul.mubr.f32.gmra.mrb[0].mxu0 %v545
    %v1007 = vpop.f32.mrb[0].mxu0
    %v1008 = vadd.f32 0.0, %v1007
    %v1009 = vpop.f32.mrb[0].mxu0
    %1010 = vmatprep.mubr.f32.mxu0 %v555
    %1011 = vmatmul.mubr.f32.gmra.mrb[0].mxu0 %v554
    %v1012 = vpop.f32.mrb[0].mxu0
    %v1013 = vadd.f32 0.0, %v1012
    %v1014 = vpop.f32.mrb[0].mxu0
    %1015 = vmatprep.mubr.f32.mxu0 %v564
    %1016 = vmatmul.mubr.f32.gmra.mrb[0].mxu0 %v563
    %v1017 = vpop.f32.mrb[0].mxu0
    %v1018 = vadd.f32 0.0, %v1017
    %v1019 = vpop.f32.mrb[0].mxu0
    %1020 = vmatprep.mubr.f32.mxu0 %v573
    %1021 = vmatmul.mubr.f32.gmra.mrb[0].mxu0 %v572
    %v1022 = vpop.f32.mrb[0].mxu0
    %v1023 = vadd.f32 0.0, %v1022
    %v1024 = vpop.f32.mrb[0].mxu0
    %1025 = vmatprep.mubr.f32.mxu0 %v582
    %1026 = vmatmul.mubr.f32.gmra.mrb[0].mxu0 %v581
    %v1027 = vpop.f32.mrb[0].mxu0
    %v1028 = vadd.f32 0.0, %v1027
    %v1029 = vpop.f32.mrb[0].mxu0
    %1030 = vmatprep.mubr.f32.mxu0 %v591
    %1031 = vmatmul.mubr.f32.gmra.mrb[0].mxu0 %v590
    %v1032 = vpop.f32.mrb[0].mxu0
    %v1033 = vadd.f32 0.0, %v1032
    %v1034 = vpop.f32.mrb[0].mxu0
    %1035 = vmatprep.mubr.f32.mxu0 %v600
    %1036 = vmatmul.mubr.f32.gmra.mrb[0].mxu0 %v599
    %v1037 = vpop.f32.mrb[0].mxu0
    %v1038 = vadd.f32 0.0, %v1037
    %v1039 = vpop.f32.mrb[0].mxu0
    %1040 = vdwg.mxu0
    %1041 = vmatprep.subr.mxu0 0.0
    %1042 = vmatpush1.msra.mxu0 %v784
    %1043 = vmatprep.subr.mxu0 0.0
    %1044 = vmatpush1.msra.mxu0 %v785
    %1045 = vmatprep.subr.mxu0 0.0
    %1046 = vmatpush1.msra.mxu0 %v786
    %1047 = vmatprep.subr.mxu0 0.0
    %1048 = vmatpush1.msra.mxu0 %v787
    %1049 = vmatprep.subr.mxu0 0.0
    %1050 = vmatpush1.msra.mxu0 %v788
    %1051 = vmatprep.subr.mxu0 0.0
    %1052 = vmatpush1.msra.mxu0 %v789
    %1053 = vmatprep.subr.mxu0 0.0
    %1054 = vmatpush1.msra.mxu0 %v790
    %1055 = vmatprep.subr.mxu0 0.0
    %1056 = vmatpush1.msra.mxu0 %v791
    %1057 = vmatprep.subr.mxu0 0.0
    %1058 = vmatpush1.msra.mxu0 %v792
    %1059 = vmatprep.subr.mxu0 0.0
    %1060 = vmatpush1.msra.mxu0 %v793
    %1061 = vmatprep.subr.mxu0 0.0
    %1062 = vmatpush1.msra.mxu0 %v794
    %1063 = vmatprep.subr.mxu0 0.0
    %1064 = vmatpush1.msra.mxu0 %v795
    %1065 = vmatprep.subr.mxu0 0.0
    %1066 = vmatpush1.msra.mxu0 %v796
    %1067 = vmatprep.subr.mxu0 0.0
    %1068 = vmatpush1.msra.mxu0 %v797
    %1069 = vmatprep.subr.mxu0 0.0
    %1070 = vmatpush1.msra.mxu0 %v798
    %1071 = vmatprep.subr.mxu0 0.0
    %1072 = vmatpush1.msra.mxu0 %v799
    %1073 = vmatprep.subr.mxu0 0.0
    %1074 = vmatpush1.msra.mxu0 %v800
    %1075 = vmatprep.subr.mxu0 0.0
    %1076 = vmatpush1.msra.mxu0 %v801
    %1077 = vmatprep.subr.mxu0 0.0
    %1078 = vmatpush1.msra.mxu0 %v802
    %1079 = vmatprep.subr.mxu0 0.0
    %1080 = vmatpush1.msra.mxu0 %v803
    %1081 = vmatprep.subr.mxu0 0.0
    %1082 = vmatpush1.msra.mxu0 %v804
    %1083 = vmatprep.subr.mxu0 0.0
    %1084 = vmatpush1.msra.mxu0 %v805
    %1085 = vmatprep.subr.mxu0 0.0
    %1086 = vmatpush1.msra.mxu0 %v806
    %1087 = vmatprep.subr.mxu0 0.0
    %1088 = vmatpush1.msra.mxu0 %v807
    %1089 = vmatprep.subr.mxu0 0.0
    %1090 = vmatpush1.msra.mxu0 %v808
    %1091 = vmatprep.subr.mxu0 0.0
    %1092 = vmatpush1.msra.mxu0 %v809
    %1093 = vmatprep.subr.mxu0 0.0
    %1094 = vmatpush1.msra.mxu0 %v810
    %1095 = vmatprep.subr.mxu0 0.0
    %1096 = vmatpush1.msra.mxu0 %v811
    %1097 = vmatprep.subr.mxu0 0.0
    %1098 = vmatpush1.msra.mxu0 %v812
    %1099 = vmatprep.subr.mxu0 0.0
    %1100 = vmatpush1.msra.mxu0 %v813
    %1101 = vmatprep.subr.mxu0 0.0
    %1102 = vmatpush1.msra.mxu0 %v814
    %1103 = vmatprep.subr.mxu0 0.0
    %1104 = vmatpush1.msra.mxu0 %v815
    %1105 = vmatprep.mubr.f32.mxu0 %v467
    %1106 = vmatmul.mubr.f32.gmra.mrb[0].mxu0 %v466
    %v1107 = vpop.f32.mrb[0].mxu0
    %v1108 = vadd.f32 %v963, %v1107
    %v1109 = vpop.f32.mrb[0].mxu0
    %1110 = vmatprep.mubr.f32.mxu0 %v476
    %1111 = vmatmul.mubr.f32.gmra.mrb[0].mxu0 %v475
    %v1112 = vpop.f32.mrb[0].mxu0
    %v1113 = vadd.f32 %v968, %v1112
    %v1114 = vpop.f32.mrb[0].mxu0
    %1115 = vmatprep.mubr.f32.mxu0 %v485
    %1116 = vmatmul.mubr.f32.gmra.mrb[0].mxu0 %v484
    %v1117 = vpop.f32.mrb[0].mxu0
    %v1118 = vadd.f32 %v973, %v1117
    %v1119 = vpop.f32.mrb[0].mxu0
    %1120 = vmatprep.mubr.f32.mxu0 %v494
    %1121 = vmatmul.mubr.f32.gmra.mrb[0].mxu0 %v493
    %v1122 = vpop.f32.mrb[0].mxu0
    %v1123 = vadd.f32 %v978, %v1122
    %v1124 = vpop.f32.mrb[0].mxu0
    %1125 = vmatprep.mubr.f32.mxu0 %v503
    %1126 = vmatmul.mubr.f32.gmra.mrb[0].mxu0 %v502
    %v1127 = vpop.f32.mrb[0].mxu0
    %v1128 = vadd.f32 %v983, %v1127
    %v1129 = vpop.f32.mrb[0].mxu0
    %1130 = vmatprep.mubr.f32.mxu0 %v512
    %1131 = vmatmul.mubr.f32.gmra.mrb[0].mxu0 %v511
    %v1132 = vpop.f32.mrb[0].mxu0
    %v1133 = vadd.f32 %v988, %v1132
    %v1134 = vpop.f32.mrb[0].mxu0
    %1135 = vmatprep.mubr.f32.mxu0 %v521
    %1136 = vmatmul.mubr.f32.gmra.mrb[0].mxu0 %v520
    %v1137 = vpop.f32.mrb[0].mxu0
    %v1138 = vadd.f32 %v993, %v1137
    %v1139 = vpop.f32.mrb[0].mxu0
    %1140 = vmatprep.mubr.f32.mxu0 %v530
    %1141 = vmatmul.mubr.f32.gmra.mrb[0].mxu0 %v529
    %v1142 = vpop.f32.mrb[0].mxu0
    %v1143 = vadd.f32 %v998, %v1142
    %v1144 = vpop.f32.mrb[0].mxu0
    %1145 = vmatprep.mubr.f32.mxu0 %v539
    %1146 = vmatmul.mubr.f32.gmra.mrb[0].mxu0 %v538
    %v1147 = vpop.f32.mrb[0].mxu0
    %v1148 = vadd.f32 %v1003, %v1147
    %v1149 = vpop.f32.mrb[0].mxu0
    %1150 = vmatprep.mubr.f32.mxu0 %v548
    %1151 = vmatmul.mubr.f32.gmra.mrb[0].mxu0 %v547
    %v1152 = vpop.f32.mrb[0].mxu0
    %v1153 = vadd.f32 %v1008, %v1152
    %v1154 = vpop.f32.mrb[0].mxu0
    %1155 = vmatprep.mubr.f32.mxu0 %v557
    %1156 = vmatmul.mubr.f32.gmra.mrb[0].mxu0 %v556
    %v1157 = vpop.f32.mrb[0].mxu0
    %v1158 = vadd.f32 %v1013, %v1157
    %v1159 = vpop.f32.mrb[0].mxu0
    %1160 = vmatprep.mubr.f32.mxu0 %v566
    %1161 = vmatmul.mubr.f32.gmra.mrb[0].mxu0 %v565
    %v1162 = vpop.f32.mrb[0].mxu0
    %v1163 = vadd.f32 %v1018, %v1162
    %v1164 = vpop.f32.mrb[0].mxu0
    %1165 = vmatprep.mubr.f32.mxu0 %v575
    %1166 = vmatmul.mubr.f32.gmra.mrb[0].mxu0 %v574
    %v1167 = vpop.f32.mrb[0].mxu0
    %v1168 = vadd.f32 %v1023, %v1167
    %v1169 = vpop.f32.mrb[0].mxu0
    %1170 = vmatprep.mubr.f32.mxu0 %v584
    %1171 = vmatmul.mubr.f32.gmra.mrb[0].mxu0 %v583
    %v1172 = vpop.f32.mrb[0].mxu0
    %v1173 = vadd.f32 %v1028, %v1172
    %v1174 = vpop.f32.mrb[0].mxu0
    %1175 = vmatprep.mubr.f32.mxu0 %v593
    %1176 = vmatmul.mubr.f32.gmra.mrb[0].mxu0 %v592
    %v1177 = vpop.f32.mrb[0].mxu0
    %v1178 = vadd.f32 %v1033, %v1177
    %v1179 = vpop.f32.mrb[0].mxu0
    %1180 = vmatprep.mubr.f32.mxu0 %v602
    %1181 = vmatmul.mubr.f32.gmra.mrb[0].mxu0 %v601
    %v1182 = vpop.f32.mrb[0].mxu0
    %v1183 = vadd.f32 %v1038, %v1182
    %v1184 = vpop.f32.mrb[0].mxu0
    %1185 = vdwg.mxu0
    %1186 = vmatprep.subr.mxu0 0.0
    %1187 = vmatpush1.msra.mxu0 %v816
    %1188 = vmatprep.subr.mxu0 0.0
    %1189 = vmatpush1.msra.mxu0 %v817
    %1190 = vmatprep.subr.mxu0 0.0
    %1191 = vmatpush1.msra.mxu0 %v818
    %1192 = vmatprep.subr.mxu0 0.0
    %1193 = vmatpush1.msra.mxu0 %v819
    %1194 = vmatprep.subr.mxu0 0.0
    %1195 = vmatpush1.msra.mxu0 %v820
    %1196 = vmatprep.subr.mxu0 0.0
    %1197 = vmatpush1.msra.mxu0 %v821
    %1198 = vmatprep.subr.mxu0 0.0
    %1199 = vmatpush1.msra.mxu0 %v822
    %1200 = vmatprep.subr.mxu0 0.0
    %1201 = vmatpush1.msra.mxu0 %v823
    %1202 = vmatprep.subr.mxu0 0.0
    %1203 = vmatpush1.msra.mxu0 %v824
    %1204 = vmatprep.subr.mxu0 0.0
    %1205 = vmatpush1.msra.mxu0 %v825
    %1206 = vmatprep.subr.mxu0 0.0
    %1207 = vmatpush1.msra.mxu0 %v826
    %1208 = vmatprep.subr.mxu0 0.0
    %1209 = vmatpush1.msra.mxu0 %v827
    %1210 = vmatprep.subr.mxu0 0.0
    %1211 = vmatpush1.msra.mxu0 %v828
    %1212 = vmatprep.subr.mxu0 0.0
    %1213 = vmatpush1.msra.mxu0 %v829
    %1214 = vmatprep.subr.mxu0 0.0
    %1215 = vmatpush1.msra.mxu0 %v830
    %1216 = vmatprep.subr.mxu0 0.0
    %1217 = vmatpush1.msra.mxu0 %v831
    %1218 = vmatprep.subr.mxu0 0.0
    %1219 = vmatpush1.msra.mxu0 %v832
    %1220 = vmatprep.subr.mxu0 0.0
    %1221 = vmatpush1.msra.mxu0 %v833
    %1222 = vmatprep.subr.mxu0 0.0
    %1223 = vmatpush1.msra.mxu0 %v834
    %1224 = vmatprep.subr.mxu0 0.0
    %1225 = vmatpush1.msra.mxu0 %v835
    %1226 = vmatprep.subr.mxu0 0.0
    %1227 = vmatpush1.msra.mxu0 %v836
    %1228 = vmatprep.subr.mxu0 0.0
    %1229 = vmatpush1.msra.mxu0 %v837
    %1230 = vmatprep.subr.mxu0 0.0
    %1231 = vmatpush1.msra.mxu0 %v838
    %1232 = vmatprep.subr.mxu0 0.0
    %1233 = vmatpush1.msra.mxu0 %v839
    %1234 = vmatprep.subr.mxu0 0.0
    %1235 = vmatpush1.msra.mxu0 %v840
    %1236 = vmatprep.subr.mxu0 0.0
    %1237 = vmatpush1.msra.mxu0 %v841
    %1238 = vmatprep.subr.mxu0 0.0
    %1239 = vmatpush1.msra.mxu0 %v842
    %1240 = vmatprep.subr.mxu0 0.0
    %1241 = vmatpush1.msra.mxu0 %v843
    %1242 = vmatprep.subr.mxu0 0.0
    %1243 = vmatpush1.msra.mxu0 %v844
    %1244 = vmatprep.subr.mxu0 0.0
    %1245 = vmatpush1.msra.mxu0 %v845
    %1246 = vmatprep.subr.mxu0 0.0
    %1247 = vmatpush1.msra.mxu0 %v846
    %1248 = vmatprep.subr.mxu0 0.0
    %1249 = vmatpush1.msra.mxu0 %v847
    %1250 = vmatprep.mubr.f32.mxu0 %v469
    %1251 = vmatmul.mubr.f32.gmra.mrb[0].mxu0 %v468
    %v1252 = vpop.f32.mrb[0].mxu0
    %v1253 = vadd.f32 %v1108, %v1252
    %v1254 = vpop.f32.mrb[0].mxu0
    %1255 = vmatprep.mubr.f32.mxu0 %v478
    %1256 = vmatmul.mubr.f32.gmra.mrb[0].mxu0 %v477
    %v1257 = vpop.f32.mrb[0].mxu0
    %v1258 = vadd.f32 %v1113, %v1257
    %v1259 = vpop.f32.mrb[0].mxu0
    %1260 = vmatprep.mubr.f32.mxu0 %v487
    %1261 = vmatmul.mubr.f32.gmra.mrb[0].mxu0 %v486
    %v1262 = vpop.f32.mrb[0].mxu0
    %v1263 = vadd.f32 %v1118, %v1262
    %v1264 = vpop.f32.mrb[0].mxu0
    %1265 = vmatprep.mubr.f32.mxu0 %v496
    %1266 = vmatmul.mubr.f32.gmra.mrb[0].mxu0 %v495
    %v1267 = vpop.f32.mrb[0].mxu0
    %v1268 = vadd.f32 %v1123, %v1267
    %v1269 = vpop.f32.mrb[0].mxu0
    %1270 = vmatprep.mubr.f32.mxu0 %v505
    %1271 = vmatmul.mubr.f32.gmra.mrb[0].mxu0 %v504
    %v1272 = vpop.f32.mrb[0].mxu0
    %v1273 = vadd.f32 %v1128, %v1272
    %v1274 = vpop.f32.mrb[0].mxu0
    %1275 = vmatprep.mubr.f32.mxu0 %v514
    %1276 = vmatmul.mubr.f32.gmra.mrb[0].mxu0 %v513
    %v1277 = vpop.f32.mrb[0].mxu0
    %v1278 = vadd.f32 %v1133, %v1277
    %v1279 = vpop.f32.mrb[0].mxu0
    %1280 = vmatprep.mubr.f32.mxu0 %v523
    %1281 = vmatmul.mubr.f32.gmra.mrb[0].mxu0 %v522
    %v1282 = vpop.f32.mrb[0].mxu0
    %v1283 = vadd.f32 %v1138, %v1282
    %v1284 = vpop.f32.mrb[0].mxu0
    %1285 = vmatprep.mubr.f32.mxu0 %v532
    %1286 = vmatmul.mubr.f32.gmra.mrb[0].mxu0 %v531
    %v1287 = vpop.f32.mrb[0].mxu0
    %v1288 = vadd.f32 %v1143, %v1287
    %v1289 = vpop.f32.mrb[0].mxu0
    %1290 = vmatprep.mubr.f32.mxu0 %v541
    %1291 = vmatmul.mubr.f32.gmra.mrb[0].mxu0 %v540
    %v1292 = vpop.f32.mrb[0].mxu0
    %v1293 = vadd.f32 %v1148, %v1292
    %v1294 = vpop.f32.mrb[0].mxu0
    %1295 = vmatprep.mubr.f32.mxu0 %v550
    %1296 = vmatmul.mubr.f32.gmra.mrb[0].mxu0 %v549
    %v1297 = vpop.f32.mrb[0].mxu0
    %v1298 = vadd.f32 %v1153, %v1297
    %v1299 = vpop.f32.mrb[0].mxu0
    %1300 = vmatprep.mubr.f32.mxu0 %v559
    %1301 = vmatmul.mubr.f32.gmra.mrb[0].mxu0 %v558
    %v1302 = vpop.f32.mrb[0].mxu0
    %v1303 = vadd.f32 %v1158, %v1302
    %v1304 = vpop.f32.mrb[0].mxu0
    %1305 = vmatprep.mubr.f32.mxu0 %v568
    %1306 = vmatmul.mubr.f32.gmra.mrb[0].mxu0 %v567
    %v1307 = vpop.f32.mrb[0].mxu0
    %v1308 = vadd.f32 %v1163, %v1307
    %v1309 = vpop.f32.mrb[0].mxu0
    %1310 = vmatprep.mubr.f32.mxu0 %v577
    %1311 = vmatmul.mubr.f32.gmra.mrb[0].mxu0 %v576
    %v1312 = vpop.f32.mrb[0].mxu0
    %v1313 = vadd.f32 %v1168, %v1312
    %v1314 = vpop.f32.mrb[0].mxu0
    %1315 = vmatprep.mubr.f32.mxu0 %v586
    %1316 = vmatmul.mubr.f32.gmra.mrb[0].mxu0 %v585
    %v1317 = vpop.f32.mrb[0].mxu0
    %v1318 = vadd.f32 %v1173, %v1317
    %v1319 = vpop.f32.mrb[0].mxu0
    %1320 = vmatprep.mubr.f32.mxu0 %v595
    %1321 = vmatmul.mubr.f32.gmra.mrb[0].mxu0 %v594
    %v1322 = vpop.f32.mrb[0].mxu0
    %v1323 = vadd.f32 %v1178, %v1322
    %v1324 = vpop.f32.mrb[0].mxu0
    %1325 = vmatprep.mubr.f32.mxu0 %v604
    %1326 = vmatmul.mubr.f32.gmra.mrb[0].mxu0 %v603
    %v1327 = vpop.f32.mrb[0].mxu0
    %v1328 = vadd.f32 %v1183, %v1327
    %v1329 = vpop.f32.mrb[0].mxu0
    %1330 = vdwg.mxu0
    %1331 = vmatprep.subr.mxu0 0.0
    %1332 = vmatpush1.msra.mxu0 %v848
    %1333 = vmatprep.subr.mxu0 0.0
    %1334 = vmatpush1.msra.mxu0 %v849
    %1335 = vmatprep.subr.mxu0 0.0
    %1336 = vmatpush1.msra.mxu0 %v850
    %1337 = vmatprep.subr.mxu0 0.0
    %1338 = vmatpush1.msra.mxu0 %v851
    %1339 = vmatprep.subr.mxu0 0.0
    %1340 = vmatpush1.msra.mxu0 %v852
    %1341 = vmatprep.subr.mxu0 0.0
    %1342 = vmatpush1.msra.mxu0 %v853
    %1343 = vmatprep.subr.mxu0 0.0
    %1344 = vmatpush1.msra.mxu0 %v854
    %1345 = vmatprep.subr.mxu0 0.0
    %1346 = vmatpush1.msra.mxu0 %v855
    %1347 = vmatprep.subr.mxu0 0.0
    %1348 = vmatpush1.msra.mxu0 %v856
    %1349 = vmatprep.subr.mxu0 0.0
    %1350 = vmatpush1.msra.mxu0 %v857
    %1351 = vmatprep.subr.mxu0 0.0
    %1352 = vmatpush1.msra.mxu0 %v858
    %1353 = vmatprep.subr.mxu0 0.0
    %1354 = vmatpush1.msra.mxu0 %v859
    %1355 = vmatprep.subr.mxu0 0.0
    %1356 = vmatpush1.msra.mxu0 %v860
    %1357 = vmatprep.subr.mxu0 0.0
    %1358 = vmatpush1.msra.mxu0 %v861
    %1359 = vmatprep.subr.mxu0 0.0
    %1360 = vmatpush1.msra.mxu0 %v862
    %1361 = vmatprep.subr.mxu0 0.0
    %1362 = vmatpush1.msra.mxu0 %v863
    %1363 = vmatprep.subr.mxu0 0.0
    %1364 = vmatpush1.msra.mxu0 %v864
    %1365 = vmatprep.subr.mxu0 0.0
    %1366 = vmatpush1.msra.mxu0 %v865
    %1367 = vmatprep.subr.mxu0 0.0
    %1368 = vmatpush1.msra.mxu0 %v866
    %1369 = vmatprep.subr.mxu0 0.0
    %1370 = vmatpush1.msra.mxu0 %v867
    %1371 = vmatprep.subr.mxu0 0.0
    %1372 = vmatpush1.msra.mxu0 %v868
    %1373 = vmatprep.subr.mxu0 0.0
    %1374 = vmatpush1.msra.mxu0 %v869
    %1375 = vmatprep.subr.mxu0 0.0
    %1376 = vmatpush1.msra.mxu0 %v870
    %1377 = vmatprep.subr.mxu0 0.0
    %1378 = vmatpush1.msra.mxu0 %v871
    %1379 = vmatprep.subr.mxu0 0.0
    %1380 = vmatpush1.msra.mxu0 %v872
    %1381 = vmatprep.subr.mxu0 0.0
    %1382 = vmatpush1.msra.mxu0 %v873
    %1383 = vmatprep.subr.mxu0 0.0
    %1384 = vmatpush1.msra.mxu0 %v874
    %1385 = vmatprep.subr.mxu0 0.0
    %1386 = vmatpush1.msra.mxu0 %v875
    %1387 = vmatprep.subr.mxu0 0.0
    %1388 = vmatpush1.msra.mxu0 %v876
    %1389 = vmatprep.subr.mxu0 0.0
    %1390 = vmatpush1.msra.mxu0 %v877
    %1391 = vmatprep.subr.mxu0 0.0
    %1392 = vmatpush1.msra.mxu0 %v878
    %1393 = vmatprep.subr.mxu0 0.0
    %1394 = vmatpush1.msra.mxu0 %v879
    %1395 = vmatprep.mubr.f32.mxu0 %v471
    %1396 = vmatmul.mubr.f32.gmra.mrb[0].mxu0 %v470
    %v1397 = vpop.f32.mrb[0].mxu0
    %v1398 = vadd.f32 %v1253, %v1397
    %v1399 = vpop.f32.mrb[0].mxu0
    %1400 = vmatprep.mubr.f32.mxu0 %v480
    %1401 = vmatmul.mubr.f32.gmra.mrb[0].mxu0 %v479
    %v1402 = vpop.f32.mrb[0].mxu0
    %v1403 = vadd.f32 %v1258, %v1402
    %v1404 = vpop.f32.mrb[0].mxu0
    %1405 = vmatprep.mubr.f32.mxu0 %v489
    %1406 = vmatmul.mubr.f32.gmra.mrb[0].mxu0 %v488
    %v1407 = vpop.f32.mrb[0].mxu0
    %v1408 = vadd.f32 %v1263, %v1407
    %v1409 = vpop.f32.mrb[0].mxu0
    %1410 = vmatprep.mubr.f32.mxu0 %v498
    %1411 = vmatmul.mubr.f32.gmra.mrb[0].mxu0 %v497
    %v1412 = vpop.f32.mrb[0].mxu0
    %v1413 = vadd.f32 %v1268, %v1412
    %v1414 = vpop.f32.mrb[0].mxu0
    %1415 = vmatprep.mubr.f32.mxu0 %v507
    %1416 = vmatmul.mubr.f32.gmra.mrb[0].mxu0 %v506
    %v1417 = vpop.f32.mrb[0].mxu0
    %v1418 = vadd.f32 %v1273, %v1417
    %v1419 = vpop.f32.mrb[0].mxu0
    %1420 = vmatprep.mubr.f32.mxu0 %v516
    %1421 = vmatmul.mubr.f32.gmra.mrb[0].mxu0 %v515
    %v1422 = vpop.f32.mrb[0].mxu0
    %v1423 = vadd.f32 %v1278, %v1422
    %v1424 = vpop.f32.mrb[0].mxu0
    %1425 = vmatprep.mubr.f32.mxu0 %v525
    %1426 = vmatmul.mubr.f32.gmra.mrb[0].mxu0 %v524
    %v1427 = vpop.f32.mrb[0].mxu0
    %v1428 = vadd.f32 %v1283, %v1427
    %v1429 = vpop.f32.mrb[0].mxu0
    %1430 = vmatprep.mubr.f32.mxu0 %v534
    %1431 = vmatmul.mubr.f32.gmra.mrb[0].mxu0 %v533
    %v1432 = vpop.f32.mrb[0].mxu0
    %v1433 = vadd.f32 %v1288, %v1432
    %v1434 = vpop.f32.mrb[0].mxu0
    %1435 = vmatprep.mubr.f32.mxu0 %v543
    %1436 = vmatmul.mubr.f32.gmra.mrb[0].mxu0 %v542
    %v1437 = vpop.f32.mrb[0].mxu0
    %v1438 = vadd.f32 %v1293, %v1437
    %v1439 = vpop.f32.mrb[0].mxu0
    %1440 = vmatprep.mubr.f32.mxu0 %v552
    %1441 = vmatmul.mubr.f32.gmra.mrb[0].mxu0 %v551
    %v1442 = vpop.f32.mrb[0].mxu0
    %v1443 = vadd.f32 %v1298, %v1442
    %v1444 = vpop.f32.mrb[0].mxu0
    %1445 = vmatprep.mubr.f32.mxu0 %v561
    %1446 = vmatmul.mubr.f32.gmra.mrb[0].mxu0 %v560
    %v1447 = vpop.f32.mrb[0].mxu0
    %v1448 = vadd.f32 %v1303, %v1447
    %v1449 = vpop.f32.mrb[0].mxu0
    %1450 = vmatprep.mubr.f32.mxu0 %v570
    %1451 = vmatmul.mubr.f32.gmra.mrb[0].mxu0 %v569
    %v1452 = vpop.f32.mrb[0].mxu0
    %v1453 = vadd.f32 %v1308, %v1452
    %v1454 = vpop.f32.mrb[0].mxu0
    %1455 = vmatprep.mubr.f32.mxu0 %v579
    %1456 = vmatmul.mubr.f32.gmra.mrb[0].mxu0 %v578
    %v1457 = vpop.f32.mrb[0].mxu0
    %v1458 = vadd.f32 %v1313, %v1457
    %v1459 = vpop.f32.mrb[0].mxu0
    %1460 = vmatprep.mubr.f32.mxu0 %v588
    %1461 = vmatmul.mubr.f32.gmra.mrb[0].mxu0 %v587
    %v1462 = vpop.f32.mrb[0].mxu0
    %v1463 = vadd.f32 %v1318, %v1462
    %v1464 = vpop.f32.mrb[0].mxu0
    %1465 = vmatprep.mubr.f32.mxu0 %v597
    %1466 = vmatmul.mubr.f32.gmra.mrb[0].mxu0 %v596
    %v1467 = vpop.f32.mrb[0].mxu0
    %v1468 = vadd.f32 %v1323, %v1467
    %v1469 = vpop.f32.mrb[0].mxu0
    %1470 = vmatprep.mubr.f32.mxu0 %v606
    %1471 = vmatmul.mubr.f32.gmra.mrb[0].mxu0 %v605
    %v1472 = vpop.f32.mrb[0].mxu0
    %v1473 = vadd.f32 %v1328, %v1472
    %v1474 = vpop.f32.mrb[0].mxu0
    %1475 = vdwg.mxu0
    %1476 = vmatprep.subr.mxu0 0.0
    %1477 = vmatpush1.msra.mxu0 %v880
    %1478 = vmatprep.subr.mxu0 0.0
    %1479 = vmatpush1.msra.mxu0 %v881
    %1480 = vmatprep.subr.mxu0 0.0
    %1481 = vmatpush1.msra.mxu0 %v882
    %1482 = vmatprep.subr.mxu0 0.0
    %1483 = vmatpush1.msra.mxu0 %v883
    %1484 = vmatprep.subr.mxu0 0.0
    %1485 = vmatpush1.msra.mxu0 %v884
    %1486 = vmatprep.subr.mxu0 0.0
    %1487 = vmatpush1.msra.mxu0 %v885
    %1488 = vmatprep.subr.mxu0 0.0
    %1489 = vmatpush1.msra.mxu0 %v886
    %1490 = vmatprep.subr.mxu0 0.0
    %1491 = vmatpush1.msra.mxu0 %v887
    %1492 = vmatprep.subr.mxu0 0.0
    %1493 = vmatpush1.msra.mxu0 %v888
    %1494 = vmatprep.subr.mxu0 0.0
    %1495 = vmatpush1.msra.mxu0 %v889
    %1496 = vmatprep.subr.mxu0 0.0
    %1497 = vmatpush1.msra.mxu0 %v890
    %1498 = vmatprep.subr.mxu0 0.0
    %1499 = vmatpush1.msra.mxu0 %v891
    %1500 = vmatprep.subr.mxu0 0.0
    %1501 = vmatpush1.msra.mxu0 %v892
    %1502 = vmatprep.subr.mxu0 0.0
    %1503 = vmatpush1.msra.mxu0 %v893
    %1504 = vmatprep.subr.mxu0 0.0
    %1505 = vmatpush1.msra.mxu0 %v894
    %1506 = vmatprep.subr.mxu0 0.0
    %1507 = vmatpush1.msra.mxu0 %v895
    %1508 = vmatprep.subr.mxu0 0.0
    %1509 = vmatpush1.msra.mxu0 0.0
    %1510 = vmatprep.subr.mxu0 0.0
    %1511 = vmatpush1.msra.mxu0 0.0
    %1512 = vmatprep.subr.mxu0 0.0
    %1513 = vmatpush1.msra.mxu0 0.0
    %1514 = vmatprep.subr.mxu0 0.0
    %1515 = vmatpush1.msra.mxu0 0.0
    %1516 = vmatprep.subr.mxu0 0.0
    %1517 = vmatpush1.msra.mxu0 0.0
    %1518 = vmatprep.subr.mxu0 0.0
    %1519 = vmatpush1.msra.mxu0 0.0
    %1520 = vmatprep.subr.mxu0 0.0
    %1521 = vmatpush1.msra.mxu0 0.0
    %1522 = vmatprep.subr.mxu0 0.0
    %1523 = vmatpush1.msra.mxu0 0.0
    %1524 = vmatprep.subr.mxu0 0.0
    %1525 = vmatpush1.msra.mxu0 0.0
    %1526 = vmatprep.subr.mxu0 0.0
    %1527 = vmatpush1.msra.mxu0 0.0
    %1528 = vmatprep.subr.mxu0 0.0
    %1529 = vmatpush1.msra.mxu0 0.0
    %1530 = vmatprep.subr.mxu0 0.0
    %1531 = vmatpush1.msra.mxu0 0.0
    %1532 = vmatprep.subr.mxu0 0.0
    %1533 = vmatpush1.msra.mxu0 0.0
    %1534 = vmatprep.subr.mxu0 0.0
    %1535 = vmatpush1.msra.mxu0 0.0
    %1536 = vmatprep.subr.mxu0 0.0
    %1537 = vmatpush1.msra.mxu0 0.0
    %1538 = vmatprep.subr.mxu0 0.0
    %1539 = vmatpush1.msra.mxu0 0.0
    %1540 = vmatprep.mubr.f32.mxu0 0.0
    %1541 = vmatmul.mubr.f32.gmra.mrb[0].mxu0 %v472
    %v1542 = vpop.f32.mrb[0].mxu0
    %v1543 = vadd.f32 %v1398, %v1542
    %v1544 = vpop.f32.mrb[0].mxu0
    %1545 = vmatprep.mubr.f32.mxu0 0.0
    %1546 = vmatmul.mubr.f32.gmra.mrb[0].mxu0 %v481
    %v1547 = vpop.f32.mrb[0].mxu0
    %v1548 = vadd.f32 %v1403, %v1547
    %v1549 = vpop.f32.mrb[0].mxu0
    %1550 = vmatprep.mubr.f32.mxu0 0.0
    %1551 = vmatmul.mubr.f32.gmra.mrb[0].mxu0 %v490
    %v1552 = vpop.f32.mrb[0].mxu0
    %v1553 = vadd.f32 %v1408, %v1552
    %v1554 = vpop.f32.mrb[0].mxu0
    %1555 = vmatprep.mubr.f32.mxu0 0.0
    %1556 = vmatmul.mubr.f32.gmra.mrb[0].mxu0 %v499
    %v1557 = vpop.f32.mrb[0].mxu0
    %v1558 = vadd.f32 %v1413, %v1557
    %v1559 = vpop.f32.mrb[0].mxu0
    %1560 = vmatprep.mubr.f32.mxu0 0.0
    %1561 = vmatmul.mubr.f32.gmra.mrb[0].mxu0 %v508
    %v1562 = vpop.f32.mrb[0].mxu0
    %v1563 = vadd.f32 %v1418, %v1562
    %v1564 = vpop.f32.mrb[0].mxu0
    %1565 = vmatprep.mubr.f32.mxu0 0.0
    %1566 = vmatmul.mubr.f32.gmra.mrb[0].mxu0 %v517
    %v1567 = vpop.f32.mrb[0].mxu0
    %v1568 = vadd.f32 %v1423, %v1567
    %v1569 = vpop.f32.mrb[0].mxu0
    %1570 = vmatprep.mubr.f32.mxu0 0.0
    %1571 = vmatmul.mubr.f32.gmra.mrb[0].mxu0 %v526
    %v1572 = vpop.f32.mrb[0].mxu0
    %v1573 = vadd.f32 %v1428, %v1572
    %v1574 = vpop.f32.mrb[0].mxu0
    %1575 = vmatprep.mubr.f32.mxu0 0.0
    %1576 = vmatmul.mubr.f32.gmra.mrb[0].mxu0 %v535
    %v1577 = vpop.f32.mrb[0].mxu0
    %v1578 = vadd.f32 %v1433, %v1577
    %v1579 = vpop.f32.mrb[0].mxu0
    %1580 = vmatprep.mubr.f32.mxu0 0.0
    %1581 = vmatmul.mubr.f32.gmra.mrb[0].mxu0 %v544
    %v1582 = vpop.f32.mrb[0].mxu0
    %v1583 = vadd.f32 %v1438, %v1582
    %v1584 = vpop.f32.mrb[0].mxu0
    %1585 = vmatprep.mubr.f32.mxu0 0.0
    %1586 = vmatmul.mubr.f32.gmra.mrb[0].mxu0 %v553
    %v1587 = vpop.f32.mrb[0].mxu0
    %v1588 = vadd.f32 %v1443, %v1587
    %v1589 = vpop.f32.mrb[0].mxu0
    %1590 = vmatprep.mubr.f32.mxu0 0.0
    %1591 = vmatmul.mubr.f32.gmra.mrb[0].mxu0 %v562
    %v1592 = vpop.f32.mrb[0].mxu0
    %v1593 = vadd.f32 %v1448, %v1592
    %v1594 = vpop.f32.mrb[0].mxu0
    %1595 = vmatprep.mubr.f32.mxu0 0.0
    %1596 = vmatmul.mubr.f32.gmra.mrb[0].mxu0 %v571
    %v1597 = vpop.f32.mrb[0].mxu0
    %v1598 = vadd.f32 %v1453, %v1597
    %v1599 = vpop.f32.mrb[0].mxu0
    %1600 = vmatprep.mubr.f32.mxu0 0.0
    %1601 = vmatmul.mubr.f32.gmra.mrb[0].mxu0 %v580
    %v1602 = vpop.f32.mrb[0].mxu0
    %v1603 = vadd.f32 %v1458, %v1602
    %v1604 = vpop.f32.mrb[0].mxu0
    %1605 = vmatprep.mubr.f32.mxu0 0.0
    %1606 = vmatmul.mubr.f32.gmra.mrb[0].mxu0 %v589
    %v1607 = vpop.f32.mrb[0].mxu0
    %v1608 = vadd.f32 %v1463, %v1607
    %v1609 = vpop.f32.mrb[0].mxu0
    %1610 = vmatprep.mubr.f32.mxu0 0.0
    %1611 = vmatmul.mubr.f32.gmra.mrb[0].mxu0 %v598
    %v1612 = vpop.f32.mrb[0].mxu0
    %v1613 = vadd.f32 %v1468, %v1612
    %v1614 = vpop.f32.mrb[0].mxu0
    %1615 = vmatprep.mubr.f32.mxu0 0.0
    %1616 = vmatmul.mubr.f32.gmra.mrb[0].mxu0 %v607
    %v1617 = vpop.f32.mrb[0].mxu0
    %v1618 = vadd.f32 %v1473, %v1617
    %v1619 = vpop.f32.mrb[0].mxu0
    %1620 = vdwg.mxu0
    %v1621 = vld [vmem:[%s2] sm:$0x1]
    %v1623 = vlaneseq
    %v1624 = vshrl.u32 %v1623, 7
    %v1625 = vsub.s32 0, %v1624
    %v1626 = vrot.slane %v1621, %v1625
    %v1628 = vmul.f32 %v1543, %v1626
    %v1629 = vmul.f32 %v1548, %v1626
    %v1630 = vmul.f32 %v1553, %v1626
    %v1631 = vmul.f32 %v1558, %v1626
    %v1632 = vmul.f32 %v1563, %v1626
    %v1633 = vmul.f32 %v1568, %v1626
    %v1634 = vmul.f32 %v1573, %v1626
    %v1635 = vmul.f32 %v1578, %v1626
    %v1636 = vmul.f32 %v1583, %v1626
    %v1637 = vmul.f32 %v1588, %v1626
    %v1638 = vmul.f32 %v1593, %v1626
    %v1639 = vmul.f32 %v1598, %v1626
    %v1640 = vmul.f32 %v1603, %v1626
    %v1641 = vmul.f32 %v1608, %v1626
    %v1642 = vmul.f32 %v1613, %v1626
    %v1643 = vmul.f32 %v1618, %v1626
    %v1644 = vld [vmem:[%s3] sm:$0x1]
    %v1646 = vlaneseq
    %v1647 = vshrl.u32 %v1646, 7
    %v1648 = vsub.s32 0, %v1647
    %v1649 = vrot.slane %v1644, %v1648
    %v1651 = vadd.f32 %v1628, %v1649
    %v1652 = vadd.f32 %v1629, %v1649
    %v1653 = vadd.f32 %v1630, %v1649
    %v1654 = vadd.f32 %v1631, %v1649
    %v1655 = vadd.f32 %v1632, %v1649
    %v1656 = vadd.f32 %v1633, %v1649
    %v1657 = vadd.f32 %v1634, %v1649
    %v1658 = vadd.f32 %v1635, %v1649
    %v1659 = vadd.f32 %v1636, %v1649
    %v1660 = vadd.f32 %v1637, %v1649
    %v1661 = vadd.f32 %v1638, %v1649
    %v1662 = vadd.f32 %v1639, %v1649
    %v1663 = vadd.f32 %v1640, %v1649
    %v1664 = vadd.f32 %v1641, %v1649
    %v1665 = vadd.f32 %v1642, %v1649
    %v1666 = vadd.f32 %v1643, %v1649
    %v1667 = vmax.f32 %v1651, 0.0
    %v1668 = vmax.f32 %v1652, 0.0
    %v1669 = vmax.f32 %v1653, 0.0
    %v1670 = vmax.f32 %v1654, 0.0
    %v1671 = vmax.f32 %v1655, 0.0
    %v1672 = vmax.f32 %v1656, 0.0
    %v1673 = vmax.f32 %v1657, 0.0
    %v1674 = vmax.f32 %v1658, 0.0
    %v1675 = vmax.f32 %v1659, 0.0
    %v1676 = vmax.f32 %v1660, 0.0
    %v1677 = vmax.f32 %v1661, 0.0
    %v1678 = vmax.f32 %v1662, 0.0
    %v1679 = vmax.f32 %v1663, 0.0
    %v1680 = vmax.f32 %v1664, 0.0
    %v1681 = vmax.f32 %v1665, 0.0
    %v1682 = vmax.f32 %v1666, 0.0
    %1683 = vst [vmem:[%s158 + $0x8] sm:$0xff] %v1667
    %1684 = vst [vmem:[%s158 + $0x20] sm:$0xff] %v1668
    %1685 = vst [vmem:[%s158 + $0x38] sm:$0xff] %v1669
    %1686 = vst [vmem:[%s158 + $0x50] sm:$0xff] %v1670
    %1687 = vst [vmem:[%s158 + $0x68] sm:$0xff] %v1671
    %1688 = vst [vmem:[%s158 + $0x80] sm:$0xff] %v1672
    %1689 = vst [vmem:[%s158 + $0x98] sm:$0xff] %v1673
    %1690 = vst [vmem:[%s158 + $0xb0] sm:$0xff] %v1674
    %1691 = vst [vmem:[%s158 + $0xf8] sm:$0xff] %v1675
    %1692 = vst [vmem:[%s158 + $0x110] sm:$0xff] %v1676
    %1693 = vst [vmem:[%s158 + $0x128] sm:$0xff] %v1677
    %1694 = vst [vmem:[%s158 + $0x140] sm:$0xff] %v1678
    %1695 = vst [vmem:[%s158 + $0x158] sm:$0xff] %v1679
    %1696 = vst [vmem:[%s158 + $0x170] sm:$0xff] %v1680
    %1697 = vst [vmem:[%s158 + $0x188] sm:$0xff] %v1681
    %1698 = vst [vmem:[%s158 + $0x1a0] sm:$0xff] %v1682
    %v1699 = vld [vmem:[#allocation2 + $0x7] sm:$0xff]
    %v1700 = vld [vmem:[#allocation2 + $0x1f] sm:$0xff]
    %v1701 = vld [vmem:[#allocation2 + $0x37] sm:$0xff]
    %v1702 = vld [vmem:[#allocation2 + $0x4f] sm:$0xff]
    %v1703 = vld [vmem:[#allocation2 + $0x67] sm:$0xff]
    %v1704 = vld [vmem:[#allocation2 + $0x7f] sm:$0xff]
    %v1705 = vld [vmem:[#allocation2 + $0x97] sm:$0xff]
    %v1706 = vld [vmem:[#allocation2 + $0xaf] sm:$0xff]
    %v1707 = vld [vmem:[#allocation2 + $0xf7] sm:$0xff]
    %v1708 = vld [vmem:[#allocation2 + $0x10f] sm:$0xff]
    %v1709 = vld [vmem:[#allocation2 + $0x127] sm:$0xff]
    %v1710 = vld [vmem:[#allocation2 + $0x13f] sm:$0xff]
    %v1711 = vld [vmem:[#allocation2 + $0x157] sm:$0xff]
    %v1712 = vld [vmem:[#allocation2 + $0x16f] sm:$0xff]
    %v1713 = vld [vmem:[#allocation2 + $0x187] sm:$0xff]
    %v1714 = vld [vmem:[#allocation2 + $0x19f] sm:$0xff]
    %1715 = vst [vmem:[#allocation3] sm:$0xff] %v1699
    %1716 = vst [vmem:[#allocation3 + $0x48] sm:$0xff] %v1700
    %1717 = vst [vmem:[#allocation3 + $0x90] sm:$0xff] %v1701
    %1718 = vst [vmem:[#allocation3 + $0xd8] sm:$0xff] %v1702
    %1719 = vst [vmem:[#allocation3 + $0x120] sm:$0xff] %v1703
    %1720 = vst [vmem:[#allocation3 + $0x168] sm:$0xff] %v1704
    %1721 = vst [vmem:[#allocation3 + $0x1b0] sm:$0xff] %v1705
    %1722 = vst [vmem:[#allocation3 + $0x1f8] sm:$0xff] %v1706
    %1723 = vst [vmem:[#allocation3 + $0x240] sm:$0xff] %v1707
    %1724 = vst [vmem:[#allocation3 + $0x288] sm:$0xff] %v1708
    %1725 = vst [vmem:[#allocation3 + $0x2d0] sm:$0xff] %v1709
    %1726 = vst [vmem:[#allocation3 + $0x318] sm:$0xff] %v1710
    %1727 = vst [vmem:[#allocation3 + $0x360] sm:$0xff] %v1711
    %1728 = vst [vmem:[#allocation3 + $0x3a8] sm:$0xff] %v1712
    %1729 = vst [vmem:[#allocation3 + $0x3f0] sm:$0xff] %v1713
    %1730 = vst [vmem:[#allocation3 + $0x438] sm:$0xff] %v1714
    %v1731 = vld [vmem:[#allocation2 + $0x8] sm:$0xff]
    %v1732 = vld [vmem:[#allocation2 + $0x20] sm:$0xff]
    %v1733 = vld [vmem:[#allocation2 + $0x38] sm:$0xff]
    %v1734 = vld [vmem:[#allocation2 + $0x50] sm:$0xff]
    %v1735 = vld [vmem:[#allocation2 + $0x68] sm:$0xff]
    %v1736 = vld [vmem:[#allocation2 + $0x80] sm:$0xff]
    %v1737 = vld [vmem:[#allocation2 + $0x98] sm:$0xff]
    %v1738 = vld [vmem:[#allocation2 + $0xb0] sm:$0xff]
    %v1739 = vld [vmem:[#allocation2 + $0xf8] sm:$0xff]
    %v1740 = vld [vmem:[#allocation2 + $0x110] sm:$0xff]
    %v1741 = vld [vmem:[#allocation2 + $0x128] sm:$0xff]
    %v1742 = vld [vmem:[#allocation2 + $0x140] sm:$0xff]
    %v1743 = vld [vmem:[#allocation2 + $0x158] sm:$0xff]
    %v1744 = vld [vmem:[#allocation2 + $0x170] sm:$0xff]
    %v1745 = vld [vmem:[#allocation2 + $0x188] sm:$0xff]
    %v1746 = vld [vmem:[#allocation2 + $0x1a0] sm:$0xff]
    %1747 = vst [vmem:[#allocation3 + $0x8] sm:$0xff] %v1731
    %1748 = vst [vmem:[#allocation3 + $0x50] sm:$0xff] %v1732
    %1749 = vst [vmem:[#allocation3 + $0x98] sm:$0xff] %v1733
    %1750 = vst [vmem:[#allocation3 + $0xe0] sm:$0xff] %v1734
    %1751 = vst [vmem:[#allocation3 + $0x128] sm:$0xff] %v1735
    %1752 = vst [vmem:[#allocation3 + $0x170] sm:$0xff] %v1736
    %1753 = vst [vmem:[#allocation3 + $0x1b8] sm:$0xff] %v1737
    %1754 = vst [vmem:[#allocation3 + $0x200] sm:$0xff] %v1738
    %1755 = vst [vmem:[#allocation3 + $0x248] sm:$0xff] %v1739
    %1756 = vst [vmem:[#allocation3 + $0x290] sm:$0xff] %v1740
    %1757 = vst [vmem:[#allocation3 + $0x2d8] sm:$0xff] %v1741
    %1758 = vst [vmem:[#allocation3 + $0x320] sm:$0xff] %v1742
    %1759 = vst [vmem:[#allocation3 + $0x368] sm:$0xff] %v1743
    %1760 = vst [vmem:[#allocation3 + $0x3b0] sm:$0xff] %v1744
    %1761 = vst [vmem:[#allocation3 + $0x3f8] sm:$0xff] %v1745
    %1762 = vst [vmem:[#allocation3 + $0x440] sm:$0xff] %v1746
    %v1763 = vld [vmem:[#allocation2 + $0x9] sm:$0xff]
    %v1764 = vld [vmem:[#allocation2 + $0x21] sm:$0xff]
    %v1765 = vld [vmem:[#allocation2 + $0x39] sm:$0xff]
    %v1766 = vld [vmem:[#allocation2 + $0x51] sm:$0xff]
    %v1767 = vld [vmem:[#allocation2 + $0x69] sm:$0xff]
    %v1768 = vld [vmem:[#allocation2 + $0x81] sm:$0xff]
    %v1769 = vld [vmem:[#allocation2 + $0x99] sm:$0xff]
    %v1770 = vld [vmem:[#allocation2 + $0xb1] sm:$0xff]
    %v1771 = vld [vmem:[#allocation2 + $0xf9] sm:$0xff]
    %v1772 = vld [vmem:[#allocation2 + $0x111] sm:$0xff]
    %v1773 = vld [vmem:[#allocation2 + $0x129] sm:$0xff]
    %v1774 = vld [vmem:[#allocation2 + $0x141] sm:$0xff]
    %v1775 = vld [vmem:[#allocation2 + $0x159] sm:$0xff]
    %v1776 = vld [vmem:[#allocation2 + $0x171] sm:$0xff]
    %v1777 = vld [vmem:[#allocation2 + $0x189] sm:$0xff]
    %v1778 = vld [vmem:[#allocation2 + $0x1a1] sm:$0xff]
    %1779 = vst [vmem:[#allocation3 + $0x10] sm:$0xff] %v1763
    %1780 = vst [vmem:[#allocation3 + $0x58] sm:$0xff] %v1764
    %1781 = vst [vmem:[#allocation3 + $0xa0] sm:$0xff] %v1765
    %1782 = vst [vmem:[#allocation3 + $0xe8] sm:$0xff] %v1766
    %1783 = vst [vmem:[#allocation3 + $0x130] sm:$0xff] %v1767
    %1784 = vst [vmem:[#allocation3 + $0x178] sm:$0xff] %v1768
    %1785 = vst [vmem:[#allocation3 + $0x1c0] sm:$0xff] %v1769
    %1786 = vst [vmem:[#allocation3 + $0x208] sm:$0xff] %v1770
    %1787 = vst [vmem:[#allocation3 + $0x250] sm:$0xff] %v1771
    %1788 = vst [vmem:[#allocation3 + $0x298] sm:$0xff] %v1772
    %1789 = vst [vmem:[#allocation3 + $0x2e0] sm:$0xff] %v1773
    %1790 = vst [vmem:[#allocation3 + $0x328] sm:$0xff] %v1774
    %1791 = vst [vmem:[#allocation3 + $0x370] sm:$0xff] %v1775
    %1792 = vst [vmem:[#allocation3 + $0x3b8] sm:$0xff] %v1776
    %1793 = vst [vmem:[#allocation3 + $0x400] sm:$0xff] %v1777
    %1794 = vst [vmem:[#allocation3 + $0x448] sm:$0xff] %v1778
    %v1795 = vld [vmem:[%s158 + $0x7] sm:$0xff]
    %v1796 = vld [vmem:[%s158 + $0x1f] sm:$0xff]
    %v1797 = vld [vmem:[%s158 + $0x37] sm:$0xff]
    %v1798 = vld [vmem:[%s158 + $0x4f] sm:$0xff]
    %v1799 = vld [vmem:[%s158 + $0x67] sm:$0xff]
    %v1800 = vld [vmem:[%s158 + $0x7f] sm:$0xff]
    %v1801 = vld [vmem:[%s158 + $0x97] sm:$0xff]
    %v1802 = vld [vmem:[%s158 + $0xaf] sm:$0xff]
    %v1803 = vld [vmem:[%s158 + $0xf7] sm:$0xff]
    %v1804 = vld [vmem:[%s158 + $0x10f] sm:$0xff]
    %v1805 = vld [vmem:[%s158 + $0x127] sm:$0xff]
    %v1806 = vld [vmem:[%s158 + $0x13f] sm:$0xff]
    %v1807 = vld [vmem:[%s158 + $0x157] sm:$0xff]
    %v1808 = vld [vmem:[%s158 + $0x16f] sm:$0xff]
    %v1809 = vld [vmem:[%s158 + $0x187] sm:$0xff]
    %v1810 = vld [vmem:[%s158 + $0x19f] sm:$0xff]
    %1811 = vst [vmem:[#allocation3 + $0x18] sm:$0xff] %v1795
    %1812 = vst [vmem:[#allocation3 + $0x60] sm:$0xff] %v1796
    %1813 = vst [vmem:[#allocation3 + $0xa8] sm:$0xff] %v1797
    %1814 = vst [vmem:[#allocation3 + $0xf0] sm:$0xff] %v1798
    %1815 = vst [vmem:[#allocation3 + $0x138] sm:$0xff] %v1799
    %1816 = vst [vmem:[#allocation3 + $0x180] sm:$0xff] %v1800
    %1817 = vst [vmem:[#allocation3 + $0x1c8] sm:$0xff] %v1801
    %1818 = vst [vmem:[#allocation3 + $0x210] sm:$0xff] %v1802
    %1819 = vst [vmem:[#allocation3 + $0x258] sm:$0xff] %v1803
    %1820 = vst [vmem:[#allocation3 + $0x2a0] sm:$0xff] %v1804
    %1821 = vst [vmem:[#allocation3 + $0x2e8] sm:$0xff] %v1805
    %1822 = vst [vmem:[#allocation3 + $0x330] sm:$0xff] %v1806
    %1823 = vst [vmem:[#allocation3 + $0x378] sm:$0xff] %v1807
    %1824 = vst [vmem:[#allocation3 + $0x3c0] sm:$0xff] %v1808
    %1825 = vst [vmem:[#allocation3 + $0x408] sm:$0xff] %v1809
    %1826 = vst [vmem:[#allocation3 + $0x450] sm:$0xff] %v1810
    %v1827 = vld [vmem:[%s158 + $0x8] sm:$0xff]
    %v1828 = vld [vmem:[%s158 + $0x20] sm:$0xff]
    %v1829 = vld [vmem:[%s158 + $0x38] sm:$0xff]
    %v1830 = vld [vmem:[%s158 + $0x50] sm:$0xff]
    %v1831 = vld [vmem:[%s158 + $0x68] sm:$0xff]
    %v1832 = vld [vmem:[%s158 + $0x80] sm:$0xff]
    %v1833 = vld [vmem:[%s158 + $0x98] sm:$0xff]
    %v1834 = vld [vmem:[%s158 + $0xb0] sm:$0xff]
    %v1835 = vld [vmem:[%s158 + $0xf8] sm:$0xff]
    %v1836 = vld [vmem:[%s158 + $0x110] sm:$0xff]
    %v1837 = vld [vmem:[%s158 + $0x128] sm:$0xff]
    %v1838 = vld [vmem:[%s158 + $0x140] sm:$0xff]
    %v1839 = vld [vmem:[%s158 + $0x158] sm:$0xff]
    %v1840 = vld [vmem:[%s158 + $0x170] sm:$0xff]
    %v1841 = vld [vmem:[%s158 + $0x188] sm:$0xff]
    %v1842 = vld [vmem:[%s158 + $0x1a0] sm:$0xff]
    %1843 = vst [vmem:[#allocation3 + $0x20] sm:$0xff] %v1827
    %1844 = vst [vmem:[#allocation3 + $0x68] sm:$0xff] %v1828
    %1845 = vst [vmem:[#allocation3 + $0xb0] sm:$0xff] %v1829
    %1846 = vst [vmem:[#allocation3 + $0xf8] sm:$0xff] %v1830
    %1847 = vst [vmem:[#allocation3 + $0x140] sm:$0xff] %v1831
    %1848 = vst [vmem:[#allocation3 + $0x188] sm:$0xff] %v1832
    %1849 = vst [vmem:[#allocation3 + $0x1d0] sm:$0xff] %v1833
    %1850 = vst [vmem:[#allocation3 + $0x218] sm:$0xff] %v1834
    %1851 = vst [vmem:[#allocation3 + $0x260] sm:$0xff] %v1835
    %1852 = vst [vmem:[#allocation3 + $0x2a8] sm:$0xff] %v1836
    %1853 = vst [vmem:[#allocation3 + $0x2f0] sm:$0xff] %v1837
    %1854 = vst [vmem:[#allocation3 + $0x338] sm:$0xff] %v1838
    %1855 = vst [vmem:[#allocation3 + $0x380] sm:$0xff] %v1839
    %1856 = vst [vmem:[#allocation3 + $0x3c8] sm:$0xff] %v1840
    %1857 = vst [vmem:[#allocation3 + $0x410] sm:$0xff] %v1841
    %1858 = vst [vmem:[#allocation3 + $0x458] sm:$0xff] %v1842
    %v1859 = vld [vmem:[%s158 + $0x9] sm:$0xff]
    %v1860 = vld [vmem:[%s158 + $0x21] sm:$0xff]
    %v1861 = vld [vmem:[%s158 + $0x39] sm:$0xff]
    %v1862 = vld [vmem:[%s158 + $0x51] sm:$0xff]
    %v1863 = vld [vmem:[%s158 + $0x69] sm:$0xff]
    %v1864 = vld [vmem:[%s158 + $0x81] sm:$0xff]
    %v1865 = vld [vmem:[%s158 + $0x99] sm:$0xff]
    %v1866 = vld [vmem:[%s158 + $0xb1] sm:$0xff]
    %v1867 = vld [vmem:[%s158 + $0xf9] sm:$0xff]
    %v1868 = vld [vmem:[%s158 + $0x111] sm:$0xff]
    %v1869 = vld [vmem:[%s158 + $0x129] sm:$0xff]
    %v1870 = vld [vmem:[%s158 + $0x141] sm:$0xff]
    %v1871 = vld [vmem:[%s158 + $0x159] sm:$0xff]
    %v1872 = vld [vmem:[%s158 + $0x171] sm:$0xff]
    %v1873 = vld [vmem:[%s158 + $0x189] sm:$0xff]
    %v1874 = vld [vmem:[%s158 + $0x1a1] sm:$0xff]
    %1875 = vst [vmem:[#allocation3 + $0x28] sm:$0xff] %v1859
    %1876 = vst [vmem:[#allocation3 + $0x70] sm:$0xff] %v1860
    %1877 = vst [vmem:[#allocation3 + $0xb8] sm:$0xff] %v1861
    %1878 = vst [vmem:[#allocation3 + $0x100] sm:$0xff] %v1862
    %1879 = vst [vmem:[#allocation3 + $0x148] sm:$0xff] %v1863
    %1880 = vst [vmem:[#allocation3 + $0x190] sm:$0xff] %v1864
    %1881 = vst [vmem:[#allocation3 + $0x1d8] sm:$0xff] %v1865
    %1882 = vst [vmem:[#allocation3 + $0x220] sm:$0xff] %v1866
    %1883 = vst [vmem:[#allocation3 + $0x268] sm:$0xff] %v1867
    %1884 = vst [vmem:[#allocation3 + $0x2b0] sm:$0xff] %v1868
    %1885 = vst [vmem:[#allocation3 + $0x2f8] sm:$0xff] %v1869
    %1886 = vst [vmem:[#allocation3 + $0x340] sm:$0xff] %v1870
    %1887 = vst [vmem:[#allocation3 + $0x388] sm:$0xff] %v1871
    %1888 = vst [vmem:[#allocation3 + $0x3d0] sm:$0xff] %v1872
    %1889 = vst [vmem:[#allocation3 + $0x418] sm:$0xff] %v1873
    %1890 = vst [vmem:[#allocation3 + $0x460] sm:$0xff] %v1874
    %v1891 = vld [vmem:[%s367 + $0x7] sm:$0xff]
    %v1892 = vld [vmem:[%s367 + $0x1f] sm:$0xff]
    %v1893 = vld [vmem:[%s367 + $0x37] sm:$0xff]
    %v1894 = vld [vmem:[%s367 + $0x4f] sm:$0xff]
    %v1895 = vld [vmem:[%s367 + $0x67] sm:$0xff]
    %v1896 = vld [vmem:[%s367 + $0x7f] sm:$0xff]
    %v1897 = vld [vmem:[%s367 + $0x97] sm:$0xff]
    %v1898 = vld [vmem:[%s367 + $0xaf] sm:$0xff]
    %v1899 = vld [vmem:[%s367 + $0xf7] sm:$0xff]
    %v1900 = vld [vmem:[%s367 + $0x10f] sm:$0xff]
    %v1901 = vld [vmem:[%s367 + $0x127] sm:$0xff]
    %v1902 = vld [vmem:[%s367 + $0x13f] sm:$0xff]
    %v1903 = vld [vmem:[%s367 + $0x157] sm:$0xff]
    %v1904 = vld [vmem:[%s367 + $0x16f] sm:$0xff]
    %v1905 = vld [vmem:[%s367 + $0x187] sm:$0xff]
    %v1906 = vld [vmem:[%s367 + $0x19f] sm:$0xff]
    %1907 = vst [vmem:[#allocation3 + $0x30] sm:$0xff] %v1891
    %1908 = vst [vmem:[#allocation3 + $0x78] sm:$0xff] %v1892
    %1909 = vst [vmem:[#allocation3 + $0xc0] sm:$0xff] %v1893
    %1910 = vst [vmem:[#allocation3 + $0x108] sm:$0xff] %v1894
    %1911 = vst [vmem:[#allocation3 + $0x150] sm:$0xff] %v1895
    %1912 = vst [vmem:[#allocation3 + $0x198] sm:$0xff] %v1896
    %1913 = vst [vmem:[#allocation3 + $0x1e0] sm:$0xff] %v1897
    %1914 = vst [vmem:[#allocation3 + $0x228] sm:$0xff] %v1898
    %1915 = vst [vmem:[#allocation3 + $0x270] sm:$0xff] %v1899
    %1916 = vst [vmem:[#allocation3 + $0x2b8] sm:$0xff] %v1900
    %1917 = vst [vmem:[#allocation3 + $0x300] sm:$0xff] %v1901
    %1918 = vst [vmem:[#allocation3 + $0x348] sm:$0xff] %v1902
    %1919 = vst [vmem:[#allocation3 + $0x390] sm:$0xff] %v1903
    %1920 = vst [vmem:[#allocation3 + $0x3d8] sm:$0xff] %v1904
    %1921 = vst [vmem:[#allocation3 + $0x420] sm:$0xff] %v1905
    %1922 = vst [vmem:[#allocation3 + $0x468] sm:$0xff] %v1906
    %v1923 = vld [vmem:[%s367 + $0x8] sm:$0xff]
    %v1924 = vld [vmem:[%s367 + $0x20] sm:$0xff]
    %v1925 = vld [vmem:[%s367 + $0x38] sm:$0xff]
    %v1926 = vld [vmem:[%s367 + $0x50] sm:$0xff]
    %v1927 = vld [vmem:[%s367 + $0x68] sm:$0xff]
    %v1928 = vld [vmem:[%s367 + $0x80] sm:$0xff]
    %v1929 = vld [vmem:[%s367 + $0x98] sm:$0xff]
    %v1930 = vld [vmem:[%s367 + $0xb0] sm:$0xff]
    %v1931 = vld [vmem:[%s367 + $0xf8] sm:$0xff]
    %v1932 = vld [vmem:[%s367 + $0x110] sm:$0xff]
    %v1933 = vld [vmem:[%s367 + $0x128] sm:$0xff]
    %v1934 = vld [vmem:[%s367 + $0x140] sm:$0xff]
    %v1935 = vld [vmem:[%s367 + $0x158] sm:$0xff]
    %v1936 = vld [vmem:[%s367 + $0x170] sm:$0xff]
    %v1937 = vld [vmem:[%s367 + $0x188] sm:$0xff]
    %v1938 = vld [vmem:[%s367 + $0x1a0] sm:$0xff]
    %1939 = vst [vmem:[#allocation3 + $0x38] sm:$0xff] %v1923
    %1940 = vst [vmem:[#allocation3 + $0x80] sm:$0xff] %v1924
    %1941 = vst [vmem:[#allocation3 + $0xc8] sm:$0xff] %v1925
    %1942 = vst [vmem:[#allocation3 + $0x110] sm:$0xff] %v1926
    %1943 = vst [vmem:[#allocation3 + $0x158] sm:$0xff] %v1927
    %1944 = vst [vmem:[#allocation3 + $0x1a0] sm:$0xff] %v1928
    %1945 = vst [vmem:[#allocation3 + $0x1e8] sm:$0xff] %v1929
    %1946 = vst [vmem:[#allocation3 + $0x230] sm:$0xff] %v1930
    %1947 = vst [vmem:[#allocation3 + $0x278] sm:$0xff] %v1931
    %1948 = vst [vmem:[#allocation3 + $0x2c0] sm:$0xff] %v1932
    %1949 = vst [vmem:[#allocation3 + $0x308] sm:$0xff] %v1933
    %1950 = vst [vmem:[#allocation3 + $0x350] sm:$0xff] %v1934
    %1951 = vst [vmem:[#allocation3 + $0x398] sm:$0xff] %v1935
    %1952 = vst [vmem:[#allocation3 + $0x3e0] sm:$0xff] %v1936
    %1953 = vst [vmem:[#allocation3 + $0x428] sm:$0xff] %v1937
    %1954 = vst [vmem:[#allocation3 + $0x470] sm:$0xff] %v1938
    %v1955 = vld [vmem:[%s367 + $0x9] sm:$0xff]
    %v1956 = vld [vmem:[%s367 + $0x21] sm:$0xff]
    %v1957 = vld [vmem:[%s367 + $0x39] sm:$0xff]
    %v1958 = vld [vmem:[%s367 + $0x51] sm:$0xff]
    %v1959 = vld [vmem:[%s367 + $0x69] sm:$0xff]
    %v1960 = vld [vmem:[%s367 + $0x81] sm:$0xff]
    %v1961 = vld [vmem:[%s367 + $0x99] sm:$0xff]
    %v1962 = vld [vmem:[%s367 + $0xb1] sm:$0xff]
    %v1963 = vld [vmem:[%s367 + $0xf9] sm:$0xff]
    %v1964 = vld [vmem:[%s367 + $0x111] sm:$0xff]
    %v1965 = vld [vmem:[%s367 + $0x129] sm:$0xff]
    %v1966 = vld [vmem:[%s367 + $0x141] sm:$0xff]
    %v1967 = vld [vmem:[%s367 + $0x159] sm:$0xff]
    %v1968 = vld [vmem:[%s367 + $0x171] sm:$0xff]
    %v1969 = vld [vmem:[%s367 + $0x189] sm:$0xff]
    %v1970 = vld [vmem:[%s367 + $0x1a1] sm:$0xff]
    %1971 = vst [vmem:[#allocation3 + $0x40] sm:$0xff] %v1955
    %1972 = vst [vmem:[#allocation3 + $0x88] sm:$0xff] %v1956
    %1973 = vst [vmem:[#allocation3 + $0xd0] sm:$0xff] %v1957
    %1974 = vst [vmem:[#allocation3 + $0x118] sm:$0xff] %v1958
    %1975 = vst [vmem:[#allocation3 + $0x160] sm:$0xff] %v1959
    %1976 = vst [vmem:[#allocation3 + $0x1a8] sm:$0xff] %v1960
    %1977 = vst [vmem:[#allocation3 + $0x1f0] sm:$0xff] %v1961
    %1978 = vst [vmem:[#allocation3 + $0x238] sm:$0xff] %v1962
    %1979 = vst [vmem:[#allocation3 + $0x280] sm:$0xff] %v1963
    %1980 = vst [vmem:[#allocation3 + $0x2c8] sm:$0xff] %v1964
    %1981 = vst [vmem:[#allocation3 + $0x310] sm:$0xff] %v1965
    %1982 = vst [vmem:[#allocation3 + $0x358] sm:$0xff] %v1966
    %1983 = vst [vmem:[#allocation3 + $0x3a0] sm:$0xff] %v1967
    %1984 = vst [vmem:[#allocation3 + $0x3e8] sm:$0xff] %v1968
    %1985 = vst [vmem:[#allocation3 + $0x430] sm:$0xff] %v1969
    %1986 = vst [vmem:[#allocation3 + $0x478] sm:$0xff] %v1970
    %v1987 = vld [vmem:[#allocation3] sm:$0xff]
    %v1988 = vld [vmem:[#allocation3 + $0x8] sm:$0xff]
    %v1989 = vld [vmem:[#allocation3 + $0x10] sm:$0xff]
    %v1990 = vld [vmem:[#allocation3 + $0x18] sm:$0xff]
    %v1991 = vld [vmem:[#allocation3 + $0x20] sm:$0xff]
    %v1992 = vld [vmem:[#allocation3 + $0x28] sm:$0xff]
    %v1993 = vld [vmem:[#allocation3 + $0x30] sm:$0xff]
    %v1994 = vld [vmem:[#allocation3 + $0x38] sm:$0xff]
    %v1995 = vld [vmem:[#allocation3 + $0x40] sm:$0xff]
    %v1996 = vld [vmem:[#allocation3 + $0x48] sm:$0xff]
    %v1997 = vld [vmem:[#allocation3 + $0x50] sm:$0xff]
    %v1998 = vld [vmem:[#allocation3 + $0x58] sm:$0xff]
    %v1999 = vld [vmem:[#allocation3 + $0x60] sm:$0xff]
    %v2000 = vld [vmem:[#allocation3 + $0x68] sm:$0xff]
    %v2001 = vld [vmem:[#allocation3 + $0x70] sm:$0xff]
    %v2002 = vld [vmem:[#allocation3 + $0x78] sm:$0xff]
    %v2003 = vld [vmem:[#allocation3 + $0x80] sm:$0xff]
    %v2004 = vld [vmem:[#allocation3 + $0x88] sm:$0xff]
    %v2005 = vld [vmem:[#allocation3 + $0x90] sm:$0xff]
    %v2006 = vld [vmem:[#allocation3 + $0x98] sm:$0xff]
    %v2007 = vld [vmem:[#allocation3 + $0xa0] sm:$0xff]
    %v2008 = vld [vmem:[#allocation3 + $0xa8] sm:$0xff]
    %v2009 = vld [vmem:[#allocation3 + $0xb0] sm:$0xff]
    %v2010 = vld [vmem:[#allocation3 + $0xb8] sm:$0xff]
    %v2011 = vld [vmem:[#allocation3 + $0xc0] sm:$0xff]
    %v2012 = vld [vmem:[#allocation3 + $0xc8] sm:$0xff]
    %v2013 = vld [vmem:[#allocation3 + $0xd0] sm:$0xff]
    %v2014 = vld [vmem:[#allocation3 + $0xd8] sm:$0xff]
    %v2015 = vld [vmem:[#allocation3 + $0xe0] sm:$0xff]
    %v2016 = vld [vmem:[#allocation3 + $0xe8] sm:$0xff]
    %v2017 = vld [vmem:[#allocation3 + $0xf0] sm:$0xff]
    %v2018 = vld [vmem:[#allocation3 + $0xf8] sm:$0xff]
    %v2019 = vld [vmem:[#allocation3 + $0x100] sm:$0xff]
    %v2020 = vld [vmem:[#allocation3 + $0x108] sm:$0xff]
    %v2021 = vld [vmem:[#allocation3 + $0x110] sm:$0xff]
    %v2022 = vld [vmem:[#allocation3 + $0x118] sm:$0xff]
    %v2023 = vld [vmem:[#allocation3 + $0x120] sm:$0xff]
    %v2024 = vld [vmem:[#allocation3 + $0x128] sm:$0xff]
    %v2025 = vld [vmem:[#allocation3 + $0x130] sm:$0xff]
    %v2026 = vld [vmem:[#allocation3 + $0x138] sm:$0xff]
    %v2027 = vld [vmem:[#allocation3 + $0x140] sm:$0xff]
    %v2028 = vld [vmem:[#allocation3 + $0x148] sm:$0xff]
    %v2029 = vld [vmem:[#allocation3 + $0x150] sm:$0xff]
    %v2030 = vld [vmem:[#allocation3 + $0x158] sm:$0xff]
    %v2031 = vld [vmem:[#allocation3 + $0x160] sm:$0xff]
    %v2032 = vld [vmem:[#allocation3 + $0x168] sm:$0xff]
    %v2033 = vld [vmem:[#allocation3 + $0x170] sm:$0xff]
    %v2034 = vld [vmem:[#allocation3 + $0x178] sm:$0xff]
    %v2035 = vld [vmem:[#allocation3 + $0x180] sm:$0xff]
    %v2036 = vld [vmem:[#allocation3 + $0x188] sm:$0xff]
    %v2037 = vld [vmem:[#allocation3 + $0x190] sm:$0xff]
    %v2038 = vld [vmem:[#allocation3 + $0x198] sm:$0xff]
    %v2039 = vld [vmem:[#allocation3 + $0x1a0] sm:$0xff]
    %v2040 = vld [vmem:[#allocation3 + $0x1a8] sm:$0xff]
    %v2041 = vld [vmem:[#allocation3 + $0x1b0] sm:$0xff]
    %v2042 = vld [vmem:[#allocation3 + $0x1b8] sm:$0xff]
    %v2043 = vld [vmem:[#allocation3 + $0x1c0] sm:$0xff]
    %v2044 = vld [vmem:[#allocation3 + $0x1c8] sm:$0xff]
    %v2045 = vld [vmem:[#allocation3 + $0x1d0] sm:$0xff]
    %v2046 = vld [vmem:[#allocation3 + $0x1d8] sm:$0xff]
    %v2047 = vld [vmem:[#allocation3 + $0x1e0] sm:$0xff]
    %v2048 = vld [vmem:[#allocation3 + $0x1e8] sm:$0xff]
    %v2049 = vld [vmem:[#allocation3 + $0x1f0] sm:$0xff]
    %v2050 = vld [vmem:[#allocation3 + $0x1f8] sm:$0xff]
    %v2051 = vld [vmem:[#allocation3 + $0x200] sm:$0xff]
    %v2052 = vld [vmem:[#allocation3 + $0x208] sm:$0xff]
    %v2053 = vld [vmem:[#allocation3 + $0x210] sm:$0xff]
    %v2054 = vld [vmem:[#allocation3 + $0x218] sm:$0xff]
    %v2055 = vld [vmem:[#allocation3 + $0x220] sm:$0xff]
    %v2056 = vld [vmem:[#allocation3 + $0x228] sm:$0xff]
    %v2057 = vld [vmem:[#allocation3 + $0x230] sm:$0xff]
    %v2058 = vld [vmem:[#allocation3 + $0x238] sm:$0xff]
    %v2059 = vld [vmem:[#allocation3 + $0x240] sm:$0xff]
    %v2060 = vld [vmem:[#allocation3 + $0x248] sm:$0xff]
    %v2061 = vld [vmem:[#allocation3 + $0x250] sm:$0xff]
    %v2062 = vld [vmem:[#allocation3 + $0x258] sm:$0xff]
    %v2063 = vld [vmem:[#allocation3 + $0x260] sm:$0xff]
    %v2064 = vld [vmem:[#allocation3 + $0x268] sm:$0xff]
    %v2065 = vld [vmem:[#allocation3 + $0x270] sm:$0xff]
    %v2066 = vld [vmem:[#allocation3 + $0x278] sm:$0xff]
    %v2067 = vld [vmem:[#allocation3 + $0x280] sm:$0xff]
    %v2068 = vld [vmem:[#allocation3 + $0x288] sm:$0xff]
    %v2069 = vld [vmem:[#allocation3 + $0x290] sm:$0xff]
    %v2070 = vld [vmem:[#allocation3 + $0x298] sm:$0xff]
    %v2071 = vld [vmem:[#allocation3 + $0x2a0] sm:$0xff]
    %v2072 = vld [vmem:[#allocation3 + $0x2a8] sm:$0xff]
    %v2073 = vld [vmem:[#allocation3 + $0x2b0] sm:$0xff]
    %v2074 = vld [vmem:[#allocation3 + $0x2b8] sm:$0xff]
    %v2075 = vld [vmem:[#allocation3 + $0x2c0] sm:$0xff]
    %v2076 = vld [vmem:[#allocation3 + $0x2c8] sm:$0xff]
    %v2077 = vld [vmem:[#allocation3 + $0x2d0] sm:$0xff]
    %v2078 = vld [vmem:[#allocation3 + $0x2d8] sm:$0xff]
    %v2079 = vld [vmem:[#allocation3 + $0x2e0] sm:$0xff]
    %v2080 = vld [vmem:[#allocation3 + $0x2e8] sm:$0xff]
    %v2081 = vld [vmem:[#allocation3 + $0x2f0] sm:$0xff]
    %v2082 = vld [vmem:[#allocation3 + $0x2f8] sm:$0xff]
    %v2083 = vld [vmem:[#allocation3 + $0x300] sm:$0xff]
    %v2084 = vld [vmem:[#allocation3 + $0x308] sm:$0xff]
    %v2085 = vld [vmem:[#allocation3 + $0x310] sm:$0xff]
    %v2086 = vld [vmem:[#allocation3 + $0x318] sm:$0xff]
    %v2087 = vld [vmem:[#allocation3 + $0x320] sm:$0xff]
    %v2088 = vld [vmem:[#allocation3 + $0x328] sm:$0xff]
    %v2089 = vld [vmem:[#allocation3 + $0x330] sm:$0xff]
    %v2090 = vld [vmem:[#allocation3 + $0x338] sm:$0xff]
    %v2091 = vld [vmem:[#allocation3 + $0x340] sm:$0xff]
    %v2092 = vld [vmem:[#allocation3 + $0x348] sm:$0xff]
    %v2093 = vld [vmem:[#allocation3 + $0x350] sm:$0xff]
    %v2094 = vld [vmem:[#allocation3 + $0x358] sm:$0xff]
    %v2095 = vld [vmem:[#allocation3 + $0x360] sm:$0xff]
    %v2096 = vld [vmem:[#allocation3 + $0x368] sm:$0xff]
    %v2097 = vld [vmem:[#allocation3 + $0x370] sm:$0xff]
    %v2098 = vld [vmem:[#allocation3 + $0x378] sm:$0xff]
    %v2099 = vld [vmem:[#allocation3 + $0x380] sm:$0xff]
    %v2100 = vld [vmem:[#allocation3 + $0x388] sm:$0xff]
    %v2101 = vld [vmem:[#allocation3 + $0x390] sm:$0xff]
    %v2102 = vld [vmem:[#allocation3 + $0x398] sm:$0xff]
    %v2103 = vld [vmem:[#allocation3 + $0x3a0] sm:$0xff]
    %v2104 = vld [vmem:[#allocation3 + $0x3a8] sm:$0xff]
    %v2105 = vld [vmem:[#allocation3 + $0x3b0] sm:$0xff]
    %v2106 = vld [vmem:[#allocation3 + $0x3b8] sm:$0xff]
    %v2107 = vld [vmem:[#allocation3 + $0x3c0] sm:$0xff]
    %v2108 = vld [vmem:[#allocation3 + $0x3c8] sm:$0xff]
    %v2109 = vld [vmem:[#allocation3 + $0x3d0] sm:$0xff]
    %v2110 = vld [vmem:[#allocation3 + $0x3d8] sm:$0xff]
    %v2111 = vld [vmem:[#allocation3 + $0x3e0] sm:$0xff]
    %v2112 = vld [vmem:[#allocation3 + $0x3e8] sm:$0xff]
    %v2113 = vld [vmem:[#allocation3 + $0x3f0] sm:$0xff]
    %v2114 = vld [vmem:[#allocation3 + $0x3f8] sm:$0xff]
    %v2115 = vld [vmem:[#allocation3 + $0x400] sm:$0xff]
    %v2116 = vld [vmem:[#allocation3 + $0x408] sm:$0xff]
    %v2117 = vld [vmem:[#allocation3 + $0x410] sm:$0xff]
    %v2118 = vld [vmem:[#allocation3 + $0x418] sm:$0xff]
    %v2119 = vld [vmem:[#allocation3 + $0x420] sm:$0xff]
    %v2120 = vld [vmem:[#allocation3 + $0x428] sm:$0xff]
    %v2121 = vld [vmem:[#allocation3 + $0x430] sm:$0xff]
    %v2122 = vld [vmem:[#allocation3 + $0x438] sm:$0xff]
    %v2123 = vld [vmem:[#allocation3 + $0x440] sm:$0xff]
    %v2124 = vld [vmem:[#allocation3 + $0x448] sm:$0xff]
    %v2125 = vld [vmem:[#allocation3 + $0x450] sm:$0xff]
    %v2126 = vld [vmem:[#allocation3 + $0x458] sm:$0xff]
    %v2127 = vld [vmem:[#allocation3 + $0x460] sm:$0xff]
    %v2128 = vld [vmem:[#allocation3 + $0x468] sm:$0xff]
    %v2129 = vld [vmem:[#allocation3 + $0x470] sm:$0xff]
    %v2130 = vld [vmem:[#allocation3 + $0x478] sm:$0xff]
    %v2131 = vld [vmem:[#allocation6] sm:$0xf]
    %v2132 = vld [vmem:[#allocation6 + $0x4] sm:$0xf]
    %v2133 = vld [vmem:[#allocation6 + $0x8] sm:$0xf]
    %v2134 = vld [vmem:[#allocation6 + $0xc] sm:$0xf]
    %v2135 = vld [vmem:[#allocation6 + $0x10] sm:$0xf]
    %v2136 = vld [vmem:[#allocation6 + $0x14] sm:$0xf]
    %v2137 = vld [vmem:[#allocation6 + $0x18] sm:$0xf]
    %v2138 = vld [vmem:[#allocation6 + $0x1c] sm:$0xf]
    %v2139 = vld [vmem:[#allocation6 + $0x20] sm:$0xf]
    %v2140 = vld [vmem:[#allocation6 + $0x24] sm:$0xf]
    %v2141 = vld [vmem:[#allocation6 + $0x28] sm:$0xf]
    %v2142 = vld [vmem:[#allocation6 + $0x2c] sm:$0xf]
    %v2143 = vld [vmem:[#allocation6 + $0x30] sm:$0xf]
    %v2144 = vld [vmem:[#allocation6 + $0x34] sm:$0xf]
    %v2145 = vld [vmem:[#allocation6 + $0x38] sm:$0xf]
    %v2146 = vld [vmem:[#allocation6 + $0x3c] sm:$0xf]
    %v2147 = vld [vmem:[#allocation6 + $0x40] sm:$0xf]
    %v2148 = vld [vmem:[#allocation6 + $0x44] sm:$0xf]
    %v2149 = vld [vmem:[#allocation6 + $0x48] sm:$0xf]
    %v2150 = vld [vmem:[#allocation6 + $0x4c] sm:$0xf]
    %v2151 = vld [vmem:[#allocation6 + $0x50] sm:$0xf]
    %v2152 = vld [vmem:[#allocation6 + $0x54] sm:$0xf]
    %v2153 = vld [vmem:[#allocation6 + $0x58] sm:$0xf]
    %v2154 = vld [vmem:[#allocation6 + $0x5c] sm:$0xf]
    %v2155 = vld [vmem:[#allocation6 + $0x60] sm:$0xf]
    %v2156 = vld [vmem:[#allocation6 + $0x64] sm:$0xf]
    %v2157 = vld [vmem:[#allocation6 + $0x68] sm:$0xf]
    %v2158 = vld [vmem:[#allocation6 + $0x6c] sm:$0xf]
    %v2159 = vld [vmem:[#allocation6 + $0x70] sm:$0xf]
    %v2160 = vld [vmem:[#allocation6 + $0x74] sm:$0xf]
    %v2161 = vld [vmem:[#allocation6 + $0x78] sm:$0xf]
    %v2162 = vld [vmem:[#allocation6 + $0x7c] sm:$0xf]
    %v2163 = vld [vmem:[#allocation6 + $0x80] sm:$0xf]
    %v2164 = vld [vmem:[#allocation6 + $0x84] sm:$0xf]
    %v2165 = vld [vmem:[#allocation6 + $0x88] sm:$0xf]
    %v2166 = vld [vmem:[#allocation6 + $0x8c] sm:$0xf]
    %v2167 = vld [vmem:[#allocation6 + $0x90] sm:$0xf]
    %v2168 = vld [vmem:[#allocation6 + $0x94] sm:$0xf]
    %v2169 = vld [vmem:[#allocation6 + $0x98] sm:$0xf]
    %v2170 = vld [vmem:[#allocation6 + $0x9c] sm:$0xf]
    %v2171 = vld [vmem:[#allocation6 + $0xa0] sm:$0xf]
    %v2172 = vld [vmem:[#allocation6 + $0xa4] sm:$0xf]
    %v2173 = vld [vmem:[#allocation6 + $0xa8] sm:$0xf]
    %v2174 = vld [vmem:[#allocation6 + $0xac] sm:$0xf]
    %v2175 = vld [vmem:[#allocation6 + $0xb0] sm:$0xf]
    %v2176 = vld [vmem:[#allocation6 + $0xb4] sm:$0xf]
    %v2177 = vld [vmem:[#allocation6 + $0xb8] sm:$0xf]
    %v2178 = vld [vmem:[#allocation6 + $0xbc] sm:$0xf]
    %v2179 = vld [vmem:[#allocation6 + $0xc0] sm:$0xf]
    %v2180 = vld [vmem:[#allocation6 + $0xc4] sm:$0xf]
    %v2181 = vld [vmem:[#allocation6 + $0xc8] sm:$0xf]
    %v2182 = vld [vmem:[#allocation6 + $0xcc] sm:$0xf]
    %v2183 = vld [vmem:[#allocation6 + $0xd0] sm:$0xf]
    %v2184 = vld [vmem:[#allocation6 + $0xd4] sm:$0xf]
    %v2185 = vld [vmem:[#allocation6 + $0xd8] sm:$0xf]
    %v2186 = vld [vmem:[#allocation6 + $0xdc] sm:$0xf]
    %v2187 = vld [vmem:[#allocation6 + $0xe0] sm:$0xf]
    %v2188 = vld [vmem:[#allocation6 + $0xe4] sm:$0xf]
    %v2189 = vld [vmem:[#allocation6 + $0xe8] sm:$0xf]
    %v2190 = vld [vmem:[#allocation6 + $0xec] sm:$0xf]
    %v2191 = vld [vmem:[#allocation6 + $0xf0] sm:$0xf]
    %v2192 = vld [vmem:[#allocation6 + $0xf4] sm:$0xf]
    %v2193 = vld [vmem:[#allocation6 + $0xf8] sm:$0xf]
    %v2194 = vld [vmem:[#allocation6 + $0xfc] sm:$0xf]
    %v2195 = vld [vmem:[#allocation6 + $0x100] sm:$0xf]
    %v2196 = vld [vmem:[#allocation6 + $0x104] sm:$0xf]
    %v2197 = vld [vmem:[#allocation6 + $0x108] sm:$0xf]
    %v2198 = vld [vmem:[#allocation6 + $0x10c] sm:$0xf]
    %v2199 = vld [vmem:[#allocation6 + $0x110] sm:$0xf]
    %v2200 = vld [vmem:[#allocation6 + $0x114] sm:$0xf]
    %v2201 = vld [vmem:[#allocation6 + $0x118] sm:$0xf]
    %v2202 = vld [vmem:[#allocation6 + $0x11c] sm:$0xf]
    %v2203 = vld [vmem:[#allocation6 + $0x120] sm:$0xf]
    %v2204 = vld [vmem:[#allocation6 + $0x124] sm:$0xf]
    %v2205 = vld [vmem:[#allocation6 + $0x128] sm:$0xf]
    %v2206 = vld [vmem:[#allocation6 + $0x12c] sm:$0xf]
    %v2207 = vld [vmem:[#allocation6 + $0x130] sm:$0xf]
    %v2208 = vld [vmem:[#allocation6 + $0x134] sm:$0xf]
    %v2209 = vld [vmem:[#allocation6 + $0x138] sm:$0xf]
    %v2210 = vld [vmem:[#allocation6 + $0x13c] sm:$0xf]
    %v2211 = vld [vmem:[#allocation6 + $0x140] sm:$0xf]
    %v2212 = vld [vmem:[#allocation6 + $0x144] sm:$0xf]
    %v2213 = vld [vmem:[#allocation6 + $0x148] sm:$0xf]
    %v2214 = vld [vmem:[#allocation6 + $0x14c] sm:$0xf]
    %v2215 = vld [vmem:[#allocation6 + $0x150] sm:$0xf]
    %v2216 = vld [vmem:[#allocation6 + $0x154] sm:$0xf]
    %v2217 = vld [vmem:[#allocation6 + $0x158] sm:$0xf]
    %v2218 = vld [vmem:[#allocation6 + $0x15c] sm:$0xf]
    %v2219 = vld [vmem:[#allocation6 + $0x160] sm:$0xf]
    %v2220 = vld [vmem:[#allocation6 + $0x164] sm:$0xf]
    %v2221 = vld [vmem:[#allocation6 + $0x168] sm:$0xf]
    %v2222 = vld [vmem:[#allocation6 + $0x16c] sm:$0xf]
    %v2223 = vld [vmem:[#allocation6 + $0x170] sm:$0xf]
    %v2224 = vld [vmem:[#allocation6 + $0x174] sm:$0xf]
    %v2225 = vld [vmem:[#allocation6 + $0x178] sm:$0xf]
    %v2226 = vld [vmem:[#allocation6 + $0x17c] sm:$0xf]
    %v2227 = vld [vmem:[#allocation6 + $0x180] sm:$0xf]
    %v2228 = vld [vmem:[#allocation6 + $0x184] sm:$0xf]
    %v2229 = vld [vmem:[#allocation6 + $0x188] sm:$0xf]
    %v2230 = vld [vmem:[#allocation6 + $0x18c] sm:$0xf]
    %v2231 = vld [vmem:[#allocation6 + $0x190] sm:$0xf]
    %v2232 = vld [vmem:[#allocation6 + $0x194] sm:$0xf]
    %v2233 = vld [vmem:[#allocation6 + $0x198] sm:$0xf]
    %v2234 = vld [vmem:[#allocation6 + $0x19c] sm:$0xf]
    %v2235 = vld [vmem:[#allocation6 + $0x1a0] sm:$0xf]
    %v2236 = vld [vmem:[#allocation6 + $0x1a4] sm:$0xf]
    %v2237 = vld [vmem:[#allocation6 + $0x1a8] sm:$0xf]
    %v2238 = vld [vmem:[#allocation6 + $0x1ac] sm:$0xf]
    %v2239 = vld [vmem:[#allocation6 + $0x1b0] sm:$0xf]
    %v2240 = vld [vmem:[#allocation6 + $0x1b4] sm:$0xf]
    %v2241 = vld [vmem:[#allocation6 + $0x1b8] sm:$0xf]
    %v2242 = vld [vmem:[#allocation6 + $0x1bc] sm:$0xf]
    %v2243 = vld [vmem:[#allocation6 + $0x1c0] sm:$0xf]
    %v2244 = vld [vmem:[#allocation6 + $0x1c4] sm:$0xf]
    %v2245 = vld [vmem:[#allocation6 + $0x1c8] sm:$0xf]
    %v2246 = vld [vmem:[#allocation6 + $0x1cc] sm:$0xf]
    %v2247 = vld [vmem:[#allocation6 + $0x1d0] sm:$0xf]
    %v2248 = vld [vmem:[#allocation6 + $0x1d4] sm:$0xf]
    %v2249 = vld [vmem:[#allocation6 + $0x1d8] sm:$0xf]
    %v2250 = vld [vmem:[#allocation6 + $0x1dc] sm:$0xf]
    %v2251 = vld [vmem:[#allocation6 + $0x1e0] sm:$0xf]
    %v2252 = vld [vmem:[#allocation6 + $0x1e4] sm:$0xf]
    %v2253 = vld [vmem:[#allocation6 + $0x1e8] sm:$0xf]
    %v2254 = vld [vmem:[#allocation6 + $0x1ec] sm:$0xf]
    %v2255 = vld [vmem:[#allocation6 + $0x1f0] sm:$0xf]
    %v2256 = vld [vmem:[#allocation6 + $0x1f4] sm:$0xf]
    %v2257 = vld [vmem:[#allocation6 + $0x1f8] sm:$0xf]
    %v2258 = vld [vmem:[#allocation6 + $0x1fc] sm:$0xf]
    %v2259 = vld [vmem:[#allocation6 + $0x200] sm:$0xf]
    %v2260 = vld [vmem:[#allocation6 + $0x204] sm:$0xf]
    %v2261 = vld [vmem:[#allocation6 + $0x208] sm:$0xf]
    %v2262 = vld [vmem:[#allocation6 + $0x20c] sm:$0xf]
    %v2263 = vld [vmem:[#allocation6 + $0x210] sm:$0xf]
    %v2264 = vld [vmem:[#allocation6 + $0x214] sm:$0xf]
    %v2265 = vld [vmem:[#allocation6 + $0x218] sm:$0xf]
    %v2266 = vld [vmem:[#allocation6 + $0x21c] sm:$0xf]
    %v2267 = vld [vmem:[#allocation6 + $0x220] sm:$0xf]
    %v2268 = vld [vmem:[#allocation6 + $0x224] sm:$0xf]
    %v2269 = vld [vmem:[#allocation6 + $0x228] sm:$0xf]
    %v2270 = vld [vmem:[#allocation6 + $0x22c] sm:$0xf]
    %v2271 = vld [vmem:[#allocation6 + $0x230] sm:$0xf]
    %v2272 = vld [vmem:[#allocation6 + $0x234] sm:$0xf]
    %v2273 = vld [vmem:[#allocation6 + $0x238] sm:$0xf]
    %v2274 = vld [vmem:[#allocation6 + $0x23c] sm:$0xf]
    %v2275 = vunpack.c.l.bf16 %v2131
    %v2276 = vunpack.c.l.bf16 %v2132
    %v2277 = vunpack.c.l.bf16 %v2133
    %v2278 = vunpack.c.l.bf16 %v2134
    %v2279 = vunpack.c.l.bf16 %v2135
    %v2280 = vunpack.c.l.bf16 %v2136
    %v2281 = vunpack.c.l.bf16 %v2137
    %v2282 = vunpack.c.l.bf16 %v2138
    %v2283 = vunpack.c.l.bf16 %v2139
    %v2284 = vunpack.c.l.bf16 %v2140
    %v2285 = vunpack.c.l.bf16 %v2141
    %v2286 = vunpack.c.l.bf16 %v2142
    %v2287 = vunpack.c.l.bf16 %v2143
    %v2288 = vunpack.c.l.bf16 %v2144
    %v2289 = vunpack.c.l.bf16 %v2145
    %v2290 = vunpack.c.l.bf16 %v2146
    %v2291 = vunpack.c.l.bf16 %v2147
    %v2292 = vunpack.c.l.bf16 %v2148
    %v2293 = vunpack.c.l.bf16 %v2149
    %v2294 = vunpack.c.l.bf16 %v2150
    %v2295 = vunpack.c.l.bf16 %v2151
    %v2296 = vunpack.c.l.bf16 %v2152
    %v2297 = vunpack.c.l.bf16 %v2153
    %v2298 = vunpack.c.l.bf16 %v2154
    %v2299 = vunpack.c.l.bf16 %v2155
    %v2300 = vunpack.c.l.bf16 %v2156
    %v2301 = vunpack.c.l.bf16 %v2157
    %v2302 = vunpack.c.l.bf16 %v2158
    %v2303 = vunpack.c.l.bf16 %v2159
    %v2304 = vunpack.c.l.bf16 %v2160
    %v2305 = vunpack.c.l.bf16 %v2161
    %v2306 = vunpack.c.l.bf16 %v2162
    %v2307 = vunpack.c.l.bf16 %v2163
    %v2308 = vunpack.c.l.bf16 %v2164
    %v2309 = vunpack.c.l.bf16 %v2165
    %v2310 = vunpack.c.l.bf16 %v2166
    %v2311 = vunpack.c.l.bf16 %v2167
    %v2312 = vunpack.c.l.bf16 %v2168
    %v2313 = vunpack.c.l.bf16 %v2169
    %v2314 = vunpack.c.l.bf16 %v2170
    %v2315 = vunpack.c.l.bf16 %v2171
    %v2316 = vunpack.c.l.bf16 %v2172
    %v2317 = vunpack.c.l.bf16 %v2173
    %v2318 = vunpack.c.l.bf16 %v2174
    %v2319 = vunpack.c.l.bf16 %v2175
    %v2320 = vunpack.c.l.bf16 %v2176
    %v2321 = vunpack.c.l.bf16 %v2177
    %v2322 = vunpack.c.l.bf16 %v2178
    %v2323 = vunpack.c.l.bf16 %v2179
    %v2324 = vunpack.c.l.bf16 %v2180
    %v2325 = vunpack.c.l.bf16 %v2181
    %v2326 = vunpack.c.l.bf16 %v2182
    %v2327 = vunpack.c.l.bf16 %v2183
    %v2328 = vunpack.c.l.bf16 %v2184
    %v2329 = vunpack.c.l.bf16 %v2185
    %v2330 = vunpack.c.l.bf16 %v2186
    %v2331 = vunpack.c.l.bf16 %v2187
    %v2332 = vunpack.c.l.bf16 %v2188
    %v2333 = vunpack.c.l.bf16 %v2189
    %v2334 = vunpack.c.l.bf16 %v2190
    %v2335 = vunpack.c.l.bf16 %v2191
    %v2336 = vunpack.c.l.bf16 %v2192
    %v2337 = vunpack.c.l.bf16 %v2193
    %v2338 = vunpack.c.l.bf16 %v2194
    %v2339 = vunpack.c.l.bf16 %v2195
    %v2340 = vunpack.c.l.bf16 %v2196
    %v2341 = vunpack.c.l.bf16 %v2197
    %v2342 = vunpack.c.l.bf16 %v2198
    %v2343 = vunpack.c.l.bf16 %v2199
    %v2344 = vunpack.c.l.bf16 %v2200
    %v2345 = vunpack.c.l.bf16 %v2201
    %v2346 = vunpack.c.l.bf16 %v2202
    %v2347 = vunpack.c.l.bf16 %v2203
    %v2348 = vunpack.c.l.bf16 %v2204
    %v2349 = vunpack.c.l.bf16 %v2205
    %v2350 = vunpack.c.l.bf16 %v2206
    %v2351 = vunpack.c.l.bf16 %v2207
    %v2352 = vunpack.c.l.bf16 %v2208
    %v2353 = vunpack.c.l.bf16 %v2209
    %v2354 = vunpack.c.l.bf16 %v2210
    %v2355 = vunpack.c.l.bf16 %v2211
    %v2356 = vunpack.c.l.bf16 %v2212
    %v2357 = vunpack.c.l.bf16 %v2213
    %v2358 = vunpack.c.l.bf16 %v2214
    %v2359 = vunpack.c.l.bf16 %v2215
    %v2360 = vunpack.c.l.bf16 %v2216
    %v2361 = vunpack.c.l.bf16 %v2217
    %v2362 = vunpack.c.l.bf16 %v2218
    %v2363 = vunpack.c.l.bf16 %v2219
    %v2364 = vunpack.c.l.bf16 %v2220
    %v2365 = vunpack.c.l.bf16 %v2221
    %v2366 = vunpack.c.l.bf16 %v2222
    %v2367 = vunpack.c.l.bf16 %v2223
    %v2368 = vunpack.c.l.bf16 %v2224
    %v2369 = vunpack.c.l.bf16 %v2225
    %v2370 = vunpack.c.l.bf16 %v2226
    %v2371 = vunpack.c.l.bf16 %v2227
    %v2372 = vunpack.c.l.bf16 %v2228
    %v2373 = vunpack.c.l.bf16 %v2229
    %v2374 = vunpack.c.l.bf16 %v2230
    %v2375 = vunpack.c.l.bf16 %v2231
    %v2376 = vunpack.c.l.bf16 %v2232
    %v2377 = vunpack.c.l.bf16 %v2233
    %v2378 = vunpack.c.l.bf16 %v2234
    %v2379 = vunpack.c.l.bf16 %v2235
    %v2380 = vunpack.c.l.bf16 %v2236
    %v2381 = vunpack.c.l.bf16 %v2237
    %v2382 = vunpack.c.l.bf16 %v2238
    %v2383 = vunpack.c.l.bf16 %v2239
    %v2384 = vunpack.c.l.bf16 %v2240
    %v2385 = vunpack.c.l.bf16 %v2241
    %v2386 = vunpack.c.l.bf16 %v2242
    %v2387 = vunpack.c.l.bf16 %v2243
    %v2388 = vunpack.c.l.bf16 %v2244
    %v2389 = vunpack.c.l.bf16 %v2245
    %v2390 = vunpack.c.l.bf16 %v2246
    %v2391 = vunpack.c.l.bf16 %v2247
    %v2392 = vunpack.c.l.bf16 %v2248
    %v2393 = vunpack.c.l.bf16 %v2249
    %v2394 = vunpack.c.l.bf16 %v2250
    %v2395 = vunpack.c.l.bf16 %v2251
    %v2396 = vunpack.c.l.bf16 %v2252
    %v2397 = vunpack.c.l.bf16 %v2253
    %v2398 = vunpack.c.l.bf16 %v2254
    %v2399 = vunpack.c.l.bf16 %v2255
    %v2400 = vunpack.c.l.bf16 %v2256
    %v2401 = vunpack.c.l.bf16 %v2257
    %v2402 = vunpack.c.l.bf16 %v2258
    %v2403 = vunpack.c.l.bf16 %v2259
    %v2404 = vunpack.c.l.bf16 %v2260
    %v2405 = vunpack.c.l.bf16 %v2261
    %v2406 = vunpack.c.l.bf16 %v2262
    %v2407 = vunpack.c.l.bf16 %v2263
    %v2408 = vunpack.c.l.bf16 %v2264
    %v2409 = vunpack.c.l.bf16 %v2265
    %v2410 = vunpack.c.l.bf16 %v2266
    %v2411 = vunpack.c.l.bf16 %v2267
    %v2412 = vunpack.c.l.bf16 %v2268
    %v2413 = vunpack.c.l.bf16 %v2269
    %v2414 = vunpack.c.l.bf16 %v2270
    %v2415 = vunpack.c.l.bf16 %v2271
    %v2416 = vunpack.c.l.bf16 %v2272
    %v2417 = vunpack.c.l.bf16 %v2273
    %v2418 = vunpack.c.l.bf16 %v2274
    %2419 = vmatprep.subr.mxu0 0.0
    %2420 = vmatpush1.msra.mxu0 %v2275
    %2421 = vmatprep.subr.mxu0 0.0
    %2422 = vmatpush1.msra.mxu0 %v2276
    %2423 = vmatprep.subr.mxu0 0.0
    %2424 = vmatpush1.msra.mxu0 %v2277
    %2425 = vmatprep.subr.mxu0 0.0
    %2426 = vmatpush1.msra.mxu0 %v2278
    %2427 = vmatprep.subr.mxu0 0.0
    %2428 = vmatpush1.msra.mxu0 %v2279
    %2429 = vmatprep.subr.mxu0 0.0
    %2430 = vmatpush1.msra.mxu0 %v2280
    %2431 = vmatprep.subr.mxu0 0.0
    %2432 = vmatpush1.msra.mxu0 %v2281
    %2433 = vmatprep.subr.mxu0 0.0
    %2434 = vmatpush1.msra.mxu0 %v2282
    %2435 = vmatprep.subr.mxu0 0.0
    %2436 = vmatpush1.msra.mxu0 %v2283
    %2437 = vmatprep.subr.mxu0 0.0
    %2438 = vmatpush1.msra.mxu0 %v2284
    %2439 = vmatprep.subr.mxu0 0.0
    %2440 = vmatpush1.msra.mxu0 %v2285
    %2441 = vmatprep.subr.mxu0 0.0
    %2442 = vmatpush1.msra.mxu0 %v2286
    %2443 = vmatprep.subr.mxu0 0.0
    %2444 = vmatpush1.msra.mxu0 %v2287
    %2445 = vmatprep.subr.mxu0 0.0
    %2446 = vmatpush1.msra.mxu0 %v2288
    %2447 = vmatprep.subr.mxu0 0.0
    %2448 = vmatpush1.msra.mxu0 %v2289
    %2449 = vmatprep.subr.mxu0 0.0
    %2450 = vmatpush1.msra.mxu0 %v2290
    %2451 = vmatprep.subr.mxu0 0.0
    %2452 = vmatpush1.msra.mxu0 %v2291
    %2453 = vmatprep.subr.mxu0 0.0
    %2454 = vmatpush1.msra.mxu0 %v2292
    %2455 = vmatprep.subr.mxu0 0.0
    %2456 = vmatpush1.msra.mxu0 %v2293
    %2457 = vmatprep.subr.mxu0 0.0
    %2458 = vmatpush1.msra.mxu0 %v2294
    %2459 = vmatprep.subr.mxu0 0.0
    %2460 = vmatpush1.msra.mxu0 %v2295
    %2461 = vmatprep.subr.mxu0 0.0
    %2462 = vmatpush1.msra.mxu0 %v2296
    %2463 = vmatprep.subr.mxu0 0.0
    %2464 = vmatpush1.msra.mxu0 %v2297
    %2465 = vmatprep.subr.mxu0 0.0
    %2466 = vmatpush1.msra.mxu0 %v2298
    %2467 = vmatprep.subr.mxu0 0.0
    %2468 = vmatpush1.msra.mxu0 %v2299
    %2469 = vmatprep.subr.mxu0 0.0
    %2470 = vmatpush1.msra.mxu0 %v2300
    %2471 = vmatprep.subr.mxu0 0.0
    %2472 = vmatpush1.msra.mxu0 %v2301
    %2473 = vmatprep.subr.mxu0 0.0
    %2474 = vmatpush1.msra.mxu0 %v2302
    %2475 = vmatprep.subr.mxu0 0.0
    %2476 = vmatpush1.msra.mxu0 %v2303
    %2477 = vmatprep.subr.mxu0 0.0
    %2478 = vmatpush1.msra.mxu0 %v2304
    %2479 = vmatprep.subr.mxu0 0.0
    %2480 = vmatpush1.msra.mxu0 %v2305
    %2481 = vmatprep.subr.mxu0 0.0
    %2482 = vmatpush1.msra.mxu0 %v2306
    %2483 = vmatprep.mubr.f32.mxu0 %v1988
    %2484 = vmatmul.mubr.f32.gmra.mrb[0].mxu0 %v1987
    %v2485 = vpop.f32.mrb[0].mxu0
    %v2486 = vadd.f32 0.0, %v2485
    %v2487 = vpop.f32.mrb[0].mxu0
    %2488 = vmatprep.mubr.f32.mxu0 %v1997
    %2489 = vmatmul.mubr.f32.gmra.mrb[0].mxu0 %v1996
    %v2490 = vpop.f32.mrb[0].mxu0
    %v2491 = vadd.f32 0.0, %v2490
    %v2492 = vpop.f32.mrb[0].mxu0
    %2493 = vmatprep.mubr.f32.mxu0 %v2006
    %2494 = vmatmul.mubr.f32.gmra.mrb[0].mxu0 %v2005
    %v2495 = vpop.f32.mrb[0].mxu0
    %v2496 = vadd.f32 0.0, %v2495
    %v2497 = vpop.f32.mrb[0].mxu0
    %2498 = vmatprep.mubr.f32.mxu0 %v2015
    %2499 = vmatmul.mubr.f32.gmra.mrb[0].mxu0 %v2014
    %v2500 = vpop.f32.mrb[0].mxu0
    %v2501 = vadd.f32 0.0, %v2500
    %v2502 = vpop.f32.mrb[0].mxu0
    %2503 = vmatprep.mubr.f32.mxu0 %v2024
    %2504 = vmatmul.mubr.f32.gmra.mrb[0].mxu0 %v2023
    %v2505 = vpop.f32.mrb[0].mxu0
    %v2506 = vadd.f32 0.0, %v2505
    %v2507 = vpop.f32.mrb[0].mxu0
    %2508 = vmatprep.mubr.f32.mxu0 %v2033
    %2509 = vmatmul.mubr.f32.gmra.mrb[0].mxu0 %v2032
    %v2510 = vpop.f32.mrb[0].mxu0
    %v2511 = vadd.f32 0.0, %v2510
    %v2512 = vpop.f32.mrb[0].mxu0
    %2513 = vmatprep.mubr.f32.mxu0 %v2042
    %2514 = vmatmul.mubr.f32.gmra.mrb[0].mxu0 %v2041
    %v2515 = vpop.f32.mrb[0].mxu0
    %v2516 = vadd.f32 0.0, %v2515
    %v2517 = vpop.f32.mrb[0].mxu0
    %2518 = vmatprep.mubr.f32.mxu0 %v2051
    %2519 = vmatmul.mubr.f32.gmra.mrb[0].mxu0 %v2050
    %v2520 = vpop.f32.mrb[0].mxu0
    %v2521 = vadd.f32 0.0, %v2520
    %v2522 = vpop.f32.mrb[0].mxu0
    %2523 = vmatprep.mubr.f32.mxu0 %v2060
    %2524 = vmatmul.mubr.f32.gmra.mrb[0].mxu0 %v2059
    %v2525 = vpop.f32.mrb[0].mxu0
    %v2526 = vadd.f32 0.0, %v2525
    %v2527 = vpop.f32.mrb[0].mxu0
    %2528 = vmatprep.mubr.f32.mxu0 %v2069
    %2529 = vmatmul.mubr.f32.gmra.mrb[0].mxu0 %v2068
    %v2530 = vpop.f32.mrb[0].mxu0
    %v2531 = vadd.f32 0.0, %v2530
    %v2532 = vpop.f32.mrb[0].mxu0
    %2533 = vmatprep.mubr.f32.mxu0 %v2078
    %2534 = vmatmul.mubr.f32.gmra.mrb[0].mxu0 %v2077
    %v2535 = vpop.f32.mrb[0].mxu0
    %v2536 = vadd.f32 0.0, %v2535
    %v2537 = vpop.f32.mrb[0].mxu0
    %2538 = vmatprep.mubr.f32.mxu0 %v2087
    %2539 = vmatmul.mubr.f32.gmra.mrb[0].mxu0 %v2086
    %v2540 = vpop.f32.mrb[0].mxu0
    %v2541 = vadd.f32 0.0, %v2540
    %v2542 = vpop.f32.mrb[0].mxu0
    %2543 = vmatprep.mubr.f32.mxu0 %v2096
    %2544 = vmatmul.mubr.f32.gmra.mrb[0].mxu0 %v2095
    %v2545 = vpop.f32.mrb[0].mxu0
    %v2546 = vadd.f32 0.0, %v2545
    %v2547 = vpop.f32.mrb[0].mxu0
    %2548 = vmatprep.mubr.f32.mxu0 %v2105
    %2549 = vmatmul.mubr.f32.gmra.mrb[0].mxu0 %v2104
    %v2550 = vpop.f32.mrb[0].mxu0
    %v2551 = vadd.f32 0.0, %v2550
    %v2552 = vpop.f32.mrb[0].mxu0
    %2553 = vmatprep.mubr.f32.mxu0 %v2114
    %2554 = vmatmul.mubr.f32.gmra.mrb[0].mxu0 %v2113
    %v2555 = vpop.f32.mrb[0].mxu0
    %v2556 = vadd.f32 0.0, %v2555
    %v2557 = vpop.f32.mrb[0].mxu0
    %2558 = vmatprep.mubr.f32.mxu0 %v2123
    %2559 = vmatmul.mubr.f32.gmra.mrb[0].mxu0 %v2122
    %v2560 = vpop.f32.mrb[0].mxu0
    %v2561 = vadd.f32 0.0, %v2560
    %v2562 = vpop.f32.mrb[0].mxu0
    %2563 = vdwg.mxu0
    %2564 = vmatprep.subr.mxu0 0.0
    %2565 = vmatpush1.msra.mxu0 %v2307
    %2566 = vmatprep.subr.mxu0 0.0
    %2567 = vmatpush1.msra.mxu0 %v2308
    %2568 = vmatprep.subr.mxu0 0.0
    %2569 = vmatpush1.msra.mxu0 %v2309
    %2570 = vmatprep.subr.mxu0 0.0
    %2571 = vmatpush1.msra.mxu0 %v2310
    %2572 = vmatprep.subr.mxu0 0.0
    %2573 = vmatpush1.msra.mxu0 %v2311
    %2574 = vmatprep.subr.mxu0 0.0
    %2575 = vmatpush1.msra.mxu0 %v2312
    %2576 = vmatprep.subr.mxu0 0.0
    %2577 = vmatpush1.msra.mxu0 %v2313
    %2578 = vmatprep.subr.mxu0 0.0
    %2579 = vmatpush1.msra.mxu0 %v2314
    %2580 = vmatprep.subr.mxu0 0.0
    %2581 = vmatpush1.msra.mxu0 %v2315
    %2582 = vmatprep.subr.mxu0 0.0
    %2583 = vmatpush1.msra.mxu0 %v2316
    %2584 = vmatprep.subr.mxu0 0.0
    %2585 = vmatpush1.msra.mxu0 %v2317
    %2586 = vmatprep.subr.mxu0 0.0
    %2587 = vmatpush1.msra.mxu0 %v2318
    %2588 = vmatprep.subr.mxu0 0.0
    %2589 = vmatpush1.msra.mxu0 %v2319
    %2590 = vmatprep.subr.mxu0 0.0
    %2591 = vmatpush1.msra.mxu0 %v2320
    %2592 = vmatprep.subr.mxu0 0.0
    %2593 = vmatpush1.msra.mxu0 %v2321
    %2594 = vmatprep.subr.mxu0 0.0
    %2595 = vmatpush1.msra.mxu0 %v2322
    %2596 = vmatprep.subr.mxu0 0.0
    %2597 = vmatpush1.msra.mxu0 %v2323
    %2598 = vmatprep.subr.mxu0 0.0
    %2599 = vmatpush1.msra.mxu0 %v2324
    %2600 = vmatprep.subr.mxu0 0.0
    %2601 = vmatpush1.msra.mxu0 %v2325
    %2602 = vmatprep.subr.mxu0 0.0
    %2603 = vmatpush1.msra.mxu0 %v2326
    %2604 = vmatprep.subr.mxu0 0.0
    %2605 = vmatpush1.msra.mxu0 %v2327
    %2606 = vmatprep.subr.mxu0 0.0
    %2607 = vmatpush1.msra.mxu0 %v2328
    %2608 = vmatprep.subr.mxu0 0.0
    %2609 = vmatpush1.msra.mxu0 %v2329
    %2610 = vmatprep.subr.mxu0 0.0
    %2611 = vmatpush1.msra.mxu0 %v2330
    %2612 = vmatprep.subr.mxu0 0.0
    %2613 = vmatpush1.msra.mxu0 %v2331
    %2614 = vmatprep.subr.mxu0 0.0
    %2615 = vmatpush1.msra.mxu0 %v2332
    %2616 = vmatprep.subr.mxu0 0.0
    %2617 = vmatpush1.msra.mxu0 %v2333
    %2618 = vmatprep.subr.mxu0 0.0
    %2619 = vmatpush1.msra.mxu0 %v2334
    %2620 = vmatprep.subr.mxu0 0.0
    %2621 = vmatpush1.msra.mxu0 %v2335
    %2622 = vmatprep.subr.mxu0 0.0
    %2623 = vmatpush1.msra.mxu0 %v2336
    %2624 = vmatprep.subr.mxu0 0.0
    %2625 = vmatpush1.msra.mxu0 %v2337
    %2626 = vmatprep.subr.mxu0 0.0
    %2627 = vmatpush1.msra.mxu0 %v2338
    %2628 = vmatprep.mubr.f32.mxu0 %v1990
    %2629 = vmatmul.mubr.f32.gmra.mrb[0].mxu0 %v1989
    %v2630 = vpop.f32.mrb[0].mxu0
    %v2631 = vadd.f32 %v2486, %v2630
    %v2632 = vpop.f32.mrb[0].mxu0
    %2633 = vmatprep.mubr.f32.mxu0 %v1999
    %2634 = vmatmul.mubr.f32.gmra.mrb[0].mxu0 %v1998
    %v2635 = vpop.f32.mrb[0].mxu0
    %v2636 = vadd.f32 %v2491, %v2635
    %v2637 = vpop.f32.mrb[0].mxu0
    %2638 = vmatprep.mubr.f32.mxu0 %v2008
    %2639 = vmatmul.mubr.f32.gmra.mrb[0].mxu0 %v2007
    %v2640 = vpop.f32.mrb[0].mxu0
    %v2641 = vadd.f32 %v2496, %v2640
    %v2642 = vpop.f32.mrb[0].mxu0
    %2643 = vmatprep.mubr.f32.mxu0 %v2017
    %2644 = vmatmul.mubr.f32.gmra.mrb[0].mxu0 %v2016
    %v2645 = vpop.f32.mrb[0].mxu0
    %v2646 = vadd.f32 %v2501, %v2645
    %v2647 = vpop.f32.mrb[0].mxu0
    %2648 = vmatprep.mubr.f32.mxu0 %v2026
    %2649 = vmatmul.mubr.f32.gmra.mrb[0].mxu0 %v2025
    %v2650 = vpop.f32.mrb[0].mxu0
    %v2651 = vadd.f32 %v2506, %v2650
    %v2652 = vpop.f32.mrb[0].mxu0
    %2653 = vmatprep.mubr.f32.mxu0 %v2035
    %2654 = vmatmul.mubr.f32.gmra.mrb[0].mxu0 %v2034
    %v2655 = vpop.f32.mrb[0].mxu0
    %v2656 = vadd.f32 %v2511, %v2655
    %v2657 = vpop.f32.mrb[0].mxu0
    %2658 = vmatprep.mubr.f32.mxu0 %v2044
    %2659 = vmatmul.mubr.f32.gmra.mrb[0].mxu0 %v2043
    %v2660 = vpop.f32.mrb[0].mxu0
    %v2661 = vadd.f32 %v2516, %v2660
    %v2662 = vpop.f32.mrb[0].mxu0
    %2663 = vmatprep.mubr.f32.mxu0 %v2053
    %2664 = vmatmul.mubr.f32.gmra.mrb[0].mxu0 %v2052
    %v2665 = vpop.f32.mrb[0].mxu0
    %v2666 = vadd.f32 %v2521, %v2665
    %v2667 = vpop.f32.mrb[0].mxu0
    %2668 = vmatprep.mubr.f32.mxu0 %v2062
    %2669 = vmatmul.mubr.f32.gmra.mrb[0].mxu0 %v2061
    %v2670 = vpop.f32.mrb[0].mxu0
    %v2671 = vadd.f32 %v2526, %v2670
    %v2672 = vpop.f32.mrb[0].mxu0
    %2673 = vmatprep.mubr.f32.mxu0 %v2071
    %2674 = vmatmul.mubr.f32.gmra.mrb[0].mxu0 %v2070
    %v2675 = vpop.f32.mrb[0].mxu0
    %v2676 = vadd.f32 %v2531, %v2675
    %v2677 = vpop.f32.mrb[0].mxu0
    %2678 = vmatprep.mubr.f32.mxu0 %v2080
    %2679 = vmatmul.mubr.f32.gmra.mrb[0].mxu0 %v2079
    %v2680 = vpop.f32.mrb[0].mxu0
    %v2681 = vadd.f32 %v2536, %v2680
    %v2682 = vpop.f32.mrb[0].mxu0
    %2683 = vmatprep.mubr.f32.mxu0 %v2089
    %2684 = vmatmul.mubr.f32.gmra.mrb[0].mxu0 %v2088
    %v2685 = vpop.f32.mrb[0].mxu0
    %v2686 = vadd.f32 %v2541, %v2685
    %v2687 = vpop.f32.mrb[0].mxu0
    %2688 = vmatprep.mubr.f32.mxu0 %v2098
    %2689 = vmatmul.mubr.f32.gmra.mrb[0].mxu0 %v2097
    %v2690 = vpop.f32.mrb[0].mxu0
    %v2691 = vadd.f32 %v2546, %v2690
    %v2692 = vpop.f32.mrb[0].mxu0
    %2693 = vmatprep.mubr.f32.mxu0 %v2107
    %2694 = vmatmul.mubr.f32.gmra.mrb[0].mxu0 %v2106
    %v2695 = vpop.f32.mrb[0].mxu0
    %v2696 = vadd.f32 %v2551, %v2695
    %v2697 = vpop.f32.mrb[0].mxu0
    %2698 = vmatprep.mubr.f32.mxu0 %v2116
    %2699 = vmatmul.mubr.f32.gmra.mrb[0].mxu0 %v2115
    %v2700 = vpop.f32.mrb[0].mxu0
    %v2701 = vadd.f32 %v2556, %v2700
    %v2702 = vpop.f32.mrb[0].mxu0
    %2703 = vmatprep.mubr.f32.mxu0 %v2125
    %2704 = vmatmul.mubr.f32.gmra.mrb[0].mxu0 %v2124
    %v2705 = vpop.f32.mrb[0].mxu0
    %v2706 = vadd.f32 %v2561, %v2705
    %v2707 = vpop.f32.mrb[0].mxu0
    %2708 = vdwg.mxu0
    %2709 = vmatprep.subr.mxu0 0.0
    %2710 = vmatpush1.msra.mxu0 %v2339
    %2711 = vmatprep.subr.mxu0 0.0
    %2712 = vmatpush1.msra.mxu0 %v2340
    %2713 = vmatprep.subr.mxu0 0.0
    %2714 = vmatpush1.msra.mxu0 %v2341
    %2715 = vmatprep.subr.mxu0 0.0
    %2716 = vmatpush1.msra.mxu0 %v2342
    %2717 = vmatprep.subr.mxu0 0.0
    %2718 = vmatpush1.msra.mxu0 %v2343
    %2719 = vmatprep.subr.mxu0 0.0
    %2720 = vmatpush1.msra.mxu0 %v2344
    %2721 = vmatprep.subr.mxu0 0.0
    %2722 = vmatpush1.msra.mxu0 %v2345
    %2723 = vmatprep.subr.mxu0 0.0
    %2724 = vmatpush1.msra.mxu0 %v2346
    %2725 = vmatprep.subr.mxu0 0.0
    %2726 = vmatpush1.msra.mxu0 %v2347
    %2727 = vmatprep.subr.mxu0 0.0
    %2728 = vmatpush1.msra.mxu0 %v2348
    %2729 = vmatprep.subr.mxu0 0.0
    %2730 = vmatpush1.msra.mxu0 %v2349
    %2731 = vmatprep.subr.mxu0 0.0
    %2732 = vmatpush1.msra.mxu0 %v2350
    %2733 = vmatprep.subr.mxu0 0.0
    %2734 = vmatpush1.msra.mxu0 %v2351
    %2735 = vmatprep.subr.mxu0 0.0
    %2736 = vmatpush1.msra.mxu0 %v2352
    %2737 = vmatprep.subr.mxu0 0.0
    %2738 = vmatpush1.msra.mxu0 %v2353
    %2739 = vmatprep.subr.mxu0 0.0
    %2740 = vmatpush1.msra.mxu0 %v2354
    %2741 = vmatprep.subr.mxu0 0.0
    %2742 = vmatpush1.msra.mxu0 %v2355
    %2743 = vmatprep.subr.mxu0 0.0
    %2744 = vmatpush1.msra.mxu0 %v2356
    %2745 = vmatprep.subr.mxu0 0.0
    %2746 = vmatpush1.msra.mxu0 %v2357
    %2747 = vmatprep.subr.mxu0 0.0
    %2748 = vmatpush1.msra.mxu0 %v2358
    %2749 = vmatprep.subr.mxu0 0.0
    %2750 = vmatpush1.msra.mxu0 %v2359
    %2751 = vmatprep.subr.mxu0 0.0
    %2752 = vmatpush1.msra.mxu0 %v2360
    %2753 = vmatprep.subr.mxu0 0.0
    %2754 = vmatpush1.msra.mxu0 %v2361
    %2755 = vmatprep.subr.mxu0 0.0
    %2756 = vmatpush1.msra.mxu0 %v2362
    %2757 = vmatprep.subr.mxu0 0.0
    %2758 = vmatpush1.msra.mxu0 %v2363
    %2759 = vmatprep.subr.mxu0 0.0
    %2760 = vmatpush1.msra.mxu0 %v2364
    %2761 = vmatprep.subr.mxu0 0.0
    %2762 = vmatpush1.msra.mxu0 %v2365
    %2763 = vmatprep.subr.mxu0 0.0
    %2764 = vmatpush1.msra.mxu0 %v2366
    %2765 = vmatprep.subr.mxu0 0.0
    %2766 = vmatpush1.msra.mxu0 %v2367
    %2767 = vmatprep.subr.mxu0 0.0
    %2768 = vmatpush1.msra.mxu0 %v2368
    %2769 = vmatprep.subr.mxu0 0.0
    %2770 = vmatpush1.msra.mxu0 %v2369
    %2771 = vmatprep.subr.mxu0 0.0
    %2772 = vmatpush1.msra.mxu0 %v2370
    %2773 = vmatprep.mubr.f32.mxu0 %v1992
    %2774 = vmatmul.mubr.f32.gmra.mrb[0].mxu0 %v1991
    %v2775 = vpop.f32.mrb[0].mxu0
    %v2776 = vadd.f32 %v2631, %v2775
    %v2777 = vpop.f32.mrb[0].mxu0
    %2778 = vmatprep.mubr.f32.mxu0 %v2001
    %2779 = vmatmul.mubr.f32.gmra.mrb[0].mxu0 %v2000
    %v2780 = vpop.f32.mrb[0].mxu0
    %v2781 = vadd.f32 %v2636, %v2780
    %v2782 = vpop.f32.mrb[0].mxu0
    %2783 = vmatprep.mubr.f32.mxu0 %v2010
    %2784 = vmatmul.mubr.f32.gmra.mrb[0].mxu0 %v2009
    %v2785 = vpop.f32.mrb[0].mxu0
    %v2786 = vadd.f32 %v2641, %v2785
    %v2787 = vpop.f32.mrb[0].mxu0
    %2788 = vmatprep.mubr.f32.mxu0 %v2019
    %2789 = vmatmul.mubr.f32.gmra.mrb[0].mxu0 %v2018
    %v2790 = vpop.f32.mrb[0].mxu0
    %v2791 = vadd.f32 %v2646, %v2790
    %v2792 = vpop.f32.mrb[0].mxu0
    %2793 = vmatprep.mubr.f32.mxu0 %v2028
    %2794 = vmatmul.mubr.f32.gmra.mrb[0].mxu0 %v2027
    %v2795 = vpop.f32.mrb[0].mxu0
    %v2796 = vadd.f32 %v2651, %v2795
    %v2797 = vpop.f32.mrb[0].mxu0
    %2798 = vmatprep.mubr.f32.mxu0 %v2037
    %2799 = vmatmul.mubr.f32.gmra.mrb[0].mxu0 %v2036
    %v2800 = vpop.f32.mrb[0].mxu0
    %v2801 = vadd.f32 %v2656, %v2800
    %v2802 = vpop.f32.mrb[0].mxu0
    %2803 = vmatprep.mubr.f32.mxu0 %v2046
    %2804 = vmatmul.mubr.f32.gmra.mrb[0].mxu0 %v2045
    %v2805 = vpop.f32.mrb[0].mxu0
    %v2806 = vadd.f32 %v2661, %v2805
    %v2807 = vpop.f32.mrb[0].mxu0
    %2808 = vmatprep.mubr.f32.mxu0 %v2055
    %2809 = vmatmul.mubr.f32.gmra.mrb[0].mxu0 %v2054
    %v2810 = vpop.f32.mrb[0].mxu0
    %v2811 = vadd.f32 %v2666, %v2810
    %v2812 = vpop.f32.mrb[0].mxu0
    %2813 = vmatprep.mubr.f32.mxu0 %v2064
    %2814 = vmatmul.mubr.f32.gmra.mrb[0].mxu0 %v2063
    %v2815 = vpop.f32.mrb[0].mxu0
    %v2816 = vadd.f32 %v2671, %v2815
    %v2817 = vpop.f32.mrb[0].mxu0
    %2818 = vmatprep.mubr.f32.mxu0 %v2073
    %2819 = vmatmul.mubr.f32.gmra.mrb[0].mxu0 %v2072
    %v2820 = vpop.f32.mrb[0].mxu0
    %v2821 = vadd.f32 %v2676, %v2820
    %v2822 = vpop.f32.mrb[0].mxu0
    %2823 = vmatprep.mubr.f32.mxu0 %v2082
    %2824 = vmatmul.mubr.f32.gmra.mrb[0].mxu0 %v2081
    %v2825 = vpop.f32.mrb[0].mxu0
    %v2826 = vadd.f32 %v2681, %v2825
    %v2827 = vpop.f32.mrb[0].mxu0
    %2828 = vmatprep.mubr.f32.mxu0 %v2091
    %2829 = vmatmul.mubr.f32.gmra.mrb[0].mxu0 %v2090
    %v2830 = vpop.f32.mrb[0].mxu0
    %v2831 = vadd.f32 %v2686, %v2830
    %v2832 = vpop.f32.mrb[0].mxu0
    %2833 = vmatprep.mubr.f32.mxu0 %v2100
    %2834 = vmatmul.mubr.f32.gmra.mrb[0].mxu0 %v2099
    %v2835 = vpop.f32.mrb[0].mxu0
    %v2836 = vadd.f32 %v2691, %v2835
    %v2837 = vpop.f32.mrb[0].mxu0
    %2838 = vmatprep.mubr.f32.mxu0 %v2109
    %2839 = vmatmul.mubr.f32.gmra.mrb[0].mxu0 %v2108
    %v2840 = vpop.f32.mrb[0].mxu0
    %v2841 = vadd.f32 %v2696, %v2840
    %v2842 = vpop.f32.mrb[0].mxu0
    %2843 = vmatprep.mubr.f32.mxu0 %v2118
    %2844 = vmatmul.mubr.f32.gmra.mrb[0].mxu0 %v2117
    %v2845 = vpop.f32.mrb[0].mxu0
    %v2846 = vadd.f32 %v2701, %v2845
    %v2847 = vpop.f32.mrb[0].mxu0
    %2848 = vmatprep.mubr.f32.mxu0 %v2127
    %2849 = vmatmul.mubr.f32.gmra.mrb[0].mxu0 %v2126
    %v2850 = vpop.f32.mrb[0].mxu0
    %v2851 = vadd.f32 %v2706, %v2850
    %v2852 = vpop.f32.mrb[0].mxu0
    %2853 = vdwg.mxu0
    %2854 = vmatprep.subr.mxu0 0.0
    %2855 = vmatpush1.msra.mxu0 %v2371
    %2856 = vmatprep.subr.mxu0 0.0
    %2857 = vmatpush1.msra.mxu0 %v2372
    %2858 = vmatprep.subr.mxu0 0.0
    %2859 = vmatpush1.msra.mxu0 %v2373
    %2860 = vmatprep.subr.mxu0 0.0
    %2861 = vmatpush1.msra.mxu0 %v2374
    %2862 = vmatprep.subr.mxu0 0.0
    %2863 = vmatpush1.msra.mxu0 %v2375
    %2864 = vmatprep.subr.mxu0 0.0
    %2865 = vmatpush1.msra.mxu0 %v2376
    %2866 = vmatprep.subr.mxu0 0.0
    %2867 = vmatpush1.msra.mxu0 %v2377
    %2868 = vmatprep.subr.mxu0 0.0
    %2869 = vmatpush1.msra.mxu0 %v2378
    %2870 = vmatprep.subr.mxu0 0.0
    %2871 = vmatpush1.msra.mxu0 %v2379
    %2872 = vmatprep.subr.mxu0 0.0
    %2873 = vmatpush1.msra.mxu0 %v2380
    %2874 = vmatprep.subr.mxu0 0.0
    %2875 = vmatpush1.msra.mxu0 %v2381
    %2876 = vmatprep.subr.mxu0 0.0
    %2877 = vmatpush1.msra.mxu0 %v2382
    %2878 = vmatprep.subr.mxu0 0.0
    %2879 = vmatpush1.msra.mxu0 %v2383
    %2880 = vmatprep.subr.mxu0 0.0
    %2881 = vmatpush1.msra.mxu0 %v2384
    %2882 = vmatprep.subr.mxu0 0.0
    %2883 = vmatpush1.msra.mxu0 %v2385
    %2884 = vmatprep.subr.mxu0 0.0
    %2885 = vmatpush1.msra.mxu0 %v2386
    %2886 = vmatprep.subr.mxu0 0.0
    %2887 = vmatpush1.msra.mxu0 %v2387
    %2888 = vmatprep.subr.mxu0 0.0
    %2889 = vmatpush1.msra.mxu0 %v2388
    %2890 = vmatprep.subr.mxu0 0.0
    %2891 = vmatpush1.msra.mxu0 %v2389
    %2892 = vmatprep.subr.mxu0 0.0
    %2893 = vmatpush1.msra.mxu0 %v2390
    %2894 = vmatprep.subr.mxu0 0.0
    %2895 = vmatpush1.msra.mxu0 %v2391
    %2896 = vmatprep.subr.mxu0 0.0
    %2897 = vmatpush1.msra.mxu0 %v2392
    %2898 = vmatprep.subr.mxu0 0.0
    %2899 = vmatpush1.msra.mxu0 %v2393
    %2900 = vmatprep.subr.mxu0 0.0
    %2901 = vmatpush1.msra.mxu0 %v2394
    %2902 = vmatprep.subr.mxu0 0.0
    %2903 = vmatpush1.msra.mxu0 %v2395
    %2904 = vmatprep.subr.mxu0 0.0
    %2905 = vmatpush1.msra.mxu0 %v2396
    %2906 = vmatprep.subr.mxu0 0.0
    %2907 = vmatpush1.msra.mxu0 %v2397
    %2908 = vmatprep.subr.mxu0 0.0
    %2909 = vmatpush1.msra.mxu0 %v2398
    %2910 = vmatprep.subr.mxu0 0.0
    %2911 = vmatpush1.msra.mxu0 %v2399
    %2912 = vmatprep.subr.mxu0 0.0
    %2913 = vmatpush1.msra.mxu0 %v2400
    %2914 = vmatprep.subr.mxu0 0.0
    %2915 = vmatpush1.msra.mxu0 %v2401
    %2916 = vmatprep.subr.mxu0 0.0
    %2917 = vmatpush1.msra.mxu0 %v2402
    %2918 = vmatprep.mubr.f32.mxu0 %v1994
    %2919 = vmatmul.mubr.f32.gmra.mrb[0].mxu0 %v1993
    %v2920 = vpop.f32.mrb[0].mxu0
    %v2921 = vadd.f32 %v2776, %v2920
    %v2922 = vpop.f32.mrb[0].mxu0
    %2923 = vmatprep.mubr.f32.mxu0 %v2003
    %2924 = vmatmul.mubr.f32.gmra.mrb[0].mxu0 %v2002
    %v2925 = vpop.f32.mrb[0].mxu0
    %v2926 = vadd.f32 %v2781, %v2925
    %v2927 = vpop.f32.mrb[0].mxu0
    %2928 = vmatprep.mubr.f32.mxu0 %v2012
    %2929 = vmatmul.mubr.f32.gmra.mrb[0].mxu0 %v2011
    %v2930 = vpop.f32.mrb[0].mxu0
    %v2931 = vadd.f32 %v2786, %v2930
    %v2932 = vpop.f32.mrb[0].mxu0
    %2933 = vmatprep.mubr.f32.mxu0 %v2021
    %2934 = vmatmul.mubr.f32.gmra.mrb[0].mxu0 %v2020
    %v2935 = vpop.f32.mrb[0].mxu0
    %v2936 = vadd.f32 %v2791, %v2935
    %v2937 = vpop.f32.mrb[0].mxu0
    %2938 = vmatprep.mubr.f32.mxu0 %v2030
    %2939 = vmatmul.mubr.f32.gmra.mrb[0].mxu0 %v2029
    %v2940 = vpop.f32.mrb[0].mxu0
    %v2941 = vadd.f32 %v2796, %v2940
    %v2942 = vpop.f32.mrb[0].mxu0
    %2943 = vmatprep.mubr.f32.mxu0 %v2039
    %2944 = vmatmul.mubr.f32.gmra.mrb[0].mxu0 %v2038
    %v2945 = vpop.f32.mrb[0].mxu0
    %v2946 = vadd.f32 %v2801, %v2945
    %v2947 = vpop.f32.mrb[0].mxu0
    %2948 = vmatprep.mubr.f32.mxu0 %v2048
    %2949 = vmatmul.mubr.f32.gmra.mrb[0].mxu0 %v2047
    %v2950 = vpop.f32.mrb[0].mxu0
    %v2951 = vadd.f32 %v2806, %v2950
    %v2952 = vpop.f32.mrb[0].mxu0
    %2953 = vmatprep.mubr.f32.mxu0 %v2057
    %2954 = vmatmul.mubr.f32.gmra.mrb[0].mxu0 %v2056
    %v2955 = vpop.f32.mrb[0].mxu0
    %v2956 = vadd.f32 %v2811, %v2955
    %v2957 = vpop.f32.mrb[0].mxu0
    %2958 = vmatprep.mubr.f32.mxu0 %v2066
    %2959 = vmatmul.mubr.f32.gmra.mrb[0].mxu0 %v2065
    %v2960 = vpop.f32.mrb[0].mxu0
    %v2961 = vadd.f32 %v2816, %v2960
    %v2962 = vpop.f32.mrb[0].mxu0
    %2963 = vmatprep.mubr.f32.mxu0 %v2075
    %2964 = vmatmul.mubr.f32.gmra.mrb[0].mxu0 %v2074
    %v2965 = vpop.f32.mrb[0].mxu0
    %v2966 = vadd.f32 %v2821, %v2965
    %v2967 = vpop.f32.mrb[0].mxu0
    %2968 = vmatprep.mubr.f32.mxu0 %v2084
    %2969 = vmatmul.mubr.f32.gmra.mrb[0].mxu0 %v2083
    %v2970 = vpop.f32.mrb[0].mxu0
    %v2971 = vadd.f32 %v2826, %v2970
    %v2972 = vpop.f32.mrb[0].mxu0
    %2973 = vmatprep.mubr.f32.mxu0 %v2093
    %2974 = vmatmul.mubr.f32.gmra.mrb[0].mxu0 %v2092
    %v2975 = vpop.f32.mrb[0].mxu0
    %v2976 = vadd.f32 %v2831, %v2975
    %v2977 = vpop.f32.mrb[0].mxu0
    %2978 = vmatprep.mubr.f32.mxu0 %v2102
    %2979 = vmatmul.mubr.f32.gmra.mrb[0].mxu0 %v2101
    %v2980 = vpop.f32.mrb[0].mxu0
    %v2981 = vadd.f32 %v2836, %v2980
    %v2982 = vpop.f32.mrb[0].mxu0
    %2983 = vmatprep.mubr.f32.mxu0 %v2111
    %2984 = vmatmul.mubr.f32.gmra.mrb[0].mxu0 %v2110
    %v2985 = vpop.f32.mrb[0].mxu0
    %v2986 = vadd.f32 %v2841, %v2985
    %v2987 = vpop.f32.mrb[0].mxu0
    %2988 = vmatprep.mubr.f32.mxu0 %v2120
    %2989 = vmatmul.mubr.f32.gmra.mrb[0].mxu0 %v2119
    %v2990 = vpop.f32.mrb[0].mxu0
    %v2991 = vadd.f32 %v2846, %v2990
    %v2992 = vpop.f32.mrb[0].mxu0
    %2993 = vmatprep.mubr.f32.mxu0 %v2129
    %2994 = vmatmul.mubr.f32.gmra.mrb[0].mxu0 %v2128
    %v2995 = vpop.f32.mrb[0].mxu0
    %v2996 = vadd.f32 %v2851, %v2995
    %v2997 = vpop.f32.mrb[0].mxu0
    %2998 = vdwg.mxu0
    %2999 = vmatprep.subr.mxu0 0.0
    %3000 = vmatpush1.msra.mxu0 %v2403
    %3001 = vmatprep.subr.mxu0 0.0
    %3002 = vmatpush1.msra.mxu0 %v2404
    %3003 = vmatprep.subr.mxu0 0.0
    %3004 = vmatpush1.msra.mxu0 %v2405
    %3005 = vmatprep.subr.mxu0 0.0
    %3006 = vmatpush1.msra.mxu0 %v2406
    %3007 = vmatprep.subr.mxu0 0.0
    %3008 = vmatpush1.msra.mxu0 %v2407
    %3009 = vmatprep.subr.mxu0 0.0
    %3010 = vmatpush1.msra.mxu0 %v2408
    %3011 = vmatprep.subr.mxu0 0.0
    %3012 = vmatpush1.msra.mxu0 %v2409
    %3013 = vmatprep.subr.mxu0 0.0
    %3014 = vmatpush1.msra.mxu0 %v2410
    %3015 = vmatprep.subr.mxu0 0.0
    %3016 = vmatpush1.msra.mxu0 %v2411
    %3017 = vmatprep.subr.mxu0 0.0
    %3018 = vmatpush1.msra.mxu0 %v2412
    %3019 = vmatprep.subr.mxu0 0.0
    %3020 = vmatpush1.msra.mxu0 %v2413
    %3021 = vmatprep.subr.mxu0 0.0
    %3022 = vmatpush1.msra.mxu0 %v2414
    %3023 = vmatprep.subr.mxu0 0.0
    %3024 = vmatpush1.msra.mxu0 %v2415
    %3025 = vmatprep.subr.mxu0 0.0
    %3026 = vmatpush1.msra.mxu0 %v2416
    %3027 = vmatprep.subr.mxu0 0.0
    %3028 = vmatpush1.msra.mxu0 %v2417
    %3029 = vmatprep.subr.mxu0 0.0
    %3030 = vmatpush1.msra.mxu0 %v2418
    %3031 = vmatprep.subr.mxu0 0.0
    %3032 = vmatpush1.msra.mxu0 0.0
    %3033 = vmatprep.subr.mxu0 0.0
    %3034 = vmatpush1.msra.mxu0 0.0
    %3035 = vmatprep.subr.mxu0 0.0
    %3036 = vmatpush1.msra.mxu0 0.0
    %3037 = vmatprep.subr.mxu0 0.0
    %3038 = vmatpush1.msra.mxu0 0.0
    %3039 = vmatprep.subr.mxu0 0.0
    %3040 = vmatpush1.msra.mxu0 0.0
    %3041 = vmatprep.subr.mxu0 0.0
    %3042 = vmatpush1.msra.mxu0 0.0
    %3043 = vmatprep.subr.mxu0 0.0
    %3044 = vmatpush1.msra.mxu0 0.0
    %3045 = vmatprep.subr.mxu0 0.0
    %3046 = vmatpush1.msra.mxu0 0.0
    %3047 = vmatprep.subr.mxu0 0.0
    %3048 = vmatpush1.msra.mxu0 0.0
    %3049 = vmatprep.subr.mxu0 0.0
    %3050 = vmatpush1.msra.mxu0 0.0
    %3051 = vmatprep.subr.mxu0 0.0
    %3052 = vmatpush1.msra.mxu0 0.0
    %3053 = vmatprep.subr.mxu0 0.0
    %3054 = vmatpush1.msra.mxu0 0.0
    %3055 = vmatprep.subr.mxu0 0.0
    %3056 = vmatpush1.msra.mxu0 0.0
    %3057 = vmatprep.subr.mxu0 0.0
    %3058 = vmatpush1.msra.mxu0 0.0
    %3059 = vmatprep.subr.mxu0 0.0
    %3060 = vmatpush1.msra.mxu0 0.0
    %3061 = vmatprep.subr.mxu0 0.0
    %3062 = vmatpush1.msra.mxu0 0.0
    %3063 = vmatprep.mubr.f32.mxu0 0.0
    %3064 = vmatmul.mubr.f32.gmra.mrb[0].mxu0 %v1995
    %v3065 = vpop.f32.mrb[0].mxu0
    %v3066 = vadd.f32 %v2921, %v3065
    %v3067 = vpop.f32.mrb[0].mxu0
    %3068 = vmatprep.mubr.f32.mxu0 0.0
    %3069 = vmatmul.mubr.f32.gmra.mrb[0].mxu0 %v2004
    %v3070 = vpop.f32.mrb[0].mxu0
    %v3071 = vadd.f32 %v2926, %v3070
    %v3072 = vpop.f32.mrb[0].mxu0
    %3073 = vmatprep.mubr.f32.mxu0 0.0
    %3074 = vmatmul.mubr.f32.gmra.mrb[0].mxu0 %v2013
    %v3075 = vpop.f32.mrb[0].mxu0
    %v3076 = vadd.f32 %v2931, %v3075
    %v3077 = vpop.f32.mrb[0].mxu0
    %3078 = vmatprep.mubr.f32.mxu0 0.0
    %3079 = vmatmul.mubr.f32.gmra.mrb[0].mxu0 %v2022
    %v3080 = vpop.f32.mrb[0].mxu0
    %v3081 = vadd.f32 %v2936, %v3080
    %v3082 = vpop.f32.mrb[0].mxu0
    %3083 = vmatprep.mubr.f32.mxu0 0.0
    %3084 = vmatmul.mubr.f32.gmra.mrb[0].mxu0 %v2031
    %v3085 = vpop.f32.mrb[0].mxu0
    %v3086 = vadd.f32 %v2941, %v3085
    %v3087 = vpop.f32.mrb[0].mxu0
    %3088 = vmatprep.mubr.f32.mxu0 0.0
    %3089 = vmatmul.mubr.f32.gmra.mrb[0].mxu0 %v2040
    %v3090 = vpop.f32.mrb[0].mxu0
    %v3091 = vadd.f32 %v2946, %v3090
    %v3092 = vpop.f32.mrb[0].mxu0
    %3093 = vmatprep.mubr.f32.mxu0 0.0
    %3094 = vmatmul.mubr.f32.gmra.mrb[0].mxu0 %v2049
    %v3095 = vpop.f32.mrb[0].mxu0
    %v3096 = vadd.f32 %v2951, %v3095
    %v3097 = vpop.f32.mrb[0].mxu0
    %3098 = vmatprep.mubr.f32.mxu0 0.0
    %3099 = vmatmul.mubr.f32.gmra.mrb[0].mxu0 %v2058
    %v3100 = vpop.f32.mrb[0].mxu0
    %v3101 = vadd.f32 %v2956, %v3100
    %v3102 = vpop.f32.mrb[0].mxu0
    %3103 = vmatprep.mubr.f32.mxu0 0.0
    %3104 = vmatmul.mubr.f32.gmra.mrb[0].mxu0 %v2067
    %v3105 = vpop.f32.mrb[0].mxu0
    %v3106 = vadd.f32 %v2961, %v3105
    %v3107 = vpop.f32.mrb[0].mxu0
    %3108 = vmatprep.mubr.f32.mxu0 0.0
    %3109 = vmatmul.mubr.f32.gmra.mrb[0].mxu0 %v2076
    %v3110 = vpop.f32.mrb[0].mxu0
    %v3111 = vadd.f32 %v2966, %v3110
    %v3112 = vpop.f32.mrb[0].mxu0
    %3113 = vmatprep.mubr.f32.mxu0 0.0
    %3114 = vmatmul.mubr.f32.gmra.mrb[0].mxu0 %v2085
    %v3115 = vpop.f32.mrb[0].mxu0
    %v3116 = vadd.f32 %v2971, %v3115
    %v3117 = vpop.f32.mrb[0].mxu0
    %3118 = vmatprep.mubr.f32.mxu0 0.0
    %3119 = vmatmul.mubr.f32.gmra.mrb[0].mxu0 %v2094
    %v3120 = vpop.f32.mrb[0].mxu0
    %v3121 = vadd.f32 %v2976, %v3120
    %v3122 = vpop.f32.mrb[0].mxu0
    %3123 = vmatprep.mubr.f32.mxu0 0.0
    %3124 = vmatmul.mubr.f32.gmra.mrb[0].mxu0 %v2103
    %v3125 = vpop.f32.mrb[0].mxu0
    %v3126 = vadd.f32 %v2981, %v3125
    %v3127 = vpop.f32.mrb[0].mxu0
    %3128 = vmatprep.mubr.f32.mxu0 0.0
    %3129 = vmatmul.mubr.f32.gmra.mrb[0].mxu0 %v2112
    %v3130 = vpop.f32.mrb[0].mxu0
    %v3131 = vadd.f32 %v2986, %v3130
    %v3132 = vpop.f32.mrb[0].mxu0
    %3133 = vmatprep.mubr.f32.mxu0 0.0
    %3134 = vmatmul.mubr.f32.gmra.mrb[0].mxu0 %v2121
    %v3135 = vpop.f32.mrb[0].mxu0
    %v3136 = vadd.f32 %v2991, %v3135
    %v3137 = vpop.f32.mrb[0].mxu0
    %3138 = vmatprep.mubr.f32.mxu0 0.0
    %3139 = vmatmul.mubr.f32.gmra.mrb[0].mxu0 %v2130
    %v3140 = vpop.f32.mrb[0].mxu0
    %v3141 = vadd.f32 %v2996, %v3140
    %v3142 = vpop.f32.mrb[0].mxu0
    %3143 = vdwg.mxu0
    %v3144 = vld [vmem:[%s5] sm:$0x1]
    %v3146 = vlaneseq
    %v3147 = vshrl.u32 %v3146, 7
    %v3148 = vsub.s32 0, %v3147
    %v3149 = vrot.slane %v3144, %v3148
    %v3151 = vmul.f32 %v3066, %v3149
    %v3152 = vmul.f32 %v3071, %v3149
    %v3153 = vmul.f32 %v3076, %v3149
    %v3154 = vmul.f32 %v3081, %v3149
    %v3155 = vmul.f32 %v3086, %v3149
    %v3156 = vmul.f32 %v3091, %v3149
    %v3157 = vmul.f32 %v3096, %v3149
    %v3158 = vmul.f32 %v3101, %v3149
    %v3159 = vmul.f32 %v3106, %v3149
    %v3160 = vmul.f32 %v3111, %v3149
    %v3161 = vmul.f32 %v3116, %v3149
    %v3162 = vmul.f32 %v3121, %v3149
    %v3163 = vmul.f32 %v3126, %v3149
    %v3164 = vmul.f32 %v3131, %v3149
    %v3165 = vmul.f32 %v3136, %v3149
    %v3166 = vmul.f32 %v3141, %v3149
    %v3167 = vld [vmem:[%s6] sm:$0x1]
    %v3169 = vlaneseq
    %v3170 = vshrl.u32 %v3169, 7
    %v3171 = vsub.s32 0, %v3170
    %v3172 = vrot.slane %v3167, %v3171
    %v3174 = vadd.f32 %v3151, %v3172
    %v3175 = vadd.f32 %v3152, %v3172
    %v3176 = vadd.f32 %v3153, %v3172
    %v3177 = vadd.f32 %v3154, %v3172
    %v3178 = vadd.f32 %v3155, %v3172
    %v3179 = vadd.f32 %v3156, %v3172
    %v3180 = vadd.f32 %v3157, %v3172
    %v3181 = vadd.f32 %v3158, %v3172
    %v3182 = vadd.f32 %v3159, %v3172
    %v3183 = vadd.f32 %v3160, %v3172
    %v3184 = vadd.f32 %v3161, %v3172
    %v3185 = vadd.f32 %v3162, %v3172
    %v3186 = vadd.f32 %v3163, %v3172
    %v3187 = vadd.f32 %v3164, %v3172
    %v3188 = vadd.f32 %v3165, %v3172
    %v3189 = vadd.f32 %v3166, %v3172
    %v3190 = vmax.f32 %v3174, 0.0
    %v3191 = vmax.f32 %v3175, 0.0
    %v3192 = vmax.f32 %v3176, 0.0
    %v3193 = vmax.f32 %v3177, 0.0
    %v3194 = vmax.f32 %v3178, 0.0
    %v3195 = vmax.f32 %v3179, 0.0
    %v3196 = vmax.f32 %v3180, 0.0
    %v3197 = vmax.f32 %v3181, 0.0
    %v3198 = vmax.f32 %v3182, 0.0
    %v3199 = vmax.f32 %v3183, 0.0
    %v3200 = vmax.f32 %v3184, 0.0
    %v3201 = vmax.f32 %v3185, 0.0
    %v3202 = vmax.f32 %v3186, 0.0
    %v3203 = vmax.f32 %v3187, 0.0
    %v3204 = vmax.f32 %v3188, 0.0
    %v3205 = vmax.f32 %v3189, 0.0
    %3206 = vst [vmem:[%s158 + $0x8] sm:$0xff] %v3190
    %3207 = vst [vmem:[%s158 + $0x20] sm:$0xff] %v3191
    %3208 = vst [vmem:[%s158 + $0x38] sm:$0xff] %v3192
    %3209 = vst [vmem:[%s158 + $0x50] sm:$0xff] %v3193
    %3210 = vst [vmem:[%s158 + $0x68] sm:$0xff] %v3194
    %3211 = vst [vmem:[%s158 + $0x80] sm:$0xff] %v3195
    %3212 = vst [vmem:[%s158 + $0x98] sm:$0xff] %v3196
    %3213 = vst [vmem:[%s158 + $0xb0] sm:$0xff] %v3197
    %3214 = vst [vmem:[%s158 + $0xf8] sm:$0xff] %v3198
    %3215 = vst [vmem:[%s158 + $0x110] sm:$0xff] %v3199
    %3216 = vst [vmem:[%s158 + $0x128] sm:$0xff] %v3200
    %3217 = vst [vmem:[%s158 + $0x140] sm:$0xff] %v3201
    %3218 = vst [vmem:[%s158 + $0x158] sm:$0xff] %v3202
    %3219 = vst [vmem:[%s158 + $0x170] sm:$0xff] %v3203
    %3220 = vst [vmem:[%s158 + $0x188] sm:$0xff] %v3204
    %3221 = vst [vmem:[%s158 + $0x1a0] sm:$0xff] %v3205
    %v3222 = vld [vmem:[#allocation2 + $0x7] sm:$0xff]
    %v3223 = vld [vmem:[#allocation2 + $0x1f] sm:$0xff]
    %v3224 = vld [vmem:[#allocation2 + $0x37] sm:$0xff]
    %v3225 = vld [vmem:[#allocation2 + $0x4f] sm:$0xff]
    %v3226 = vld [vmem:[#allocation2 + $0x67] sm:$0xff]
    %v3227 = vld [vmem:[#allocation2 + $0x7f] sm:$0xff]
    %v3228 = vld [vmem:[#allocation2 + $0x97] sm:$0xff]
    %v3229 = vld [vmem:[#allocation2 + $0xaf] sm:$0xff]
    %v3230 = vld [vmem:[#allocation2 + $0xf7] sm:$0xff]
    %v3231 = vld [vmem:[#allocation2 + $0x10f] sm:$0xff]
    %v3232 = vld [vmem:[#allocation2 + $0x127] sm:$0xff]
    %v3233 = vld [vmem:[#allocation2 + $0x13f] sm:$0xff]
    %v3234 = vld [vmem:[#allocation2 + $0x157] sm:$0xff]
    %v3235 = vld [vmem:[#allocation2 + $0x16f] sm:$0xff]
    %v3236 = vld [vmem:[#allocation2 + $0x187] sm:$0xff]
    %v3237 = vld [vmem:[#allocation2 + $0x19f] sm:$0xff]
    %3238 = vst [vmem:[#allocation3] sm:$0xff] %v3222
    %3239 = vst [vmem:[#allocation3 + $0x48] sm:$0xff] %v3223
    %3240 = vst [vmem:[#allocation3 + $0x90] sm:$0xff] %v3224
    %3241 = vst [vmem:[#allocation3 + $0xd8] sm:$0xff] %v3225
    %3242 = vst [vmem:[#allocation3 + $0x120] sm:$0xff] %v3226
    %3243 = vst [vmem:[#allocation3 + $0x168] sm:$0xff] %v3227
    %3244 = vst [vmem:[#allocation3 + $0x1b0] sm:$0xff] %v3228
    %3245 = vst [vmem:[#allocation3 + $0x1f8] sm:$0xff] %v3229
    %3246 = vst [vmem:[#allocation3 + $0x240] sm:$0xff] %v3230
    %3247 = vst [vmem:[#allocation3 + $0x288] sm:$0xff] %v3231
    %3248 = vst [vmem:[#allocation3 + $0x2d0] sm:$0xff] %v3232
    %3249 = vst [vmem:[#allocation3 + $0x318] sm:$0xff] %v3233
    %3250 = vst [vmem:[#allocation3 + $0x360] sm:$0xff] %v3234
    %3251 = vst [vmem:[#allocation3 + $0x3a8] sm:$0xff] %v3235
    %3252 = vst [vmem:[#allocation3 + $0x3f0] sm:$0xff] %v3236
    %3253 = vst [vmem:[#allocation3 + $0x438] sm:$0xff] %v3237
    %v3254 = vld [vmem:[#allocation2 + $0x8] sm:$0xff]
    %v3255 = vld [vmem:[#allocation2 + $0x20] sm:$0xff]
    %v3256 = vld [vmem:[#allocation2 + $0x38] sm:$0xff]
    %v3257 = vld [vmem:[#allocation2 + $0x50] sm:$0xff]
    %v3258 = vld [vmem:[#allocation2 + $0x68] sm:$0xff]
    %v3259 = vld [vmem:[#allocation2 + $0x80] sm:$0xff]
    %v3260 = vld [vmem:[#allocation2 + $0x98] sm:$0xff]
    %v3261 = vld [vmem:[#allocation2 + $0xb0] sm:$0xff]
    %v3262 = vld [vmem:[#allocation2 + $0xf8] sm:$0xff]
    %v3263 = vld [vmem:[#allocation2 + $0x110] sm:$0xff]
    %v3264 = vld [vmem:[#allocation2 + $0x128] sm:$0xff]
    %v3265 = vld [vmem:[#allocation2 + $0x140] sm:$0xff]
    %v3266 = vld [vmem:[#allocation2 + $0x158] sm:$0xff]
    %v3267 = vld [vmem:[#allocation2 + $0x170] sm:$0xff]
    %v3268 = vld [vmem:[#allocation2 + $0x188] sm:$0xff]
    %v3269 = vld [vmem:[#allocation2 + $0x1a0] sm:$0xff]
    %3270 = vst [vmem:[#allocation3 + $0x8] sm:$0xff] %v3254
    %3271 = vst [vmem:[#allocation3 + $0x50] sm:$0xff] %v3255
    %3272 = vst [vmem:[#allocation3 + $0x98] sm:$0xff] %v3256
    %3273 = vst [vmem:[#allocation3 + $0xe0] sm:$0xff] %v3257
    %3274 = vst [vmem:[#allocation3 + $0x128] sm:$0xff] %v3258
    %3275 = vst [vmem:[#allocation3 + $0x170] sm:$0xff] %v3259
    %3276 = vst [vmem:[#allocation3 + $0x1b8] sm:$0xff] %v3260
    %3277 = vst [vmem:[#allocation3 + $0x200] sm:$0xff] %v3261
    %3278 = vst [vmem:[#allocation3 + $0x248] sm:$0xff] %v3262
    %3279 = vst [vmem:[#allocation3 + $0x290] sm:$0xff] %v3263
    %3280 = vst [vmem:[#allocation3 + $0x2d8] sm:$0xff] %v3264
    %3281 = vst [vmem:[#allocation3 + $0x320] sm:$0xff] %v3265
    %3282 = vst [vmem:[#allocation3 + $0x368] sm:$0xff] %v3266
    %3283 = vst [vmem:[#allocation3 + $0x3b0] sm:$0xff] %v3267
    %3284 = vst [vmem:[#allocation3 + $0x3f8] sm:$0xff] %v3268
    %3285 = vst [vmem:[#allocation3 + $0x440] sm:$0xff] %v3269
    %v3286 = vld [vmem:[#allocation2 + $0x9] sm:$0xff]
    %v3287 = vld [vmem:[#allocation2 + $0x21] sm:$0xff]
    %v3288 = vld [vmem:[#allocation2 + $0x39] sm:$0xff]
    %v3289 = vld [vmem:[#allocation2 + $0x51] sm:$0xff]
    %v3290 = vld [vmem:[#allocation2 + $0x69] sm:$0xff]
    %v3291 = vld [vmem:[#allocation2 + $0x81] sm:$0xff]
    %v3292 = vld [vmem:[#allocation2 + $0x99] sm:$0xff]
    %v3293 = vld [vmem:[#allocation2 + $0xb1] sm:$0xff]
    %v3294 = vld [vmem:[#allocation2 + $0xf9] sm:$0xff]
    %v3295 = vld [vmem:[#allocation2 + $0x111] sm:$0xff]
    %v3296 = vld [vmem:[#allocation2 + $0x129] sm:$0xff]
    %v3297 = vld [vmem:[#allocation2 + $0x141] sm:$0xff]
    %v3298 = vld [vmem:[#allocation2 + $0x159] sm:$0xff]
    %v3299 = vld [vmem:[#allocation2 + $0x171] sm:$0xff]
    %v3300 = vld [vmem:[#allocation2 + $0x189] sm:$0xff]
    %v3301 = vld [vmem:[#allocation2 + $0x1a1] sm:$0xff]
    %3302 = vst [vmem:[#allocation3 + $0x10] sm:$0xff] %v3286
    %3303 = vst [vmem:[#allocation3 + $0x58] sm:$0xff] %v3287
    %3304 = vst [vmem:[#allocation3 + $0xa0] sm:$0xff] %v3288
    %3305 = vst [vmem:[#allocation3 + $0xe8] sm:$0xff] %v3289
    %3306 = vst [vmem:[#allocation3 + $0x130] sm:$0xff] %v3290
    %3307 = vst [vmem:[#allocation3 + $0x178] sm:$0xff] %v3291
    %3308 = vst [vmem:[#allocation3 + $0x1c0] sm:$0xff] %v3292
    %3309 = vst [vmem:[#allocation3 + $0x208] sm:$0xff] %v3293
    %3310 = vst [vmem:[#allocation3 + $0x250] sm:$0xff] %v3294
    %3311 = vst [vmem:[#allocation3 + $0x298] sm:$0xff] %v3295
    %3312 = vst [vmem:[#allocation3 + $0x2e0] sm:$0xff] %v3296
    %3313 = vst [vmem:[#allocation3 + $0x328] sm:$0xff] %v3297
    %3314 = vst [vmem:[#allocation3 + $0x370] sm:$0xff] %v3298
    %3315 = vst [vmem:[#allocation3 + $0x3b8] sm:$0xff] %v3299
    %3316 = vst [vmem:[#allocation3 + $0x400] sm:$0xff] %v3300
    %3317 = vst [vmem:[#allocation3 + $0x448] sm:$0xff] %v3301
    %v3318 = vld [vmem:[%s158 + $0x7] sm:$0xff]
    %v3319 = vld [vmem:[%s158 + $0x1f] sm:$0xff]
    %v3320 = vld [vmem:[%s158 + $0x37] sm:$0xff]
    %v3321 = vld [vmem:[%s158 + $0x4f] sm:$0xff]
    %v3322 = vld [vmem:[%s158 + $0x67] sm:$0xff]
    %v3323 = vld [vmem:[%s158 + $0x7f] sm:$0xff]
    %v3324 = vld [vmem:[%s158 + $0x97] sm:$0xff]
    %v3325 = vld [vmem:[%s158 + $0xaf] sm:$0xff]
    %v3326 = vld [vmem:[%s158 + $0xf7] sm:$0xff]
    %v3327 = vld [vmem:[%s158 + $0x10f] sm:$0xff]
    %v3328 = vld [vmem:[%s158 + $0x127] sm:$0xff]
    %v3329 = vld [vmem:[%s158 + $0x13f] sm:$0xff]
    %v3330 = vld [vmem:[%s158 + $0x157] sm:$0xff]
    %v3331 = vld [vmem:[%s158 + $0x16f] sm:$0xff]
    %v3332 = vld [vmem:[%s158 + $0x187] sm:$0xff]
    %v3333 = vld [vmem:[%s158 + $0x19f] sm:$0xff]
    %3334 = vst [vmem:[#allocation3 + $0x18] sm:$0xff] %v3318
    %3335 = vst [vmem:[#allocation3 + $0x60] sm:$0xff] %v3319
    %3336 = vst [vmem:[#allocation3 + $0xa8] sm:$0xff] %v3320
    %3337 = vst [vmem:[#allocation3 + $0xf0] sm:$0xff] %v3321
    %3338 = vst [vmem:[#allocation3 + $0x138] sm:$0xff] %v3322
    %3339 = vst [vmem:[#allocation3 + $0x180] sm:$0xff] %v3323
    %3340 = vst [vmem:[#allocation3 + $0x1c8] sm:$0xff] %v3324
    %3341 = vst [vmem:[#allocation3 + $0x210] sm:$0xff] %v3325
    %3342 = vst [vmem:[#allocation3 + $0x258] sm:$0xff] %v3326
    %3343 = vst [vmem:[#allocation3 + $0x2a0] sm:$0xff] %v3327
    %3344 = vst [vmem:[#allocation3 + $0x2e8] sm:$0xff] %v3328
    %3345 = vst [vmem:[#allocation3 + $0x330] sm:$0xff] %v3329
    %3346 = vst [vmem:[#allocation3 + $0x378] sm:$0xff] %v3330
    %3347 = vst [vmem:[#allocation3 + $0x3c0] sm:$0xff] %v3331
    %3348 = vst [vmem:[#allocation3 + $0x408] sm:$0xff] %v3332
    %3349 = vst [vmem:[#allocation3 + $0x450] sm:$0xff] %v3333
    %v3350 = vld [vmem:[%s158 + $0x8] sm:$0xff]
    %v3351 = vld [vmem:[%s158 + $0x20] sm:$0xff]
    %v3352 = vld [vmem:[%s158 + $0x38] sm:$0xff]
    %v3353 = vld [vmem:[%s158 + $0x50] sm:$0xff]
    %v3354 = vld [vmem:[%s158 + $0x68] sm:$0xff]
    %v3355 = vld [vmem:[%s158 + $0x80] sm:$0xff]
    %v3356 = vld [vmem:[%s158 + $0x98] sm:$0xff]
    %v3357 = vld [vmem:[%s158 + $0xb0] sm:$0xff]
    %v3358 = vld [vmem:[%s158 + $0xf8] sm:$0xff]
    %v3359 = vld [vmem:[%s158 + $0x110] sm:$0xff]
    %v3360 = vld [vmem:[%s158 + $0x128] sm:$0xff]
    %v3361 = vld [vmem:[%s158 + $0x140] sm:$0xff]
    %v3362 = vld [vmem:[%s158 + $0x158] sm:$0xff]
    %v3363 = vld [vmem:[%s158 + $0x170] sm:$0xff]
    %v3364 = vld [vmem:[%s158 + $0x188] sm:$0xff]
    %v3365 = vld [vmem:[%s158 + $0x1a0] sm:$0xff]
    %3366 = vst [vmem:[#allocation3 + $0x20] sm:$0xff] %v3350
    %3367 = vst [vmem:[#allocation3 + $0x68] sm:$0xff] %v3351
    %3368 = vst [vmem:[#allocation3 + $0xb0] sm:$0xff] %v3352
    %3369 = vst [vmem:[#allocation3 + $0xf8] sm:$0xff] %v3353
    %3370 = vst [vmem:[#allocation3 + $0x140] sm:$0xff] %v3354
    %3371 = vst [vmem:[#allocation3 + $0x188] sm:$0xff] %v3355
    %3372 = vst [vmem:[#allocation3 + $0x1d0] sm:$0xff] %v3356
    %3373 = vst [vmem:[#allocation3 + $0x218] sm:$0xff] %v3357
    %3374 = vst [vmem:[#allocation3 + $0x260] sm:$0xff] %v3358
    %3375 = vst [vmem:[#allocation3 + $0x2a8] sm:$0xff] %v3359
    %3376 = vst [vmem:[#allocation3 + $0x2f0] sm:$0xff] %v3360
    %3377 = vst [vmem:[#allocation3 + $0x338] sm:$0xff] %v3361
    %3378 = vst [vmem:[#allocation3 + $0x380] sm:$0xff] %v3362
    %3379 = vst [vmem:[#allocation3 + $0x3c8] sm:$0xff] %v3363
    %3380 = vst [vmem:[#allocation3 + $0x410] sm:$0xff] %v3364
    %3381 = vst [vmem:[#allocation3 + $0x458] sm:$0xff] %v3365
    %v3382 = vld [vmem:[%s158 + $0x9] sm:$0xff]
    %v3383 = vld [vmem:[%s158 + $0x21] sm:$0xff]
    %v3384 = vld [vmem:[%s158 + $0x39] sm:$0xff]
    %v3385 = vld [vmem:[%s158 + $0x51] sm:$0xff]
    %v3386 = vld [vmem:[%s158 + $0x69] sm:$0xff]
    %v3387 = vld [vmem:[%s158 + $0x81] sm:$0xff]
    %v3388 = vld [vmem:[%s158 + $0x99] sm:$0xff]
    %v3389 = vld [vmem:[%s158 + $0xb1] sm:$0xff]
    %v3390 = vld [vmem:[%s158 + $0xf9] sm:$0xff]
    %v3391 = vld [vmem:[%s158 + $0x111] sm:$0xff]
    %v3392 = vld [vmem:[%s158 + $0x129] sm:$0xff]
    %v3393 = vld [vmem:[%s158 + $0x141] sm:$0xff]
    %v3394 = vld [vmem:[%s158 + $0x159] sm:$0xff]
    %v3395 = vld [vmem:[%s158 + $0x171] sm:$0xff]
    %v3396 = vld [vmem:[%s158 + $0x189] sm:$0xff]
    %v3397 = vld [vmem:[%s158 + $0x1a1] sm:$0xff]
    %3398 = vst [vmem:[#allocation3 + $0x28] sm:$0xff] %v3382
    %3399 = vst [vmem:[#allocation3 + $0x70] sm:$0xff] %v3383
    %3400 = vst [vmem:[#allocation3 + $0xb8] sm:$0xff] %v3384
    %3401 = vst [vmem:[#allocation3 + $0x100] sm:$0xff] %v3385
    %3402 = vst [vmem:[#allocation3 + $0x148] sm:$0xff] %v3386
    %3403 = vst [vmem:[#allocation3 + $0x190] sm:$0xff] %v3387
    %3404 = vst [vmem:[#allocation3 + $0x1d8] sm:$0xff] %v3388
    %3405 = vst [vmem:[#allocation3 + $0x220] sm:$0xff] %v3389
    %3406 = vst [vmem:[#allocation3 + $0x268] sm:$0xff] %v3390
    %3407 = vst [vmem:[#allocation3 + $0x2b0] sm:$0xff] %v3391
    %3408 = vst [vmem:[#allocation3 + $0x2f8] sm:$0xff] %v3392
    %3409 = vst [vmem:[#allocation3 + $0x340] sm:$0xff] %v3393
    %3410 = vst [vmem:[#allocation3 + $0x388] sm:$0xff] %v3394
    %3411 = vst [vmem:[#allocation3 + $0x3d0] sm:$0xff] %v3395
    %3412 = vst [vmem:[#allocation3 + $0x418] sm:$0xff] %v3396
    %3413 = vst [vmem:[#allocation3 + $0x460] sm:$0xff] %v3397
    %v3414 = vld [vmem:[%s367 + $0x7] sm:$0xff]
    %v3415 = vld [vmem:[%s367 + $0x1f] sm:$0xff]
    %v3416 = vld [vmem:[%s367 + $0x37] sm:$0xff]
    %v3417 = vld [vmem:[%s367 + $0x4f] sm:$0xff]
    %v3418 = vld [vmem:[%s367 + $0x67] sm:$0xff]
    %v3419 = vld [vmem:[%s367 + $0x7f] sm:$0xff]
    %v3420 = vld [vmem:[%s367 + $0x97] sm:$0xff]
    %v3421 = vld [vmem:[%s367 + $0xaf] sm:$0xff]
    %v3422 = vld [vmem:[%s367 + $0xf7] sm:$0xff]
    %v3423 = vld [vmem:[%s367 + $0x10f] sm:$0xff]
    %v3424 = vld [vmem:[%s367 + $0x127] sm:$0xff]
    %v3425 = vld [vmem:[%s367 + $0x13f] sm:$0xff]
    %v3426 = vld [vmem:[%s367 + $0x157] sm:$0xff]
    %v3427 = vld [vmem:[%s367 + $0x16f] sm:$0xff]
    %v3428 = vld [vmem:[%s367 + $0x187] sm:$0xff]
    %v3429 = vld [vmem:[%s367 + $0x19f] sm:$0xff]
    %3430 = vst [vmem:[#allocation3 + $0x30] sm:$0xff] %v3414
    %3431 = vst [vmem:[#allocation3 + $0x78] sm:$0xff] %v3415
    %3432 = vst [vmem:[#allocation3 + $0xc0] sm:$0xff] %v3416
    %3433 = vst [vmem:[#allocation3 + $0x108] sm:$0xff] %v3417
    %3434 = vst [vmem:[#allocation3 + $0x150] sm:$0xff] %v3418
    %3435 = vst [vmem:[#allocation3 + $0x198] sm:$0xff] %v3419
    %3436 = vst [vmem:[#allocation3 + $0x1e0] sm:$0xff] %v3420
    %3437 = vst [vmem:[#allocation3 + $0x228] sm:$0xff] %v3421
    %3438 = vst [vmem:[#allocation3 + $0x270] sm:$0xff] %v3422
    %3439 = vst [vmem:[#allocation3 + $0x2b8] sm:$0xff] %v3423
    %3440 = vst [vmem:[#allocation3 + $0x300] sm:$0xff] %v3424
    %3441 = vst [vmem:[#allocation3 + $0x348] sm:$0xff] %v3425
    %3442 = vst [vmem:[#allocation3 + $0x390] sm:$0xff] %v3426
    %3443 = vst [vmem:[#allocation3 + $0x3d8] sm:$0xff] %v3427
    %3444 = vst [vmem:[#allocation3 + $0x420] sm:$0xff] %v3428
    %3445 = vst [vmem:[#allocation3 + $0x468] sm:$0xff] %v3429
    %v3446 = vld [vmem:[%s367 + $0x8] sm:$0xff]
    %v3447 = vld [vmem:[%s367 + $0x20] sm:$0xff]
    %v3448 = vld [vmem:[%s367 + $0x38] sm:$0xff]
    %v3449 = vld [vmem:[%s367 + $0x50] sm:$0xff]
    %v3450 = vld [vmem:[%s367 + $0x68] sm:$0xff]
    %v3451 = vld [vmem:[%s367 + $0x80] sm:$0xff]
    %v3452 = vld [vmem:[%s367 + $0x98] sm:$0xff]
    %v3453 = vld [vmem:[%s367 + $0xb0] sm:$0xff]
    %v3454 = vld [vmem:[%s367 + $0xf8] sm:$0xff]
    %v3455 = vld [vmem:[%s367 + $0x110] sm:$0xff]
    %v3456 = vld [vmem:[%s367 + $0x128] sm:$0xff]
    %v3457 = vld [vmem:[%s367 + $0x140] sm:$0xff]
    %v3458 = vld [vmem:[%s367 + $0x158] sm:$0xff]
    %v3459 = vld [vmem:[%s367 + $0x170] sm:$0xff]
    %v3460 = vld [vmem:[%s367 + $0x188] sm:$0xff]
    %v3461 = vld [vmem:[%s367 + $0x1a0] sm:$0xff]
    %3462 = vst [vmem:[#allocation3 + $0x38] sm:$0xff] %v3446
    %3463 = vst [vmem:[#allocation3 + $0x80] sm:$0xff] %v3447
    %3464 = vst [vmem:[#allocation3 + $0xc8] sm:$0xff] %v3448
    %3465 = vst [vmem:[#allocation3 + $0x110] sm:$0xff] %v3449
    %3466 = vst [vmem:[#allocation3 + $0x158] sm:$0xff] %v3450
    %3467 = vst [vmem:[#allocation3 + $0x1a0] sm:$0xff] %v3451
    %3468 = vst [vmem:[#allocation3 + $0x1e8] sm:$0xff] %v3452
    %3469 = vst [vmem:[#allocation3 + $0x230] sm:$0xff] %v3453
    %3470 = vst [vmem:[#allocation3 + $0x278] sm:$0xff] %v3454
    %3471 = vst [vmem:[#allocation3 + $0x2c0] sm:$0xff] %v3455
    %3472 = vst [vmem:[#allocation3 + $0x308] sm:$0xff] %v3456
    %3473 = vst [vmem:[#allocation3 + $0x350] sm:$0xff] %v3457
    %3474 = vst [vmem:[#allocation3 + $0x398] sm:$0xff] %v3458
    %3475 = vst [vmem:[#allocation3 + $0x3e0] sm:$0xff] %v3459
    %3476 = vst [vmem:[#allocation3 + $0x428] sm:$0xff] %v3460
    %3477 = vst [vmem:[#allocation3 + $0x470] sm:$0xff] %v3461
    %v3478 = vld [vmem:[%s367 + $0x9] sm:$0xff]
    %v3479 = vld [vmem:[%s367 + $0x21] sm:$0xff]
    %v3480 = vld [vmem:[%s367 + $0x39] sm:$0xff]
    %v3481 = vld [vmem:[%s367 + $0x51] sm:$0xff]
    %v3482 = vld [vmem:[%s367 + $0x69] sm:$0xff]
    %v3483 = vld [vmem:[%s367 + $0x81] sm:$0xff]
    %v3484 = vld [vmem:[%s367 + $0x99] sm:$0xff]
    %v3485 = vld [vmem:[%s367 + $0xb1] sm:$0xff]
    %v3486 = vld [vmem:[%s367 + $0xf9] sm:$0xff]
    %v3487 = vld [vmem:[%s367 + $0x111] sm:$0xff]
    %v3488 = vld [vmem:[%s367 + $0x129] sm:$0xff]
    %v3489 = vld [vmem:[%s367 + $0x141] sm:$0xff]
    %v3490 = vld [vmem:[%s367 + $0x159] sm:$0xff]
    %v3491 = vld [vmem:[%s367 + $0x171] sm:$0xff]
    %v3492 = vld [vmem:[%s367 + $0x189] sm:$0xff]
    %v3493 = vld [vmem:[%s367 + $0x1a1] sm:$0xff]
    %3494 = vst [vmem:[#allocation3 + $0x40] sm:$0xff] %v3478
    %3495 = vst [vmem:[#allocation3 + $0x88] sm:$0xff] %v3479
    %3496 = vst [vmem:[#allocation3 + $0xd0] sm:$0xff] %v3480
    %3497 = vst [vmem:[#allocation3 + $0x118] sm:$0xff] %v3481
    %3498 = vst [vmem:[#allocation3 + $0x160] sm:$0xff] %v3482
    %3499 = vst [vmem:[#allocation3 + $0x1a8] sm:$0xff] %v3483
    %3500 = vst [vmem:[#allocation3 + $0x1f0] sm:$0xff] %v3484
    %3501 = vst [vmem:[#allocation3 + $0x238] sm:$0xff] %v3485
    %3502 = vst [vmem:[#allocation3 + $0x280] sm:$0xff] %v3486
    %3503 = vst [vmem:[#allocation3 + $0x2c8] sm:$0xff] %v3487
    %3504 = vst [vmem:[#allocation3 + $0x310] sm:$0xff] %v3488
    %3505 = vst [vmem:[#allocation3 + $0x358] sm:$0xff] %v3489
    %3506 = vst [vmem:[#allocation3 + $0x3a0] sm:$0xff] %v3490
    %3507 = vst [vmem:[#allocation3 + $0x3e8] sm:$0xff] %v3491
    %3508 = vst [vmem:[#allocation3 + $0x430] sm:$0xff] %v3492
    %3509 = vst [vmem:[#allocation3 + $0x478] sm:$0xff] %v3493
    %v3510 = vld [vmem:[#allocation3] sm:$0xff]
    %v3511 = vld [vmem:[#allocation3 + $0x8] sm:$0xff]
    %v3512 = vld [vmem:[#allocation3 + $0x10] sm:$0xff]
    %v3513 = vld [vmem:[#allocation3 + $0x18] sm:$0xff]
    %v3514 = vld [vmem:[#allocation3 + $0x20] sm:$0xff]
    %v3515 = vld [vmem:[#allocation3 + $0x28] sm:$0xff]
    %v3516 = vld [vmem:[#allocation3 + $0x30] sm:$0xff]
    %v3517 = vld [vmem:[#allocation3 + $0x38] sm:$0xff]
    %v3518 = vld [vmem:[#allocation3 + $0x40] sm:$0xff]
    %v3519 = vld [vmem:[#allocation3 + $0x48] sm:$0xff]
    %v3520 = vld [vmem:[#allocation3 + $0x50] sm:$0xff]
    %v3521 = vld [vmem:[#allocation3 + $0x58] sm:$0xff]
    %v3522 = vld [vmem:[#allocation3 + $0x60] sm:$0xff]
    %v3523 = vld [vmem:[#allocation3 + $0x68] sm:$0xff]
    %v3524 = vld [vmem:[#allocation3 + $0x70] sm:$0xff]
    %v3525 = vld [vmem:[#allocation3 + $0x78] sm:$0xff]
    %v3526 = vld [vmem:[#allocation3 + $0x80] sm:$0xff]
    %v3527 = vld [vmem:[#allocation3 + $0x88] sm:$0xff]
    %v3528 = vld [vmem:[#allocation3 + $0x90] sm:$0xff]
    %v3529 = vld [vmem:[#allocation3 + $0x98] sm:$0xff]
    %v3530 = vld [vmem:[#allocation3 + $0xa0] sm:$0xff]
    %v3531 = vld [vmem:[#allocation3 + $0xa8] sm:$0xff]
    %v3532 = vld [vmem:[#allocation3 + $0xb0] sm:$0xff]
    %v3533 = vld [vmem:[#allocation3 + $0xb8] sm:$0xff]
    %v3534 = vld [vmem:[#allocation3 + $0xc0] sm:$0xff]
    %v3535 = vld [vmem:[#allocation3 + $0xc8] sm:$0xff]
    %v3536 = vld [vmem:[#allocation3 + $0xd0] sm:$0xff]
    %v3537 = vld [vmem:[#allocation3 + $0xd8] sm:$0xff]
    %v3538 = vld [vmem:[#allocation3 + $0xe0] sm:$0xff]
    %v3539 = vld [vmem:[#allocation3 + $0xe8] sm:$0xff]
    %v3540 = vld [vmem:[#allocation3 + $0xf0] sm:$0xff]
    %v3541 = vld [vmem:[#allocation3 + $0xf8] sm:$0xff]
    %v3542 = vld [vmem:[#allocation3 + $0x100] sm:$0xff]
    %v3543 = vld [vmem:[#allocation3 + $0x108] sm:$0xff]
    %v3544 = vld [vmem:[#allocation3 + $0x110] sm:$0xff]
    %v3545 = vld [vmem:[#allocation3 + $0x118] sm:$0xff]
    %v3546 = vld [vmem:[#allocation3 + $0x120] sm:$0xff]
    %v3547 = vld [vmem:[#allocation3 + $0x128] sm:$0xff]
    %v3548 = vld [vmem:[#allocation3 + $0x130] sm:$0xff]
    %v3549 = vld [vmem:[#allocation3 + $0x138] sm:$0xff]
    %v3550 = vld [vmem:[#allocation3 + $0x140] sm:$0xff]
    %v3551 = vld [vmem:[#allocation3 + $0x148] sm:$0xff]
    %v3552 = vld [vmem:[#allocation3 + $0x150] sm:$0xff]
    %v3553 = vld [vmem:[#allocation3 + $0x158] sm:$0xff]
    %v3554 = vld [vmem:[#allocation3 + $0x160] sm:$0xff]
    %v3555 = vld [vmem:[#allocation3 + $0x168] sm:$0xff]
    %v3556 = vld [vmem:[#allocation3 + $0x170] sm:$0xff]
    %v3557 = vld [vmem:[#allocation3 + $0x178] sm:$0xff]
    %v3558 = vld [vmem:[#allocation3 + $0x180] sm:$0xff]
    %v3559 = vld [vmem:[#allocation3 + $0x188] sm:$0xff]
    %v3560 = vld [vmem:[#allocation3 + $0x190] sm:$0xff]
    %v3561 = vld [vmem:[#allocation3 + $0x198] sm:$0xff]
    %v3562 = vld [vmem:[#allocation3 + $0x1a0] sm:$0xff]
    %v3563 = vld [vmem:[#allocation3 + $0x1a8] sm:$0xff]
    %v3564 = vld [vmem:[#allocation3 + $0x1b0] sm:$0xff]
    %v3565 = vld [vmem:[#allocation3 + $0x1b8] sm:$0xff]
    %v3566 = vld [vmem:[#allocation3 + $0x1c0] sm:$0xff]
    %v3567 = vld [vmem:[#allocation3 + $0x1c8] sm:$0xff]
    %v3568 = vld [vmem:[#allocation3 + $0x1d0] sm:$0xff]
    %v3569 = vld [vmem:[#allocation3 + $0x1d8] sm:$0xff]
    %v3570 = vld [vmem:[#allocation3 + $0x1e0] sm:$0xff]
    %v3571 = vld [vmem:[#allocation3 + $0x1e8] sm:$0xff]
    %v3572 = vld [vmem:[#allocation3 + $0x1f0] sm:$0xff]
    %v3573 = vld [vmem:[#allocation3 + $0x1f8] sm:$0xff]
    %v3574 = vld [vmem:[#allocation3 + $0x200] sm:$0xff]
    %v3575 = vld [vmem:[#allocation3 + $0x208] sm:$0xff]
    %v3576 = vld [vmem:[#allocation3 + $0x210] sm:$0xff]
    %v3577 = vld [vmem:[#allocation3 + $0x218] sm:$0xff]
    %v3578 = vld [vmem:[#allocation3 + $0x220] sm:$0xff]
    %v3579 = vld [vmem:[#allocation3 + $0x228] sm:$0xff]
    %v3580 = vld [vmem:[#allocation3 + $0x230] sm:$0xff]
    %v3581 = vld [vmem:[#allocation3 + $0x238] sm:$0xff]
    %v3582 = vld [vmem:[#allocation3 + $0x240] sm:$0xff]
    %v3583 = vld [vmem:[#allocation3 + $0x248] sm:$0xff]
    %v3584 = vld [vmem:[#allocation3 + $0x250] sm:$0xff]
    %v3585 = vld [vmem:[#allocation3 + $0x258] sm:$0xff]
    %v3586 = vld [vmem:[#allocation3 + $0x260] sm:$0xff]
    %v3587 = vld [vmem:[#allocation3 + $0x268] sm:$0xff]
    %v3588 = vld [vmem:[#allocation3 + $0x270] sm:$0xff]
    %v3589 = vld [vmem:[#allocation3 + $0x278] sm:$0xff]
    %v3590 = vld [vmem:[#allocation3 + $0x280] sm:$0xff]
    %v3591 = vld [vmem:[#allocation3 + $0x288] sm:$0xff]
    %v3592 = vld [vmem:[#allocation3 + $0x290] sm:$0xff]
    %v3593 = vld [vmem:[#allocation3 + $0x298] sm:$0xff]
    %v3594 = vld [vmem:[#allocation3 + $0x2a0] sm:$0xff]
    %v3595 = vld [vmem:[#allocation3 + $0x2a8] sm:$0xff]
    %v3596 = vld [vmem:[#allocation3 + $0x2b0] sm:$0xff]
    %v3597 = vld [vmem:[#allocation3 + $0x2b8] sm:$0xff]
    %v3598 = vld [vmem:[#allocation3 + $0x2c0] sm:$0xff]
    %v3599 = vld [vmem:[#allocation3 + $0x2c8] sm:$0xff]
    %v3600 = vld [vmem:[#allocation3 + $0x2d0] sm:$0xff]
    %v3601 = vld [vmem:[#allocation3 + $0x2d8] sm:$0xff]
    %v3602 = vld [vmem:[#allocation3 + $0x2e0] sm:$0xff]
    %v3603 = vld [vmem:[#allocation3 + $0x2e8] sm:$0xff]
    %v3604 = vld [vmem:[#allocation3 + $0x2f0] sm:$0xff]
    %v3605 = vld [vmem:[#allocation3 + $0x2f8] sm:$0xff]
    %v3606 = vld [vmem:[#allocation3 + $0x300] sm:$0xff]
    %v3607 = vld [vmem:[#allocation3 + $0x308] sm:$0xff]
    %v3608 = vld [vmem:[#allocation3 + $0x310] sm:$0xff]
    %v3609 = vld [vmem:[#allocation3 + $0x318] sm:$0xff]
    %v3610 = vld [vmem:[#allocation3 + $0x320] sm:$0xff]
    %v3611 = vld [vmem:[#allocation3 + $0x328] sm:$0xff]
    %v3612 = vld [vmem:[#allocation3 + $0x330] sm:$0xff]
    %v3613 = vld [vmem:[#allocation3 + $0x338] sm:$0xff]
    %v3614 = vld [vmem:[#allocation3 + $0x340] sm:$0xff]
    %v3615 = vld [vmem:[#allocation3 + $0x348] sm:$0xff]
    %v3616 = vld [vmem:[#allocation3 + $0x350] sm:$0xff]
    %v3617 = vld [vmem:[#allocation3 + $0x358] sm:$0xff]
    %v3618 = vld [vmem:[#allocation3 + $0x360] sm:$0xff]
    %v3619 = vld [vmem:[#allocation3 + $0x368] sm:$0xff]
    %v3620 = vld [vmem:[#allocation3 + $0x370] sm:$0xff]
    %v3621 = vld [vmem:[#allocation3 + $0x378] sm:$0xff]
    %v3622 = vld [vmem:[#allocation3 + $0x380] sm:$0xff]
    %v3623 = vld [vmem:[#allocation3 + $0x388] sm:$0xff]
    %v3624 = vld [vmem:[#allocation3 + $0x390] sm:$0xff]
    %v3625 = vld [vmem:[#allocation3 + $0x398] sm:$0xff]
    %v3626 = vld [vmem:[#allocation3 + $0x3a0] sm:$0xff]
    %v3627 = vld [vmem:[#allocation3 + $0x3a8] sm:$0xff]
    %v3628 = vld [vmem:[#allocation3 + $0x3b0] sm:$0xff]
    %v3629 = vld [vmem:[#allocation3 + $0x3b8] sm:$0xff]
    %v3630 = vld [vmem:[#allocation3 + $0x3c0] sm:$0xff]
    %v3631 = vld [vmem:[#allocation3 + $0x3c8] sm:$0xff]
    %v3632 = vld [vmem:[#allocation3 + $0x3d0] sm:$0xff]
    %v3633 = vld [vmem:[#allocation3 + $0x3d8] sm:$0xff]
    %v3634 = vld [vmem:[#allocation3 + $0x3e0] sm:$0xff]
    %v3635 = vld [vmem:[#allocation3 + $0x3e8] sm:$0xff]
    %v3636 = vld [vmem:[#allocation3 + $0x3f0] sm:$0xff]
    %v3637 = vld [vmem:[#allocation3 + $0x3f8] sm:$0xff]
    %v3638 = vld [vmem:[#allocation3 + $0x400] sm:$0xff]
    %v3639 = vld [vmem:[#allocation3 + $0x408] sm:$0xff]
    %v3640 = vld [vmem:[#allocation3 + $0x410] sm:$0xff]
    %v3641 = vld [vmem:[#allocation3 + $0x418] sm:$0xff]
    %v3642 = vld [vmem:[#allocation3 + $0x420] sm:$0xff]
    %v3643 = vld [vmem:[#allocation3 + $0x428] sm:$0xff]
    %v3644 = vld [vmem:[#allocation3 + $0x430] sm:$0xff]
    %v3645 = vld [vmem:[#allocation3 + $0x438] sm:$0xff]
    %v3646 = vld [vmem:[#allocation3 + $0x440] sm:$0xff]
    %v3647 = vld [vmem:[#allocation3 + $0x448] sm:$0xff]
    %v3648 = vld [vmem:[#allocation3 + $0x450] sm:$0xff]
    %v3649 = vld [vmem:[#allocation3 + $0x458] sm:$0xff]
    %v3650 = vld [vmem:[#allocation3 + $0x460] sm:$0xff]
    %v3651 = vld [vmem:[#allocation3 + $0x468] sm:$0xff]
    %v3652 = vld [vmem:[#allocation3 + $0x470] sm:$0xff]
    %v3653 = vld [vmem:[#allocation3 + $0x478] sm:$0xff]
    %v3654 = vld [vmem:[#allocation8] sm:$0xf]
    %v3655 = vld [vmem:[#allocation8 + $0x4] sm:$0xf]
    %v3656 = vld [vmem:[#allocation8 + $0x8] sm:$0xf]
    %v3657 = vld [vmem:[#allocation8 + $0xc] sm:$0xf]
    %v3658 = vld [vmem:[#allocation8 + $0x10] sm:$0xf]
    %v3659 = vld [vmem:[#allocation8 + $0x14] sm:$0xf]
    %v3660 = vld [vmem:[#allocation8 + $0x18] sm:$0xf]
    %v3661 = vld [vmem:[#allocation8 + $0x1c] sm:$0xf]
    %v3662 = vld [vmem:[#allocation8 + $0x20] sm:$0xf]
    %v3663 = vld [vmem:[#allocation8 + $0x24] sm:$0xf]
    %v3664 = vld [vmem:[#allocation8 + $0x28] sm:$0xf]
    %v3665 = vld [vmem:[#allocation8 + $0x2c] sm:$0xf]
    %v3666 = vld [vmem:[#allocation8 + $0x30] sm:$0xf]
    %v3667 = vld [vmem:[#allocation8 + $0x34] sm:$0xf]
    %v3668 = vld [vmem:[#allocation8 + $0x38] sm:$0xf]
    %v3669 = vld [vmem:[#allocation8 + $0x3c] sm:$0xf]
    %v3670 = vld [vmem:[#allocation8 + $0x40] sm:$0xf]
    %v3671 = vld [vmem:[#allocation8 + $0x44] sm:$0xf]
    %v3672 = vld [vmem:[#allocation8 + $0x48] sm:$0xf]
    %v3673 = vld [vmem:[#allocation8 + $0x4c] sm:$0xf]
    %v3674 = vld [vmem:[#allocation8 + $0x50] sm:$0xf]
    %v3675 = vld [vmem:[#allocation8 + $0x54] sm:$0xf]
    %v3676 = vld [vmem:[#allocation8 + $0x58] sm:$0xf]
    %v3677 = vld [vmem:[#allocation8 + $0x5c] sm:$0xf]
    %v3678 = vld [vmem:[#allocation8 + $0x60] sm:$0xf]
    %v3679 = vld [vmem:[#allocation8 + $0x64] sm:$0xf]
    %v3680 = vld [vmem:[#allocation8 + $0x68] sm:$0xf]
    %v3681 = vld [vmem:[#allocation8 + $0x6c] sm:$0xf]
    %v3682 = vld [vmem:[#allocation8 + $0x70] sm:$0xf]
    %v3683 = vld [vmem:[#allocation8 + $0x74] sm:$0xf]
    %v3684 = vld [vmem:[#allocation8 + $0x78] sm:$0xf]
    %v3685 = vld [vmem:[#allocation8 + $0x7c] sm:$0xf]
    %v3686 = vld [vmem:[#allocation8 + $0x80] sm:$0xf]
    %v3687 = vld [vmem:[#allocation8 + $0x84] sm:$0xf]
    %v3688 = vld [vmem:[#allocation8 + $0x88] sm:$0xf]
    %v3689 = vld [vmem:[#allocation8 + $0x8c] sm:$0xf]
    %v3690 = vld [vmem:[#allocation8 + $0x90] sm:$0xf]
    %v3691 = vld [vmem:[#allocation8 + $0x94] sm:$0xf]
    %v3692 = vld [vmem:[#allocation8 + $0x98] sm:$0xf]
    %v3693 = vld [vmem:[#allocation8 + $0x9c] sm:$0xf]
    %v3694 = vld [vmem:[#allocation8 + $0xa0] sm:$0xf]
    %v3695 = vld [vmem:[#allocation8 + $0xa4] sm:$0xf]
    %v3696 = vld [vmem:[#allocation8 + $0xa8] sm:$0xf]
    %v3697 = vld [vmem:[#allocation8 + $0xac] sm:$0xf]
    %v3698 = vld [vmem:[#allocation8 + $0xb0] sm:$0xf]
    %v3699 = vld [vmem:[#allocation8 + $0xb4] sm:$0xf]
    %v3700 = vld [vmem:[#allocation8 + $0xb8] sm:$0xf]
    %v3701 = vld [vmem:[#allocation8 + $0xbc] sm:$0xf]
    %v3702 = vld [vmem:[#allocation8 + $0xc0] sm:$0xf]
    %v3703 = vld [vmem:[#allocation8 + $0xc4] sm:$0xf]
    %v3704 = vld [vmem:[#allocation8 + $0xc8] sm:$0xf]
    %v3705 = vld [vmem:[#allocation8 + $0xcc] sm:$0xf]
    %v3706 = vld [vmem:[#allocation8 + $0xd0] sm:$0xf]
    %v3707 = vld [vmem:[#allocation8 + $0xd4] sm:$0xf]
    %v3708 = vld [vmem:[#allocation8 + $0xd8] sm:$0xf]
    %v3709 = vld [vmem:[#allocation8 + $0xdc] sm:$0xf]
    %v3710 = vld [vmem:[#allocation8 + $0xe0] sm:$0xf]
    %v3711 = vld [vmem:[#allocation8 + $0xe4] sm:$0xf]
    %v3712 = vld [vmem:[#allocation8 + $0xe8] sm:$0xf]
    %v3713 = vld [vmem:[#allocation8 + $0xec] sm:$0xf]
    %v3714 = vld [vmem:[#allocation8 + $0xf0] sm:$0xf]
    %v3715 = vld [vmem:[#allocation8 + $0xf4] sm:$0xf]
    %v3716 = vld [vmem:[#allocation8 + $0xf8] sm:$0xf]
    %v3717 = vld [vmem:[#allocation8 + $0xfc] sm:$0xf]
    %v3718 = vld [vmem:[#allocation8 + $0x100] sm:$0xf]
    %v3719 = vld [vmem:[#allocation8 + $0x104] sm:$0xf]
    %v3720 = vld [vmem:[#allocation8 + $0x108] sm:$0xf]
    %v3721 = vld [vmem:[#allocation8 + $0x10c] sm:$0xf]
    %v3722 = vld [vmem:[#allocation8 + $0x110] sm:$0xf]
    %v3723 = vld [vmem:[#allocation8 + $0x114] sm:$0xf]
    %v3724 = vld [vmem:[#allocation8 + $0x118] sm:$0xf]
    %v3725 = vld [vmem:[#allocation8 + $0x11c] sm:$0xf]
    %v3726 = vld [vmem:[#allocation8 + $0x120] sm:$0xf]
    %v3727 = vld [vmem:[#allocation8 + $0x124] sm:$0xf]
    %v3728 = vld [vmem:[#allocation8 + $0x128] sm:$0xf]
    %v3729 = vld [vmem:[#allocation8 + $0x12c] sm:$0xf]
    %v3730 = vld [vmem:[#allocation8 + $0x130] sm:$0xf]
    %v3731 = vld [vmem:[#allocation8 + $0x134] sm:$0xf]
    %v3732 = vld [vmem:[#allocation8 + $0x138] sm:$0xf]
    %v3733 = vld [vmem:[#allocation8 + $0x13c] sm:$0xf]
    %v3734 = vld [vmem:[#allocation8 + $0x140] sm:$0xf]
    %v3735 = vld [vmem:[#allocation8 + $0x144] sm:$0xf]
    %v3736 = vld [vmem:[#allocation8 + $0x148] sm:$0xf]
    %v3737 = vld [vmem:[#allocation8 + $0x14c] sm:$0xf]
    %v3738 = vld [vmem:[#allocation8 + $0x150] sm:$0xf]
    %v3739 = vld [vmem:[#allocation8 + $0x154] sm:$0xf]
    %v3740 = vld [vmem:[#allocation8 + $0x158] sm:$0xf]
    %v3741 = vld [vmem:[#allocation8 + $0x15c] sm:$0xf]
    %v3742 = vld [vmem:[#allocation8 + $0x160] sm:$0xf]
    %v3743 = vld [vmem:[#allocation8 + $0x164] sm:$0xf]
    %v3744 = vld [vmem:[#allocation8 + $0x168] sm:$0xf]
    %v3745 = vld [vmem:[#allocation8 + $0x16c] sm:$0xf]
    %v3746 = vld [vmem:[#allocation8 + $0x170] sm:$0xf]
    %v3747 = vld [vmem:[#allocation8 + $0x174] sm:$0xf]
    %v3748 = vld [vmem:[#allocation8 + $0x178] sm:$0xf]
    %v3749 = vld [vmem:[#allocation8 + $0x17c] sm:$0xf]
    %v3750 = vld [vmem:[#allocation8 + $0x180] sm:$0xf]
    %v3751 = vld [vmem:[#allocation8 + $0x184] sm:$0xf]
    %v3752 = vld [vmem:[#allocation8 + $0x188] sm:$0xf]
    %v3753 = vld [vmem:[#allocation8 + $0x18c] sm:$0xf]
    %v3754 = vld [vmem:[#allocation8 + $0x190] sm:$0xf]
    %v3755 = vld [vmem:[#allocation8 + $0x194] sm:$0xf]
    %v3756 = vld [vmem:[#allocation8 + $0x198] sm:$0xf]
    %v3757 = vld [vmem:[#allocation8 + $0x19c] sm:$0xf]
    %v3758 = vld [vmem:[#allocation8 + $0x1a0] sm:$0xf]
    %v3759 = vld [vmem:[#allocation8 + $0x1a4] sm:$0xf]
    %v3760 = vld [vmem:[#allocation8 + $0x1a8] sm:$0xf]
    %v3761 = vld [vmem:[#allocation8 + $0x1ac] sm:$0xf]
    %v3762 = vld [vmem:[#allocation8 + $0x1b0] sm:$0xf]
    %v3763 = vld [vmem:[#allocation8 + $0x1b4] sm:$0xf]
    %v3764 = vld [vmem:[#allocation8 + $0x1b8] sm:$0xf]
    %v3765 = vld [vmem:[#allocation8 + $0x1bc] sm:$0xf]
    %v3766 = vld [vmem:[#allocation8 + $0x1c0] sm:$0xf]
    %v3767 = vld [vmem:[#allocation8 + $0x1c4] sm:$0xf]
    %v3768 = vld [vmem:[#allocation8 + $0x1c8] sm:$0xf]
    %v3769 = vld [vmem:[#allocation8 + $0x1cc] sm:$0xf]
    %v3770 = vld [vmem:[#allocation8 + $0x1d0] sm:$0xf]
    %v3771 = vld [vmem:[#allocation8 + $0x1d4] sm:$0xf]
    %v3772 = vld [vmem:[#allocation8 + $0x1d8] sm:$0xf]
    %v3773 = vld [vmem:[#allocation8 + $0x1dc] sm:$0xf]
    %v3774 = vld [vmem:[#allocation8 + $0x1e0] sm:$0xf]
    %v3775 = vld [vmem:[#allocation8 + $0x1e4] sm:$0xf]
    %v3776 = vld [vmem:[#allocation8 + $0x1e8] sm:$0xf]
    %v3777 = vld [vmem:[#allocation8 + $0x1ec] sm:$0xf]
    %v3778 = vld [vmem:[#allocation8 + $0x1f0] sm:$0xf]
    %v3779 = vld [vmem:[#allocation8 + $0x1f4] sm:$0xf]
    %v3780 = vld [vmem:[#allocation8 + $0x1f8] sm:$0xf]
    %v3781 = vld [vmem:[#allocation8 + $0x1fc] sm:$0xf]
    %v3782 = vld [vmem:[#allocation8 + $0x200] sm:$0xf]
    %v3783 = vld [vmem:[#allocation8 + $0x204] sm:$0xf]
    %v3784 = vld [vmem:[#allocation8 + $0x208] sm:$0xf]
    %v3785 = vld [vmem:[#allocation8 + $0x20c] sm:$0xf]
    %v3786 = vld [vmem:[#allocation8 + $0x210] sm:$0xf]
    %v3787 = vld [vmem:[#allocation8 + $0x214] sm:$0xf]
    %v3788 = vld [vmem:[#allocation8 + $0x218] sm:$0xf]
    %v3789 = vld [vmem:[#allocation8 + $0x21c] sm:$0xf]
    %v3790 = vld [vmem:[#allocation8 + $0x220] sm:$0xf]
    %v3791 = vld [vmem:[#allocation8 + $0x224] sm:$0xf]
    %v3792 = vld [vmem:[#allocation8 + $0x228] sm:$0xf]
    %v3793 = vld [vmem:[#allocation8 + $0x22c] sm:$0xf]
    %v3794 = vld [vmem:[#allocation8 + $0x230] sm:$0xf]
    %v3795 = vld [vmem:[#allocation8 + $0x234] sm:$0xf]
    %v3796 = vld [vmem:[#allocation8 + $0x238] sm:$0xf]
    %v3797 = vld [vmem:[#allocation8 + $0x23c] sm:$0xf]
    %v3798 = vunpack.c.l.bf16 %v3654
    %v3799 = vunpack.c.l.bf16 %v3655
    %v3800 = vunpack.c.l.bf16 %v3656
    %v3801 = vunpack.c.l.bf16 %v3657
    %v3802 = vunpack.c.l.bf16 %v3658
    %v3803 = vunpack.c.l.bf16 %v3659
    %v3804 = vunpack.c.l.bf16 %v3660
    %v3805 = vunpack.c.l.bf16 %v3661
    %v3806 = vunpack.c.l.bf16 %v3662
    %v3807 = vunpack.c.l.bf16 %v3663
    %v3808 = vunpack.c.l.bf16 %v3664
    %v3809 = vunpack.c.l.bf16 %v3665
    %v3810 = vunpack.c.l.bf16 %v3666
    %v3811 = vunpack.c.l.bf16 %v3667
    %v3812 = vunpack.c.l.bf16 %v3668
    %v3813 = vunpack.c.l.bf16 %v3669
    %v3814 = vunpack.c.l.bf16 %v3670
    %v3815 = vunpack.c.l.bf16 %v3671
    %v3816 = vunpack.c.l.bf16 %v3672
    %v3817 = vunpack.c.l.bf16 %v3673
    %v3818 = vunpack.c.l.bf16 %v3674
    %v3819 = vunpack.c.l.bf16 %v3675
    %v3820 = vunpack.c.l.bf16 %v3676
    %v3821 = vunpack.c.l.bf16 %v3677
    %v3822 = vunpack.c.l.bf16 %v3678
    %v3823 = vunpack.c.l.bf16 %v3679
    %v3824 = vunpack.c.l.bf16 %v3680
    %v3825 = vunpack.c.l.bf16 %v3681
    %v3826 = vunpack.c.l.bf16 %v3682
    %v3827 = vunpack.c.l.bf16 %v3683
    %v3828 = vunpack.c.l.bf16 %v3684
    %v3829 = vunpack.c.l.bf16 %v3685
    %v3830 = vunpack.c.l.bf16 %v3686
    %v3831 = vunpack.c.l.bf16 %v3687
    %v3832 = vunpack.c.l.bf16 %v3688
    %v3833 = vunpack.c.l.bf16 %v3689
    %v3834 = vunpack.c.l.bf16 %v3690
    %v3835 = vunpack.c.l.bf16 %v3691
    %v3836 = vunpack.c.l.bf16 %v3692
    %v3837 = vunpack.c.l.bf16 %v3693
    %v3838 = vunpack.c.l.bf16 %v3694
    %v3839 = vunpack.c.l.bf16 %v3695
    %v3840 = vunpack.c.l.bf16 %v3696
    %v3841 = vunpack.c.l.bf16 %v3697
    %v3842 = vunpack.c.l.bf16 %v3698
    %v3843 = vunpack.c.l.bf16 %v3699
    %v3844 = vunpack.c.l.bf16 %v3700
    %v3845 = vunpack.c.l.bf16 %v3701
    %v3846 = vunpack.c.l.bf16 %v3702
    %v3847 = vunpack.c.l.bf16 %v3703
    %v3848 = vunpack.c.l.bf16 %v3704
    %v3849 = vunpack.c.l.bf16 %v3705
    %v3850 = vunpack.c.l.bf16 %v3706
    %v3851 = vunpack.c.l.bf16 %v3707
    %v3852 = vunpack.c.l.bf16 %v3708
    %v3853 = vunpack.c.l.bf16 %v3709
    %v3854 = vunpack.c.l.bf16 %v3710
    %v3855 = vunpack.c.l.bf16 %v3711
    %v3856 = vunpack.c.l.bf16 %v3712
    %v3857 = vunpack.c.l.bf16 %v3713
    %v3858 = vunpack.c.l.bf16 %v3714
    %v3859 = vunpack.c.l.bf16 %v3715
    %v3860 = vunpack.c.l.bf16 %v3716
    %v3861 = vunpack.c.l.bf16 %v3717
    %v3862 = vunpack.c.l.bf16 %v3718
    %v3863 = vunpack.c.l.bf16 %v3719
    %v3864 = vunpack.c.l.bf16 %v3720
    %v3865 = vunpack.c.l.bf16 %v3721
    %v3866 = vunpack.c.l.bf16 %v3722
    %v3867 = vunpack.c.l.bf16 %v3723
    %v3868 = vunpack.c.l.bf16 %v3724
    %v3869 = vunpack.c.l.bf16 %v3725
    %v3870 = vunpack.c.l.bf16 %v3726
    %v3871 = vunpack.c.l.bf16 %v3727
    %v3872 = vunpack.c.l.bf16 %v3728
    %v3873 = vunpack.c.l.bf16 %v3729
    %v3874 = vunpack.c.l.bf16 %v3730
    %v3875 = vunpack.c.l.bf16 %v3731
    %v3876 = vunpack.c.l.bf16 %v3732
    %v3877 = vunpack.c.l.bf16 %v3733
    %v3878 = vunpack.c.l.bf16 %v3734
    %v3879 = vunpack.c.l.bf16 %v3735
    %v3880 = vunpack.c.l.bf16 %v3736
    %v3881 = vunpack.c.l.bf16 %v3737
    %v3882 = vunpack.c.l.bf16 %v3738
    %v3883 = vunpack.c.l.bf16 %v3739
    %v3884 = vunpack.c.l.bf16 %v3740
    %v3885 = vunpack.c.l.bf16 %v3741
    %v3886 = vunpack.c.l.bf16 %v3742
    %v3887 = vunpack.c.l.bf16 %v3743
    %v3888 = vunpack.c.l.bf16 %v3744
    %v3889 = vunpack.c.l.bf16 %v3745
    %v3890 = vunpack.c.l.bf16 %v3746
    %v3891 = vunpack.c.l.bf16 %v3747
    %v3892 = vunpack.c.l.bf16 %v3748
    %v3893 = vunpack.c.l.bf16 %v3749
    %v3894 = vunpack.c.l.bf16 %v3750
    %v3895 = vunpack.c.l.bf16 %v3751
    %v3896 = vunpack.c.l.bf16 %v3752
    %v3897 = vunpack.c.l.bf16 %v3753
    %v3898 = vunpack.c.l.bf16 %v3754
    %v3899 = vunpack.c.l.bf16 %v3755
    %v3900 = vunpack.c.l.bf16 %v3756
    %v3901 = vunpack.c.l.bf16 %v3757
    %v3902 = vunpack.c.l.bf16 %v3758
    %v3903 = vunpack.c.l.bf16 %v3759
    %v3904 = vunpack.c.l.bf16 %v3760
    %v3905 = vunpack.c.l.bf16 %v3761
    %v3906 = vunpack.c.l.bf16 %v3762
    %v3907 = vunpack.c.l.bf16 %v3763
    %v3908 = vunpack.c.l.bf16 %v3764
    %v3909 = vunpack.c.l.bf16 %v3765
    %v3910 = vunpack.c.l.bf16 %v3766
    %v3911 = vunpack.c.l.bf16 %v3767
    %v3912 = vunpack.c.l.bf16 %v3768
    %v3913 = vunpack.c.l.bf16 %v3769
    %v3914 = vunpack.c.l.bf16 %v3770
    %v3915 = vunpack.c.l.bf16 %v3771
    %v3916 = vunpack.c.l.bf16 %v3772
    %v3917 = vunpack.c.l.bf16 %v3773
    %v3918 = vunpack.c.l.bf16 %v3774
    %v3919 = vunpack.c.l.bf16 %v3775
    %v3920 = vunpack.c.l.bf16 %v3776
    %v3921 = vunpack.c.l.bf16 %v3777
    %v3922 = vunpack.c.l.bf16 %v3778
    %v3923 = vunpack.c.l.bf16 %v3779
    %v3924 = vunpack.c.l.bf16 %v3780
    %v3925 = vunpack.c.l.bf16 %v3781
    %v3926 = vunpack.c.l.bf16 %v3782
    %v3927 = vunpack.c.l.bf16 %v3783
    %v3928 = vunpack.c.l.bf16 %v3784
    %v3929 = vunpack.c.l.bf16 %v3785
    %v3930 = vunpack.c.l.bf16 %v3786
    %v3931 = vunpack.c.l.bf16 %v3787
    %v3932 = vunpack.c.l.bf16 %v3788
    %v3933 = vunpack.c.l.bf16 %v3789
    %v3934 = vunpack.c.l.bf16 %v3790
    %v3935 = vunpack.c.l.bf16 %v3791
    %v3936 = vunpack.c.l.bf16 %v3792
    %v3937 = vunpack.c.l.bf16 %v3793
    %v3938 = vunpack.c.l.bf16 %v3794
    %v3939 = vunpack.c.l.bf16 %v3795
    %v3940 = vunpack.c.l.bf16 %v3796
    %v3941 = vunpack.c.l.bf16 %v3797
    %3942 = vmatprep.subr.mxu0 0.0
    %3943 = vmatpush1.msra.mxu0 %v3798
    %3944 = vmatprep.subr.mxu0 0.0
    %3945 = vmatpush1.msra.mxu0 %v3799
    %3946 = vmatprep.subr.mxu0 0.0
    %3947 = vmatpush1.msra.mxu0 %v3800
    %3948 = vmatprep.subr.mxu0 0.0
    %3949 = vmatpush1.msra.mxu0 %v3801
    %3950 = vmatprep.subr.mxu0 0.0
    %3951 = vmatpush1.msra.mxu0 %v3802
    %3952 = vmatprep.subr.mxu0 0.0
    %3953 = vmatpush1.msra.mxu0 %v3803
    %3954 = vmatprep.subr.mxu0 0.0
    %3955 = vmatpush1.msra.mxu0 %v3804
    %3956 = vmatprep.subr.mxu0 0.0
    %3957 = vmatpush1.msra.mxu0 %v3805
    %3958 = vmatprep.subr.mxu0 0.0
    %3959 = vmatpush1.msra.mxu0 %v3806
    %3960 = vmatprep.subr.mxu0 0.0
    %3961 = vmatpush1.msra.mxu0 %v3807
    %3962 = vmatprep.subr.mxu0 0.0
    %3963 = vmatpush1.msra.mxu0 %v3808
    %3964 = vmatprep.subr.mxu0 0.0
    %3965 = vmatpush1.msra.mxu0 %v3809
    %3966 = vmatprep.subr.mxu0 0.0
    %3967 = vmatpush1.msra.mxu0 %v3810
    %3968 = vmatprep.subr.mxu0 0.0
    %3969 = vmatpush1.msra.mxu0 %v3811
    %3970 = vmatprep.subr.mxu0 0.0
    %3971 = vmatpush1.msra.mxu0 %v3812
    %3972 = vmatprep.subr.mxu0 0.0
    %3973 = vmatpush1.msra.mxu0 %v3813
    %3974 = vmatprep.subr.mxu0 0.0
    %3975 = vmatpush1.msra.mxu0 %v3814
    %3976 = vmatprep.subr.mxu0 0.0
    %3977 = vmatpush1.msra.mxu0 %v3815
    %3978 = vmatprep.subr.mxu0 0.0
    %3979 = vmatpush1.msra.mxu0 %v3816
    %3980 = vmatprep.subr.mxu0 0.0
    %3981 = vmatpush1.msra.mxu0 %v3817
    %3982 = vmatprep.subr.mxu0 0.0
    %3983 = vmatpush1.msra.mxu0 %v3818
    %3984 = vmatprep.subr.mxu0 0.0
    %3985 = vmatpush1.msra.mxu0 %v3819
    %3986 = vmatprep.subr.mxu0 0.0
    %3987 = vmatpush1.msra.mxu0 %v3820
    %3988 = vmatprep.subr.mxu0 0.0
    %3989 = vmatpush1.msra.mxu0 %v3821
    %3990 = vmatprep.subr.mxu0 0.0
    %3991 = vmatpush1.msra.mxu0 %v3822
    %3992 = vmatprep.subr.mxu0 0.0
    %3993 = vmatpush1.msra.mxu0 %v3823
    %3994 = vmatprep.subr.mxu0 0.0
    %3995 = vmatpush1.msra.mxu0 %v3824
    %3996 = vmatprep.subr.mxu0 0.0
    %3997 = vmatpush1.msra.mxu0 %v3825
    %3998 = vmatprep.subr.mxu0 0.0
    %3999 = vmatpush1.msra.mxu0 %v3826
    %4000 = vmatprep.subr.mxu0 0.0
    %4001 = vmatpush1.msra.mxu0 %v3827
    %4002 = vmatprep.subr.mxu0 0.0
    %4003 = vmatpush1.msra.mxu0 %v3828
    %4004 = vmatprep.subr.mxu0 0.0
    %4005 = vmatpush1.msra.mxu0 %v3829
    %4006 = vmatprep.mubr.f32.mxu0 %v3511
    %4007 = vmatmul.mubr.f32.gmra.mrb[0].mxu0 %v3510
    %v4008 = vpop.f32.mrb[0].mxu0
    %v4009 = vadd.f32 0.0, %v4008
    %v4010 = vpop.f32.mrb[0].mxu0
    %4011 = vmatprep.mubr.f32.mxu0 %v3520
    %4012 = vmatmul.mubr.f32.gmra.mrb[0].mxu0 %v3519
    %v4013 = vpop.f32.mrb[0].mxu0
    %v4014 = vadd.f32 0.0, %v4013
    %v4015 = vpop.f32.mrb[0].mxu0
    %4016 = vmatprep.mubr.f32.mxu0 %v3529
    %4017 = vmatmul.mubr.f32.gmra.mrb[0].mxu0 %v3528
    %v4018 = vpop.f32.mrb[0].mxu0
    %v4019 = vadd.f32 0.0, %v4018
    %v4020 = vpop.f32.mrb[0].mxu0
    %4021 = vmatprep.mubr.f32.mxu0 %v3538
    %4022 = vmatmul.mubr.f32.gmra.mrb[0].mxu0 %v3537
    %v4023 = vpop.f32.mrb[0].mxu0
    %v4024 = vadd.f32 0.0, %v4023
    %v4025 = vpop.f32.mrb[0].mxu0
    %4026 = vmatprep.mubr.f32.mxu0 %v3547
    %4027 = vmatmul.mubr.f32.gmra.mrb[0].mxu0 %v3546
    %v4028 = vpop.f32.mrb[0].mxu0
    %v4029 = vadd.f32 0.0, %v4028
    %v4030 = vpop.f32.mrb[0].mxu0
    %4031 = vmatprep.mubr.f32.mxu0 %v3556
    %4032 = vmatmul.mubr.f32.gmra.mrb[0].mxu0 %v3555
    %v4033 = vpop.f32.mrb[0].mxu0
    %v4034 = vadd.f32 0.0, %v4033
    %v4035 = vpop.f32.mrb[0].mxu0
    %4036 = vmatprep.mubr.f32.mxu0 %v3565
    %4037 = vmatmul.mubr.f32.gmra.mrb[0].mxu0 %v3564
    %v4038 = vpop.f32.mrb[0].mxu0
    %v4039 = vadd.f32 0.0, %v4038
    %v4040 = vpop.f32.mrb[0].mxu0
    %4041 = vmatprep.mubr.f32.mxu0 %v3574
    %4042 = vmatmul.mubr.f32.gmra.mrb[0].mxu0 %v3573
    %v4043 = vpop.f32.mrb[0].mxu0
    %v4044 = vadd.f32 0.0, %v4043
    %v4045 = vpop.f32.mrb[0].mxu0
    %4046 = vmatprep.mubr.f32.mxu0 %v3583
    %4047 = vmatmul.mubr.f32.gmra.mrb[0].mxu0 %v3582
    %v4048 = vpop.f32.mrb[0].mxu0
    %v4049 = vadd.f32 0.0, %v4048
    %v4050 = vpop.f32.mrb[0].mxu0
    %4051 = vmatprep.mubr.f32.mxu0 %v3592
    %4052 = vmatmul.mubr.f32.gmra.mrb[0].mxu0 %v3591
    %v4053 = vpop.f32.mrb[0].mxu0
    %v4054 = vadd.f32 0.0, %v4053
    %v4055 = vpop.f32.mrb[0].mxu0
    %4056 = vmatprep.mubr.f32.mxu0 %v3601
    %4057 = vmatmul.mubr.f32.gmra.mrb[0].mxu0 %v3600
    %v4058 = vpop.f32.mrb[0].mxu0
    %v4059 = vadd.f32 0.0, %v4058
    %v4060 = vpop.f32.mrb[0].mxu0
    %4061 = vmatprep.mubr.f32.mxu0 %v3610
    %4062 = vmatmul.mubr.f32.gmra.mrb[0].mxu0 %v3609
    %v4063 = vpop.f32.mrb[0].mxu0
    %v4064 = vadd.f32 0.0, %v4063
    %v4065 = vpop.f32.mrb[0].mxu0
    %4066 = vmatprep.mubr.f32.mxu0 %v3619
    %4067 = vmatmul.mubr.f32.gmra.mrb[0].mxu0 %v3618
    %v4068 = vpop.f32.mrb[0].mxu0
    %v4069 = vadd.f32 0.0, %v4068
    %v4070 = vpop.f32.mrb[0].mxu0
    %4071 = vmatprep.mubr.f32.mxu0 %v3628
    %4072 = vmatmul.mubr.f32.gmra.mrb[0].mxu0 %v3627
    %v4073 = vpop.f32.mrb[0].mxu0
    %v4074 = vadd.f32 0.0, %v4073
    %v4075 = vpop.f32.mrb[0].mxu0
    %4076 = vmatprep.mubr.f32.mxu0 %v3637
    %4077 = vmatmul.mubr.f32.gmra.mrb[0].mxu0 %v3636
    %v4078 = vpop.f32.mrb[0].mxu0
    %v4079 = vadd.f32 0.0, %v4078
    %v4080 = vpop.f32.mrb[0].mxu0
    %4081 = vmatprep.mubr.f32.mxu0 %v3646
    %4082 = vmatmul.mubr.f32.gmra.mrb[0].mxu0 %v3645
    %v4083 = vpop.f32.mrb[0].mxu0
    %v4084 = vadd.f32 0.0, %v4083
    %v4085 = vpop.f32.mrb[0].mxu0
    %4086 = vdwg.mxu0
    %4087 = vmatprep.subr.mxu0 0.0
    %4088 = vmatpush1.msra.mxu0 %v3830
    %4089 = vmatprep.subr.mxu0 0.0
    %4090 = vmatpush1.msra.mxu0 %v3831
    %4091 = vmatprep.subr.mxu0 0.0
    %4092 = vmatpush1.msra.mxu0 %v3832
    %4093 = vmatprep.subr.mxu0 0.0
    %4094 = vmatpush1.msra.mxu0 %v3833
    %4095 = vmatprep.subr.mxu0 0.0
    %4096 = vmatpush1.msra.mxu0 %v3834
    %4097 = vmatprep.subr.mxu0 0.0
    %4098 = vmatpush1.msra.mxu0 %v3835
    %4099 = vmatprep.subr.mxu0 0.0
    %4100 = vmatpush1.msra.mxu0 %v3836
    %4101 = vmatprep.subr.mxu0 0.0
    %4102 = vmatpush1.msra.mxu0 %v3837
    %4103 = vmatprep.subr.mxu0 0.0
    %4104 = vmatpush1.msra.mxu0 %v3838
    %4105 = vmatprep.subr.mxu0 0.0
    %4106 = vmatpush1.msra.mxu0 %v3839
    %4107 = vmatprep.subr.mxu0 0.0
    %4108 = vmatpush1.msra.mxu0 %v3840
    %4109 = vmatprep.subr.mxu0 0.0
    %4110 = vmatpush1.msra.mxu0 %v3841
    %4111 = vmatprep.subr.mxu0 0.0
    %4112 = vmatpush1.msra.mxu0 %v3842
    %4113 = vmatprep.subr.mxu0 0.0
    %4114 = vmatpush1.msra.mxu0 %v3843
    %4115 = vmatprep.subr.mxu0 0.0
    %4116 = vmatpush1.msra.mxu0 %v3844
    %4117 = vmatprep.subr.mxu0 0.0
    %4118 = vmatpush1.msra.mxu0 %v3845
    %4119 = vmatprep.subr.mxu0 0.0
    %4120 = vmatpush1.msra.mxu0 %v3846
    %4121 = vmatprep.subr.mxu0 0.0
    %4122 = vmatpush1.msra.mxu0 %v3847
    %4123 = vmatprep.subr.mxu0 0.0
    %4124 = vmatpush1.msra.mxu0 %v3848
    %4125 = vmatprep.subr.mxu0 0.0
    %4126 = vmatpush1.msra.mxu0 %v3849
    %4127 = vmatprep.subr.mxu0 0.0
    %4128 = vmatpush1.msra.mxu0 %v3850
    %4129 = vmatprep.subr.mxu0 0.0
    %4130 = vmatpush1.msra.mxu0 %v3851
    %4131 = vmatprep.subr.mxu0 0.0
    %4132 = vmatpush1.msra.mxu0 %v3852
    %4133 = vmatprep.subr.mxu0 0.0
    %4134 = vmatpush1.msra.mxu0 %v3853
    %4135 = vmatprep.subr.mxu0 0.0
    %4136 = vmatpush1.msra.mxu0 %v3854
    %4137 = vmatprep.subr.mxu0 0.0
    %4138 = vmatpush1.msra.mxu0 %v3855
    %4139 = vmatprep.subr.mxu0 0.0
    %4140 = vmatpush1.msra.mxu0 %v3856
    %4141 = vmatprep.subr.mxu0 0.0
    %4142 = vmatpush1.msra.mxu0 %v3857
    %4143 = vmatprep.subr.mxu0 0.0
    %4144 = vmatpush1.msra.mxu0 %v3858
    %4145 = vmatprep.subr.mxu0 0.0
    %4146 = vmatpush1.msra.mxu0 %v3859
    %4147 = vmatprep.subr.mxu0 0.0
    %4148 = vmatpush1.msra.mxu0 %v3860
    %4149 = vmatprep.subr.mxu0 0.0
    %4150 = vmatpush1.msra.mxu0 %v3861
    %4151 = vmatprep.mubr.f32.mxu0 %v3513
    %4152 = vmatmul.mubr.f32.gmra.mrb[0].mxu0 %v3512
    %v4153 = vpop.f32.mrb[0].mxu0
    %v4154 = vadd.f32 %v4009, %v4153
    %v4155 = vpop.f32.mrb[0].mxu0
    %4156 = vmatprep.mubr.f32.mxu0 %v3522
    %4157 = vmatmul.mubr.f32.gmra.mrb[0].mxu0 %v3521
    %v4158 = vpop.f32.mrb[0].mxu0
    %v4159 = vadd.f32 %v4014, %v4158
    %v4160 = vpop.f32.mrb[0].mxu0
    %4161 = vmatprep.mubr.f32.mxu0 %v3531
    %4162 = vmatmul.mubr.f32.gmra.mrb[0].mxu0 %v3530
    %v4163 = vpop.f32.mrb[0].mxu0
    %v4164 = vadd.f32 %v4019, %v4163
    %v4165 = vpop.f32.mrb[0].mxu0
    %4166 = vmatprep.mubr.f32.mxu0 %v3540
    %4167 = vmatmul.mubr.f32.gmra.mrb[0].mxu0 %v3539
    %v4168 = vpop.f32.mrb[0].mxu0
    %v4169 = vadd.f32 %v4024, %v4168
    %v4170 = vpop.f32.mrb[0].mxu0
    %4171 = vmatprep.mubr.f32.mxu0 %v3549
    %4172 = vmatmul.mubr.f32.gmra.mrb[0].mxu0 %v3548
    %v4173 = vpop.f32.mrb[0].mxu0
    %v4174 = vadd.f32 %v4029, %v4173
    %v4175 = vpop.f32.mrb[0].mxu0
    %4176 = vmatprep.mubr.f32.mxu0 %v3558
    %4177 = vmatmul.mubr.f32.gmra.mrb[0].mxu0 %v3557
    %v4178 = vpop.f32.mrb[0].mxu0
    %v4179 = vadd.f32 %v4034, %v4178
    %v4180 = vpop.f32.mrb[0].mxu0
    %4181 = vmatprep.mubr.f32.mxu0 %v3567
    %4182 = vmatmul.mubr.f32.gmra.mrb[0].mxu0 %v3566
    %v4183 = vpop.f32.mrb[0].mxu0
    %v4184 = vadd.f32 %v4039, %v4183
    %v4185 = vpop.f32.mrb[0].mxu0
    %4186 = vmatprep.mubr.f32.mxu0 %v3576
    %4187 = vmatmul.mubr.f32.gmra.mrb[0].mxu0 %v3575
    %v4188 = vpop.f32.mrb[0].mxu0
    %v4189 = vadd.f32 %v4044, %v4188
    %v4190 = vpop.f32.mrb[0].mxu0
    %4191 = vmatprep.mubr.f32.mxu0 %v3585
    %4192 = vmatmul.mubr.f32.gmra.mrb[0].mxu0 %v3584
    %v4193 = vpop.f32.mrb[0].mxu0
    %v4194 = vadd.f32 %v4049, %v4193
    %v4195 = vpop.f32.mrb[0].mxu0
    %4196 = vmatprep.mubr.f32.mxu0 %v3594
    %4197 = vmatmul.mubr.f32.gmra.mrb[0].mxu0 %v3593
    %v4198 = vpop.f32.mrb[0].mxu0
    %v4199 = vadd.f32 %v4054, %v4198
    %v4200 = vpop.f32.mrb[0].mxu0
    %4201 = vmatprep.mubr.f32.mxu0 %v3603
    %4202 = vmatmul.mubr.f32.gmra.mrb[0].mxu0 %v3602
    %v4203 = vpop.f32.mrb[0].mxu0
    %v4204 = vadd.f32 %v4059, %v4203
    %v4205 = vpop.f32.mrb[0].mxu0
    %4206 = vmatprep.mubr.f32.mxu0 %v3612
    %4207 = vmatmul.mubr.f32.gmra.mrb[0].mxu0 %v3611
    %v4208 = vpop.f32.mrb[0].mxu0
    %v4209 = vadd.f32 %v4064, %v4208
    %v4210 = vpop.f32.mrb[0].mxu0
    %4211 = vmatprep.mubr.f32.mxu0 %v3621
    %4212 = vmatmul.mubr.f32.gmra.mrb[0].mxu0 %v3620
    %v4213 = vpop.f32.mrb[0].mxu0
    %v4214 = vadd.f32 %v4069, %v4213
    %v4215 = vpop.f32.mrb[0].mxu0
    %4216 = vmatprep.mubr.f32.mxu0 %v3630
    %4217 = vmatmul.mubr.f32.gmra.mrb[0].mxu0 %v3629
    %v4218 = vpop.f32.mrb[0].mxu0
    %v4219 = vadd.f32 %v4074, %v4218
    %v4220 = vpop.f32.mrb[0].mxu0
    %4221 = vmatprep.mubr.f32.mxu0 %v3639
    %4222 = vmatmul.mubr.f32.gmra.mrb[0].mxu0 %v3638
    %v4223 = vpop.f32.mrb[0].mxu0
    %v4224 = vadd.f32 %v4079, %v4223
    %v4225 = vpop.f32.mrb[0].mxu0
    %4226 = vmatprep.mubr.f32.mxu0 %v3648
    %4227 = vmatmul.mubr.f32.gmra.mrb[0].mxu0 %v3647
    %v4228 = vpop.f32.mrb[0].mxu0
    %v4229 = vadd.f32 %v4084, %v4228
    %v4230 = vpop.f32.mrb[0].mxu0
    %4231 = vdwg.mxu0
    %4232 = vmatprep.subr.mxu0 0.0
    %4233 = vmatpush1.msra.mxu0 %v3862
    %4234 = vmatprep.subr.mxu0 0.0
    %4235 = vmatpush1.msra.mxu0 %v3863
    %4236 = vmatprep.subr.mxu0 0.0
    %4237 = vmatpush1.msra.mxu0 %v3864
    %4238 = vmatprep.subr.mxu0 0.0
    %4239 = vmatpush1.msra.mxu0 %v3865
    %4240 = vmatprep.subr.mxu0 0.0
    %4241 = vmatpush1.msra.mxu0 %v3866
    %4242 = vmatprep.subr.mxu0 0.0
    %4243 = vmatpush1.msra.mxu0 %v3867
    %4244 = vmatprep.subr.mxu0 0.0
    %4245 = vmatpush1.msra.mxu0 %v3868
    %4246 = vmatprep.subr.mxu0 0.0
    %4247 = vmatpush1.msra.mxu0 %v3869
    %4248 = vmatprep.subr.mxu0 0.0
    %4249 = vmatpush1.msra.mxu0 %v3870
    %4250 = vmatprep.subr.mxu0 0.0
    %4251 = vmatpush1.msra.mxu0 %v3871
    %4252 = vmatprep.subr.mxu0 0.0
    %4253 = vmatpush1.msra.mxu0 %v3872
    %4254 = vmatprep.subr.mxu0 0.0
    %4255 = vmatpush1.msra.mxu0 %v3873
    %4256 = vmatprep.subr.mxu0 0.0
    %4257 = vmatpush1.msra.mxu0 %v3874
    %4258 = vmatprep.subr.mxu0 0.0
    %4259 = vmatpush1.msra.mxu0 %v3875
    %4260 = vmatprep.subr.mxu0 0.0
    %4261 = vmatpush1.msra.mxu0 %v3876
    %4262 = vmatprep.subr.mxu0 0.0
    %4263 = vmatpush1.msra.mxu0 %v3877
    %4264 = vmatprep.subr.mxu0 0.0
    %4265 = vmatpush1.msra.mxu0 %v3878
    %4266 = vmatprep.subr.mxu0 0.0
    %4267 = vmatpush1.msra.mxu0 %v3879
    %4268 = vmatprep.subr.mxu0 0.0
    %4269 = vmatpush1.msra.mxu0 %v3880
    %4270 = vmatprep.subr.mxu0 0.0
    %4271 = vmatpush1.msra.mxu0 %v3881
    %4272 = vmatprep.subr.mxu0 0.0
    %4273 = vmatpush1.msra.mxu0 %v3882
    %4274 = vmatprep.subr.mxu0 0.0
    %4275 = vmatpush1.msra.mxu0 %v3883
    %4276 = vmatprep.subr.mxu0 0.0
    %4277 = vmatpush1.msra.mxu0 %v3884
    %4278 = vmatprep.subr.mxu0 0.0
    %4279 = vmatpush1.msra.mxu0 %v3885
    %4280 = vmatprep.subr.mxu0 0.0
    %4281 = vmatpush1.msra.mxu0 %v3886
    %4282 = vmatprep.subr.mxu0 0.0
    %4283 = vmatpush1.msra.mxu0 %v3887
    %4284 = vmatprep.subr.mxu0 0.0
    %4285 = vmatpush1.msra.mxu0 %v3888
    %4286 = vmatprep.subr.mxu0 0.0
    %4287 = vmatpush1.msra.mxu0 %v3889
    %4288 = vmatprep.subr.mxu0 0.0
    %4289 = vmatpush1.msra.mxu0 %v3890
    %4290 = vmatprep.subr.mxu0 0.0
    %4291 = vmatpush1.msra.mxu0 %v3891
    %4292 = vmatprep.subr.mxu0 0.0
    %4293 = vmatpush1.msra.mxu0 %v3892
    %4294 = vmatprep.subr.mxu0 0.0
    %4295 = vmatpush1.msra.mxu0 %v3893
    %4296 = vmatprep.mubr.f32.mxu0 %v3515
    %4297 = vmatmul.mubr.f32.gmra.mrb[0].mxu0 %v3514
    %v4298 = vpop.f32.mrb[0].mxu0
    %v4299 = vadd.f32 %v4154, %v4298
    %v4300 = vpop.f32.mrb[0].mxu0
    %4301 = vmatprep.mubr.f32.mxu0 %v3524
    %4302 = vmatmul.mubr.f32.gmra.mrb[0].mxu0 %v3523
    %v4303 = vpop.f32.mrb[0].mxu0
    %v4304 = vadd.f32 %v4159, %v4303
    %v4305 = vpop.f32.mrb[0].mxu0
    %4306 = vmatprep.mubr.f32.mxu0 %v3533
    %4307 = vmatmul.mubr.f32.gmra.mrb[0].mxu0 %v3532
    %v4308 = vpop.f32.mrb[0].mxu0
    %v4309 = vadd.f32 %v4164, %v4308
    %v4310 = vpop.f32.mrb[0].mxu0
    %4311 = vmatprep.mubr.f32.mxu0 %v3542
    %4312 = vmatmul.mubr.f32.gmra.mrb[0].mxu0 %v3541
    %v4313 = vpop.f32.mrb[0].mxu0
    %v4314 = vadd.f32 %v4169, %v4313
    %v4315 = vpop.f32.mrb[0].mxu0
    %4316 = vmatprep.mubr.f32.mxu0 %v3551
    %4317 = vmatmul.mubr.f32.gmra.mrb[0].mxu0 %v3550
    %v4318 = vpop.f32.mrb[0].mxu0
    %v4319 = vadd.f32 %v4174, %v4318
    %v4320 = vpop.f32.mrb[0].mxu0
    %4321 = vmatprep.mubr.f32.mxu0 %v3560
    %4322 = vmatmul.mubr.f32.gmra.mrb[0].mxu0 %v3559
    %v4323 = vpop.f32.mrb[0].mxu0
    %v4324 = vadd.f32 %v4179, %v4323
    %v4325 = vpop.f32.mrb[0].mxu0
    %4326 = vmatprep.mubr.f32.mxu0 %v3569
    %4327 = vmatmul.mubr.f32.gmra.mrb[0].mxu0 %v3568
    %v4328 = vpop.f32.mrb[0].mxu0
    %v4329 = vadd.f32 %v4184, %v4328
    %v4330 = vpop.f32.mrb[0].mxu0
    %4331 = vmatprep.mubr.f32.mxu0 %v3578
    %4332 = vmatmul.mubr.f32.gmra.mrb[0].mxu0 %v3577
    %v4333 = vpop.f32.mrb[0].mxu0
    %v4334 = vadd.f32 %v4189, %v4333
    %v4335 = vpop.f32.mrb[0].mxu0
    %4336 = vmatprep.mubr.f32.mxu0 %v3587
    %4337 = vmatmul.mubr.f32.gmra.mrb[0].mxu0 %v3586
    %v4338 = vpop.f32.mrb[0].mxu0
    %v4339 = vadd.f32 %v4194, %v4338
    %v4340 = vpop.f32.mrb[0].mxu0
    %4341 = vmatprep.mubr.f32.mxu0 %v3596
    %4342 = vmatmul.mubr.f32.gmra.mrb[0].mxu0 %v3595
    %v4343 = vpop.f32.mrb[0].mxu0
    %v4344 = vadd.f32 %v4199, %v4343
    %v4345 = vpop.f32.mrb[0].mxu0
    %4346 = vmatprep.mubr.f32.mxu0 %v3605
    %4347 = vmatmul.mubr.f32.gmra.mrb[0].mxu0 %v3604
    %v4348 = vpop.f32.mrb[0].mxu0
    %v4349 = vadd.f32 %v4204, %v4348
    %v4350 = vpop.f32.mrb[0].mxu0
    %4351 = vmatprep.mubr.f32.mxu0 %v3614
    %4352 = vmatmul.mubr.f32.gmra.mrb[0].mxu0 %v3613
    %v4353 = vpop.f32.mrb[0].mxu0
    %v4354 = vadd.f32 %v4209, %v4353
    %v4355 = vpop.f32.mrb[0].mxu0
    %4356 = vmatprep.mubr.f32.mxu0 %v3623
    %4357 = vmatmul.mubr.f32.gmra.mrb[0].mxu0 %v3622
    %v4358 = vpop.f32.mrb[0].mxu0
    %v4359 = vadd.f32 %v4214, %v4358
    %v4360 = vpop.f32.mrb[0].mxu0
    %4361 = vmatprep.mubr.f32.mxu0 %v3632
    %4362 = vmatmul.mubr.f32.gmra.mrb[0].mxu0 %v3631
    %v4363 = vpop.f32.mrb[0].mxu0
    %v4364 = vadd.f32 %v4219, %v4363
    %v4365 = vpop.f32.mrb[0].mxu0
    %4366 = vmatprep.mubr.f32.mxu0 %v3641
    %4367 = vmatmul.mubr.f32.gmra.mrb[0].mxu0 %v3640
    %v4368 = vpop.f32.mrb[0].mxu0
    %v4369 = vadd.f32 %v4224, %v4368
    %v4370 = vpop.f32.mrb[0].mxu0
    %4371 = vmatprep.mubr.f32.mxu0 %v3650
    %4372 = vmatmul.mubr.f32.gmra.mrb[0].mxu0 %v3649
    %v4373 = vpop.f32.mrb[0].mxu0
    %v4374 = vadd.f32 %v4229, %v4373
    %v4375 = vpop.f32.mrb[0].mxu0
    %4376 = vdwg.mxu0
    %4377 = vmatprep.subr.mxu0 0.0
    %4378 = vmatpush1.msra.mxu0 %v3894
    %4379 = vmatprep.subr.mxu0 0.0
    %4380 = vmatpush1.msra.mxu0 %v3895
    %4381 = vmatprep.subr.mxu0 0.0
    %4382 = vmatpush1.msra.mxu0 %v3896
    %4383 = vmatprep.subr.mxu0 0.0
    %4384 = vmatpush1.msra.mxu0 %v3897
    %4385 = vmatprep.subr.mxu0 0.0
    %4386 = vmatpush1.msra.mxu0 %v3898
    %4387 = vmatprep.subr.mxu0 0.0
    %4388 = vmatpush1.msra.mxu0 %v3899
    %4389 = vmatprep.subr.mxu0 0.0
    %4390 = vmatpush1.msra.mxu0 %v3900
    %4391 = vmatprep.subr.mxu0 0.0
    %4392 = vmatpush1.msra.mxu0 %v3901
    %4393 = vmatprep.subr.mxu0 0.0
    %4394 = vmatpush1.msra.mxu0 %v3902
    %4395 = vmatprep.subr.mxu0 0.0
    %4396 = vmatpush1.msra.mxu0 %v3903
    %4397 = vmatprep.subr.mxu0 0.0
    %4398 = vmatpush1.msra.mxu0 %v3904
    %4399 = vmatprep.subr.mxu0 0.0
    %4400 = vmatpush1.msra.mxu0 %v3905
    %4401 = vmatprep.subr.mxu0 0.0
    %4402 = vmatpush1.msra.mxu0 %v3906
    %4403 = vmatprep.subr.mxu0 0.0
    %4404 = vmatpush1.msra.mxu0 %v3907
    %4405 = vmatprep.subr.mxu0 0.0
    %4406 = vmatpush1.msra.mxu0 %v3908
    %4407 = vmatprep.subr.mxu0 0.0
    %4408 = vmatpush1.msra.mxu0 %v3909
    %4409 = vmatprep.subr.mxu0 0.0
    %4410 = vmatpush1.msra.mxu0 %v3910
    %4411 = vmatprep.subr.mxu0 0.0
    %4412 = vmatpush1.msra.mxu0 %v3911
    %4413 = vmatprep.subr.mxu0 0.0
    %4414 = vmatpush1.msra.mxu0 %v3912
    %4415 = vmatprep.subr.mxu0 0.0
    %4416 = vmatpush1.msra.mxu0 %v3913
    %4417 = vmatprep.subr.mxu0 0.0
    %4418 = vmatpush1.msra.mxu0 %v3914
    %4419 = vmatprep.subr.mxu0 0.0
    %4420 = vmatpush1.msra.mxu0 %v3915
    %4421 = vmatprep.subr.mxu0 0.0
    %4422 = vmatpush1.msra.mxu0 %v3916
    %4423 = vmatprep.subr.mxu0 0.0
    %4424 = vmatpush1.msra.mxu0 %v3917
    %4425 = vmatprep.subr.mxu0 0.0
    %4426 = vmatpush1.msra.mxu0 %v3918
    %4427 = vmatprep.subr.mxu0 0.0
    %4428 = vmatpush1.msra.mxu0 %v3919
    %4429 = vmatprep.subr.mxu0 0.0
    %4430 = vmatpush1.msra.mxu0 %v3920
    %4431 = vmatprep.subr.mxu0 0.0
    %4432 = vmatpush1.msra.mxu0 %v3921
    %4433 = vmatprep.subr.mxu0 0.0
    %4434 = vmatpush1.msra.mxu0 %v3922
    %4435 = vmatprep.subr.mxu0 0.0
    %4436 = vmatpush1.msra.mxu0 %v3923
    %4437 = vmatprep.subr.mxu0 0.0
    %4438 = vmatpush1.msra.mxu0 %v3924
    %4439 = vmatprep.subr.mxu0 0.0
    %4440 = vmatpush1.msra.mxu0 %v3925
    %4441 = vmatprep.mubr.f32.mxu0 %v3517
    %4442 = vmatmul.mubr.f32.gmra.mrb[0].mxu0 %v3516
    %v4443 = vpop.f32.mrb[0].mxu0
    %v4444 = vadd.f32 %v4299, %v4443
    %v4445 = vpop.f32.mrb[0].mxu0
    %4446 = vmatprep.mubr.f32.mxu0 %v3526
    %4447 = vmatmul.mubr.f32.gmra.mrb[0].mxu0 %v3525
    %v4448 = vpop.f32.mrb[0].mxu0
    %v4449 = vadd.f32 %v4304, %v4448
    %v4450 = vpop.f32.mrb[0].mxu0
    %4451 = vmatprep.mubr.f32.mxu0 %v3535
    %4452 = vmatmul.mubr.f32.gmra.mrb[0].mxu0 %v3534
    %v4453 = vpop.f32.mrb[0].mxu0
    %v4454 = vadd.f32 %v4309, %v4453
    %v4455 = vpop.f32.mrb[0].mxu0
    %4456 = vmatprep.mubr.f32.mxu0 %v3544
    %4457 = vmatmul.mubr.f32.gmra.mrb[0].mxu0 %v3543
    %v4458 = vpop.f32.mrb[0].mxu0
    %v4459 = vadd.f32 %v4314, %v4458
    %v4460 = vpop.f32.mrb[0].mxu0
    %4461 = vmatprep.mubr.f32.mxu0 %v3553
    %4462 = vmatmul.mubr.f32.gmra.mrb[0].mxu0 %v3552
    %v4463 = vpop.f32.mrb[0].mxu0
    %v4464 = vadd.f32 %v4319, %v4463
    %v4465 = vpop.f32.mrb[0].mxu0
    %4466 = vmatprep.mubr.f32.mxu0 %v3562
    %4467 = vmatmul.mubr.f32.gmra.mrb[0].mxu0 %v3561
    %v4468 = vpop.f32.mrb[0].mxu0
    %v4469 = vadd.f32 %v4324, %v4468
    %v4470 = vpop.f32.mrb[0].mxu0
    %4471 = vmatprep.mubr.f32.mxu0 %v3571
    %4472 = vmatmul.mubr.f32.gmra.mrb[0].mxu0 %v3570
    %v4473 = vpop.f32.mrb[0].mxu0
    %v4474 = vadd.f32 %v4329, %v4473
    %v4475 = vpop.f32.mrb[0].mxu0
    %4476 = vmatprep.mubr.f32.mxu0 %v3580
    %4477 = vmatmul.mubr.f32.gmra.mrb[0].mxu0 %v3579
    %v4478 = vpop.f32.mrb[0].mxu0
    %v4479 = vadd.f32 %v4334, %v4478
    %v4480 = vpop.f32.mrb[0].mxu0
    %4481 = vmatprep.mubr.f32.mxu0 %v3589
    %4482 = vmatmul.mubr.f32.gmra.mrb[0].mxu0 %v3588
    %v4483 = vpop.f32.mrb[0].mxu0
    %v4484 = vadd.f32 %v4339, %v4483
    %v4485 = vpop.f32.mrb[0].mxu0
    %4486 = vmatprep.mubr.f32.mxu0 %v3598
    %4487 = vmatmul.mubr.f32.gmra.mrb[0].mxu0 %v3597
    %v4488 = vpop.f32.mrb[0].mxu0
    %v4489 = vadd.f32 %v4344, %v4488
    %v4490 = vpop.f32.mrb[0].mxu0
    %4491 = vmatprep.mubr.f32.mxu0 %v3607
    %4492 = vmatmul.mubr.f32.gmra.mrb[0].mxu0 %v3606
    %v4493 = vpop.f32.mrb[0].mxu0
    %v4494 = vadd.f32 %v4349, %v4493
    %v4495 = vpop.f32.mrb[0].mxu0
    %4496 = vmatprep.mubr.f32.mxu0 %v3616
    %4497 = vmatmul.mubr.f32.gmra.mrb[0].mxu0 %v3615
    %v4498 = vpop.f32.mrb[0].mxu0
    %v4499 = vadd.f32 %v4354, %v4498
    %v4500 = vpop.f32.mrb[0].mxu0
    %4501 = vmatprep.mubr.f32.mxu0 %v3625
    %4502 = vmatmul.mubr.f32.gmra.mrb[0].mxu0 %v3624
    %v4503 = vpop.f32.mrb[0].mxu0
    %v4504 = vadd.f32 %v4359, %v4503
    %v4505 = vpop.f32.mrb[0].mxu0
    %4506 = vmatprep.mubr.f32.mxu0 %v3634
    %4507 = vmatmul.mubr.f32.gmra.mrb[0].mxu0 %v3633
    %v4508 = vpop.f32.mrb[0].mxu0
    %v4509 = vadd.f32 %v4364, %v4508
    %v4510 = vpop.f32.mrb[0].mxu0
    %4511 = vmatprep.mubr.f32.mxu0 %v3643
    %4512 = vmatmul.mubr.f32.gmra.mrb[0].mxu0 %v3642
    %v4513 = vpop.f32.mrb[0].mxu0
    %v4514 = vadd.f32 %v4369, %v4513
    %v4515 = vpop.f32.mrb[0].mxu0
    %4516 = vmatprep.mubr.f32.mxu0 %v3652
    %4517 = vmatmul.mubr.f32.gmra.mrb[0].mxu0 %v3651
    %v4518 = vpop.f32.mrb[0].mxu0
    %v4519 = vadd.f32 %v4374, %v4518
    %v4520 = vpop.f32.mrb[0].mxu0
    %4521 = vdwg.mxu0
    %4522 = vmatprep.subr.mxu0 0.0
    %4523 = vmatpush1.msra.mxu0 %v3926
    %4524 = vmatprep.subr.mxu0 0.0
    %4525 = vmatpush1.msra.mxu0 %v3927
    %4526 = vmatprep.subr.mxu0 0.0
    %4527 = vmatpush1.msra.mxu0 %v3928
    %4528 = vmatprep.subr.mxu0 0.0
    %4529 = vmatpush1.msra.mxu0 %v3929
    %4530 = vmatprep.subr.mxu0 0.0
    %4531 = vmatpush1.msra.mxu0 %v3930
    %4532 = vmatprep.subr.mxu0 0.0
    %4533 = vmatpush1.msra.mxu0 %v3931
    %4534 = vmatprep.subr.mxu0 0.0
    %4535 = vmatpush1.msra.mxu0 %v3932
    %4536 = vmatprep.subr.mxu0 0.0
    %4537 = vmatpush1.msra.mxu0 %v3933
    %4538 = vmatprep.subr.mxu0 0.0
    %4539 = vmatpush1.msra.mxu0 %v3934
    %4540 = vmatprep.subr.mxu0 0.0
    %4541 = vmatpush1.msra.mxu0 %v3935
    %4542 = vmatprep.subr.mxu0 0.0
    %4543 = vmatpush1.msra.mxu0 %v3936
    %4544 = vmatprep.subr.mxu0 0.0
    %4545 = vmatpush1.msra.mxu0 %v3937
    %4546 = vmatprep.subr.mxu0 0.0
    %4547 = vmatpush1.msra.mxu0 %v3938
    %4548 = vmatprep.subr.mxu0 0.0
    %4549 = vmatpush1.msra.mxu0 %v3939
    %4550 = vmatprep.subr.mxu0 0.0
    %4551 = vmatpush1.msra.mxu0 %v3940
    %4552 = vmatprep.subr.mxu0 0.0
    %4553 = vmatpush1.msra.mxu0 %v3941
    %4554 = vmatprep.subr.mxu0 0.0
    %4555 = vmatpush1.msra.mxu0 0.0
    %4556 = vmatprep.subr.mxu0 0.0
    %4557 = vmatpush1.msra.mxu0 0.0
    %4558 = vmatprep.subr.mxu0 0.0
    %4559 = vmatpush1.msra.mxu0 0.0
    %4560 = vmatprep.subr.mxu0 0.0
    %4561 = vmatpush1.msra.mxu0 0.0
    %4562 = vmatprep.subr.mxu0 0.0
    %4563 = vmatpush1.msra.mxu0 0.0
    %4564 = vmatprep.subr.mxu0 0.0
    %4565 = vmatpush1.msra.mxu0 0.0
    %4566 = vmatprep.subr.mxu0 0.0
    %4567 = vmatpush1.msra.mxu0 0.0
    %4568 = vmatprep.subr.mxu0 0.0
    %4569 = vmatpush1.msra.mxu0 0.0
    %4570 = vmatprep.subr.mxu0 0.0
    %4571 = vmatpush1.msra.mxu0 0.0
    %4572 = vmatprep.subr.mxu0 0.0
    %4573 = vmatpush1.msra.mxu0 0.0
    %4574 = vmatprep.subr.mxu0 0.0
    %4575 = vmatpush1.msra.mxu0 0.0
    %4576 = vmatprep.subr.mxu0 0.0
    %4577 = vmatpush1.msra.mxu0 0.0
    %4578 = vmatprep.subr.mxu0 0.0
    %4579 = vmatpush1.msra.mxu0 0.0
    %4580 = vmatprep.subr.mxu0 0.0
    %4581 = vmatpush1.msra.mxu0 0.0
    %4582 = vmatprep.subr.mxu0 0.0
    %4583 = vmatpush1.msra.mxu0 0.0
    %4584 = vmatprep.subr.mxu0 0.0
    %4585 = vmatpush1.msra.mxu0 0.0
    %4586 = vmatprep.mubr.f32.mxu0 0.0
    %4587 = vmatmul.mubr.f32.gmra.mrb[0].mxu0 %v3518
    %v4588 = vpop.f32.mrb[0].mxu0
    %v4589 = vadd.f32 %v4444, %v4588
    %v4590 = vpop.f32.mrb[0].mxu0
    %4591 = vmatprep.mubr.f32.mxu0 0.0
    %4592 = vmatmul.mubr.f32.gmra.mrb[0].mxu0 %v3527
    %v4593 = vpop.f32.mrb[0].mxu0
    %v4594 = vadd.f32 %v4449, %v4593
    %v4595 = vpop.f32.mrb[0].mxu0
    %4596 = vmatprep.mubr.f32.mxu0 0.0
    %4597 = vmatmul.mubr.f32.gmra.mrb[0].mxu0 %v3536
    %v4598 = vpop.f32.mrb[0].mxu0
    %v4599 = vadd.f32 %v4454, %v4598
    %v4600 = vpop.f32.mrb[0].mxu0
    %4601 = vmatprep.mubr.f32.mxu0 0.0
    %4602 = vmatmul.mubr.f32.gmra.mrb[0].mxu0 %v3545
    %v4603 = vpop.f32.mrb[0].mxu0
    %v4604 = vadd.f32 %v4459, %v4603
    %v4605 = vpop.f32.mrb[0].mxu0
    %4606 = vmatprep.mubr.f32.mxu0 0.0
    %4607 = vmatmul.mubr.f32.gmra.mrb[0].mxu0 %v3554
    %v4608 = vpop.f32.mrb[0].mxu0
    %v4609 = vadd.f32 %v4464, %v4608
    %v4610 = vpop.f32.mrb[0].mxu0
    %4611 = vmatprep.mubr.f32.mxu0 0.0
    %4612 = vmatmul.mubr.f32.gmra.mrb[0].mxu0 %v3563
    %v4613 = vpop.f32.mrb[0].mxu0
    %v4614 = vadd.f32 %v4469, %v4613
    %v4615 = vpop.f32.mrb[0].mxu0
    %4616 = vmatprep.mubr.f32.mxu0 0.0
    %4617 = vmatmul.mubr.f32.gmra.mrb[0].mxu0 %v3572
    %v4618 = vpop.f32.mrb[0].mxu0
    %v4619 = vadd.f32 %v4474, %v4618
    %v4620 = vpop.f32.mrb[0].mxu0
    %4621 = vmatprep.mubr.f32.mxu0 0.0
    %4622 = vmatmul.mubr.f32.gmra.mrb[0].mxu0 %v3581
    %v4623 = vpop.f32.mrb[0].mxu0
    %v4624 = vadd.f32 %v4479, %v4623
    %v4625 = vpop.f32.mrb[0].mxu0
    %4626 = vmatprep.mubr.f32.mxu0 0.0
    %4627 = vmatmul.mubr.f32.gmra.mrb[0].mxu0 %v3590
    %v4628 = vpop.f32.mrb[0].mxu0
    %v4629 = vadd.f32 %v4484, %v4628
    %v4630 = vpop.f32.mrb[0].mxu0
    %4631 = vmatprep.mubr.f32.mxu0 0.0
    %4632 = vmatmul.mubr.f32.gmra.mrb[0].mxu0 %v3599
    %v4633 = vpop.f32.mrb[0].mxu0
    %v4634 = vadd.f32 %v4489, %v4633
    %v4635 = vpop.f32.mrb[0].mxu0
    %4636 = vmatprep.mubr.f32.mxu0 0.0
    %4637 = vmatmul.mubr.f32.gmra.mrb[0].mxu0 %v3608
    %v4638 = vpop.f32.mrb[0].mxu0
    %v4639 = vadd.f32 %v4494, %v4638
    %v4640 = vpop.f32.mrb[0].mxu0
    %4641 = vmatprep.mubr.f32.mxu0 0.0
    %4642 = vmatmul.mubr.f32.gmra.mrb[0].mxu0 %v3617
    %v4643 = vpop.f32.mrb[0].mxu0
    %v4644 = vadd.f32 %v4499, %v4643
    %v4645 = vpop.f32.mrb[0].mxu0
    %4646 = vmatprep.mubr.f32.mxu0 0.0
    %4647 = vmatmul.mubr.f32.gmra.mrb[0].mxu0 %v3626
    %v4648 = vpop.f32.mrb[0].mxu0
    %v4649 = vadd.f32 %v4504, %v4648
    %v4650 = vpop.f32.mrb[0].mxu0
    %4651 = vmatprep.mubr.f32.mxu0 0.0
    %4652 = vmatmul.mubr.f32.gmra.mrb[0].mxu0 %v3635
    %v4653 = vpop.f32.mrb[0].mxu0
    %v4654 = vadd.f32 %v4509, %v4653
    %v4655 = vpop.f32.mrb[0].mxu0
    %4656 = vmatprep.mubr.f32.mxu0 0.0
    %4657 = vmatmul.mubr.f32.gmra.mrb[0].mxu0 %v3644
    %v4658 = vpop.f32.mrb[0].mxu0
    %v4659 = vadd.f32 %v4514, %v4658
    %v4660 = vpop.f32.mrb[0].mxu0
    %4661 = vmatprep.mubr.f32.mxu0 0.0
    %4662 = vmatmul.mubr.f32.gmra.mrb[0].mxu0 %v3653
    %v4663 = vpop.f32.mrb[0].mxu0
    %v4664 = vadd.f32 %v4519, %v4663
    %v4665 = vpop.f32.mrb[0].mxu0
    %4666 = vdwg.mxu0
    %v4667 = vld [vmem:[%s8] sm:$0x1]
    %v4669 = vlaneseq
    %v4670 = vshrl.u32 %v4669, 7
    %v4671 = vsub.s32 0, %v4670
    %v4672 = vrot.slane %v4667, %v4671
    %v4674 = vmul.f32 %v4589, %v4672
    %v4675 = vmul.f32 %v4594, %v4672
    %v4676 = vmul.f32 %v4599, %v4672
    %v4677 = vmul.f32 %v4604, %v4672
    %v4678 = vmul.f32 %v4609, %v4672
    %v4679 = vmul.f32 %v4614, %v4672
    %v4680 = vmul.f32 %v4619, %v4672
    %v4681 = vmul.f32 %v4624, %v4672
    %v4682 = vmul.f32 %v4629, %v4672
    %v4683 = vmul.f32 %v4634, %v4672
    %v4684 = vmul.f32 %v4639, %v4672
    %v4685 = vmul.f32 %v4644, %v4672
    %v4686 = vmul.f32 %v4649, %v4672
    %v4687 = vmul.f32 %v4654, %v4672
    %v4688 = vmul.f32 %v4659, %v4672
    %v4689 = vmul.f32 %v4664, %v4672
    %v4690 = vld [vmem:[%s9] sm:$0x1]
    %v4692 = vlaneseq
    %v4693 = vshrl.u32 %v4692, 7
    %v4694 = vsub.s32 0, %v4693
    %v4695 = vrot.slane %v4690, %v4694
    %v4697 = vadd.f32 %v4674, %v4695
    %v4698 = vadd.f32 %v4675, %v4695
    %v4699 = vadd.f32 %v4676, %v4695
    %v4700 = vadd.f32 %v4677, %v4695
    %v4701 = vadd.f32 %v4678, %v4695
    %v4702 = vadd.f32 %v4679, %v4695
    %v4703 = vadd.f32 %v4680, %v4695
    %v4704 = vadd.f32 %v4681, %v4695
    %v4705 = vadd.f32 %v4682, %v4695
    %v4706 = vadd.f32 %v4683, %v4695
    %v4707 = vadd.f32 %v4684, %v4695
    %v4708 = vadd.f32 %v4685, %v4695
    %v4709 = vadd.f32 %v4686, %v4695
    %v4710 = vadd.f32 %v4687, %v4695
    %v4711 = vadd.f32 %v4688, %v4695
    %v4712 = vadd.f32 %v4689, %v4695
    %v4713 = vmax.f32 %v4697, 0.0
    %v4714 = vmax.f32 %v4698, 0.0
    %v4715 = vmax.f32 %v4699, 0.0
    %v4716 = vmax.f32 %v4700, 0.0
    %v4717 = vmax.f32 %v4701, 0.0
    %v4718 = vmax.f32 %v4702, 0.0
    %v4719 = vmax.f32 %v4703, 0.0
    %v4720 = vmax.f32 %v4704, 0.0
    %v4721 = vmax.f32 %v4705, 0.0
    %v4722 = vmax.f32 %v4706, 0.0
    %v4723 = vmax.f32 %v4707, 0.0
    %v4724 = vmax.f32 %v4708, 0.0
    %v4725 = vmax.f32 %v4709, 0.0
    %v4726 = vmax.f32 %v4710, 0.0
    %v4727 = vmax.f32 %v4711, 0.0
    %v4728 = vmax.f32 %v4712, 0.0
    %v4729 = vld [vmem:[%s10] sm:$0xf]
    %v4730 = vld [vmem:[%s10 + $0x4] sm:$0xf]
    %v4731 = vld [vmem:[%s10 + $0x8] sm:$0xf]
    %v4732 = vld [vmem:[%s10 + $0xc] sm:$0xf]
    %v4733 = vld [vmem:[%s10 + $0x10] sm:$0xf]
    %v4734 = vld [vmem:[%s10 + $0x14] sm:$0xf]
    %v4735 = vld [vmem:[%s10 + $0x18] sm:$0xf]
    %v4736 = vld [vmem:[%s10 + $0x1c] sm:$0xf]
    %v4737 = vld [vmem:[%s10 + $0x20] sm:$0xf]
    %v4738 = vld [vmem:[%s10 + $0x24] sm:$0xf]
    %v4739 = vld [vmem:[%s10 + $0x28] sm:$0xf]
    %v4740 = vld [vmem:[%s10 + $0x2c] sm:$0xf]
    %v4741 = vld [vmem:[%s10 + $0x30] sm:$0xf]
    %v4742 = vld [vmem:[%s10 + $0x34] sm:$0xf]
    %v4743 = vld [vmem:[%s10 + $0x38] sm:$0xf]
    %v4744 = vld [vmem:[%s10 + $0x3c] sm:$0xf]
    %v4745 = vunpack.c.l.bf16 %v4729
    %v4746 = vunpack.c.l.bf16 %v4730
    %v4747 = vunpack.c.l.bf16 %v4731
    %v4748 = vunpack.c.l.bf16 %v4732
    %v4749 = vunpack.c.l.bf16 %v4733
    %v4750 = vunpack.c.l.bf16 %v4734
    %v4751 = vunpack.c.l.bf16 %v4735
    %v4752 = vunpack.c.l.bf16 %v4736
    %v4753 = vunpack.c.l.bf16 %v4737
    %v4754 = vunpack.c.l.bf16 %v4738
    %v4755 = vunpack.c.l.bf16 %v4739
    %v4756 = vunpack.c.l.bf16 %v4740
    %v4757 = vunpack.c.l.bf16 %v4741
    %v4758 = vunpack.c.l.bf16 %v4742
    %v4759 = vunpack.c.l.bf16 %v4743
    %v4760 = vunpack.c.l.bf16 %v4744
    %v4761 = vld [vmem:[%s11] sm:$0x1]
    %v4763 = vlaneseq
    %v4764 = vshrl.u32 %v4763, 7
    %v4765 = vsub.s32 0, %v4764
    %v4766 = vrot.slane %v4761, %v4765
    %4768 = vmatprep.subr.mxu0 0.0
    %4769 = vmatpush1.msra.mxu0 %v4745
    %4770 = vmatprep.subr.mxu0 0.0
    %4771 = vmatpush1.msra.mxu0 %v4746
    %4772 = vmatprep.subr.mxu0 0.0
    %4773 = vmatpush1.msra.mxu0 %v4747
    %4774 = vmatprep.subr.mxu0 0.0
    %4775 = vmatpush1.msra.mxu0 %v4748
    %4776 = vmatprep.subr.mxu0 0.0
    %4777 = vmatpush1.msra.mxu0 %v4749
    %4778 = vmatprep.subr.mxu0 0.0
    %4779 = vmatpush1.msra.mxu0 %v4750
    %4780 = vmatprep.subr.mxu0 0.0
    %4781 = vmatpush1.msra.mxu0 %v4751
    %4782 = vmatprep.subr.mxu0 0.0
    %4783 = vmatpush1.msra.mxu0 %v4752
    %4784 = vmatprep.subr.mxu0 0.0
    %4785 = vmatpush1.msra.mxu0 %v4753
    %4786 = vmatprep.subr.mxu0 0.0
    %4787 = vmatpush1.msra.mxu0 %v4754
    %4788 = vmatprep.subr.mxu0 0.0
    %4789 = vmatpush1.msra.mxu0 %v4755
    %4790 = vmatprep.subr.mxu0 0.0
    %4791 = vmatpush1.msra.mxu0 %v4756
    %4792 = vmatprep.subr.mxu0 0.0
    %4793 = vmatpush1.msra.mxu0 %v4757
    %4794 = vmatprep.subr.mxu0 0.0
    %4795 = vmatpush1.msra.mxu0 %v4758
    %4796 = vmatprep.subr.mxu0 0.0
    %4797 = vmatpush1.msra.mxu0 %v4759
    %4798 = vmatprep.subr.mxu0 0.0
    %4799 = vmatpush1.msra.mxu0 %v4760
    %4800 = vmatprep.subr.mxu0 0.0
    %4801 = vmatpush1.msra.mxu0 0.0
    %4802 = vmatprep.subr.mxu0 0.0
    %4803 = vmatpush1.msra.mxu0 0.0
    %4804 = vmatprep.subr.mxu0 0.0
    %4805 = vmatpush1.msra.mxu0 0.0
    %4806 = vmatprep.subr.mxu0 0.0
    %4807 = vmatpush1.msra.mxu0 0.0
    %4808 = vmatprep.subr.mxu0 0.0
    %4809 = vmatpush1.msra.mxu0 0.0
    %4810 = vmatprep.subr.mxu0 0.0
    %4811 = vmatpush1.msra.mxu0 0.0
    %4812 = vmatprep.subr.mxu0 0.0
    %4813 = vmatpush1.msra.mxu0 0.0
    %4814 = vmatprep.subr.mxu0 0.0
    %4815 = vmatpush1.msra.mxu0 0.0
    %4816 = vmatprep.subr.mxu0 0.0
    %4817 = vmatpush1.msra.mxu0 0.0
    %4818 = vmatprep.subr.mxu0 0.0
    %4819 = vmatpush1.msra.mxu0 0.0
    %4820 = vmatprep.subr.mxu0 0.0
    %4821 = vmatpush1.msra.mxu0 0.0
    %4822 = vmatprep.subr.mxu0 0.0
    %4823 = vmatpush1.msra.mxu0 0.0
    %4824 = vmatprep.subr.mxu0 0.0
    %4825 = vmatpush1.msra.mxu0 0.0
    %4826 = vmatprep.subr.mxu0 0.0
    %4827 = vmatpush1.msra.mxu0 0.0
    %4828 = vmatprep.subr.mxu0 0.0
    %4829 = vmatpush1.msra.mxu0 0.0
    %4830 = vmatprep.subr.mxu0 0.0
    %4831 = vmatpush1.msra.mxu0 0.0
    %4832 = vmatprep.mubr.f32.mxu0 0.0
    %4833 = vmatmul.mubr.f32.gmra.mrb[0].mxu0 %v4713
    %v4834 = vpop.f32.mrb[0].mxu0
    %v4835 = vadd.f32 %v4766, %v4834
    %v4836 = vpop.f32.mrb[0].mxu0
    %4837 = vmatprep.mubr.f32.mxu0 0.0
    %4838 = vmatmul.mubr.f32.gmra.mrb[0].mxu0 %v4714
    %v4839 = vpop.f32.mrb[0].mxu0
    %v4840 = vadd.f32 %v4766, %v4839
    %v4841 = vpop.f32.mrb[0].mxu0
    %4842 = vmatprep.mubr.f32.mxu0 0.0
    %4843 = vmatmul.mubr.f32.gmra.mrb[0].mxu0 %v4715
    %v4844 = vpop.f32.mrb[0].mxu0
    %v4845 = vadd.f32 %v4766, %v4844
    %v4846 = vpop.f32.mrb[0].mxu0
    %4847 = vmatprep.mubr.f32.mxu0 0.0
    %4848 = vmatmul.mubr.f32.gmra.mrb[0].mxu0 %v4716
    %v4849 = vpop.f32.mrb[0].mxu0
    %v4850 = vadd.f32 %v4766, %v4849
    %v4851 = vpop.f32.mrb[0].mxu0
    %4852 = vmatprep.mubr.f32.mxu0 0.0
    %4853 = vmatmul.mubr.f32.gmra.mrb[0].mxu0 %v4717
    %v4854 = vpop.f32.mrb[0].mxu0
    %v4855 = vadd.f32 %v4766, %v4854
    %v4856 = vpop.f32.mrb[0].mxu0
    %4857 = vmatprep.mubr.f32.mxu0 0.0
    %4858 = vmatmul.mubr.f32.gmra.mrb[0].mxu0 %v4718
    %v4859 = vpop.f32.mrb[0].mxu0
    %v4860 = vadd.f32 %v4766, %v4859
    %v4861 = vpop.f32.mrb[0].mxu0
    %4862 = vmatprep.mubr.f32.mxu0 0.0
    %4863 = vmatmul.mubr.f32.gmra.mrb[0].mxu0 %v4719
    %v4864 = vpop.f32.mrb[0].mxu0
    %v4865 = vadd.f32 %v4766, %v4864
    %v4866 = vpop.f32.mrb[0].mxu0
    %4867 = vmatprep.mubr.f32.mxu0 0.0
    %4868 = vmatmul.mubr.f32.gmra.mrb[0].mxu0 %v4720
    %v4869 = vpop.f32.mrb[0].mxu0
    %v4870 = vadd.f32 %v4766, %v4869
    %v4871 = vpop.f32.mrb[0].mxu0
    %4872 = vmatprep.mubr.f32.mxu0 0.0
    %4873 = vmatmul.mubr.f32.gmra.mrb[0].mxu0 %v4721
    %v4874 = vpop.f32.mrb[0].mxu0
    %v4875 = vadd.f32 %v4766, %v4874
    %v4876 = vpop.f32.mrb[0].mxu0
    %4877 = vmatprep.mubr.f32.mxu0 0.0
    %4878 = vmatmul.mubr.f32.gmra.mrb[0].mxu0 %v4722
    %v4879 = vpop.f32.mrb[0].mxu0
    %v4880 = vadd.f32 %v4766, %v4879
    %v4881 = vpop.f32.mrb[0].mxu0
    %4882 = vmatprep.mubr.f32.mxu0 0.0
    %4883 = vmatmul.mubr.f32.gmra.mrb[0].mxu0 %v4723
    %v4884 = vpop.f32.mrb[0].mxu0
    %v4885 = vadd.f32 %v4766, %v4884
    %v4886 = vpop.f32.mrb[0].mxu0
    %4887 = vmatprep.mubr.f32.mxu0 0.0
    %4888 = vmatmul.mubr.f32.gmra.mrb[0].mxu0 %v4724
    %v4889 = vpop.f32.mrb[0].mxu0
    %v4890 = vadd.f32 %v4766, %v4889
    %v4891 = vpop.f32.mrb[0].mxu0
    %4892 = vmatprep.mubr.f32.mxu0 0.0
    %4893 = vmatmul.mubr.f32.gmra.mrb[0].mxu0 %v4725
    %v4894 = vpop.f32.mrb[0].mxu0
    %v4895 = vadd.f32 %v4766, %v4894
    %v4896 = vpop.f32.mrb[0].mxu0
    %4897 = vmatprep.mubr.f32.mxu0 0.0
    %4898 = vmatmul.mubr.f32.gmra.mrb[0].mxu0 %v4726
    %v4899 = vpop.f32.mrb[0].mxu0
    %v4900 = vadd.f32 %v4766, %v4899
    %v4901 = vpop.f32.mrb[0].mxu0
    %4902 = vmatprep.mubr.f32.mxu0 0.0
    %4903 = vmatmul.mubr.f32.gmra.mrb[0].mxu0 %v4727
    %v4904 = vpop.f32.mrb[0].mxu0
    %v4905 = vadd.f32 %v4766, %v4904
    %v4906 = vpop.f32.mrb[0].mxu0
    %4907 = vmatprep.mubr.f32.mxu0 0.0
    %4908 = vmatmul.mubr.f32.gmra.mrb[0].mxu0 %v4728
    %v4909 = vpop.f32.mrb[0].mxu0
    %v4910 = vadd.f32 %v4766, %v4909
    %v4911 = vpop.f32.mrb[0].mxu0
    %4912 = vdwg.mxu0
    %v4913 = vmax.f32 %v4835, 0.0
    %v4914 = vmax.f32 %v4840, 0.0
    %v4915 = vmax.f32 %v4845, 0.0
    %v4916 = vmax.f32 %v4850, 0.0
    %v4917 = vmax.f32 %v4855, 0.0
    %v4918 = vmax.f32 %v4860, 0.0
    %v4919 = vmax.f32 %v4865, 0.0
    %v4920 = vmax.f32 %v4870, 0.0
    %v4921 = vmax.f32 %v4875, 0.0
    %v4922 = vmax.f32 %v4880, 0.0
    %v4923 = vmax.f32 %v4885, 0.0
    %v4924 = vmax.f32 %v4890, 0.0
    %v4925 = vmax.f32 %v4895, 0.0
    %v4926 = vmax.f32 %v4900, 0.0
    %v4927 = vmax.f32 %v4905, 0.0
    %v4928 = vmax.f32 %v4910, 0.0
    %4929 = vst [vmem:[%s12] sm:$0xff] %v4913
    %4930 = vst [vmem:[%s12 + $0x8] sm:$0xff] %v4914
    %4931 = vst [vmem:[%s12 + $0x10] sm:$0xff] %v4915
    %4932 = vst [vmem:[%s12 + $0x18] sm:$0xff] %v4916
    %4933 = vst [vmem:[%s12 + $0x20] sm:$0xff] %v4917
    %4934 = vst [vmem:[%s12 + $0x28] sm:$0xff] %v4918
    %4935 = vst [vmem:[%s12 + $0x30] sm:$0xff] %v4919
    %4936 = vst [vmem:[%s12 + $0x38] sm:$0xff] %v4920
    %4937 = vst [vmem:[%s12 + $0x40] sm:$0xff] %v4921
    %4938 = vst [vmem:[%s12 + $0x48] sm:$0xff] %v4922
    %4939 = vst [vmem:[%s12 + $0x50] sm:$0xff] %v4923
    %4940 = vst [vmem:[%s12 + $0x58] sm:$0xff] %v4924
    %4941 = vst [vmem:[%s12 + $0x60] sm:$0xff] %v4925
    %4942 = vst [vmem:[%s12 + $0x68] sm:$0xff] %v4926
    %4943 = vst [vmem:[%s12 + $0x70] sm:$0xff] %v4927
    %4944 = vst [vmem:[%s12 + $0x78] sm:$0xff] %v4928
    // Predicated region
    $region62: #{dual_head_forward.2} parent=1 // pred_check
      _
    $region63: #{dual_head_forward.2} parent=1 // pred_check_branch
      %4946 = sbr.rel (0) target = $region65
    $region64: #{dual_head_forward.2} parent=1 // pred_region
      _
    $region65: #{dual_head_forward.2} parent=1 // pred_fallthru
      _
    // Predicated region
    $region66: #{dual_head_forward.2} parent=1 // pred_check
      _
    $region67: #{dual_head_forward.2} parent=1 // pred_check_branch
      %4948 = sbr.rel (0) target = $region69
    $region68: #{dual_head_forward.2} parent=1 // pred_region
      _
    $region69: #{dual_head_forward.2} parent=1 // pred_fallthru
      _
    %4949 = vsyncpa [#allocation5], 1
    %4950 = vsyncpa [#allocation7], 1

</llo_original>
